<compile_context>
chip_gen: v5e
topology: v5e:2x2
jax: 0.10.0
libtpu: 0.0.40
codegen_flags: <defaults>
</compile_context>

<pallas_src>
import functools

import jax
import jax.numpy as jnp
from jax import lax
from jax.experimental import pallas as pl
from jax.experimental.pallas import tpu as pltpu

NEG_SLOPE = 0.01   # torch.nn.LeakyReLU default negative_slope
TB = 8             # images per grid step


# ----------------------------------------------------------------------------
# Host-side weight re-packing: banded conv matrices, pooling selection
# matrices and packed biases.  All tiny, plain JAX outside the kernel.
# ----------------------------------------------------------------------------
def _conv_band_mats(w_oihw, w_in_len):
    """Band matrices M s.t. conv rows = sum_kh  in_rows[kh:kh+Ho] @ M[kh].

    Input rows are lane-flattened as [w*Cin + ci], output rows as [w*Cout + c].
    M[kh][(w+kw)*Cin + ci, w*Cout + c] = W[c, ci, kh, kw].
    """
    c_out, c_in, kh_sz, kw_sz = w_oihw.shape
    w_out_len = w_in_len - kw_sz + 1
    j = jnp.arange(w_in_len)[:, None]          # input column position
    w = jnp.arange(w_out_len)[None, :]         # output column position
    off = j - w                                # tap index kw (if in range)
    valid = ((off >= 0) & (off < kw_sz)).astype(w_oihw.dtype)
    off_c = jnp.clip(off, 0, kw_sz - 1)
    mats = []
    for kh in range(kh_sz):
        wkt = jnp.transpose(w_oihw[:, :, kh, :], (2, 1, 0))     # (KW, Cin, Cout)
        m4 = wkt[off_c] * valid[:, :, None, None]               # (Win, Wout, Cin, Cout)
        m = jnp.transpose(m4, (0, 2, 1, 3)).reshape(w_in_len * c_in,
                                                    w_out_len * c_out)
        mats.append(m)
    return jnp.stack(mats, axis=0)             # (KH, Win*Cin, Wout*Cout)


def _col_pool_sel(w_in, c):
    """((w_in-1)*c, (w_in//2)*c) 0/1 matrix picking even spatial columns."""
    w_out = w_in // 2
    rows = (2 * jnp.arange(w_out)[:, None] * c + jnp.arange(c)[None, :]).ravel()
    cols = (jnp.arange(w_out)[:, None] * c + jnp.arange(c)[None, :]).ravel()
    return jnp.zeros(((w_in - 1) * c, w_out * c), jnp.float32).at[rows, cols].set(1.0)


def _row_pool_sel(h_in):
    """(h_in//2, h_in-1) 0/1 matrix picking even rows (left-multiply)."""
    h_out = h_in // 2
    i = jnp.arange(h_out)
    return jnp.zeros((h_out, h_in - 1), jnp.float32).at[i, 2 * i].set(1.0)


def _lrelu(v):
    return jnp.where(v >= 0.0, v, NEG_SLOPE * v)


# ----------------------------------------------------------------------------
# Fused kernel: TB images per grid step.
# ----------------------------------------------------------------------------
def _lenet_kernel(tb, x_ref, m1_ref, se1_ref, re1_ref, m3_ref, se2_ref,
                  re2_ref, m5_ref, bias_ref, o_ref):
    f32 = jnp.float32
    bf16 = jnp.bfloat16

    b1 = bias_ref[pl.ds(0, 1), :]                  # (1, 168)
    b3 = bias_ref[pl.ds(1, 1), pl.ds(0, 160)]      # (1, 160)
    b5 = bias_ref[pl.ds(2, 1), pl.ds(0, 128)]      # (1, 128)

    p3_rows = []                                   # per image: (5, 80) f32
    for t in range(tb):
        # ---- conv1 (1->6, 5x5): five banded matmuls (28,32)@(32,168) --------
        acc1 = jnp.dot(x_ref[t, pl.ds(0, 28), :].astype(bf16), m1_ref[0],
                       preferred_element_type=f32)
        for kh in range(1, 5):
            acc1 = acc1 + jnp.dot(x_ref[t, pl.ds(kh, 28), :].astype(bf16),
                                  m1_ref[kh], preferred_element_type=f32)
        a1 = _lrelu(acc1 + b1)                                  # (28, 168)

        # ---- maxpool 2x2: pair-max via shifted slices + even selection ------
        cmax = jnp.maximum(a1[:, 0:162], a1[:, 6:168])          # (28, 162)
        cp = jnp.dot(cmax.astype(bf16), se1_ref[...],
                     preferred_element_type=f32)                # (28, 84)
        rmax = jnp.maximum(cp[0:27, :], cp[1:28, :])            # (27, 84)
        p1 = jnp.dot(re1_ref[...], rmax.astype(bf16),
                     preferred_element_type=f32)                # (14, 84)

        # ---- conv3 (6->16, 5x5): (10,84)@(84,160) x 5 ------------------------
        acc3 = jnp.dot(p1[0:10, :].astype(bf16), m3_ref[0],
                       preferred_element_type=f32)
        for kh in range(1, 5):
            acc3 = acc3 + jnp.dot(p1[kh:kh + 10, :].astype(bf16), m3_ref[kh],
                                  preferred_element_type=f32)
        a3 = _lrelu(acc3 + b3)                                  # (10, 160)

        # ---- maxpool 2x2 -----------------------------------------------------
        cmax3 = jnp.maximum(a3[:, 0:144], a3[:, 16:160])        # (10, 144)
        cp3 = jnp.dot(cmax3.astype(bf16), se2_ref[...],
                      preferred_element_type=f32)               # (10, 80)
        rmax3 = jnp.maximum(cp3[0:9, :], cp3[1:10, :])          # (9, 80)
        p3 = jnp.dot(re2_ref[...], rmax3.astype(bf16),
                     preferred_element_type=f32)                # (5, 80)
        p3_rows.append(p3)

    # ---- conv5 (16->120, 5x5 -> 1x1 spatial): batch stacked along M ---------
    # Gather row h of each image's (5,80) map into a (tb,80) LHS with a
    # one-hot where-chain (cheap VPU work, no unaligned concatenation).
    row_ids = lax.broadcasted_iota(jnp.int32, (tb, 80), 0)
    acc5 = jnp.zeros((tb, 128), f32)
    for h in range(5):
        lhs = jnp.zeros((tb, 80), f32)
        for t in range(tb):
            lhs = jnp.where(row_ids == t, p3_rows[t][h:h + 1, :], lhs)
        acc5 = acc5 + jnp.dot(lhs.astype(bf16), m5_ref[h],
                              preferred_element_type=f32)       # (tb, 128)
    o_ref[...] = _lrelu(acc5 + b5)                              # lane-dense store


# ----------------------------------------------------------------------------
# Forward pass wrapper.
# ----------------------------------------------------------------------------
def lenet_rep_forward(x_nchw, params, *, tb=TB):
    """Pallas forward pass. x_nchw: (B, 1, 32, 32) f32 -> (B, 120) f32."""
    assert x_nchw.shape[1:] == (1, 32, 32), x_nchw.shape
    batch = x_nchw.shape[0]
    bf16 = jnp.bfloat16

    w1, b1 = params["conv1"]
    w3, b3 = params["conv3"]
    w5, b5 = params["conv5"]

    x = x_nchw[:, 0, :, :]                                     # (B, 32, 32) f32
    b_pad = pl.cdiv(batch, tb) * tb
    if b_pad != batch:
        x = jnp.concatenate(
            [x, jnp.zeros((b_pad - batch, 32, 32), x.dtype)], axis=0)

    m1 = _conv_band_mats(w1, 32).astype(bf16)                  # (5, 32, 168)
    m3 = _conv_band_mats(w3, 14).astype(bf16)                  # (5, 84, 160)
    m5 = jnp.pad(_conv_band_mats(w5, 5),
                 ((0, 0), (0, 0), (0, 8))).astype(bf16)        # (5, 80, 128)
    se1 = _col_pool_sel(28, 6).astype(bf16)                    # (162, 84)
    re1 = _row_pool_sel(28).astype(bf16)                       # (14, 27)
    se2 = _col_pool_sel(10, 16).astype(bf16)                   # (144, 80)
    re2 = _row_pool_sel(10).astype(bf16)                       # (5, 9)

    bias = jnp.zeros((3, 168), jnp.float32)
    bias = bias.at[0, :168].set(jnp.tile(b1, 28))
    bias = bias.at[1, :160].set(jnp.tile(b3, 10))
    bias = bias.at[2, :120].set(b5)

    const2 = lambda n: (0, 0)
    const3 = lambda n: (0, 0, 0)
    out = pl.pallas_call(
        functools.partial(_lenet_kernel, tb),
        out_shape=jax.ShapeDtypeStruct((b_pad, 128), jnp.float32),
        grid=(b_pad // tb,),
        in_specs=[
            pl.BlockSpec((tb, 32, 32), lambda n: (n, 0, 0)),   # images
            pl.BlockSpec((5, 32, 168), const3),                # conv1 bands
            pl.BlockSpec((162, 84), const2),                   # pool1 col-select
            pl.BlockSpec((14, 27), const2),                    # pool1 row-select
            pl.BlockSpec((5, 84, 160), const3),                # conv3 bands
            pl.BlockSpec((144, 80), const2),                   # pool2 col-select
            pl.BlockSpec((5, 9), const2),                      # pool2 row-select
            pl.BlockSpec((5, 80, 128), const3),                # conv5 bands (N pad)
            pl.BlockSpec((3, 168), const2),                    # packed biases
        ],
        out_specs=pl.BlockSpec((tb, 128), lambda n: (n, 0)),
        compiler_params=pltpu.CompilerParams(
            dimension_semantics=("parallel",)),
    )(x, m1, se1, re1, m3, se2, re2, m5, bias)
    return out[:batch, :120]                   # matches torch x.view(-1, 120)


# ----------------------------------------------------------------------------
# Parameters (deterministic, PyTorch-like uniform init) and pure-JAX reference.
# ----------------------------------------------------------------------------
def init_params(key):
    def conv_init(k, c_out, c_in, ksz):
        k_w, k_b = jax.random.split(k)
        bound = 1.0 / (c_in * ksz * ksz) ** 0.5
        w_oihw = jax.random.uniform(k_w, (c_out, c_in, ksz, ksz), jnp.float32,
                                    -bound, bound)
        bias = jax.random.uniform(k_b, (c_out,), jnp.float32, -bound, bound)
        return w_oihw, bias

    k1, k3, k5 = jax.random.split(key, 3)
    return {"conv1": conv_init(k1, 6, 1, 5),
            "conv3": conv_init(k3, 16, 6, 5),
            "conv5": conv_init(k5, 120, 16, 5)}


def reference_forward(x_nchw, params):
    """Pure-JAX reference mirroring the PyTorch module (NCHW)."""
    def conv(v, w_oihw, bias):
        y = lax.conv_general_dilated(
            v, w_oihw, window_strides=(1, 1), padding="VALID",
            dimension_numbers=("NCHW", "OIHW", "NCHW"),
            precision=lax.Precision.HIGHEST)
        return y + bias[None, :, None, None]

    def pool(v):
        return lax.reduce_window(v, -jnp.inf, lax.max,
                                 (1, 1, 2, 2), (1, 1, 2, 2), "VALID")

    w1, b1 = params["conv1"]
    w3, b3 = params["conv3"]
    w5, b5 = params["conv5"]
    v = pool(_lrelu(conv(x_nchw, w1, b1)))
    v = pool(_lrelu(conv(v, w3, b3)))
    v = _lrelu(conv(v, w5, b5))
    return v.reshape(-1, 120)


if __name__ == "__main__":
    key = jax.random.PRNGKey(0)
    k_param, k_x = jax.random.split(key)
    params = init_params(k_param)
    # batch=10 (not a multiple of TB=8) exercises the batch-padding path.
    x = jax.random.normal(k_x, (10, 1, 32, 32), jnp.float32)

    fwd = jax.jit(lenet_rep_forward)
    out = jax.block_until_ready(fwd(x, params))
    assert out.shape == (10, 120), out.shape

    ref = reference_forward(x, params)
    max_err = float(jnp.max(jnp.abs(out - ref)))
    assert max_err < 5e-2, f"mismatch vs reference: {max_err}"
    print("KERNEL_OK")
</pallas_src>

<mosaic_0001>
module attributes {stable_mosaic.version = 11 : i64} {
  func.func @_lenet_kernel(%arg0: i32, %arg1: memref<8x32x32xf32, #tpu.memory_space<vmem>>, %arg2: memref<5x32x168xbf16, #tpu.memory_space<vmem>>, %arg3: memref<162x84xbf16, #tpu.memory_space<vmem>>, %arg4: memref<14x27xbf16, #tpu.memory_space<vmem>>, %arg5: memref<5x84x160xbf16, #tpu.memory_space<vmem>>, %arg6: memref<144x80xbf16, #tpu.memory_space<vmem>>, %arg7: memref<5x9xbf16, #tpu.memory_space<vmem>>, %arg8: memref<5x80x128xbf16, #tpu.memory_space<vmem>>, %arg9: memref<3x168xf32, #tpu.memory_space<vmem>>, %arg10: memref<8x128xf32, #tpu.memory_space<vmem>>) attributes {dimension_semantics = [#tpu.dimension_semantics<parallel>], iteration_bounds = array<i64: 2>, scalar_prefetch = 0 : i64, scratch_operands = 0 : i64, tpu.core_type = #tpu.core_type<tc>, window_params = [{transform_indices = @transform_0, window_bounds = array<i64: 8, 32, 32>}, {pipeline_mode = #tpu.pipeline_mode<synchronous>, transform_indices = @transform_1, window_bounds = array<i64: 5, 32, 168>}, {pipeline_mode = #tpu.pipeline_mode<synchronous>, transform_indices = @transform_2, window_bounds = array<i64: 162, 84>}, {pipeline_mode = #tpu.pipeline_mode<synchronous>, transform_indices = @transform_3, window_bounds = array<i64: 14, 27>}, {pipeline_mode = #tpu.pipeline_mode<synchronous>, transform_indices = @transform_4, window_bounds = array<i64: 5, 84, 160>}, {pipeline_mode = #tpu.pipeline_mode<synchronous>, transform_indices = @transform_5, window_bounds = array<i64: 144, 80>}, {pipeline_mode = #tpu.pipeline_mode<synchronous>, transform_indices = @transform_6, window_bounds = array<i64: 5, 9>}, {pipeline_mode = #tpu.pipeline_mode<synchronous>, transform_indices = @transform_7, window_bounds = array<i64: 5, 80, 128>}, {pipeline_mode = #tpu.pipeline_mode<synchronous>, transform_indices = @transform_8, window_bounds = array<i64: 3, 168>}, {transform_indices = @transform_9, window_bounds = array<i64: 8, 128>}]} {
    %c0 = arith.constant 0 : index
    %c0_0 = arith.constant 0 : index
    %0 = vector.load %arg9[%c0, %c0_0] : memref<3x168xf32, #tpu.memory_space<vmem>>, vector<1x168xf32>
    %c1 = arith.constant 1 : index
    %c0_1 = arith.constant 0 : index
    %1 = vector.load %arg9[%c1, %c0_1] : memref<3x168xf32, #tpu.memory_space<vmem>>, vector<1x160xf32>
    %c2 = arith.constant 2 : index
    %c0_2 = arith.constant 0 : index
    %2 = vector.load %arg9[%c2, %c0_2] : memref<3x168xf32, #tpu.memory_space<vmem>>, vector<1x128xf32>
    %c0_3 = arith.constant 0 : index
    %c0_4 = arith.constant 0 : index
    %c0_5 = arith.constant 0 : index
    %3 = vector.load %arg1[%c0_3, %c0_4, %c0_5] : memref<8x32x32xf32, #tpu.memory_space<vmem>>, vector<1x28x32xf32>
    %4 = vector.shape_cast %3 : vector<1x28x32xf32> to vector<28x32xf32>
    %5 = arith.truncf %4 : vector<28x32xf32> to vector<28x32xbf16>
    %c0_6 = arith.constant 0 : index
    %c0_7 = arith.constant 0 : index
    %c0_8 = arith.constant 0 : index
    %6 = vector.load %arg2[%c0_6, %c0_7, %c0_8] : memref<5x32x168xbf16, #tpu.memory_space<vmem>>, vector<1x32x168xbf16>
    %7 = vector.shape_cast %6 : vector<1x32x168xbf16> to vector<32x168xbf16>
    %cst = arith.constant dense<0.000000e+00> : vector<28x168xf32>
    %8 = tpu.matmul %5, %7, %cst {dimension_numbers = #tpu.dot_dimension_numbers<[1], [0], [0], [1], [0, 0, 1, 1], [], []>} : vector<28x32xbf16>, vector<32x168xbf16>, vector<28x168xf32> -> vector<28x168xf32>
    %c0_9 = arith.constant 0 : index
    %c1_10 = arith.constant 1 : index
    %c0_11 = arith.constant 0 : index
    %9 = vector.load %arg1[%c0_9, %c1_10, %c0_11] : memref<8x32x32xf32, #tpu.memory_space<vmem>>, vector<1x28x32xf32>
    %10 = vector.shape_cast %9 : vector<1x28x32xf32> to vector<28x32xf32>
    %11 = arith.truncf %10 : vector<28x32xf32> to vector<28x32xbf16>
    %c1_12 = arith.constant 1 : index
    %c0_13 = arith.constant 0 : index
    %c0_14 = arith.constant 0 : index
    %12 = vector.load %arg2[%c1_12, %c0_13, %c0_14] : memref<5x32x168xbf16, #tpu.memory_space<vmem>>, vector<1x32x168xbf16>
    %13 = vector.shape_cast %12 : vector<1x32x168xbf16> to vector<32x168xbf16>
    %cst_15 = arith.constant dense<0.000000e+00> : vector<28x168xf32>
    %14 = tpu.matmul %11, %13, %cst_15 {dimension_numbers = #tpu.dot_dimension_numbers<[1], [0], [0], [1], [0, 0, 1, 1], [], []>} : vector<28x32xbf16>, vector<32x168xbf16>, vector<28x168xf32> -> vector<28x168xf32>
    %15 = arith.addf %8, %14 : vector<28x168xf32>
    %c0_16 = arith.constant 0 : index
    %c2_17 = arith.constant 2 : index
    %c0_18 = arith.constant 0 : index
    %16 = vector.load %arg1[%c0_16, %c2_17, %c0_18] : memref<8x32x32xf32, #tpu.memory_space<vmem>>, vector<1x28x32xf32>
    %17 = vector.shape_cast %16 : vector<1x28x32xf32> to vector<28x32xf32>
    %18 = arith.truncf %17 : vector<28x32xf32> to vector<28x32xbf16>
    %c2_19 = arith.constant 2 : index
    %c0_20 = arith.constant 0 : index
    %c0_21 = arith.constant 0 : index
    %19 = vector.load %arg2[%c2_19, %c0_20, %c0_21] : memref<5x32x168xbf16, #tpu.memory_space<vmem>>, vector<1x32x168xbf16>
    %20 = vector.shape_cast %19 : vector<1x32x168xbf16> to vector<32x168xbf16>
    %cst_22 = arith.constant dense<0.000000e+00> : vector<28x168xf32>
    %21 = tpu.matmul %18, %20, %cst_22 {dimension_numbers = #tpu.dot_dimension_numbers<[1], [0], [0], [1], [0, 0, 1, 1], [], []>} : vector<28x32xbf16>, vector<32x168xbf16>, vector<28x168xf32> -> vector<28x168xf32>
    %22 = arith.addf %15, %21 : vector<28x168xf32>
    %c0_23 = arith.constant 0 : index
    %c3 = arith.constant 3 : index
    %c0_24 = arith.constant 0 : index
    %23 = vector.load %arg1[%c0_23, %c3, %c0_24] : memref<8x32x32xf32, #tpu.memory_space<vmem>>, vector<1x28x32xf32>
    %24 = vector.shape_cast %23 : vector<1x28x32xf32> to vector<28x32xf32>
    %25 = arith.truncf %24 : vector<28x32xf32> to vector<28x32xbf16>
    %c3_25 = arith.constant 3 : index
    %c0_26 = arith.constant 0 : index
    %c0_27 = arith.constant 0 : index
    %26 = vector.load %arg2[%c3_25, %c0_26, %c0_27] : memref<5x32x168xbf16, #tpu.memory_space<vmem>>, vector<1x32x168xbf16>
    %27 = vector.shape_cast %26 : vector<1x32x168xbf16> to vector<32x168xbf16>
    %cst_28 = arith.constant dense<0.000000e+00> : vector<28x168xf32>
    %28 = tpu.matmul %25, %27, %cst_28 {dimension_numbers = #tpu.dot_dimension_numbers<[1], [0], [0], [1], [0, 0, 1, 1], [], []>} : vector<28x32xbf16>, vector<32x168xbf16>, vector<28x168xf32> -> vector<28x168xf32>
    %29 = arith.addf %22, %28 : vector<28x168xf32>
    %c0_29 = arith.constant 0 : index
    %c4 = arith.constant 4 : index
    %c0_30 = arith.constant 0 : index
    %30 = vector.load %arg1[%c0_29, %c4, %c0_30] : memref<8x32x32xf32, #tpu.memory_space<vmem>>, vector<1x28x32xf32>
    %31 = vector.shape_cast %30 : vector<1x28x32xf32> to vector<28x32xf32>
    %32 = arith.truncf %31 : vector<28x32xf32> to vector<28x32xbf16>
    %c4_31 = arith.constant 4 : index
    %c0_32 = arith.constant 0 : index
    %c0_33 = arith.constant 0 : index
    %33 = vector.load %arg2[%c4_31, %c0_32, %c0_33] : memref<5x32x168xbf16, #tpu.memory_space<vmem>>, vector<1x32x168xbf16>
    %34 = vector.shape_cast %33 : vector<1x32x168xbf16> to vector<32x168xbf16>
    %cst_34 = arith.constant dense<0.000000e+00> : vector<28x168xf32>
    %35 = tpu.matmul %32, %34, %cst_34 {dimension_numbers = #tpu.dot_dimension_numbers<[1], [0], [0], [1], [0, 0, 1, 1], [], []>} : vector<28x32xbf16>, vector<32x168xbf16>, vector<28x168xf32> -> vector<28x168xf32>
    %36 = arith.addf %29, %35 : vector<28x168xf32>
    %37 = vector.broadcast %0 : vector<1x168xf32> to vector<28x168xf32>
    %38 = arith.addf %36, %37 : vector<28x168xf32>
    %cst_35 = arith.constant 0.000000e+00 : f32
    %39 = vector.broadcast %cst_35 : f32 to vector<28x168xf32>
    %40 = arith.cmpf oge, %38, %39 : vector<28x168xf32>
    %cst_36 = arith.constant 0.00999999977 : f32
    %41 = vector.broadcast %cst_36 : f32 to vector<28x168xf32>
    %42 = arith.mulf %41, %38 : vector<28x168xf32>
    %43 = arith.select %40, %38, %42 : vector<28x168xi1>, vector<28x168xf32>
    %44 = vector.extract_strided_slice %43 {offsets = [0, 0], sizes = [28, 162], strides = [1, 1]} : vector<28x168xf32> to vector<28x162xf32>
    %45 = vector.extract_strided_slice %43 {offsets = [0, 6], sizes = [28, 162], strides = [1, 1]} : vector<28x168xf32> to vector<28x162xf32>
    %46 = arith.maximumf %44, %45 : vector<28x162xf32>
    %47 = arith.truncf %46 : vector<28x162xf32> to vector<28x162xbf16>
    %c0_37 = arith.constant 0 : index
    %c0_38 = arith.constant 0 : index
    %48 = vector.load %arg3[%c0_37, %c0_38] : memref<162x84xbf16, #tpu.memory_space<vmem>>, vector<162x84xbf16>
    %cst_39 = arith.constant dense<0.000000e+00> : vector<28x84xf32>
    %49 = tpu.matmul %47, %48, %cst_39 {dimension_numbers = #tpu.dot_dimension_numbers<[1], [0], [0], [1], [0, 0, 1, 1], [], []>} : vector<28x162xbf16>, vector<162x84xbf16>, vector<28x84xf32> -> vector<28x84xf32>
    %50 = vector.extract_strided_slice %49 {offsets = [0, 0], sizes = [27, 84], strides = [1, 1]} : vector<28x84xf32> to vector<27x84xf32>
    %51 = vector.extract_strided_slice %49 {offsets = [1, 0], sizes = [27, 84], strides = [1, 1]} : vector<28x84xf32> to vector<27x84xf32>
    %52 = arith.maximumf %50, %51 : vector<27x84xf32>
    %c0_40 = arith.constant 0 : index
    %c0_41 = arith.constant 0 : index
    %53 = vector.load %arg4[%c0_40, %c0_41] : memref<14x27xbf16, #tpu.memory_space<vmem>>, vector<14x27xbf16>
    %54 = arith.truncf %52 : vector<27x84xf32> to vector<27x84xbf16>
    %cst_42 = arith.constant dense<0.000000e+00> : vector<14x84xf32>
    %55 = tpu.matmul %53, %54, %cst_42 {dimension_numbers = #tpu.dot_dimension_numbers<[1], [0], [0], [1], [0, 0, 1, 1], [], []>} : vector<14x27xbf16>, vector<27x84xbf16>, vector<14x84xf32> -> vector<14x84xf32>
    %56 = vector.extract_strided_slice %55 {offsets = [0, 0], sizes = [10, 84], strides = [1, 1]} : vector<14x84xf32> to vector<10x84xf32>
    %57 = arith.truncf %56 : vector<10x84xf32> to vector<10x84xbf16>
    %c0_43 = arith.constant 0 : index
    %c0_44 = arith.constant 0 : index
    %c0_45 = arith.constant 0 : index
    %58 = vector.load %arg5[%c0_43, %c0_44, %c0_45] : memref<5x84x160xbf16, #tpu.memory_space<vmem>>, vector<1x84x160xbf16>
    %59 = vector.shape_cast %58 : vector<1x84x160xbf16> to vector<84x160xbf16>
    %cst_46 = arith.constant dense<0.000000e+00> : vector<10x160xf32>
    %60 = tpu.matmul %57, %59, %cst_46 {dimension_numbers = #tpu.dot_dimension_numbers<[1], [0], [0], [1], [0, 0, 1, 1], [], []>} : vector<10x84xbf16>, vector<84x160xbf16>, vector<10x160xf32> -> vector<10x160xf32>
    %61 = vector.extract_strided_slice %55 {offsets = [1, 0], sizes = [10, 84], strides = [1, 1]} : vector<14x84xf32> to vector<10x84xf32>
    %62 = arith.truncf %61 : vector<10x84xf32> to vector<10x84xbf16>
    %c1_47 = arith.constant 1 : index
    %c0_48 = arith.constant 0 : index
    %c0_49 = arith.constant 0 : index
    %63 = vector.load %arg5[%c1_47, %c0_48, %c0_49] : memref<5x84x160xbf16, #tpu.memory_space<vmem>>, vector<1x84x160xbf16>
    %64 = vector.shape_cast %63 : vector<1x84x160xbf16> to vector<84x160xbf16>
    %cst_50 = arith.constant dense<0.000000e+00> : vector<10x160xf32>
    %65 = tpu.matmul %62, %64, %cst_50 {dimension_numbers = #tpu.dot_dimension_numbers<[1], [0], [0], [1], [0, 0, 1, 1], [], []>} : vector<10x84xbf16>, vector<84x160xbf16>, vector<10x160xf32> -> vector<10x160xf32>
    %66 = arith.addf %60, %65 : vector<10x160xf32>
    %67 = vector.extract_strided_slice %55 {offsets = [2, 0], sizes = [10, 84], strides = [1, 1]} : vector<14x84xf32> to vector<10x84xf32>
    %68 = arith.truncf %67 : vector<10x84xf32> to vector<10x84xbf16>
    %c2_51 = arith.constant 2 : index
    %c0_52 = arith.constant 0 : index
    %c0_53 = arith.constant 0 : index
    %69 = vector.load %arg5[%c2_51, %c0_52, %c0_53] : memref<5x84x160xbf16, #tpu.memory_space<vmem>>, vector<1x84x160xbf16>
    %70 = vector.shape_cast %69 : vector<1x84x160xbf16> to vector<84x160xbf16>
    %cst_54 = arith.constant dense<0.000000e+00> : vector<10x160xf32>
    %71 = tpu.matmul %68, %70, %cst_54 {dimension_numbers = #tpu.dot_dimension_numbers<[1], [0], [0], [1], [0, 0, 1, 1], [], []>} : vector<10x84xbf16>, vector<84x160xbf16>, vector<10x160xf32> -> vector<10x160xf32>
    %72 = arith.addf %66, %71 : vector<10x160xf32>
    %73 = vector.extract_strided_slice %55 {offsets = [3, 0], sizes = [10, 84], strides = [1, 1]} : vector<14x84xf32> to vector<10x84xf32>
    %74 = arith.truncf %73 : vector<10x84xf32> to vector<10x84xbf16>
    %c3_55 = arith.constant 3 : index
    %c0_56 = arith.constant 0 : index
    %c0_57 = arith.constant 0 : index
    %75 = vector.load %arg5[%c3_55, %c0_56, %c0_57] : memref<5x84x160xbf16, #tpu.memory_space<vmem>>, vector<1x84x160xbf16>
    %76 = vector.shape_cast %75 : vector<1x84x160xbf16> to vector<84x160xbf16>
    %cst_58 = arith.constant dense<0.000000e+00> : vector<10x160xf32>
    %77 = tpu.matmul %74, %76, %cst_58 {dimension_numbers = #tpu.dot_dimension_numbers<[1], [0], [0], [1], [0, 0, 1, 1], [], []>} : vector<10x84xbf16>, vector<84x160xbf16>, vector<10x160xf32> -> vector<10x160xf32>
    %78 = arith.addf %72, %77 : vector<10x160xf32>
    %79 = vector.extract_strided_slice %55 {offsets = [4, 0], sizes = [10, 84], strides = [1, 1]} : vector<14x84xf32> to vector<10x84xf32>
    %80 = arith.truncf %79 : vector<10x84xf32> to vector<10x84xbf16>
    %c4_59 = arith.constant 4 : index
    %c0_60 = arith.constant 0 : index
    %c0_61 = arith.constant 0 : index
    %81 = vector.load %arg5[%c4_59, %c0_60, %c0_61] : memref<5x84x160xbf16, #tpu.memory_space<vmem>>, vector<1x84x160xbf16>
    %82 = vector.shape_cast %81 : vector<1x84x160xbf16> to vector<84x160xbf16>
    %cst_62 = arith.constant dense<0.000000e+00> : vector<10x160xf32>
    %83 = tpu.matmul %80, %82, %cst_62 {dimension_numbers = #tpu.dot_dimension_numbers<[1], [0], [0], [1], [0, 0, 1, 1], [], []>} : vector<10x84xbf16>, vector<84x160xbf16>, vector<10x160xf32> -> vector<10x160xf32>
    %84 = arith.addf %78, %83 : vector<10x160xf32>
    %85 = vector.broadcast %1 : vector<1x160xf32> to vector<10x160xf32>
    %86 = arith.addf %84, %85 : vector<10x160xf32>
    %cst_63 = arith.constant 0.000000e+00 : f32
    %87 = vector.broadcast %cst_63 : f32 to vector<10x160xf32>
    %88 = arith.cmpf oge, %86, %87 : vector<10x160xf32>
    %cst_64 = arith.constant 0.00999999977 : f32
    %89 = vector.broadcast %cst_64 : f32 to vector<10x160xf32>
    %90 = arith.mulf %89, %86 : vector<10x160xf32>
    %91 = arith.select %88, %86, %90 : vector<10x160xi1>, vector<10x160xf32>
    %92 = vector.extract_strided_slice %91 {offsets = [0, 0], sizes = [10, 144], strides = [1, 1]} : vector<10x160xf32> to vector<10x144xf32>
    %93 = vector.extract_strided_slice %91 {offsets = [0, 16], sizes = [10, 144], strides = [1, 1]} : vector<10x160xf32> to vector<10x144xf32>
    %94 = arith.maximumf %92, %93 : vector<10x144xf32>
    %95 = arith.truncf %94 : vector<10x144xf32> to vector<10x144xbf16>
    %c0_65 = arith.constant 0 : index
    %c0_66 = arith.constant 0 : index
    %96 = vector.load %arg6[%c0_65, %c0_66] : memref<144x80xbf16, #tpu.memory_space<vmem>>, vector<144x80xbf16>
    %cst_67 = arith.constant dense<0.000000e+00> : vector<10x80xf32>
    %97 = tpu.matmul %95, %96, %cst_67 {dimension_numbers = #tpu.dot_dimension_numbers<[1], [0], [0], [1], [0, 0, 1, 1], [], []>} : vector<10x144xbf16>, vector<144x80xbf16>, vector<10x80xf32> -> vector<10x80xf32>
    %98 = vector.extract_strided_slice %97 {offsets = [0, 0], sizes = [9, 80], strides = [1, 1]} : vector<10x80xf32> to vector<9x80xf32>
    %99 = vector.extract_strided_slice %97 {offsets = [1, 0], sizes = [9, 80], strides = [1, 1]} : vector<10x80xf32> to vector<9x80xf32>
    %100 = arith.maximumf %98, %99 : vector<9x80xf32>
    %c0_68 = arith.constant 0 : index
    %c0_69 = arith.constant 0 : index
    %101 = vector.load %arg7[%c0_68, %c0_69] : memref<5x9xbf16, #tpu.memory_space<vmem>>, vector<5x9xbf16>
    %102 = arith.truncf %100 : vector<9x80xf32> to vector<9x80xbf16>
    %cst_70 = arith.constant dense<0.000000e+00> : vector<5x80xf32>
    %103 = tpu.matmul %101, %102, %cst_70 {dimension_numbers = #tpu.dot_dimension_numbers<[1], [0], [0], [1], [0, 0, 1, 1], [], []>} : vector<5x9xbf16>, vector<9x80xbf16>, vector<5x80xf32> -> vector<5x80xf32>
    %c1_71 = arith.constant 1 : index
    %c0_72 = arith.constant 0 : index
    %c0_73 = arith.constant 0 : index
    %104 = vector.load %arg1[%c1_71, %c0_72, %c0_73] : memref<8x32x32xf32, #tpu.memory_space<vmem>>, vector<1x28x32xf32>
    %105 = vector.shape_cast %104 : vector<1x28x32xf32> to vector<28x32xf32>
    %106 = arith.truncf %105 : vector<28x32xf32> to vector<28x32xbf16>
    %c0_74 = arith.constant 0 : index
    %c0_75 = arith.constant 0 : index
    %c0_76 = arith.constant 0 : index
    %107 = vector.load %arg2[%c0_74, %c0_75, %c0_76] : memref<5x32x168xbf16, #tpu.memory_space<vmem>>, vector<1x32x168xbf16>
    %108 = vector.shape_cast %107 : vector<1x32x168xbf16> to vector<32x168xbf16>
    %cst_77 = arith.constant dense<0.000000e+00> : vector<28x168xf32>
    %109 = tpu.matmul %106, %108, %cst_77 {dimension_numbers = #tpu.dot_dimension_numbers<[1], [0], [0], [1], [0, 0, 1, 1], [], []>} : vector<28x32xbf16>, vector<32x168xbf16>, vector<28x168xf32> -> vector<28x168xf32>
    %c1_78 = arith.constant 1 : index
    %c1_79 = arith.constant 1 : index
    %c0_80 = arith.constant 0 : index
    %110 = vector.load %arg1[%c1_78, %c1_79, %c0_80] : memref<8x32x32xf32, #tpu.memory_space<vmem>>, vector<1x28x32xf32>
    %111 = vector.shape_cast %110 : vector<1x28x32xf32> to vector<28x32xf32>
    %112 = arith.truncf %111 : vector<28x32xf32> to vector<28x32xbf16>
    %c1_81 = arith.constant 1 : index
    %c0_82 = arith.constant 0 : index
    %c0_83 = arith.constant 0 : index
    %113 = vector.load %arg2[%c1_81, %c0_82, %c0_83] : memref<5x32x168xbf16, #tpu.memory_space<vmem>>, vector<1x32x168xbf16>
    %114 = vector.shape_cast %113 : vector<1x32x168xbf16> to vector<32x168xbf16>
    %cst_84 = arith.constant dense<0.000000e+00> : vector<28x168xf32>
    %115 = tpu.matmul %112, %114, %cst_84 {dimension_numbers = #tpu.dot_dimension_numbers<[1], [0], [0], [1], [0, 0, 1, 1], [], []>} : vector<28x32xbf16>, vector<32x168xbf16>, vector<28x168xf32> -> vector<28x168xf32>
    %116 = arith.addf %109, %115 : vector<28x168xf32>
    %c1_85 = arith.constant 1 : index
    %c2_86 = arith.constant 2 : index
    %c0_87 = arith.constant 0 : index
    %117 = vector.load %arg1[%c1_85, %c2_86, %c0_87] : memref<8x32x32xf32, #tpu.memory_space<vmem>>, vector<1x28x32xf32>
    %118 = vector.shape_cast %117 : vector<1x28x32xf32> to vector<28x32xf32>
    %119 = arith.truncf %118 : vector<28x32xf32> to vector<28x32xbf16>
    %c2_88 = arith.constant 2 : index
    %c0_89 = arith.constant 0 : index
    %c0_90 = arith.constant 0 : index
    %120 = vector.load %arg2[%c2_88, %c0_89, %c0_90] : memref<5x32x168xbf16, #tpu.memory_space<vmem>>, vector<1x32x168xbf16>
    %121 = vector.shape_cast %120 : vector<1x32x168xbf16> to vector<32x168xbf16>
    %cst_91 = arith.constant dense<0.000000e+00> : vector<28x168xf32>
    %122 = tpu.matmul %119, %121, %cst_91 {dimension_numbers = #tpu.dot_dimension_numbers<[1], [0], [0], [1], [0, 0, 1, 1], [], []>} : vector<28x32xbf16>, vector<32x168xbf16>, vector<28x168xf32> -> vector<28x168xf32>
    %123 = arith.addf %116, %122 : vector<28x168xf32>
    %c1_92 = arith.constant 1 : index
    %c3_93 = arith.constant 3 : index
    %c0_94 = arith.constant 0 : index
    %124 = vector.load %arg1[%c1_92, %c3_93, %c0_94] : memref<8x32x32xf32, #tpu.memory_space<vmem>>, vector<1x28x32xf32>
    %125 = vector.shape_cast %124 : vector<1x28x32xf32> to vector<28x32xf32>
    %126 = arith.truncf %125 : vector<28x32xf32> to vector<28x32xbf16>
    %c3_95 = arith.constant 3 : index
    %c0_96 = arith.constant 0 : index
    %c0_97 = arith.constant 0 : index
    %127 = vector.load %arg2[%c3_95, %c0_96, %c0_97] : memref<5x32x168xbf16, #tpu.memory_space<vmem>>, vector<1x32x168xbf16>
    %128 = vector.shape_cast %127 : vector<1x32x168xbf16> to vector<32x168xbf16>
    %cst_98 = arith.constant dense<0.000000e+00> : vector<28x168xf32>
    %129 = tpu.matmul %126, %128, %cst_98 {dimension_numbers = #tpu.dot_dimension_numbers<[1], [0], [0], [1], [0, 0, 1, 1], [], []>} : vector<28x32xbf16>, vector<32x168xbf16>, vector<28x168xf32> -> vector<28x168xf32>
    %130 = arith.addf %123, %129 : vector<28x168xf32>
    %c1_99 = arith.constant 1 : index
    %c4_100 = arith.constant 4 : index
    %c0_101 = arith.constant 0 : index
    %131 = vector.load %arg1[%c1_99, %c4_100, %c0_101] : memref<8x32x32xf32, #tpu.memory_space<vmem>>, vector<1x28x32xf32>
    %132 = vector.shape_cast %131 : vector<1x28x32xf32> to vector<28x32xf32>
    %133 = arith.truncf %132 : vector<28x32xf32> to vector<28x32xbf16>
    %c4_102 = arith.constant 4 : index
    %c0_103 = arith.constant 0 : index
    %c0_104 = arith.constant 0 : index
    %134 = vector.load %arg2[%c4_102, %c0_103, %c0_104] : memref<5x32x168xbf16, #tpu.memory_space<vmem>>, vector<1x32x168xbf16>
    %135 = vector.shape_cast %134 : vector<1x32x168xbf16> to vector<32x168xbf16>
    %cst_105 = arith.constant dense<0.000000e+00> : vector<28x168xf32>
    %136 = tpu.matmul %133, %135, %cst_105 {dimension_numbers = #tpu.dot_dimension_numbers<[1], [0], [0], [1], [0, 0, 1, 1], [], []>} : vector<28x32xbf16>, vector<32x168xbf16>, vector<28x168xf32> -> vector<28x168xf32>
    %137 = arith.addf %130, %136 : vector<28x168xf32>
    %138 = vector.broadcast %0 : vector<1x168xf32> to vector<28x168xf32>
    %139 = arith.addf %137, %138 : vector<28x168xf32>
    %cst_106 = arith.constant 0.000000e+00 : f32
    %140 = vector.broadcast %cst_106 : f32 to vector<28x168xf32>
    %141 = arith.cmpf oge, %139, %140 : vector<28x168xf32>
    %cst_107 = arith.constant 0.00999999977 : f32
    %142 = vector.broadcast %cst_107 : f32 to vector<28x168xf32>
    %143 = arith.mulf %142, %139 : vector<28x168xf32>
    %144 = arith.select %141, %139, %143 : vector<28x168xi1>, vector<28x168xf32>
    %145 = vector.extract_strided_slice %144 {offsets = [0, 0], sizes = [28, 162], strides = [1, 1]} : vector<28x168xf32> to vector<28x162xf32>
    %146 = vector.extract_strided_slice %144 {offsets = [0, 6], sizes = [28, 162], strides = [1, 1]} : vector<28x168xf32> to vector<28x162xf32>
    %147 = arith.maximumf %145, %146 : vector<28x162xf32>
    %148 = arith.truncf %147 : vector<28x162xf32> to vector<28x162xbf16>
    %c0_108 = arith.constant 0 : index
    %c0_109 = arith.constant 0 : index
    %149 = vector.load %arg3[%c0_108, %c0_109] : memref<162x84xbf16, #tpu.memory_space<vmem>>, vector<162x84xbf16>
    %cst_110 = arith.constant dense<0.000000e+00> : vector<28x84xf32>
    %150 = tpu.matmul %148, %149, %cst_110 {dimension_numbers = #tpu.dot_dimension_numbers<[1], [0], [0], [1], [0, 0, 1, 1], [], []>} : vector<28x162xbf16>, vector<162x84xbf16>, vector<28x84xf32> -> vector<28x84xf32>
    %151 = vector.extract_strided_slice %150 {offsets = [0, 0], sizes = [27, 84], strides = [1, 1]} : vector<28x84xf32> to vector<27x84xf32>
    %152 = vector.extract_strided_slice %150 {offsets = [1, 0], sizes = [27, 84], strides = [1, 1]} : vector<28x84xf32> to vector<27x84xf32>
    %153 = arith.maximumf %151, %152 : vector<27x84xf32>
    %c0_111 = arith.constant 0 : index
    %c0_112 = arith.constant 0 : index
    %154 = vector.load %arg4[%c0_111, %c0_112] : memref<14x27xbf16, #tpu.memory_space<vmem>>, vector<14x27xbf16>
    %155 = arith.truncf %153 : vector<27x84xf32> to vector<27x84xbf16>
    %cst_113 = arith.constant dense<0.000000e+00> : vector<14x84xf32>
    %156 = tpu.matmul %154, %155, %cst_113 {dimension_numbers = #tpu.dot_dimension_numbers<[1], [0], [0], [1], [0, 0, 1, 1], [], []>} : vector<14x27xbf16>, vector<27x84xbf16>, vector<14x84xf32> -> vector<14x84xf32>
    %157 = vector.extract_strided_slice %156 {offsets = [0, 0], sizes = [10, 84], strides = [1, 1]} : vector<14x84xf32> to vector<10x84xf32>
    %158 = arith.truncf %157 : vector<10x84xf32> to vector<10x84xbf16>
    %c0_114 = arith.constant 0 : index
    %c0_115 = arith.constant 0 : index
    %c0_116 = arith.constant 0 : index
    %159 = vector.load %arg5[%c0_114, %c0_115, %c0_116] : memref<5x84x160xbf16, #tpu.memory_space<vmem>>, vector<1x84x160xbf16>
    %160 = vector.shape_cast %159 : vector<1x84x160xbf16> to vector<84x160xbf16>
    %cst_117 = arith.constant dense<0.000000e+00> : vector<10x160xf32>
    %161 = tpu.matmul %158, %160, %cst_117 {dimension_numbers = #tpu.dot_dimension_numbers<[1], [0], [0], [1], [0, 0, 1, 1], [], []>} : vector<10x84xbf16>, vector<84x160xbf16>, vector<10x160xf32> -> vector<10x160xf32>
    %162 = vector.extract_strided_slice %156 {offsets = [1, 0], sizes = [10, 84], strides = [1, 1]} : vector<14x84xf32> to vector<10x84xf32>
    %163 = arith.truncf %162 : vector<10x84xf32> to vector<10x84xbf16>
    %c1_118 = arith.constant 1 : index
    %c0_119 = arith.constant 0 : index
    %c0_120 = arith.constant 0 : index
    %164 = vector.load %arg5[%c1_118, %c0_119, %c0_120] : memref<5x84x160xbf16, #tpu.memory_space<vmem>>, vector<1x84x160xbf16>
    %165 = vector.shape_cast %164 : vector<1x84x160xbf16> to vector<84x160xbf16>
    %cst_121 = arith.constant dense<0.000000e+00> : vector<10x160xf32>
    %166 = tpu.matmul %163, %165, %cst_121 {dimension_numbers = #tpu.dot_dimension_numbers<[1], [0], [0], [1], [0, 0, 1, 1], [], []>} : vector<10x84xbf16>, vector<84x160xbf16>, vector<10x160xf32> -> vector<10x160xf32>
    %167 = arith.addf %161, %166 : vector<10x160xf32>
    %168 = vector.extract_strided_slice %156 {offsets = [2, 0], sizes = [10, 84], strides = [1, 1]} : vector<14x84xf32> to vector<10x84xf32>
    %169 = arith.truncf %168 : vector<10x84xf32> to vector<10x84xbf16>
    %c2_122 = arith.constant 2 : index
    %c0_123 = arith.constant 0 : index
    %c0_124 = arith.constant 0 : index
    %170 = vector.load %arg5[%c2_122, %c0_123, %c0_124] : memref<5x84x160xbf16, #tpu.memory_space<vmem>>, vector<1x84x160xbf16>
    %171 = vector.shape_cast %170 : vector<1x84x160xbf16> to vector<84x160xbf16>
    %cst_125 = arith.constant dense<0.000000e+00> : vector<10x160xf32>
    %172 = tpu.matmul %169, %171, %cst_125 {dimension_numbers = #tpu.dot_dimension_numbers<[1], [0], [0], [1], [0, 0, 1, 1], [], []>} : vector<10x84xbf16>, vector<84x160xbf16>, vector<10x160xf32> -> vector<10x160xf32>
    %173 = arith.addf %167, %172 : vector<10x160xf32>
    %174 = vector.extract_strided_slice %156 {offsets = [3, 0], sizes = [10, 84], strides = [1, 1]} : vector<14x84xf32> to vector<10x84xf32>
    %175 = arith.truncf %174 : vector<10x84xf32> to vector<10x84xbf16>
    %c3_126 = arith.constant 3 : index
    %c0_127 = arith.constant 0 : index
    %c0_128 = arith.constant 0 : index
    %176 = vector.load %arg5[%c3_126, %c0_127, %c0_128] : memref<5x84x160xbf16, #tpu.memory_space<vmem>>, vector<1x84x160xbf16>
    %177 = vector.shape_cast %176 : vector<1x84x160xbf16> to vector<84x160xbf16>
    %cst_129 = arith.constant dense<0.000000e+00> : vector<10x160xf32>
    %178 = tpu.matmul %175, %177, %cst_129 {dimension_numbers = #tpu.dot_dimension_numbers<[1], [0], [0], [1], [0, 0, 1, 1], [], []>} : vector<10x84xbf16>, vector<84x160xbf16>, vector<10x160xf32> -> vector<10x160xf32>
    %179 = arith.addf %173, %178 : vector<10x160xf32>
    %180 = vector.extract_strided_slice %156 {offsets = [4, 0], sizes = [10, 84], strides = [1, 1]} : vector<14x84xf32> to vector<10x84xf32>
    %181 = arith.truncf %180 : vector<10x84xf32> to vector<10x84xbf16>
    %c4_130 = arith.constant 4 : index
    %c0_131 = arith.constant 0 : index
    %c0_132 = arith.constant 0 : index
    %182 = vector.load %arg5[%c4_130, %c0_131, %c0_132] : memref<5x84x160xbf16, #tpu.memory_space<vmem>>, vector<1x84x160xbf16>
    %183 = vector.shape_cast %182 : vector<1x84x160xbf16> to vector<84x160xbf16>
    %cst_133 = arith.constant dense<0.000000e+00> : vector<10x160xf32>
    %184 = tpu.matmul %181, %183, %cst_133 {dimension_numbers = #tpu.dot_dimension_numbers<[1], [0], [0], [1], [0, 0, 1, 1], [], []>} : vector<10x84xbf16>, vector<84x160xbf16>, vector<10x160xf32> -> vector<10x160xf32>
    %185 = arith.addf %179, %184 : vector<10x160xf32>
    %186 = vector.broadcast %1 : vector<1x160xf32> to vector<10x160xf32>
    %187 = arith.addf %185, %186 : vector<10x160xf32>
    %cst_134 = arith.constant 0.000000e+00 : f32
    %188 = vector.broadcast %cst_134 : f32 to vector<10x160xf32>
    %189 = arith.cmpf oge, %187, %188 : vector<10x160xf32>
    %cst_135 = arith.constant 0.00999999977 : f32
    %190 = vector.broadcast %cst_135 : f32 to vector<10x160xf32>
    %191 = arith.mulf %190, %187 : vector<10x160xf32>
    %192 = arith.select %189, %187, %191 : vector<10x160xi1>, vector<10x160xf32>
    %193 = vector.extract_strided_slice %192 {offsets = [0, 0], sizes = [10, 144], strides = [1, 1]} : vector<10x160xf32> to vector<10x144xf32>
    %194 = vector.extract_strided_slice %192 {offsets = [0, 16], sizes = [10, 144], strides = [1, 1]} : vector<10x160xf32> to vector<10x144xf32>
    %195 = arith.maximumf %193, %194 : vector<10x144xf32>
    %196 = arith.truncf %195 : vector<10x144xf32> to vector<10x144xbf16>
    %c0_136 = arith.constant 0 : index
    %c0_137 = arith.constant 0 : index
    %197 = vector.load %arg6[%c0_136, %c0_137] : memref<144x80xbf16, #tpu.memory_space<vmem>>, vector<144x80xbf16>
    %cst_138 = arith.constant dense<0.000000e+00> : vector<10x80xf32>
    %198 = tpu.matmul %196, %197, %cst_138 {dimension_numbers = #tpu.dot_dimension_numbers<[1], [0], [0], [1], [0, 0, 1, 1], [], []>} : vector<10x144xbf16>, vector<144x80xbf16>, vector<10x80xf32> -> vector<10x80xf32>
    %199 = vector.extract_strided_slice %198 {offsets = [0, 0], sizes = [9, 80], strides = [1, 1]} : vector<10x80xf32> to vector<9x80xf32>
    %200 = vector.extract_strided_slice %198 {offsets = [1, 0], sizes = [9, 80], strides = [1, 1]} : vector<10x80xf32> to vector<9x80xf32>
    %201 = arith.maximumf %199, %200 : vector<9x80xf32>
    %c0_139 = arith.constant 0 : index
    %c0_140 = arith.constant 0 : index
    %202 = vector.load %arg7[%c0_139, %c0_140] : memref<5x9xbf16, #tpu.memory_space<vmem>>, vector<5x9xbf16>
    %203 = arith.truncf %201 : vector<9x80xf32> to vector<9x80xbf16>
    %cst_141 = arith.constant dense<0.000000e+00> : vector<5x80xf32>
    %204 = tpu.matmul %202, %203, %cst_141 {dimension_numbers = #tpu.dot_dimension_numbers<[1], [0], [0], [1], [0, 0, 1, 1], [], []>} : vector<5x9xbf16>, vector<9x80xbf16>, vector<5x80xf32> -> vector<5x80xf32>
    %c2_142 = arith.constant 2 : index
    %c0_143 = arith.constant 0 : index
    %c0_144 = arith.constant 0 : index
    %205 = vector.load %arg1[%c2_142, %c0_143, %c0_144] : memref<8x32x32xf32, #tpu.memory_space<vmem>>, vector<1x28x32xf32>
    %206 = vector.shape_cast %205 : vector<1x28x32xf32> to vector<28x32xf32>
    %207 = arith.truncf %206 : vector<28x32xf32> to vector<28x32xbf16>
    %c0_145 = arith.constant 0 : index
    %c0_146 = arith.constant 0 : index
    %c0_147 = arith.constant 0 : index
    %208 = vector.load %arg2[%c0_145, %c0_146, %c0_147] : memref<5x32x168xbf16, #tpu.memory_space<vmem>>, vector<1x32x168xbf16>
    %209 = vector.shape_cast %208 : vector<1x32x168xbf16> to vector<32x168xbf16>
    %cst_148 = arith.constant dense<0.000000e+00> : vector<28x168xf32>
    %210 = tpu.matmul %207, %209, %cst_148 {dimension_numbers = #tpu.dot_dimension_numbers<[1], [0], [0], [1], [0, 0, 1, 1], [], []>} : vector<28x32xbf16>, vector<32x168xbf16>, vector<28x168xf32> -> vector<28x168xf32>
    %c2_149 = arith.constant 2 : index
    %c1_150 = arith.constant 1 : index
    %c0_151 = arith.constant 0 : index
    %211 = vector.load %arg1[%c2_149, %c1_150, %c0_151] : memref<8x32x32xf32, #tpu.memory_space<vmem>>, vector<1x28x32xf32>
    %212 = vector.shape_cast %211 : vector<1x28x32xf32> to vector<28x32xf32>
    %213 = arith.truncf %212 : vector<28x32xf32> to vector<28x32xbf16>
    %c1_152 = arith.constant 1 : index
    %c0_153 = arith.constant 0 : index
    %c0_154 = arith.constant 0 : index
    %214 = vector.load %arg2[%c1_152, %c0_153, %c0_154] : memref<5x32x168xbf16, #tpu.memory_space<vmem>>, vector<1x32x168xbf16>
    %215 = vector.shape_cast %214 : vector<1x32x168xbf16> to vector<32x168xbf16>
    %cst_155 = arith.constant dense<0.000000e+00> : vector<28x168xf32>
    %216 = tpu.matmul %213, %215, %cst_155 {dimension_numbers = #tpu.dot_dimension_numbers<[1], [0], [0], [1], [0, 0, 1, 1], [], []>} : vector<28x32xbf16>, vector<32x168xbf16>, vector<28x168xf32> -> vector<28x168xf32>
    %217 = arith.addf %210, %216 : vector<28x168xf32>
    %c2_156 = arith.constant 2 : index
    %c2_157 = arith.constant 2 : index
    %c0_158 = arith.constant 0 : index
    %218 = vector.load %arg1[%c2_156, %c2_157, %c0_158] : memref<8x32x32xf32, #tpu.memory_space<vmem>>, vector<1x28x32xf32>
    %219 = vector.shape_cast %218 : vector<1x28x32xf32> to vector<28x32xf32>
    %220 = arith.truncf %219 : vector<28x32xf32> to vector<28x32xbf16>
    %c2_159 = arith.constant 2 : index
    %c0_160 = arith.constant 0 : index
    %c0_161 = arith.constant 0 : index
    %221 = vector.load %arg2[%c2_159, %c0_160, %c0_161] : memref<5x32x168xbf16, #tpu.memory_space<vmem>>, vector<1x32x168xbf16>
    %222 = vector.shape_cast %221 : vector<1x32x168xbf16> to vector<32x168xbf16>
    %cst_162 = arith.constant dense<0.000000e+00> : vector<28x168xf32>
    %223 = tpu.matmul %220, %222, %cst_162 {dimension_numbers = #tpu.dot_dimension_numbers<[1], [0], [0], [1], [0, 0, 1, 1], [], []>} : vector<28x32xbf16>, vector<32x168xbf16>, vector<28x168xf32> -> vector<28x168xf32>
    %224 = arith.addf %217, %223 : vector<28x168xf32>
    %c2_163 = arith.constant 2 : index
    %c3_164 = arith.constant 3 : index
    %c0_165 = arith.constant 0 : index
    %225 = vector.load %arg1[%c2_163, %c3_164, %c0_165] : memref<8x32x32xf32, #tpu.memory_space<vmem>>, vector<1x28x32xf32>
    %226 = vector.shape_cast %225 : vector<1x28x32xf32> to vector<28x32xf32>
    %227 = arith.truncf %226 : vector<28x32xf32> to vector<28x32xbf16>
    %c3_166 = arith.constant 3 : index
    %c0_167 = arith.constant 0 : index
    %c0_168 = arith.constant 0 : index
    %228 = vector.load %arg2[%c3_166, %c0_167, %c0_168] : memref<5x32x168xbf16, #tpu.memory_space<vmem>>, vector<1x32x168xbf16>
    %229 = vector.shape_cast %228 : vector<1x32x168xbf16> to vector<32x168xbf16>
    %cst_169 = arith.constant dense<0.000000e+00> : vector<28x168xf32>
    %230 = tpu.matmul %227, %229, %cst_169 {dimension_numbers = #tpu.dot_dimension_numbers<[1], [0], [0], [1], [0, 0, 1, 1], [], []>} : vector<28x32xbf16>, vector<32x168xbf16>, vector<28x168xf32> -> vector<28x168xf32>
    %231 = arith.addf %224, %230 : vector<28x168xf32>
    %c2_170 = arith.constant 2 : index
    %c4_171 = arith.constant 4 : index
    %c0_172 = arith.constant 0 : index
    %232 = vector.load %arg1[%c2_170, %c4_171, %c0_172] : memref<8x32x32xf32, #tpu.memory_space<vmem>>, vector<1x28x32xf32>
    %233 = vector.shape_cast %232 : vector<1x28x32xf32> to vector<28x32xf32>
    %234 = arith.truncf %233 : vector<28x32xf32> to vector<28x32xbf16>
    %c4_173 = arith.constant 4 : index
    %c0_174 = arith.constant 0 : index
    %c0_175 = arith.constant 0 : index
    %235 = vector.load %arg2[%c4_173, %c0_174, %c0_175] : memref<5x32x168xbf16, #tpu.memory_space<vmem>>, vector<1x32x168xbf16>
    %236 = vector.shape_cast %235 : vector<1x32x168xbf16> to vector<32x168xbf16>
    %cst_176 = arith.constant dense<0.000000e+00> : vector<28x168xf32>
    %237 = tpu.matmul %234, %236, %cst_176 {dimension_numbers = #tpu.dot_dimension_numbers<[1], [0], [0], [1], [0, 0, 1, 1], [], []>} : vector<28x32xbf16>, vector<32x168xbf16>, vector<28x168xf32> -> vector<28x168xf32>
    %238 = arith.addf %231, %237 : vector<28x168xf32>
    %239 = vector.broadcast %0 : vector<1x168xf32> to vector<28x168xf32>
    %240 = arith.addf %238, %239 : vector<28x168xf32>
    %cst_177 = arith.constant 0.000000e+00 : f32
    %241 = vector.broadcast %cst_177 : f32 to vector<28x168xf32>
    %242 = arith.cmpf oge, %240, %241 : vector<28x168xf32>
    %cst_178 = arith.constant 0.00999999977 : f32
    %243 = vector.broadcast %cst_178 : f32 to vector<28x168xf32>
    %244 = arith.mulf %243, %240 : vector<28x168xf32>
    %245 = arith.select %242, %240, %244 : vector<28x168xi1>, vector<28x168xf32>
    %246 = vector.extract_strided_slice %245 {offsets = [0, 0], sizes = [28, 162], strides = [1, 1]} : vector<28x168xf32> to vector<28x162xf32>
    %247 = vector.extract_strided_slice %245 {offsets = [0, 6], sizes = [28, 162], strides = [1, 1]} : vector<28x168xf32> to vector<28x162xf32>
    %248 = arith.maximumf %246, %247 : vector<28x162xf32>
    %249 = arith.truncf %248 : vector<28x162xf32> to vector<28x162xbf16>
    %c0_179 = arith.constant 0 : index
    %c0_180 = arith.constant 0 : index
    %250 = vector.load %arg3[%c0_179, %c0_180] : memref<162x84xbf16, #tpu.memory_space<vmem>>, vector<162x84xbf16>
    %cst_181 = arith.constant dense<0.000000e+00> : vector<28x84xf32>
    %251 = tpu.matmul %249, %250, %cst_181 {dimension_numbers = #tpu.dot_dimension_numbers<[1], [0], [0], [1], [0, 0, 1, 1], [], []>} : vector<28x162xbf16>, vector<162x84xbf16>, vector<28x84xf32> -> vector<28x84xf32>
    %252 = vector.extract_strided_slice %251 {offsets = [0, 0], sizes = [27, 84], strides = [1, 1]} : vector<28x84xf32> to vector<27x84xf32>
    %253 = vector.extract_strided_slice %251 {offsets = [1, 0], sizes = [27, 84], strides = [1, 1]} : vector<28x84xf32> to vector<27x84xf32>
    %254 = arith.maximumf %252, %253 : vector<27x84xf32>
    %c0_182 = arith.constant 0 : index
    %c0_183 = arith.constant 0 : index
    %255 = vector.load %arg4[%c0_182, %c0_183] : memref<14x27xbf16, #tpu.memory_space<vmem>>, vector<14x27xbf16>
    %256 = arith.truncf %254 : vector<27x84xf32> to vector<27x84xbf16>
    %cst_184 = arith.constant dense<0.000000e+00> : vector<14x84xf32>
    %257 = tpu.matmul %255, %256, %cst_184 {dimension_numbers = #tpu.dot_dimension_numbers<[1], [0], [0], [1], [0, 0, 1, 1], [], []>} : vector<14x27xbf16>, vector<27x84xbf16>, vector<14x84xf32> -> vector<14x84xf32>
    %258 = vector.extract_strided_slice %257 {offsets = [0, 0], sizes = [10, 84], strides = [1, 1]} : vector<14x84xf32> to vector<10x84xf32>
    %259 = arith.truncf %258 : vector<10x84xf32> to vector<10x84xbf16>
    %c0_185 = arith.constant 0 : index
    %c0_186 = arith.constant 0 : index
    %c0_187 = arith.constant 0 : index
    %260 = vector.load %arg5[%c0_185, %c0_186, %c0_187] : memref<5x84x160xbf16, #tpu.memory_space<vmem>>, vector<1x84x160xbf16>
    %261 = vector.shape_cast %260 : vector<1x84x160xbf16> to vector<84x160xbf16>
    %cst_188 = arith.constant dense<0.000000e+00> : vector<10x160xf32>
    %262 = tpu.matmul %259, %261, %cst_188 {dimension_numbers = #tpu.dot_dimension_numbers<[1], [0], [0], [1], [0, 0, 1, 1], [], []>} : vector<10x84xbf16>, vector<84x160xbf16>, vector<10x160xf32> -> vector<10x160xf32>
    %263 = vector.extract_strided_slice %257 {offsets = [1, 0], sizes = [10, 84], strides = [1, 1]} : vector<14x84xf32> to vector<10x84xf32>
    %264 = arith.truncf %263 : vector<10x84xf32> to vector<10x84xbf16>
    %c1_189 = arith.constant 1 : index
    %c0_190 = arith.constant 0 : index
    %c0_191 = arith.constant 0 : index
    %265 = vector.load %arg5[%c1_189, %c0_190, %c0_191] : memref<5x84x160xbf16, #tpu.memory_space<vmem>>, vector<1x84x160xbf16>
    %266 = vector.shape_cast %265 : vector<1x84x160xbf16> to vector<84x160xbf16>
    %cst_192 = arith.constant dense<0.000000e+00> : vector<10x160xf32>
    %267 = tpu.matmul %264, %266, %cst_192 {dimension_numbers = #tpu.dot_dimension_numbers<[1], [0], [0], [1], [0, 0, 1, 1], [], []>} : vector<10x84xbf16>, vector<84x160xbf16>, vector<10x160xf32> -> vector<10x160xf32>
    %268 = arith.addf %262, %267 : vector<10x160xf32>
    %269 = vector.extract_strided_slice %257 {offsets = [2, 0], sizes = [10, 84], strides = [1, 1]} : vector<14x84xf32> to vector<10x84xf32>
    %270 = arith.truncf %269 : vector<10x84xf32> to vector<10x84xbf16>
    %c2_193 = arith.constant 2 : index
    %c0_194 = arith.constant 0 : index
    %c0_195 = arith.constant 0 : index
    %271 = vector.load %arg5[%c2_193, %c0_194, %c0_195] : memref<5x84x160xbf16, #tpu.memory_space<vmem>>, vector<1x84x160xbf16>
    %272 = vector.shape_cast %271 : vector<1x84x160xbf16> to vector<84x160xbf16>
    %cst_196 = arith.constant dense<0.000000e+00> : vector<10x160xf32>
    %273 = tpu.matmul %270, %272, %cst_196 {dimension_numbers = #tpu.dot_dimension_numbers<[1], [0], [0], [1], [0, 0, 1, 1], [], []>} : vector<10x84xbf16>, vector<84x160xbf16>, vector<10x160xf32> -> vector<10x160xf32>
    %274 = arith.addf %268, %273 : vector<10x160xf32>
    %275 = vector.extract_strided_slice %257 {offsets = [3, 0], sizes = [10, 84], strides = [1, 1]} : vector<14x84xf32> to vector<10x84xf32>
    %276 = arith.truncf %275 : vector<10x84xf32> to vector<10x84xbf16>
    %c3_197 = arith.constant 3 : index
    %c0_198 = arith.constant 0 : index
    %c0_199 = arith.constant 0 : index
    %277 = vector.load %arg5[%c3_197, %c0_198, %c0_199] : memref<5x84x160xbf16, #tpu.memory_space<vmem>>, vector<1x84x160xbf16>
    %278 = vector.shape_cast %277 : vector<1x84x160xbf16> to vector<84x160xbf16>
    %cst_200 = arith.constant dense<0.000000e+00> : vector<10x160xf32>
    %279 = tpu.matmul %276, %278, %cst_200 {dimension_numbers = #tpu.dot_dimension_numbers<[1], [0], [0], [1], [0, 0, 1, 1], [], []>} : vector<10x84xbf16>, vector<84x160xbf16>, vector<10x160xf32> -> vector<10x160xf32>
    %280 = arith.addf %274, %279 : vector<10x160xf32>
    %281 = vector.extract_strided_slice %257 {offsets = [4, 0], sizes = [10, 84], strides = [1, 1]} : vector<14x84xf32> to vector<10x84xf32>
    %282 = arith.truncf %281 : vector<10x84xf32> to vector<10x84xbf16>
    %c4_201 = arith.constant 4 : index
    %c0_202 = arith.constant 0 : index
    %c0_203 = arith.constant 0 : index
    %283 = vector.load %arg5[%c4_201, %c0_202, %c0_203] : memref<5x84x160xbf16, #tpu.memory_space<vmem>>, vector<1x84x160xbf16>
    %284 = vector.shape_cast %283 : vector<1x84x160xbf16> to vector<84x160xbf16>
    %cst_204 = arith.constant dense<0.000000e+00> : vector<10x160xf32>
    %285 = tpu.matmul %282, %284, %cst_204 {dimension_numbers = #tpu.dot_dimension_numbers<[1], [0], [0], [1], [0, 0, 1, 1], [], []>} : vector<10x84xbf16>, vector<84x160xbf16>, vector<10x160xf32> -> vector<10x160xf32>
    %286 = arith.addf %280, %285 : vector<10x160xf32>
    %287 = vector.broadcast %1 : vector<1x160xf32> to vector<10x160xf32>
    %288 = arith.addf %286, %287 : vector<10x160xf32>
    %cst_205 = arith.constant 0.000000e+00 : f32
    %289 = vector.broadcast %cst_205 : f32 to vector<10x160xf32>
    %290 = arith.cmpf oge, %288, %289 : vector<10x160xf32>
    %cst_206 = arith.constant 0.00999999977 : f32
    %291 = vector.broadcast %cst_206 : f32 to vector<10x160xf32>
    %292 = arith.mulf %291, %288 : vector<10x160xf32>
    %293 = arith.select %290, %288, %292 : vector<10x160xi1>, vector<10x160xf32>
    %294 = vector.extract_strided_slice %293 {offsets = [0, 0], sizes = [10, 144], strides = [1, 1]} : vector<10x160xf32> to vector<10x144xf32>
    %295 = vector.extract_strided_slice %293 {offsets = [0, 16], sizes = [10, 144], strides = [1, 1]} : vector<10x160xf32> to vector<10x144xf32>
    %296 = arith.maximumf %294, %295 : vector<10x144xf32>
    %297 = arith.truncf %296 : vector<10x144xf32> to vector<10x144xbf16>
    %c0_207 = arith.constant 0 : index
    %c0_208 = arith.constant 0 : index
    %298 = vector.load %arg6[%c0_207, %c0_208] : memref<144x80xbf16, #tpu.memory_space<vmem>>, vector<144x80xbf16>
    %cst_209 = arith.constant dense<0.000000e+00> : vector<10x80xf32>
    %299 = tpu.matmul %297, %298, %cst_209 {dimension_numbers = #tpu.dot_dimension_numbers<[1], [0], [0], [1], [0, 0, 1, 1], [], []>} : vector<10x144xbf16>, vector<144x80xbf16>, vector<10x80xf32> -> vector<10x80xf32>
    %300 = vector.extract_strided_slice %299 {offsets = [0, 0], sizes = [9, 80], strides = [1, 1]} : vector<10x80xf32> to vector<9x80xf32>
    %301 = vector.extract_strided_slice %299 {offsets = [1, 0], sizes = [9, 80], strides = [1, 1]} : vector<10x80xf32> to vector<9x80xf32>
    %302 = arith.maximumf %300, %301 : vector<9x80xf32>
    %c0_210 = arith.constant 0 : index
    %c0_211 = arith.constant 0 : index
    %303 = vector.load %arg7[%c0_210, %c0_211] : memref<5x9xbf16, #tpu.memory_space<vmem>>, vector<5x9xbf16>
    %304 = arith.truncf %302 : vector<9x80xf32> to vector<9x80xbf16>
    %cst_212 = arith.constant dense<0.000000e+00> : vector<5x80xf32>
    %305 = tpu.matmul %303, %304, %cst_212 {dimension_numbers = #tpu.dot_dimension_numbers<[1], [0], [0], [1], [0, 0, 1, 1], [], []>} : vector<5x9xbf16>, vector<9x80xbf16>, vector<5x80xf32> -> vector<5x80xf32>
    %c3_213 = arith.constant 3 : index
    %c0_214 = arith.constant 0 : index
    %c0_215 = arith.constant 0 : index
    %306 = vector.load %arg1[%c3_213, %c0_214, %c0_215] : memref<8x32x32xf32, #tpu.memory_space<vmem>>, vector<1x28x32xf32>
    %307 = vector.shape_cast %306 : vector<1x28x32xf32> to vector<28x32xf32>
    %308 = arith.truncf %307 : vector<28x32xf32> to vector<28x32xbf16>
    %c0_216 = arith.constant 0 : index
    %c0_217 = arith.constant 0 : index
    %c0_218 = arith.constant 0 : index
    %309 = vector.load %arg2[%c0_216, %c0_217, %c0_218] : memref<5x32x168xbf16, #tpu.memory_space<vmem>>, vector<1x32x168xbf16>
    %310 = vector.shape_cast %309 : vector<1x32x168xbf16> to vector<32x168xbf16>
    %cst_219 = arith.constant dense<0.000000e+00> : vector<28x168xf32>
    %311 = tpu.matmul %308, %310, %cst_219 {dimension_numbers = #tpu.dot_dimension_numbers<[1], [0], [0], [1], [0, 0, 1, 1], [], []>} : vector<28x32xbf16>, vector<32x168xbf16>, vector<28x168xf32> -> vector<28x168xf32>
    %c3_220 = arith.constant 3 : index
    %c1_221 = arith.constant 1 : index
    %c0_222 = arith.constant 0 : index
    %312 = vector.load %arg1[%c3_220, %c1_221, %c0_222] : memref<8x32x32xf32, #tpu.memory_space<vmem>>, vector<1x28x32xf32>
    %313 = vector.shape_cast %312 : vector<1x28x32xf32> to vector<28x32xf32>
    %314 = arith.truncf %313 : vector<28x32xf32> to vector<28x32xbf16>
    %c1_223 = arith.constant 1 : index
    %c0_224 = arith.constant 0 : index
    %c0_225 = arith.constant 0 : index
    %315 = vector.load %arg2[%c1_223, %c0_224, %c0_225] : memref<5x32x168xbf16, #tpu.memory_space<vmem>>, vector<1x32x168xbf16>
    %316 = vector.shape_cast %315 : vector<1x32x168xbf16> to vector<32x168xbf16>
    %cst_226 = arith.constant dense<0.000000e+00> : vector<28x168xf32>
    %317 = tpu.matmul %314, %316, %cst_226 {dimension_numbers = #tpu.dot_dimension_numbers<[1], [0], [0], [1], [0, 0, 1, 1], [], []>} : vector<28x32xbf16>, vector<32x168xbf16>, vector<28x168xf32> -> vector<28x168xf32>
    %318 = arith.addf %311, %317 : vector<28x168xf32>
    %c3_227 = arith.constant 3 : index
    %c2_228 = arith.constant 2 : index
    %c0_229 = arith.constant 0 : index
    %319 = vector.load %arg1[%c3_227, %c2_228, %c0_229] : memref<8x32x32xf32, #tpu.memory_space<vmem>>, vector<1x28x32xf32>
    %320 = vector.shape_cast %319 : vector<1x28x32xf32> to vector<28x32xf32>
    %321 = arith.truncf %320 : vector<28x32xf32> to vector<28x32xbf16>
    %c2_230 = arith.constant 2 : index
    %c0_231 = arith.constant 0 : index
    %c0_232 = arith.constant 0 : index
    %322 = vector.load %arg2[%c2_230, %c0_231, %c0_232] : memref<5x32x168xbf16, #tpu.memory_space<vmem>>, vector<1x32x168xbf16>
    %323 = vector.shape_cast %322 : vector<1x32x168xbf16> to vector<32x168xbf16>
    %cst_233 = arith.constant dense<0.000000e+00> : vector<28x168xf32>
    %324 = tpu.matmul %321, %323, %cst_233 {dimension_numbers = #tpu.dot_dimension_numbers<[1], [0], [0], [1], [0, 0, 1, 1], [], []>} : vector<28x32xbf16>, vector<32x168xbf16>, vector<28x168xf32> -> vector<28x168xf32>
    %325 = arith.addf %318, %324 : vector<28x168xf32>
    %c3_234 = arith.constant 3 : index
    %c3_235 = arith.constant 3 : index
    %c0_236 = arith.constant 0 : index
    %326 = vector.load %arg1[%c3_234, %c3_235, %c0_236] : memref<8x32x32xf32, #tpu.memory_space<vmem>>, vector<1x28x32xf32>
    %327 = vector.shape_cast %326 : vector<1x28x32xf32> to vector<28x32xf32>
    %328 = arith.truncf %327 : vector<28x32xf32> to vector<28x32xbf16>
    %c3_237 = arith.constant 3 : index
    %c0_238 = arith.constant 0 : index
    %c0_239 = arith.constant 0 : index
    %329 = vector.load %arg2[%c3_237, %c0_238, %c0_239] : memref<5x32x168xbf16, #tpu.memory_space<vmem>>, vector<1x32x168xbf16>
    %330 = vector.shape_cast %329 : vector<1x32x168xbf16> to vector<32x168xbf16>
    %cst_240 = arith.constant dense<0.000000e+00> : vector<28x168xf32>
    %331 = tpu.matmul %328, %330, %cst_240 {dimension_numbers = #tpu.dot_dimension_numbers<[1], [0], [0], [1], [0, 0, 1, 1], [], []>} : vector<28x32xbf16>, vector<32x168xbf16>, vector<28x168xf32> -> vector<28x168xf32>
    %332 = arith.addf %325, %331 : vector<28x168xf32>
    %c3_241 = arith.constant 3 : index
    %c4_242 = arith.constant 4 : index
    %c0_243 = arith.constant 0 : index
    %333 = vector.load %arg1[%c3_241, %c4_242, %c0_243] : memref<8x32x32xf32, #tpu.memory_space<vmem>>, vector<1x28x32xf32>
    %334 = vector.shape_cast %333 : vector<1x28x32xf32> to vector<28x32xf32>
    %335 = arith.truncf %334 : vector<28x32xf32> to vector<28x32xbf16>
    %c4_244 = arith.constant 4 : index
    %c0_245 = arith.constant 0 : index
    %c0_246 = arith.constant 0 : index
    %336 = vector.load %arg2[%c4_244, %c0_245, %c0_246] : memref<5x32x168xbf16, #tpu.memory_space<vmem>>, vector<1x32x168xbf16>
    %337 = vector.shape_cast %336 : vector<1x32x168xbf16> to vector<32x168xbf16>
    %cst_247 = arith.constant dense<0.000000e+00> : vector<28x168xf32>
    %338 = tpu.matmul %335, %337, %cst_247 {dimension_numbers = #tpu.dot_dimension_numbers<[1], [0], [0], [1], [0, 0, 1, 1], [], []>} : vector<28x32xbf16>, vector<32x168xbf16>, vector<28x168xf32> -> vector<28x168xf32>
    %339 = arith.addf %332, %338 : vector<28x168xf32>
    %340 = vector.broadcast %0 : vector<1x168xf32> to vector<28x168xf32>
    %341 = arith.addf %339, %340 : vector<28x168xf32>
    %cst_248 = arith.constant 0.000000e+00 : f32
    %342 = vector.broadcast %cst_248 : f32 to vector<28x168xf32>
    %343 = arith.cmpf oge, %341, %342 : vector<28x168xf32>
    %cst_249 = arith.constant 0.00999999977 : f32
    %344 = vector.broadcast %cst_249 : f32 to vector<28x168xf32>
    %345 = arith.mulf %344, %341 : vector<28x168xf32>
    %346 = arith.select %343, %341, %345 : vector<28x168xi1>, vector<28x168xf32>
    %347 = vector.extract_strided_slice %346 {offsets = [0, 0], sizes = [28, 162], strides = [1, 1]} : vector<28x168xf32> to vector<28x162xf32>
    %348 = vector.extract_strided_slice %346 {offsets = [0, 6], sizes = [28, 162], strides = [1, 1]} : vector<28x168xf32> to vector<28x162xf32>
    %349 = arith.maximumf %347, %348 : vector<28x162xf32>
    %350 = arith.truncf %349 : vector<28x162xf32> to vector<28x162xbf16>
    %c0_250 = arith.constant 0 : index
    %c0_251 = arith.constant 0 : index
    %351 = vector.load %arg3[%c0_250, %c0_251] : memref<162x84xbf16, #tpu.memory_space<vmem>>, vector<162x84xbf16>
    %cst_252 = arith.constant dense<0.000000e+00> : vector<28x84xf32>
    %352 = tpu.matmul %350, %351, %cst_252 {dimension_numbers = #tpu.dot_dimension_numbers<[1], [0], [0], [1], [0, 0, 1, 1], [], []>} : vector<28x162xbf16>, vector<162x84xbf16>, vector<28x84xf32> -> vector<28x84xf32>
    %353 = vector.extract_strided_slice %352 {offsets = [0, 0], sizes = [27, 84], strides = [1, 1]} : vector<28x84xf32> to vector<27x84xf32>
    %354 = vector.extract_strided_slice %352 {offsets = [1, 0], sizes = [27, 84], strides = [1, 1]} : vector<28x84xf32> to vector<27x84xf32>
    %355 = arith.maximumf %353, %354 : vector<27x84xf32>
    %c0_253 = arith.constant 0 : index
    %c0_254 = arith.constant 0 : index
    %356 = vector.load %arg4[%c0_253, %c0_254] : memref<14x27xbf16, #tpu.memory_space<vmem>>, vector<14x27xbf16>
    %357 = arith.truncf %355 : vector<27x84xf32> to vector<27x84xbf16>
    %cst_255 = arith.constant dense<0.000000e+00> : vector<14x84xf32>
    %358 = tpu.matmul %356, %357, %cst_255 {dimension_numbers = #tpu.dot_dimension_numbers<[1], [0], [0], [1], [0, 0, 1, 1], [], []>} : vector<14x27xbf16>, vector<27x84xbf16>, vector<14x84xf32> -> vector<14x84xf32>
    %359 = vector.extract_strided_slice %358 {offsets = [0, 0], sizes = [10, 84], strides = [1, 1]} : vector<14x84xf32> to vector<10x84xf32>
    %360 = arith.truncf %359 : vector<10x84xf32> to vector<10x84xbf16>
    %c0_256 = arith.constant 0 : index
    %c0_257 = arith.constant 0 : index
    %c0_258 = arith.constant 0 : index
    %361 = vector.load %arg5[%c0_256, %c0_257, %c0_258] : memref<5x84x160xbf16, #tpu.memory_space<vmem>>, vector<1x84x160xbf16>
    %362 = vector.shape_cast %361 : vector<1x84x160xbf16> to vector<84x160xbf16>
    %cst_259 = arith.constant dense<0.000000e+00> : vector<10x160xf32>
    %363 = tpu.matmul %360, %362, %cst_259 {dimension_numbers = #tpu.dot_dimension_numbers<[1], [0], [0], [1], [0, 0, 1, 1], [], []>} : vector<10x84xbf16>, vector<84x160xbf16>, vector<10x160xf32> -> vector<10x160xf32>
    %364 = vector.extract_strided_slice %358 {offsets = [1, 0], sizes = [10, 84], strides = [1, 1]} : vector<14x84xf32> to vector<10x84xf32>
    %365 = arith.truncf %364 : vector<10x84xf32> to vector<10x84xbf16>
    %c1_260 = arith.constant 1 : index
    %c0_261 = arith.constant 0 : index
    %c0_262 = arith.constant 0 : index
    %366 = vector.load %arg5[%c1_260, %c0_261, %c0_262] : memref<5x84x160xbf16, #tpu.memory_space<vmem>>, vector<1x84x160xbf16>
    %367 = vector.shape_cast %366 : vector<1x84x160xbf16> to vector<84x160xbf16>
    %cst_263 = arith.constant dense<0.000000e+00> : vector<10x160xf32>
    %368 = tpu.matmul %365, %367, %cst_263 {dimension_numbers = #tpu.dot_dimension_numbers<[1], [0], [0], [1], [0, 0, 1, 1], [], []>} : vector<10x84xbf16>, vector<84x160xbf16>, vector<10x160xf32> -> vector<10x160xf32>
    %369 = arith.addf %363, %368 : vector<10x160xf32>
    %370 = vector.extract_strided_slice %358 {offsets = [2, 0], sizes = [10, 84], strides = [1, 1]} : vector<14x84xf32> to vector<10x84xf32>
    %371 = arith.truncf %370 : vector<10x84xf32> to vector<10x84xbf16>
    %c2_264 = arith.constant 2 : index
    %c0_265 = arith.constant 0 : index
    %c0_266 = arith.constant 0 : index
    %372 = vector.load %arg5[%c2_264, %c0_265, %c0_266] : memref<5x84x160xbf16, #tpu.memory_space<vmem>>, vector<1x84x160xbf16>
    %373 = vector.shape_cast %372 : vector<1x84x160xbf16> to vector<84x160xbf16>
    %cst_267 = arith.constant dense<0.000000e+00> : vector<10x160xf32>
    %374 = tpu.matmul %371, %373, %cst_267 {dimension_numbers = #tpu.dot_dimension_numbers<[1], [0], [0], [1], [0, 0, 1, 1], [], []>} : vector<10x84xbf16>, vector<84x160xbf16>, vector<10x160xf32> -> vector<10x160xf32>
    %375 = arith.addf %369, %374 : vector<10x160xf32>
    %376 = vector.extract_strided_slice %358 {offsets = [3, 0], sizes = [10, 84], strides = [1, 1]} : vector<14x84xf32> to vector<10x84xf32>
    %377 = arith.truncf %376 : vector<10x84xf32> to vector<10x84xbf16>
    %c3_268 = arith.constant 3 : index
    %c0_269 = arith.constant 0 : index
    %c0_270 = arith.constant 0 : index
    %378 = vector.load %arg5[%c3_268, %c0_269, %c0_270] : memref<5x84x160xbf16, #tpu.memory_space<vmem>>, vector<1x84x160xbf16>
    %379 = vector.shape_cast %378 : vector<1x84x160xbf16> to vector<84x160xbf16>
    %cst_271 = arith.constant dense<0.000000e+00> : vector<10x160xf32>
    %380 = tpu.matmul %377, %379, %cst_271 {dimension_numbers = #tpu.dot_dimension_numbers<[1], [0], [0], [1], [0, 0, 1, 1], [], []>} : vector<10x84xbf16>, vector<84x160xbf16>, vector<10x160xf32> -> vector<10x160xf32>
    %381 = arith.addf %375, %380 : vector<10x160xf32>
    %382 = vector.extract_strided_slice %358 {offsets = [4, 0], sizes = [10, 84], strides = [1, 1]} : vector<14x84xf32> to vector<10x84xf32>
    %383 = arith.truncf %382 : vector<10x84xf32> to vector<10x84xbf16>
    %c4_272 = arith.constant 4 : index
    %c0_273 = arith.constant 0 : index
    %c0_274 = arith.constant 0 : index
    %384 = vector.load %arg5[%c4_272, %c0_273, %c0_274] : memref<5x84x160xbf16, #tpu.memory_space<vmem>>, vector<1x84x160xbf16>
    %385 = vector.shape_cast %384 : vector<1x84x160xbf16> to vector<84x160xbf16>
    %cst_275 = arith.constant dense<0.000000e+00> : vector<10x160xf32>
    %386 = tpu.matmul %383, %385, %cst_275 {dimension_numbers = #tpu.dot_dimension_numbers<[1], [0], [0], [1], [0, 0, 1, 1], [], []>} : vector<10x84xbf16>, vector<84x160xbf16>, vector<10x160xf32> -> vector<10x160xf32>
    %387 = arith.addf %381, %386 : vector<10x160xf32>
    %388 = vector.broadcast %1 : vector<1x160xf32> to vector<10x160xf32>
    %389 = arith.addf %387, %388 : vector<10x160xf32>
    %cst_276 = arith.constant 0.000000e+00 : f32
    %390 = vector.broadcast %cst_276 : f32 to vector<10x160xf32>
    %391 = arith.cmpf oge, %389, %390 : vector<10x160xf32>
    %cst_277 = arith.constant 0.00999999977 : f32
    %392 = vector.broadcast %cst_277 : f32 to vector<10x160xf32>
    %393 = arith.mulf %392, %389 : vector<10x160xf32>
    %394 = arith.select %391, %389, %393 : vector<10x160xi1>, vector<10x160xf32>
    %395 = vector.extract_strided_slice %394 {offsets = [0, 0], sizes = [10, 144], strides = [1, 1]} : vector<10x160xf32> to vector<10x144xf32>
    %396 = vector.extract_strided_slice %394 {offsets = [0, 16], sizes = [10, 144], strides = [1, 1]} : vector<10x160xf32> to vector<10x144xf32>
    %397 = arith.maximumf %395, %396 : vector<10x144xf32>
    %398 = arith.truncf %397 : vector<10x144xf32> to vector<10x144xbf16>
    %c0_278 = arith.constant 0 : index
    %c0_279 = arith.constant 0 : index
    %399 = vector.load %arg6[%c0_278, %c0_279] : memref<144x80xbf16, #tpu.memory_space<vmem>>, vector<144x80xbf16>
    %cst_280 = arith.constant dense<0.000000e+00> : vector<10x80xf32>
    %400 = tpu.matmul %398, %399, %cst_280 {dimension_numbers = #tpu.dot_dimension_numbers<[1], [0], [0], [1], [0, 0, 1, 1], [], []>} : vector<10x144xbf16>, vector<144x80xbf16>, vector<10x80xf32> -> vector<10x80xf32>
    %401 = vector.extract_strided_slice %400 {offsets = [0, 0], sizes = [9, 80], strides = [1, 1]} : vector<10x80xf32> to vector<9x80xf32>
    %402 = vector.extract_strided_slice %400 {offsets = [1, 0], sizes = [9, 80], strides = [1, 1]} : vector<10x80xf32> to vector<9x80xf32>
    %403 = arith.maximumf %401, %402 : vector<9x80xf32>
    %c0_281 = arith.constant 0 : index
    %c0_282 = arith.constant 0 : index
    %404 = vector.load %arg7[%c0_281, %c0_282] : memref<5x9xbf16, #tpu.memory_space<vmem>>, vector<5x9xbf16>
    %405 = arith.truncf %403 : vector<9x80xf32> to vector<9x80xbf16>
    %cst_283 = arith.constant dense<0.000000e+00> : vector<5x80xf32>
    %406 = tpu.matmul %404, %405, %cst_283 {dimension_numbers = #tpu.dot_dimension_numbers<[1], [0], [0], [1], [0, 0, 1, 1], [], []>} : vector<5x9xbf16>, vector<9x80xbf16>, vector<5x80xf32> -> vector<5x80xf32>
    %c4_284 = arith.constant 4 : index
    %c0_285 = arith.constant 0 : index
    %c0_286 = arith.constant 0 : index
    %407 = vector.load %arg1[%c4_284, %c0_285, %c0_286] : memref<8x32x32xf32, #tpu.memory_space<vmem>>, vector<1x28x32xf32>
    %408 = vector.shape_cast %407 : vector<1x28x32xf32> to vector<28x32xf32>
    %409 = arith.truncf %408 : vector<28x32xf32> to vector<28x32xbf16>
    %c0_287 = arith.constant 0 : index
    %c0_288 = arith.constant 0 : index
    %c0_289 = arith.constant 0 : index
    %410 = vector.load %arg2[%c0_287, %c0_288, %c0_289] : memref<5x32x168xbf16, #tpu.memory_space<vmem>>, vector<1x32x168xbf16>
    %411 = vector.shape_cast %410 : vector<1x32x168xbf16> to vector<32x168xbf16>
    %cst_290 = arith.constant dense<0.000000e+00> : vector<28x168xf32>
    %412 = tpu.matmul %409, %411, %cst_290 {dimension_numbers = #tpu.dot_dimension_numbers<[1], [0], [0], [1], [0, 0, 1, 1], [], []>} : vector<28x32xbf16>, vector<32x168xbf16>, vector<28x168xf32> -> vector<28x168xf32>
    %c4_291 = arith.constant 4 : index
    %c1_292 = arith.constant 1 : index
    %c0_293 = arith.constant 0 : index
    %413 = vector.load %arg1[%c4_291, %c1_292, %c0_293] : memref<8x32x32xf32, #tpu.memory_space<vmem>>, vector<1x28x32xf32>
    %414 = vector.shape_cast %413 : vector<1x28x32xf32> to vector<28x32xf32>
    %415 = arith.truncf %414 : vector<28x32xf32> to vector<28x32xbf16>
    %c1_294 = arith.constant 1 : index
    %c0_295 = arith.constant 0 : index
    %c0_296 = arith.constant 0 : index
    %416 = vector.load %arg2[%c1_294, %c0_295, %c0_296] : memref<5x32x168xbf16, #tpu.memory_space<vmem>>, vector<1x32x168xbf16>
    %417 = vector.shape_cast %416 : vector<1x32x168xbf16> to vector<32x168xbf16>
    %cst_297 = arith.constant dense<0.000000e+00> : vector<28x168xf32>
    %418 = tpu.matmul %415, %417, %cst_297 {dimension_numbers = #tpu.dot_dimension_numbers<[1], [0], [0], [1], [0, 0, 1, 1], [], []>} : vector<28x32xbf16>, vector<32x168xbf16>, vector<28x168xf32> -> vector<28x168xf32>
    %419 = arith.addf %412, %418 : vector<28x168xf32>
    %c4_298 = arith.constant 4 : index
    %c2_299 = arith.constant 2 : index
    %c0_300 = arith.constant 0 : index
    %420 = vector.load %arg1[%c4_298, %c2_299, %c0_300] : memref<8x32x32xf32, #tpu.memory_space<vmem>>, vector<1x28x32xf32>
    %421 = vector.shape_cast %420 : vector<1x28x32xf32> to vector<28x32xf32>
    %422 = arith.truncf %421 : vector<28x32xf32> to vector<28x32xbf16>
    %c2_301 = arith.constant 2 : index
    %c0_302 = arith.constant 0 : index
    %c0_303 = arith.constant 0 : index
    %423 = vector.load %arg2[%c2_301, %c0_302, %c0_303] : memref<5x32x168xbf16, #tpu.memory_space<vmem>>, vector<1x32x168xbf16>
    %424 = vector.shape_cast %423 : vector<1x32x168xbf16> to vector<32x168xbf16>
    %cst_304 = arith.constant dense<0.000000e+00> : vector<28x168xf32>
    %425 = tpu.matmul %422, %424, %cst_304 {dimension_numbers = #tpu.dot_dimension_numbers<[1], [0], [0], [1], [0, 0, 1, 1], [], []>} : vector<28x32xbf16>, vector<32x168xbf16>, vector<28x168xf32> -> vector<28x168xf32>
    %426 = arith.addf %419, %425 : vector<28x168xf32>
    %c4_305 = arith.constant 4 : index
    %c3_306 = arith.constant 3 : index
    %c0_307 = arith.constant 0 : index
    %427 = vector.load %arg1[%c4_305, %c3_306, %c0_307] : memref<8x32x32xf32, #tpu.memory_space<vmem>>, vector<1x28x32xf32>
    %428 = vector.shape_cast %427 : vector<1x28x32xf32> to vector<28x32xf32>
    %429 = arith.truncf %428 : vector<28x32xf32> to vector<28x32xbf16>
    %c3_308 = arith.constant 3 : index
    %c0_309 = arith.constant 0 : index
    %c0_310 = arith.constant 0 : index
    %430 = vector.load %arg2[%c3_308, %c0_309, %c0_310] : memref<5x32x168xbf16, #tpu.memory_space<vmem>>, vector<1x32x168xbf16>
    %431 = vector.shape_cast %430 : vector<1x32x168xbf16> to vector<32x168xbf16>
    %cst_311 = arith.constant dense<0.000000e+00> : vector<28x168xf32>
    %432 = tpu.matmul %429, %431, %cst_311 {dimension_numbers = #tpu.dot_dimension_numbers<[1], [0], [0], [1], [0, 0, 1, 1], [], []>} : vector<28x32xbf16>, vector<32x168xbf16>, vector<28x168xf32> -> vector<28x168xf32>
    %433 = arith.addf %426, %432 : vector<28x168xf32>
    %c4_312 = arith.constant 4 : index
    %c4_313 = arith.constant 4 : index
    %c0_314 = arith.constant 0 : index
    %434 = vector.load %arg1[%c4_312, %c4_313, %c0_314] : memref<8x32x32xf32, #tpu.memory_space<vmem>>, vector<1x28x32xf32>
    %435 = vector.shape_cast %434 : vector<1x28x32xf32> to vector<28x32xf32>
    %436 = arith.truncf %435 : vector<28x32xf32> to vector<28x32xbf16>
    %c4_315 = arith.constant 4 : index
    %c0_316 = arith.constant 0 : index
    %c0_317 = arith.constant 0 : index
    %437 = vector.load %arg2[%c4_315, %c0_316, %c0_317] : memref<5x32x168xbf16, #tpu.memory_space<vmem>>, vector<1x32x168xbf16>
    %438 = vector.shape_cast %437 : vector<1x32x168xbf16> to vector<32x168xbf16>
    %cst_318 = arith.constant dense<0.000000e+00> : vector<28x168xf32>
    %439 = tpu.matmul %436, %438, %cst_318 {dimension_numbers = #tpu.dot_dimension_numbers<[1], [0], [0], [1], [0, 0, 1, 1], [], []>} : vector<28x32xbf16>, vector<32x168xbf16>, vector<28x168xf32> -> vector<28x168xf32>
    %440 = arith.addf %433, %439 : vector<28x168xf32>
    %441 = vector.broadcast %0 : vector<1x168xf32> to vector<28x168xf32>
    %442 = arith.addf %440, %441 : vector<28x168xf32>
    %cst_319 = arith.constant 0.000000e+00 : f32
    %443 = vector.broadcast %cst_319 : f32 to vector<28x168xf32>
    %444 = arith.cmpf oge, %442, %443 : vector<28x168xf32>
    %cst_320 = arith.constant 0.00999999977 : f32
    %445 = vector.broadcast %cst_320 : f32 to vector<28x168xf32>
    %446 = arith.mulf %445, %442 : vector<28x168xf32>
    %447 = arith.select %444, %442, %446 : vector<28x168xi1>, vector<28x168xf32>
    %448 = vector.extract_strided_slice %447 {offsets = [0, 0], sizes = [28, 162], strides = [1, 1]} : vector<28x168xf32> to vector<28x162xf32>
    %449 = vector.extract_strided_slice %447 {offsets = [0, 6], sizes = [28, 162], strides = [1, 1]} : vector<28x168xf32> to vector<28x162xf32>
    %450 = arith.maximumf %448, %449 : vector<28x162xf32>
    %451 = arith.truncf %450 : vector<28x162xf32> to vector<28x162xbf16>
    %c0_321 = arith.constant 0 : index
    %c0_322 = arith.constant 0 : index
    %452 = vector.load %arg3[%c0_321, %c0_322] : memref<162x84xbf16, #tpu.memory_space<vmem>>, vector<162x84xbf16>
    %cst_323 = arith.constant dense<0.000000e+00> : vector<28x84xf32>
    %453 = tpu.matmul %451, %452, %cst_323 {dimension_numbers = #tpu.dot_dimension_numbers<[1], [0], [0], [1], [0, 0, 1, 1], [], []>} : vector<28x162xbf16>, vector<162x84xbf16>, vector<28x84xf32> -> vector<28x84xf32>
    %454 = vector.extract_strided_slice %453 {offsets = [0, 0], sizes = [27, 84], strides = [1, 1]} : vector<28x84xf32> to vector<27x84xf32>
    %455 = vector.extract_strided_slice %453 {offsets = [1, 0], sizes = [27, 84], strides = [1, 1]} : vector<28x84xf32> to vector<27x84xf32>
    %456 = arith.maximumf %454, %455 : vector<27x84xf32>
    %c0_324 = arith.constant 0 : index
    %c0_325 = arith.constant 0 : index
    %457 = vector.load %arg4[%c0_324, %c0_325] : memref<14x27xbf16, #tpu.memory_space<vmem>>, vector<14x27xbf16>
    %458 = arith.truncf %456 : vector<27x84xf32> to vector<27x84xbf16>
    %cst_326 = arith.constant dense<0.000000e+00> : vector<14x84xf32>
    %459 = tpu.matmul %457, %458, %cst_326 {dimension_numbers = #tpu.dot_dimension_numbers<[1], [0], [0], [1], [0, 0, 1, 1], [], []>} : vector<14x27xbf16>, vector<27x84xbf16>, vector<14x84xf32> -> vector<14x84xf32>
    %460 = vector.extract_strided_slice %459 {offsets = [0, 0], sizes = [10, 84], strides = [1, 1]} : vector<14x84xf32> to vector<10x84xf32>
    %461 = arith.truncf %460 : vector<10x84xf32> to vector<10x84xbf16>
    %c0_327 = arith.constant 0 : index
    %c0_328 = arith.constant 0 : index
    %c0_329 = arith.constant 0 : index
    %462 = vector.load %arg5[%c0_327, %c0_328, %c0_329] : memref<5x84x160xbf16, #tpu.memory_space<vmem>>, vector<1x84x160xbf16>
    %463 = vector.shape_cast %462 : vector<1x84x160xbf16> to vector<84x160xbf16>
    %cst_330 = arith.constant dense<0.000000e+00> : vector<10x160xf32>
    %464 = tpu.matmul %461, %463, %cst_330 {dimension_numbers = #tpu.dot_dimension_numbers<[1], [0], [0], [1], [0, 0, 1, 1], [], []>} : vector<10x84xbf16>, vector<84x160xbf16>, vector<10x160xf32> -> vector<10x160xf32>
    %465 = vector.extract_strided_slice %459 {offsets = [1, 0], sizes = [10, 84], strides = [1, 1]} : vector<14x84xf32> to vector<10x84xf32>
    %466 = arith.truncf %465 : vector<10x84xf32> to vector<10x84xbf16>
    %c1_331 = arith.constant 1 : index
    %c0_332 = arith.constant 0 : index
    %c0_333 = arith.constant 0 : index
    %467 = vector.load %arg5[%c1_331, %c0_332, %c0_333] : memref<5x84x160xbf16, #tpu.memory_space<vmem>>, vector<1x84x160xbf16>
    %468 = vector.shape_cast %467 : vector<1x84x160xbf16> to vector<84x160xbf16>
    %cst_334 = arith.constant dense<0.000000e+00> : vector<10x160xf32>
    %469 = tpu.matmul %466, %468, %cst_334 {dimension_numbers = #tpu.dot_dimension_numbers<[1], [0], [0], [1], [0, 0, 1, 1], [], []>} : vector<10x84xbf16>, vector<84x160xbf16>, vector<10x160xf32> -> vector<10x160xf32>
    %470 = arith.addf %464, %469 : vector<10x160xf32>
    %471 = vector.extract_strided_slice %459 {offsets = [2, 0], sizes = [10, 84], strides = [1, 1]} : vector<14x84xf32> to vector<10x84xf32>
    %472 = arith.truncf %471 : vector<10x84xf32> to vector<10x84xbf16>
    %c2_335 = arith.constant 2 : index
    %c0_336 = arith.constant 0 : index
    %c0_337 = arith.constant 0 : index
    %473 = vector.load %arg5[%c2_335, %c0_336, %c0_337] : memref<5x84x160xbf16, #tpu.memory_space<vmem>>, vector<1x84x160xbf16>
    %474 = vector.shape_cast %473 : vector<1x84x160xbf16> to vector<84x160xbf16>
    %cst_338 = arith.constant dense<0.000000e+00> : vector<10x160xf32>
    %475 = tpu.matmul %472, %474, %cst_338 {dimension_numbers = #tpu.dot_dimension_numbers<[1], [0], [0], [1], [0, 0, 1, 1], [], []>} : vector<10x84xbf16>, vector<84x160xbf16>, vector<10x160xf32> -> vector<10x160xf32>
    %476 = arith.addf %470, %475 : vector<10x160xf32>
    %477 = vector.extract_strided_slice %459 {offsets = [3, 0], sizes = [10, 84], strides = [1, 1]} : vector<14x84xf32> to vector<10x84xf32>
    %478 = arith.truncf %477 : vector<10x84xf32> to vector<10x84xbf16>
    %c3_339 = arith.constant 3 : index
    %c0_340 = arith.constant 0 : index
    %c0_341 = arith.constant 0 : index
    %479 = vector.load %arg5[%c3_339, %c0_340, %c0_341] : memref<5x84x160xbf16, #tpu.memory_space<vmem>>, vector<1x84x160xbf16>
    %480 = vector.shape_cast %479 : vector<1x84x160xbf16> to vector<84x160xbf16>
    %cst_342 = arith.constant dense<0.000000e+00> : vector<10x160xf32>
    %481 = tpu.matmul %478, %480, %cst_342 {dimension_numbers = #tpu.dot_dimension_numbers<[1], [0], [0], [1], [0, 0, 1, 1], [], []>} : vector<10x84xbf16>, vector<84x160xbf16>, vector<10x160xf32> -> vector<10x160xf32>
    %482 = arith.addf %476, %481 : vector<10x160xf32>
    %483 = vector.extract_strided_slice %459 {offsets = [4, 0], sizes = [10, 84], strides = [1, 1]} : vector<14x84xf32> to vector<10x84xf32>
    %484 = arith.truncf %483 : vector<10x84xf32> to vector<10x84xbf16>
    %c4_343 = arith.constant 4 : index
    %c0_344 = arith.constant 0 : index
    %c0_345 = arith.constant 0 : index
    %485 = vector.load %arg5[%c4_343, %c0_344, %c0_345] : memref<5x84x160xbf16, #tpu.memory_space<vmem>>, vector<1x84x160xbf16>
    %486 = vector.shape_cast %485 : vector<1x84x160xbf16> to vector<84x160xbf16>
    %cst_346 = arith.constant dense<0.000000e+00> : vector<10x160xf32>
    %487 = tpu.matmul %484, %486, %cst_346 {dimension_numbers = #tpu.dot_dimension_numbers<[1], [0], [0], [1], [0, 0, 1, 1], [], []>} : vector<10x84xbf16>, vector<84x160xbf16>, vector<10x160xf32> -> vector<10x160xf32>
    %488 = arith.addf %482, %487 : vector<10x160xf32>
    %489 = vector.broadcast %1 : vector<1x160xf32> to vector<10x160xf32>
    %490 = arith.addf %488, %489 : vector<10x160xf32>
    %cst_347 = arith.constant 0.000000e+00 : f32
    %491 = vector.broadcast %cst_347 : f32 to vector<10x160xf32>
    %492 = arith.cmpf oge, %490, %491 : vector<10x160xf32>
    %cst_348 = arith.constant 0.00999999977 : f32
    %493 = vector.broadcast %cst_348 : f32 to vector<10x160xf32>
    %494 = arith.mulf %493, %490 : vector<10x160xf32>
    %495 = arith.select %492, %490, %494 : vector<10x160xi1>, vector<10x160xf32>
    %496 = vector.extract_strided_slice %495 {offsets = [0, 0], sizes = [10, 144], strides = [1, 1]} : vector<10x160xf32> to vector<10x144xf32>
    %497 = vector.extract_strided_slice %495 {offsets = [0, 16], sizes = [10, 144], strides = [1, 1]} : vector<10x160xf32> to vector<10x144xf32>
    %498 = arith.maximumf %496, %497 : vector<10x144xf32>
    %499 = arith.truncf %498 : vector<10x144xf32> to vector<10x144xbf16>
    %c0_349 = arith.constant 0 : index
    %c0_350 = arith.constant 0 : index
    %500 = vector.load %arg6[%c0_349, %c0_350] : memref<144x80xbf16, #tpu.memory_space<vmem>>, vector<144x80xbf16>
    %cst_351 = arith.constant dense<0.000000e+00> : vector<10x80xf32>
    %501 = tpu.matmul %499, %500, %cst_351 {dimension_numbers = #tpu.dot_dimension_numbers<[1], [0], [0], [1], [0, 0, 1, 1], [], []>} : vector<10x144xbf16>, vector<144x80xbf16>, vector<10x80xf32> -> vector<10x80xf32>
    %502 = vector.extract_strided_slice %501 {offsets = [0, 0], sizes = [9, 80], strides = [1, 1]} : vector<10x80xf32> to vector<9x80xf32>
    %503 = vector.extract_strided_slice %501 {offsets = [1, 0], sizes = [9, 80], strides = [1, 1]} : vector<10x80xf32> to vector<9x80xf32>
    %504 = arith.maximumf %502, %503 : vector<9x80xf32>
    %c0_352 = arith.constant 0 : index
    %c0_353 = arith.constant 0 : index
    %505 = vector.load %arg7[%c0_352, %c0_353] : memref<5x9xbf16, #tpu.memory_space<vmem>>, vector<5x9xbf16>
    %506 = arith.truncf %504 : vector<9x80xf32> to vector<9x80xbf16>
    %cst_354 = arith.constant dense<0.000000e+00> : vector<5x80xf32>
    %507 = tpu.matmul %505, %506, %cst_354 {dimension_numbers = #tpu.dot_dimension_numbers<[1], [0], [0], [1], [0, 0, 1, 1], [], []>} : vector<5x9xbf16>, vector<9x80xbf16>, vector<5x80xf32> -> vector<5x80xf32>
    %c5 = arith.constant 5 : index
    %c0_355 = arith.constant 0 : index
    %c0_356 = arith.constant 0 : index
    %508 = vector.load %arg1[%c5, %c0_355, %c0_356] : memref<8x32x32xf32, #tpu.memory_space<vmem>>, vector<1x28x32xf32>
    %509 = vector.shape_cast %508 : vector<1x28x32xf32> to vector<28x32xf32>
    %510 = arith.truncf %509 : vector<28x32xf32> to vector<28x32xbf16>
    %c0_357 = arith.constant 0 : index
    %c0_358 = arith.constant 0 : index
    %c0_359 = arith.constant 0 : index
    %511 = vector.load %arg2[%c0_357, %c0_358, %c0_359] : memref<5x32x168xbf16, #tpu.memory_space<vmem>>, vector<1x32x168xbf16>
    %512 = vector.shape_cast %511 : vector<1x32x168xbf16> to vector<32x168xbf16>
    %cst_360 = arith.constant dense<0.000000e+00> : vector<28x168xf32>
    %513 = tpu.matmul %510, %512, %cst_360 {dimension_numbers = #tpu.dot_dimension_numbers<[1], [0], [0], [1], [0, 0, 1, 1], [], []>} : vector<28x32xbf16>, vector<32x168xbf16>, vector<28x168xf32> -> vector<28x168xf32>
    %c5_361 = arith.constant 5 : index
    %c1_362 = arith.constant 1 : index
    %c0_363 = arith.constant 0 : index
    %514 = vector.load %arg1[%c5_361, %c1_362, %c0_363] : memref<8x32x32xf32, #tpu.memory_space<vmem>>, vector<1x28x32xf32>
    %515 = vector.shape_cast %514 : vector<1x28x32xf32> to vector<28x32xf32>
    %516 = arith.truncf %515 : vector<28x32xf32> to vector<28x32xbf16>
    %c1_364 = arith.constant 1 : index
    %c0_365 = arith.constant 0 : index
    %c0_366 = arith.constant 0 : index
    %517 = vector.load %arg2[%c1_364, %c0_365, %c0_366] : memref<5x32x168xbf16, #tpu.memory_space<vmem>>, vector<1x32x168xbf16>
    %518 = vector.shape_cast %517 : vector<1x32x168xbf16> to vector<32x168xbf16>
    %cst_367 = arith.constant dense<0.000000e+00> : vector<28x168xf32>
    %519 = tpu.matmul %516, %518, %cst_367 {dimension_numbers = #tpu.dot_dimension_numbers<[1], [0], [0], [1], [0, 0, 1, 1], [], []>} : vector<28x32xbf16>, vector<32x168xbf16>, vector<28x168xf32> -> vector<28x168xf32>
    %520 = arith.addf %513, %519 : vector<28x168xf32>
    %c5_368 = arith.constant 5 : index
    %c2_369 = arith.constant 2 : index
    %c0_370 = arith.constant 0 : index
    %521 = vector.load %arg1[%c5_368, %c2_369, %c0_370] : memref<8x32x32xf32, #tpu.memory_space<vmem>>, vector<1x28x32xf32>
    %522 = vector.shape_cast %521 : vector<1x28x32xf32> to vector<28x32xf32>
    %523 = arith.truncf %522 : vector<28x32xf32> to vector<28x32xbf16>
    %c2_371 = arith.constant 2 : index
    %c0_372 = arith.constant 0 : index
    %c0_373 = arith.constant 0 : index
    %524 = vector.load %arg2[%c2_371, %c0_372, %c0_373] : memref<5x32x168xbf16, #tpu.memory_space<vmem>>, vector<1x32x168xbf16>
    %525 = vector.shape_cast %524 : vector<1x32x168xbf16> to vector<32x168xbf16>
    %cst_374 = arith.constant dense<0.000000e+00> : vector<28x168xf32>
    %526 = tpu.matmul %523, %525, %cst_374 {dimension_numbers = #tpu.dot_dimension_numbers<[1], [0], [0], [1], [0, 0, 1, 1], [], []>} : vector<28x32xbf16>, vector<32x168xbf16>, vector<28x168xf32> -> vector<28x168xf32>
    %527 = arith.addf %520, %526 : vector<28x168xf32>
    %c5_375 = arith.constant 5 : index
    %c3_376 = arith.constant 3 : index
    %c0_377 = arith.constant 0 : index
    %528 = vector.load %arg1[%c5_375, %c3_376, %c0_377] : memref<8x32x32xf32, #tpu.memory_space<vmem>>, vector<1x28x32xf32>
    %529 = vector.shape_cast %528 : vector<1x28x32xf32> to vector<28x32xf32>
    %530 = arith.truncf %529 : vector<28x32xf32> to vector<28x32xbf16>
    %c3_378 = arith.constant 3 : index
    %c0_379 = arith.constant 0 : index
    %c0_380 = arith.constant 0 : index
    %531 = vector.load %arg2[%c3_378, %c0_379, %c0_380] : memref<5x32x168xbf16, #tpu.memory_space<vmem>>, vector<1x32x168xbf16>
    %532 = vector.shape_cast %531 : vector<1x32x168xbf16> to vector<32x168xbf16>
    %cst_381 = arith.constant dense<0.000000e+00> : vector<28x168xf32>
    %533 = tpu.matmul %530, %532, %cst_381 {dimension_numbers = #tpu.dot_dimension_numbers<[1], [0], [0], [1], [0, 0, 1, 1], [], []>} : vector<28x32xbf16>, vector<32x168xbf16>, vector<28x168xf32> -> vector<28x168xf32>
    %534 = arith.addf %527, %533 : vector<28x168xf32>
    %c5_382 = arith.constant 5 : index
    %c4_383 = arith.constant 4 : index
    %c0_384 = arith.constant 0 : index
    %535 = vector.load %arg1[%c5_382, %c4_383, %c0_384] : memref<8x32x32xf32, #tpu.memory_space<vmem>>, vector<1x28x32xf32>
    %536 = vector.shape_cast %535 : vector<1x28x32xf32> to vector<28x32xf32>
    %537 = arith.truncf %536 : vector<28x32xf32> to vector<28x32xbf16>
    %c4_385 = arith.constant 4 : index
    %c0_386 = arith.constant 0 : index
    %c0_387 = arith.constant 0 : index
    %538 = vector.load %arg2[%c4_385, %c0_386, %c0_387] : memref<5x32x168xbf16, #tpu.memory_space<vmem>>, vector<1x32x168xbf16>
    %539 = vector.shape_cast %538 : vector<1x32x168xbf16> to vector<32x168xbf16>
    %cst_388 = arith.constant dense<0.000000e+00> : vector<28x168xf32>
    %540 = tpu.matmul %537, %539, %cst_388 {dimension_numbers = #tpu.dot_dimension_numbers<[1], [0], [0], [1], [0, 0, 1, 1], [], []>} : vector<28x32xbf16>, vector<32x168xbf16>, vector<28x168xf32> -> vector<28x168xf32>
    %541 = arith.addf %534, %540 : vector<28x168xf32>
    %542 = vector.broadcast %0 : vector<1x168xf32> to vector<28x168xf32>
    %543 = arith.addf %541, %542 : vector<28x168xf32>
    %cst_389 = arith.constant 0.000000e+00 : f32
    %544 = vector.broadcast %cst_389 : f32 to vector<28x168xf32>
    %545 = arith.cmpf oge, %543, %544 : vector<28x168xf32>
    %cst_390 = arith.constant 0.00999999977 : f32
    %546 = vector.broadcast %cst_390 : f32 to vector<28x168xf32>
    %547 = arith.mulf %546, %543 : vector<28x168xf32>
    %548 = arith.select %545, %543, %547 : vector<28x168xi1>, vector<28x168xf32>
    %549 = vector.extract_strided_slice %548 {offsets = [0, 0], sizes = [28, 162], strides = [1, 1]} : vector<28x168xf32> to vector<28x162xf32>
    %550 = vector.extract_strided_slice %548 {offsets = [0, 6], sizes = [28, 162], strides = [1, 1]} : vector<28x168xf32> to vector<28x162xf32>
    %551 = arith.maximumf %549, %550 : vector<28x162xf32>
    %552 = arith.truncf %551 : vector<28x162xf32> to vector<28x162xbf16>
    %c0_391 = arith.constant 0 : index
    %c0_392 = arith.constant 0 : index
    %553 = vector.load %arg3[%c0_391, %c0_392] : memref<162x84xbf16, #tpu.memory_space<vmem>>, vector<162x84xbf16>
    %cst_393 = arith.constant dense<0.000000e+00> : vector<28x84xf32>
    %554 = tpu.matmul %552, %553, %cst_393 {dimension_numbers = #tpu.dot_dimension_numbers<[1], [0], [0], [1], [0, 0, 1, 1], [], []>} : vector<28x162xbf16>, vector<162x84xbf16>, vector<28x84xf32> -> vector<28x84xf32>
    %555 = vector.extract_strided_slice %554 {offsets = [0, 0], sizes = [27, 84], strides = [1, 1]} : vector<28x84xf32> to vector<27x84xf32>
    %556 = vector.extract_strided_slice %554 {offsets = [1, 0], sizes = [27, 84], strides = [1, 1]} : vector<28x84xf32> to vector<27x84xf32>
    %557 = arith.maximumf %555, %556 : vector<27x84xf32>
    %c0_394 = arith.constant 0 : index
    %c0_395 = arith.constant 0 : index
    %558 = vector.load %arg4[%c0_394, %c0_395] : memref<14x27xbf16, #tpu.memory_space<vmem>>, vector<14x27xbf16>
    %559 = arith.truncf %557 : vector<27x84xf32> to vector<27x84xbf16>
    %cst_396 = arith.constant dense<0.000000e+00> : vector<14x84xf32>
    %560 = tpu.matmul %558, %559, %cst_396 {dimension_numbers = #tpu.dot_dimension_numbers<[1], [0], [0], [1], [0, 0, 1, 1], [], []>} : vector<14x27xbf16>, vector<27x84xbf16>, vector<14x84xf32> -> vector<14x84xf32>
    %561 = vector.extract_strided_slice %560 {offsets = [0, 0], sizes = [10, 84], strides = [1, 1]} : vector<14x84xf32> to vector<10x84xf32>
    %562 = arith.truncf %561 : vector<10x84xf32> to vector<10x84xbf16>
    %c0_397 = arith.constant 0 : index
    %c0_398 = arith.constant 0 : index
    %c0_399 = arith.constant 0 : index
    %563 = vector.load %arg5[%c0_397, %c0_398, %c0_399] : memref<5x84x160xbf16, #tpu.memory_space<vmem>>, vector<1x84x160xbf16>
    %564 = vector.shape_cast %563 : vector<1x84x160xbf16> to vector<84x160xbf16>
    %cst_400 = arith.constant dense<0.000000e+00> : vector<10x160xf32>
    %565 = tpu.matmul %562, %564, %cst_400 {dimension_numbers = #tpu.dot_dimension_numbers<[1], [0], [0], [1], [0, 0, 1, 1], [], []>} : vector<10x84xbf16>, vector<84x160xbf16>, vector<10x160xf32> -> vector<10x160xf32>
    %566 = vector.extract_strided_slice %560 {offsets = [1, 0], sizes = [10, 84], strides = [1, 1]} : vector<14x84xf32> to vector<10x84xf32>
    %567 = arith.truncf %566 : vector<10x84xf32> to vector<10x84xbf16>
    %c1_401 = arith.constant 1 : index
    %c0_402 = arith.constant 0 : index
    %c0_403 = arith.constant 0 : index
    %568 = vector.load %arg5[%c1_401, %c0_402, %c0_403] : memref<5x84x160xbf16, #tpu.memory_space<vmem>>, vector<1x84x160xbf16>
    %569 = vector.shape_cast %568 : vector<1x84x160xbf16> to vector<84x160xbf16>
    %cst_404 = arith.constant dense<0.000000e+00> : vector<10x160xf32>
    %570 = tpu.matmul %567, %569, %cst_404 {dimension_numbers = #tpu.dot_dimension_numbers<[1], [0], [0], [1], [0, 0, 1, 1], [], []>} : vector<10x84xbf16>, vector<84x160xbf16>, vector<10x160xf32> -> vector<10x160xf32>
    %571 = arith.addf %565, %570 : vector<10x160xf32>
    %572 = vector.extract_strided_slice %560 {offsets = [2, 0], sizes = [10, 84], strides = [1, 1]} : vector<14x84xf32> to vector<10x84xf32>
    %573 = arith.truncf %572 : vector<10x84xf32> to vector<10x84xbf16>
    %c2_405 = arith.constant 2 : index
    %c0_406 = arith.constant 0 : index
    %c0_407 = arith.constant 0 : index
    %574 = vector.load %arg5[%c2_405, %c0_406, %c0_407] : memref<5x84x160xbf16, #tpu.memory_space<vmem>>, vector<1x84x160xbf16>
    %575 = vector.shape_cast %574 : vector<1x84x160xbf16> to vector<84x160xbf16>
    %cst_408 = arith.constant dense<0.000000e+00> : vector<10x160xf32>
    %576 = tpu.matmul %573, %575, %cst_408 {dimension_numbers = #tpu.dot_dimension_numbers<[1], [0], [0], [1], [0, 0, 1, 1], [], []>} : vector<10x84xbf16>, vector<84x160xbf16>, vector<10x160xf32> -> vector<10x160xf32>
    %577 = arith.addf %571, %576 : vector<10x160xf32>
    %578 = vector.extract_strided_slice %560 {offsets = [3, 0], sizes = [10, 84], strides = [1, 1]} : vector<14x84xf32> to vector<10x84xf32>
    %579 = arith.truncf %578 : vector<10x84xf32> to vector<10x84xbf16>
    %c3_409 = arith.constant 3 : index
    %c0_410 = arith.constant 0 : index
    %c0_411 = arith.constant 0 : index
    %580 = vector.load %arg5[%c3_409, %c0_410, %c0_411] : memref<5x84x160xbf16, #tpu.memory_space<vmem>>, vector<1x84x160xbf16>
    %581 = vector.shape_cast %580 : vector<1x84x160xbf16> to vector<84x160xbf16>
    %cst_412 = arith.constant dense<0.000000e+00> : vector<10x160xf32>
    %582 = tpu.matmul %579, %581, %cst_412 {dimension_numbers = #tpu.dot_dimension_numbers<[1], [0], [0], [1], [0, 0, 1, 1], [], []>} : vector<10x84xbf16>, vector<84x160xbf16>, vector<10x160xf32> -> vector<10x160xf32>
    %583 = arith.addf %577, %582 : vector<10x160xf32>
    %584 = vector.extract_strided_slice %560 {offsets = [4, 0], sizes = [10, 84], strides = [1, 1]} : vector<14x84xf32> to vector<10x84xf32>
    %585 = arith.truncf %584 : vector<10x84xf32> to vector<10x84xbf16>
    %c4_413 = arith.constant 4 : index
    %c0_414 = arith.constant 0 : index
    %c0_415 = arith.constant 0 : index
    %586 = vector.load %arg5[%c4_413, %c0_414, %c0_415] : memref<5x84x160xbf16, #tpu.memory_space<vmem>>, vector<1x84x160xbf16>
    %587 = vector.shape_cast %586 : vector<1x84x160xbf16> to vector<84x160xbf16>
    %cst_416 = arith.constant dense<0.000000e+00> : vector<10x160xf32>
    %588 = tpu.matmul %585, %587, %cst_416 {dimension_numbers = #tpu.dot_dimension_numbers<[1], [0], [0], [1], [0, 0, 1, 1], [], []>} : vector<10x84xbf16>, vector<84x160xbf16>, vector<10x160xf32> -> vector<10x160xf32>
    %589 = arith.addf %583, %588 : vector<10x160xf32>
    %590 = vector.broadcast %1 : vector<1x160xf32> to vector<10x160xf32>
    %591 = arith.addf %589, %590 : vector<10x160xf32>
    %cst_417 = arith.constant 0.000000e+00 : f32
    %592 = vector.broadcast %cst_417 : f32 to vector<10x160xf32>
    %593 = arith.cmpf oge, %591, %592 : vector<10x160xf32>
    %cst_418 = arith.constant 0.00999999977 : f32
    %594 = vector.broadcast %cst_418 : f32 to vector<10x160xf32>
    %595 = arith.mulf %594, %591 : vector<10x160xf32>
    %596 = arith.select %593, %591, %595 : vector<10x160xi1>, vector<10x160xf32>
    %597 = vector.extract_strided_slice %596 {offsets = [0, 0], sizes = [10, 144], strides = [1, 1]} : vector<10x160xf32> to vector<10x144xf32>
    %598 = vector.extract_strided_slice %596 {offsets = [0, 16], sizes = [10, 144], strides = [1, 1]} : vector<10x160xf32> to vector<10x144xf32>
    %599 = arith.maximumf %597, %598 : vector<10x144xf32>
    %600 = arith.truncf %599 : vector<10x144xf32> to vector<10x144xbf16>
    %c0_419 = arith.constant 0 : index
    %c0_420 = arith.constant 0 : index
    %601 = vector.load %arg6[%c0_419, %c0_420] : memref<144x80xbf16, #tpu.memory_space<vmem>>, vector<144x80xbf16>
    %cst_421 = arith.constant dense<0.000000e+00> : vector<10x80xf32>
    %602 = tpu.matmul %600, %601, %cst_421 {dimension_numbers = #tpu.dot_dimension_numbers<[1], [0], [0], [1], [0, 0, 1, 1], [], []>} : vector<10x144xbf16>, vector<144x80xbf16>, vector<10x80xf32> -> vector<10x80xf32>
    %603 = vector.extract_strided_slice %602 {offsets = [0, 0], sizes = [9, 80], strides = [1, 1]} : vector<10x80xf32> to vector<9x80xf32>
    %604 = vector.extract_strided_slice %602 {offsets = [1, 0], sizes = [9, 80], strides = [1, 1]} : vector<10x80xf32> to vector<9x80xf32>
    %605 = arith.maximumf %603, %604 : vector<9x80xf32>
    %c0_422 = arith.constant 0 : index
    %c0_423 = arith.constant 0 : index
    %606 = vector.load %arg7[%c0_422, %c0_423] : memref<5x9xbf16, #tpu.memory_space<vmem>>, vector<5x9xbf16>
    %607 = arith.truncf %605 : vector<9x80xf32> to vector<9x80xbf16>
    %cst_424 = arith.constant dense<0.000000e+00> : vector<5x80xf32>
    %608 = tpu.matmul %606, %607, %cst_424 {dimension_numbers = #tpu.dot_dimension_numbers<[1], [0], [0], [1], [0, 0, 1, 1], [], []>} : vector<5x9xbf16>, vector<9x80xbf16>, vector<5x80xf32> -> vector<5x80xf32>
    %c6 = arith.constant 6 : index
    %c0_425 = arith.constant 0 : index
    %c0_426 = arith.constant 0 : index
    %609 = vector.load %arg1[%c6, %c0_425, %c0_426] : memref<8x32x32xf32, #tpu.memory_space<vmem>>, vector<1x28x32xf32>
    %610 = vector.shape_cast %609 : vector<1x28x32xf32> to vector<28x32xf32>
    %611 = arith.truncf %610 : vector<28x32xf32> to vector<28x32xbf16>
    %c0_427 = arith.constant 0 : index
    %c0_428 = arith.constant 0 : index
    %c0_429 = arith.constant 0 : index
    %612 = vector.load %arg2[%c0_427, %c0_428, %c0_429] : memref<5x32x168xbf16, #tpu.memory_space<vmem>>, vector<1x32x168xbf16>
    %613 = vector.shape_cast %612 : vector<1x32x168xbf16> to vector<32x168xbf16>
    %cst_430 = arith.constant dense<0.000000e+00> : vector<28x168xf32>
    %614 = tpu.matmul %611, %613, %cst_430 {dimension_numbers = #tpu.dot_dimension_numbers<[1], [0], [0], [1], [0, 0, 1, 1], [], []>} : vector<28x32xbf16>, vector<32x168xbf16>, vector<28x168xf32> -> vector<28x168xf32>
    %c6_431 = arith.constant 6 : index
    %c1_432 = arith.constant 1 : index
    %c0_433 = arith.constant 0 : index
    %615 = vector.load %arg1[%c6_431, %c1_432, %c0_433] : memref<8x32x32xf32, #tpu.memory_space<vmem>>, vector<1x28x32xf32>
    %616 = vector.shape_cast %615 : vector<1x28x32xf32> to vector<28x32xf32>
    %617 = arith.truncf %616 : vector<28x32xf32> to vector<28x32xbf16>
    %c1_434 = arith.constant 1 : index
    %c0_435 = arith.constant 0 : index
    %c0_436 = arith.constant 0 : index
    %618 = vector.load %arg2[%c1_434, %c0_435, %c0_436] : memref<5x32x168xbf16, #tpu.memory_space<vmem>>, vector<1x32x168xbf16>
    %619 = vector.shape_cast %618 : vector<1x32x168xbf16> to vector<32x168xbf16>
    %cst_437 = arith.constant dense<0.000000e+00> : vector<28x168xf32>
    %620 = tpu.matmul %617, %619, %cst_437 {dimension_numbers = #tpu.dot_dimension_numbers<[1], [0], [0], [1], [0, 0, 1, 1], [], []>} : vector<28x32xbf16>, vector<32x168xbf16>, vector<28x168xf32> -> vector<28x168xf32>
    %621 = arith.addf %614, %620 : vector<28x168xf32>
    %c6_438 = arith.constant 6 : index
    %c2_439 = arith.constant 2 : index
    %c0_440 = arith.constant 0 : index
    %622 = vector.load %arg1[%c6_438, %c2_439, %c0_440] : memref<8x32x32xf32, #tpu.memory_space<vmem>>, vector<1x28x32xf32>
    %623 = vector.shape_cast %622 : vector<1x28x32xf32> to vector<28x32xf32>
    %624 = arith.truncf %623 : vector<28x32xf32> to vector<28x32xbf16>
    %c2_441 = arith.constant 2 : index
    %c0_442 = arith.constant 0 : index
    %c0_443 = arith.constant 0 : index
    %625 = vector.load %arg2[%c2_441, %c0_442, %c0_443] : memref<5x32x168xbf16, #tpu.memory_space<vmem>>, vector<1x32x168xbf16>
    %626 = vector.shape_cast %625 : vector<1x32x168xbf16> to vector<32x168xbf16>
    %cst_444 = arith.constant dense<0.000000e+00> : vector<28x168xf32>
    %627 = tpu.matmul %624, %626, %cst_444 {dimension_numbers = #tpu.dot_dimension_numbers<[1], [0], [0], [1], [0, 0, 1, 1], [], []>} : vector<28x32xbf16>, vector<32x168xbf16>, vector<28x168xf32> -> vector<28x168xf32>
    %628 = arith.addf %621, %627 : vector<28x168xf32>
    %c6_445 = arith.constant 6 : index
    %c3_446 = arith.constant 3 : index
    %c0_447 = arith.constant 0 : index
    %629 = vector.load %arg1[%c6_445, %c3_446, %c0_447] : memref<8x32x32xf32, #tpu.memory_space<vmem>>, vector<1x28x32xf32>
    %630 = vector.shape_cast %629 : vector<1x28x32xf32> to vector<28x32xf32>
    %631 = arith.truncf %630 : vector<28x32xf32> to vector<28x32xbf16>
    %c3_448 = arith.constant 3 : index
    %c0_449 = arith.constant 0 : index
    %c0_450 = arith.constant 0 : index
    %632 = vector.load %arg2[%c3_448, %c0_449, %c0_450] : memref<5x32x168xbf16, #tpu.memory_space<vmem>>, vector<1x32x168xbf16>
    %633 = vector.shape_cast %632 : vector<1x32x168xbf16> to vector<32x168xbf16>
    %cst_451 = arith.constant dense<0.000000e+00> : vector<28x168xf32>
    %634 = tpu.matmul %631, %633, %cst_451 {dimension_numbers = #tpu.dot_dimension_numbers<[1], [0], [0], [1], [0, 0, 1, 1], [], []>} : vector<28x32xbf16>, vector<32x168xbf16>, vector<28x168xf32> -> vector<28x168xf32>
    %635 = arith.addf %628, %634 : vector<28x168xf32>
    %c6_452 = arith.constant 6 : index
    %c4_453 = arith.constant 4 : index
    %c0_454 = arith.constant 0 : index
    %636 = vector.load %arg1[%c6_452, %c4_453, %c0_454] : memref<8x32x32xf32, #tpu.memory_space<vmem>>, vector<1x28x32xf32>
    %637 = vector.shape_cast %636 : vector<1x28x32xf32> to vector<28x32xf32>
    %638 = arith.truncf %637 : vector<28x32xf32> to vector<28x32xbf16>
    %c4_455 = arith.constant 4 : index
    %c0_456 = arith.constant 0 : index
    %c0_457 = arith.constant 0 : index
    %639 = vector.load %arg2[%c4_455, %c0_456, %c0_457] : memref<5x32x168xbf16, #tpu.memory_space<vmem>>, vector<1x32x168xbf16>
    %640 = vector.shape_cast %639 : vector<1x32x168xbf16> to vector<32x168xbf16>
    %cst_458 = arith.constant dense<0.000000e+00> : vector<28x168xf32>
    %641 = tpu.matmul %638, %640, %cst_458 {dimension_numbers = #tpu.dot_dimension_numbers<[1], [0], [0], [1], [0, 0, 1, 1], [], []>} : vector<28x32xbf16>, vector<32x168xbf16>, vector<28x168xf32> -> vector<28x168xf32>
    %642 = arith.addf %635, %641 : vector<28x168xf32>
    %643 = vector.broadcast %0 : vector<1x168xf32> to vector<28x168xf32>
    %644 = arith.addf %642, %643 : vector<28x168xf32>
    %cst_459 = arith.constant 0.000000e+00 : f32
    %645 = vector.broadcast %cst_459 : f32 to vector<28x168xf32>
    %646 = arith.cmpf oge, %644, %645 : vector<28x168xf32>
    %cst_460 = arith.constant 0.00999999977 : f32
    %647 = vector.broadcast %cst_460 : f32 to vector<28x168xf32>
    %648 = arith.mulf %647, %644 : vector<28x168xf32>
    %649 = arith.select %646, %644, %648 : vector<28x168xi1>, vector<28x168xf32>
    %650 = vector.extract_strided_slice %649 {offsets = [0, 0], sizes = [28, 162], strides = [1, 1]} : vector<28x168xf32> to vector<28x162xf32>
    %651 = vector.extract_strided_slice %649 {offsets = [0, 6], sizes = [28, 162], strides = [1, 1]} : vector<28x168xf32> to vector<28x162xf32>
    %652 = arith.maximumf %650, %651 : vector<28x162xf32>
    %653 = arith.truncf %652 : vector<28x162xf32> to vector<28x162xbf16>
    %c0_461 = arith.constant 0 : index
    %c0_462 = arith.constant 0 : index
    %654 = vector.load %arg3[%c0_461, %c0_462] : memref<162x84xbf16, #tpu.memory_space<vmem>>, vector<162x84xbf16>
    %cst_463 = arith.constant dense<0.000000e+00> : vector<28x84xf32>
    %655 = tpu.matmul %653, %654, %cst_463 {dimension_numbers = #tpu.dot_dimension_numbers<[1], [0], [0], [1], [0, 0, 1, 1], [], []>} : vector<28x162xbf16>, vector<162x84xbf16>, vector<28x84xf32> -> vector<28x84xf32>
    %656 = vector.extract_strided_slice %655 {offsets = [0, 0], sizes = [27, 84], strides = [1, 1]} : vector<28x84xf32> to vector<27x84xf32>
    %657 = vector.extract_strided_slice %655 {offsets = [1, 0], sizes = [27, 84], strides = [1, 1]} : vector<28x84xf32> to vector<27x84xf32>
    %658 = arith.maximumf %656, %657 : vector<27x84xf32>
    %c0_464 = arith.constant 0 : index
    %c0_465 = arith.constant 0 : index
    %659 = vector.load %arg4[%c0_464, %c0_465] : memref<14x27xbf16, #tpu.memory_space<vmem>>, vector<14x27xbf16>
    %660 = arith.truncf %658 : vector<27x84xf32> to vector<27x84xbf16>
    %cst_466 = arith.constant dense<0.000000e+00> : vector<14x84xf32>
    %661 = tpu.matmul %659, %660, %cst_466 {dimension_numbers = #tpu.dot_dimension_numbers<[1], [0], [0], [1], [0, 0, 1, 1], [], []>} : vector<14x27xbf16>, vector<27x84xbf16>, vector<14x84xf32> -> vector<14x84xf32>
    %662 = vector.extract_strided_slice %661 {offsets = [0, 0], sizes = [10, 84], strides = [1, 1]} : vector<14x84xf32> to vector<10x84xf32>
    %663 = arith.truncf %662 : vector<10x84xf32> to vector<10x84xbf16>
    %c0_467 = arith.constant 0 : index
    %c0_468 = arith.constant 0 : index
    %c0_469 = arith.constant 0 : index
    %664 = vector.load %arg5[%c0_467, %c0_468, %c0_469] : memref<5x84x160xbf16, #tpu.memory_space<vmem>>, vector<1x84x160xbf16>
    %665 = vector.shape_cast %664 : vector<1x84x160xbf16> to vector<84x160xbf16>
    %cst_470 = arith.constant dense<0.000000e+00> : vector<10x160xf32>
    %666 = tpu.matmul %663, %665, %cst_470 {dimension_numbers = #tpu.dot_dimension_numbers<[1], [0], [0], [1], [0, 0, 1, 1], [], []>} : vector<10x84xbf16>, vector<84x160xbf16>, vector<10x160xf32> -> vector<10x160xf32>
    %667 = vector.extract_strided_slice %661 {offsets = [1, 0], sizes = [10, 84], strides = [1, 1]} : vector<14x84xf32> to vector<10x84xf32>
    %668 = arith.truncf %667 : vector<10x84xf32> to vector<10x84xbf16>
    %c1_471 = arith.constant 1 : index
    %c0_472 = arith.constant 0 : index
    %c0_473 = arith.constant 0 : index
    %669 = vector.load %arg5[%c1_471, %c0_472, %c0_473] : memref<5x84x160xbf16, #tpu.memory_space<vmem>>, vector<1x84x160xbf16>
    %670 = vector.shape_cast %669 : vector<1x84x160xbf16> to vector<84x160xbf16>
    %cst_474 = arith.constant dense<0.000000e+00> : vector<10x160xf32>
    %671 = tpu.matmul %668, %670, %cst_474 {dimension_numbers = #tpu.dot_dimension_numbers<[1], [0], [0], [1], [0, 0, 1, 1], [], []>} : vector<10x84xbf16>, vector<84x160xbf16>, vector<10x160xf32> -> vector<10x160xf32>
    %672 = arith.addf %666, %671 : vector<10x160xf32>
    %673 = vector.extract_strided_slice %661 {offsets = [2, 0], sizes = [10, 84], strides = [1, 1]} : vector<14x84xf32> to vector<10x84xf32>
    %674 = arith.truncf %673 : vector<10x84xf32> to vector<10x84xbf16>
    %c2_475 = arith.constant 2 : index
    %c0_476 = arith.constant 0 : index
    %c0_477 = arith.constant 0 : index
    %675 = vector.load %arg5[%c2_475, %c0_476, %c0_477] : memref<5x84x160xbf16, #tpu.memory_space<vmem>>, vector<1x84x160xbf16>
    %676 = vector.shape_cast %675 : vector<1x84x160xbf16> to vector<84x160xbf16>
    %cst_478 = arith.constant dense<0.000000e+00> : vector<10x160xf32>
    %677 = tpu.matmul %674, %676, %cst_478 {dimension_numbers = #tpu.dot_dimension_numbers<[1], [0], [0], [1], [0, 0, 1, 1], [], []>} : vector<10x84xbf16>, vector<84x160xbf16>, vector<10x160xf32> -> vector<10x160xf32>
    %678 = arith.addf %672, %677 : vector<10x160xf32>
    %679 = vector.extract_strided_slice %661 {offsets = [3, 0], sizes = [10, 84], strides = [1, 1]} : vector<14x84xf32> to vector<10x84xf32>
    %680 = arith.truncf %679 : vector<10x84xf32> to vector<10x84xbf16>
    %c3_479 = arith.constant 3 : index
    %c0_480 = arith.constant 0 : index
    %c0_481 = arith.constant 0 : index
    %681 = vector.load %arg5[%c3_479, %c0_480, %c0_481] : memref<5x84x160xbf16, #tpu.memory_space<vmem>>, vector<1x84x160xbf16>
    %682 = vector.shape_cast %681 : vector<1x84x160xbf16> to vector<84x160xbf16>
    %cst_482 = arith.constant dense<0.000000e+00> : vector<10x160xf32>
    %683 = tpu.matmul %680, %682, %cst_482 {dimension_numbers = #tpu.dot_dimension_numbers<[1], [0], [0], [1], [0, 0, 1, 1], [], []>} : vector<10x84xbf16>, vector<84x160xbf16>, vector<10x160xf32> -> vector<10x160xf32>
    %684 = arith.addf %678, %683 : vector<10x160xf32>
    %685 = vector.extract_strided_slice %661 {offsets = [4, 0], sizes = [10, 84], strides = [1, 1]} : vector<14x84xf32> to vector<10x84xf32>
    %686 = arith.truncf %685 : vector<10x84xf32> to vector<10x84xbf16>
    %c4_483 = arith.constant 4 : index
    %c0_484 = arith.constant 0 : index
    %c0_485 = arith.constant 0 : index
    %687 = vector.load %arg5[%c4_483, %c0_484, %c0_485] : memref<5x84x160xbf16, #tpu.memory_space<vmem>>, vector<1x84x160xbf16>
    %688 = vector.shape_cast %687 : vector<1x84x160xbf16> to vector<84x160xbf16>
    %cst_486 = arith.constant dense<0.000000e+00> : vector<10x160xf32>
    %689 = tpu.matmul %686, %688, %cst_486 {dimension_numbers = #tpu.dot_dimension_numbers<[1], [0], [0], [1], [0, 0, 1, 1], [], []>} : vector<10x84xbf16>, vector<84x160xbf16>, vector<10x160xf32> -> vector<10x160xf32>
    %690 = arith.addf %684, %689 : vector<10x160xf32>
    %691 = vector.broadcast %1 : vector<1x160xf32> to vector<10x160xf32>
    %692 = arith.addf %690, %691 : vector<10x160xf32>
    %cst_487 = arith.constant 0.000000e+00 : f32
    %693 = vector.broadcast %cst_487 : f32 to vector<10x160xf32>
    %694 = arith.cmpf oge, %692, %693 : vector<10x160xf32>
    %cst_488 = arith.constant 0.00999999977 : f32
    %695 = vector.broadcast %cst_488 : f32 to vector<10x160xf32>
    %696 = arith.mulf %695, %692 : vector<10x160xf32>
    %697 = arith.select %694, %692, %696 : vector<10x160xi1>, vector<10x160xf32>
    %698 = vector.extract_strided_slice %697 {offsets = [0, 0], sizes = [10, 144], strides = [1, 1]} : vector<10x160xf32> to vector<10x144xf32>
    %699 = vector.extract_strided_slice %697 {offsets = [0, 16], sizes = [10, 144], strides = [1, 1]} : vector<10x160xf32> to vector<10x144xf32>
    %700 = arith.maximumf %698, %699 : vector<10x144xf32>
    %701 = arith.truncf %700 : vector<10x144xf32> to vector<10x144xbf16>
    %c0_489 = arith.constant 0 : index
    %c0_490 = arith.constant 0 : index
    %702 = vector.load %arg6[%c0_489, %c0_490] : memref<144x80xbf16, #tpu.memory_space<vmem>>, vector<144x80xbf16>
    %cst_491 = arith.constant dense<0.000000e+00> : vector<10x80xf32>
    %703 = tpu.matmul %701, %702, %cst_491 {dimension_numbers = #tpu.dot_dimension_numbers<[1], [0], [0], [1], [0, 0, 1, 1], [], []>} : vector<10x144xbf16>, vector<144x80xbf16>, vector<10x80xf32> -> vector<10x80xf32>
    %704 = vector.extract_strided_slice %703 {offsets = [0, 0], sizes = [9, 80], strides = [1, 1]} : vector<10x80xf32> to vector<9x80xf32>
    %705 = vector.extract_strided_slice %703 {offsets = [1, 0], sizes = [9, 80], strides = [1, 1]} : vector<10x80xf32> to vector<9x80xf32>
    %706 = arith.maximumf %704, %705 : vector<9x80xf32>
    %c0_492 = arith.constant 0 : index
    %c0_493 = arith.constant 0 : index
    %707 = vector.load %arg7[%c0_492, %c0_493] : memref<5x9xbf16, #tpu.memory_space<vmem>>, vector<5x9xbf16>
    %708 = arith.truncf %706 : vector<9x80xf32> to vector<9x80xbf16>
    %cst_494 = arith.constant dense<0.000000e+00> : vector<5x80xf32>
    %709 = tpu.matmul %707, %708, %cst_494 {dimension_numbers = #tpu.dot_dimension_numbers<[1], [0], [0], [1], [0, 0, 1, 1], [], []>} : vector<5x9xbf16>, vector<9x80xbf16>, vector<5x80xf32> -> vector<5x80xf32>
    %c7 = arith.constant 7 : index
    %c0_495 = arith.constant 0 : index
    %c0_496 = arith.constant 0 : index
    %710 = vector.load %arg1[%c7, %c0_495, %c0_496] : memref<8x32x32xf32, #tpu.memory_space<vmem>>, vector<1x28x32xf32>
    %711 = vector.shape_cast %710 : vector<1x28x32xf32> to vector<28x32xf32>
    %712 = arith.truncf %711 : vector<28x32xf32> to vector<28x32xbf16>
    %c0_497 = arith.constant 0 : index
    %c0_498 = arith.constant 0 : index
    %c0_499 = arith.constant 0 : index
    %713 = vector.load %arg2[%c0_497, %c0_498, %c0_499] : memref<5x32x168xbf16, #tpu.memory_space<vmem>>, vector<1x32x168xbf16>
    %714 = vector.shape_cast %713 : vector<1x32x168xbf16> to vector<32x168xbf16>
    %cst_500 = arith.constant dense<0.000000e+00> : vector<28x168xf32>
    %715 = tpu.matmul %712, %714, %cst_500 {dimension_numbers = #tpu.dot_dimension_numbers<[1], [0], [0], [1], [0, 0, 1, 1], [], []>} : vector<28x32xbf16>, vector<32x168xbf16>, vector<28x168xf32> -> vector<28x168xf32>
    %c7_501 = arith.constant 7 : index
    %c1_502 = arith.constant 1 : index
    %c0_503 = arith.constant 0 : index
    %716 = vector.load %arg1[%c7_501, %c1_502, %c0_503] : memref<8x32x32xf32, #tpu.memory_space<vmem>>, vector<1x28x32xf32>
    %717 = vector.shape_cast %716 : vector<1x28x32xf32> to vector<28x32xf32>
    %718 = arith.truncf %717 : vector<28x32xf32> to vector<28x32xbf16>
    %c1_504 = arith.constant 1 : index
    %c0_505 = arith.constant 0 : index
    %c0_506 = arith.constant 0 : index
    %719 = vector.load %arg2[%c1_504, %c0_505, %c0_506] : memref<5x32x168xbf16, #tpu.memory_space<vmem>>, vector<1x32x168xbf16>
    %720 = vector.shape_cast %719 : vector<1x32x168xbf16> to vector<32x168xbf16>
    %cst_507 = arith.constant dense<0.000000e+00> : vector<28x168xf32>
    %721 = tpu.matmul %718, %720, %cst_507 {dimension_numbers = #tpu.dot_dimension_numbers<[1], [0], [0], [1], [0, 0, 1, 1], [], []>} : vector<28x32xbf16>, vector<32x168xbf16>, vector<28x168xf32> -> vector<28x168xf32>
    %722 = arith.addf %715, %721 : vector<28x168xf32>
    %c7_508 = arith.constant 7 : index
    %c2_509 = arith.constant 2 : index
    %c0_510 = arith.constant 0 : index
    %723 = vector.load %arg1[%c7_508, %c2_509, %c0_510] : memref<8x32x32xf32, #tpu.memory_space<vmem>>, vector<1x28x32xf32>
    %724 = vector.shape_cast %723 : vector<1x28x32xf32> to vector<28x32xf32>
    %725 = arith.truncf %724 : vector<28x32xf32> to vector<28x32xbf16>
    %c2_511 = arith.constant 2 : index
    %c0_512 = arith.constant 0 : index
    %c0_513 = arith.constant 0 : index
    %726 = vector.load %arg2[%c2_511, %c0_512, %c0_513] : memref<5x32x168xbf16, #tpu.memory_space<vmem>>, vector<1x32x168xbf16>
    %727 = vector.shape_cast %726 : vector<1x32x168xbf16> to vector<32x168xbf16>
    %cst_514 = arith.constant dense<0.000000e+00> : vector<28x168xf32>
    %728 = tpu.matmul %725, %727, %cst_514 {dimension_numbers = #tpu.dot_dimension_numbers<[1], [0], [0], [1], [0, 0, 1, 1], [], []>} : vector<28x32xbf16>, vector<32x168xbf16>, vector<28x168xf32> -> vector<28x168xf32>
    %729 = arith.addf %722, %728 : vector<28x168xf32>
    %c7_515 = arith.constant 7 : index
    %c3_516 = arith.constant 3 : index
    %c0_517 = arith.constant 0 : index
    %730 = vector.load %arg1[%c7_515, %c3_516, %c0_517] : memref<8x32x32xf32, #tpu.memory_space<vmem>>, vector<1x28x32xf32>
    %731 = vector.shape_cast %730 : vector<1x28x32xf32> to vector<28x32xf32>
    %732 = arith.truncf %731 : vector<28x32xf32> to vector<28x32xbf16>
    %c3_518 = arith.constant 3 : index
    %c0_519 = arith.constant 0 : index
    %c0_520 = arith.constant 0 : index
    %733 = vector.load %arg2[%c3_518, %c0_519, %c0_520] : memref<5x32x168xbf16, #tpu.memory_space<vmem>>, vector<1x32x168xbf16>
    %734 = vector.shape_cast %733 : vector<1x32x168xbf16> to vector<32x168xbf16>
    %cst_521 = arith.constant dense<0.000000e+00> : vector<28x168xf32>
    %735 = tpu.matmul %732, %734, %cst_521 {dimension_numbers = #tpu.dot_dimension_numbers<[1], [0], [0], [1], [0, 0, 1, 1], [], []>} : vector<28x32xbf16>, vector<32x168xbf16>, vector<28x168xf32> -> vector<28x168xf32>
    %736 = arith.addf %729, %735 : vector<28x168xf32>
    %c7_522 = arith.constant 7 : index
    %c4_523 = arith.constant 4 : index
    %c0_524 = arith.constant 0 : index
    %737 = vector.load %arg1[%c7_522, %c4_523, %c0_524] : memref<8x32x32xf32, #tpu.memory_space<vmem>>, vector<1x28x32xf32>
    %738 = vector.shape_cast %737 : vector<1x28x32xf32> to vector<28x32xf32>
    %739 = arith.truncf %738 : vector<28x32xf32> to vector<28x32xbf16>
    %c4_525 = arith.constant 4 : index
    %c0_526 = arith.constant 0 : index
    %c0_527 = arith.constant 0 : index
    %740 = vector.load %arg2[%c4_525, %c0_526, %c0_527] : memref<5x32x168xbf16, #tpu.memory_space<vmem>>, vector<1x32x168xbf16>
    %741 = vector.shape_cast %740 : vector<1x32x168xbf16> to vector<32x168xbf16>
    %cst_528 = arith.constant dense<0.000000e+00> : vector<28x168xf32>
    %742 = tpu.matmul %739, %741, %cst_528 {dimension_numbers = #tpu.dot_dimension_numbers<[1], [0], [0], [1], [0, 0, 1, 1], [], []>} : vector<28x32xbf16>, vector<32x168xbf16>, vector<28x168xf32> -> vector<28x168xf32>
    %743 = arith.addf %736, %742 : vector<28x168xf32>
    %744 = vector.broadcast %0 : vector<1x168xf32> to vector<28x168xf32>
    %745 = arith.addf %743, %744 : vector<28x168xf32>
    %cst_529 = arith.constant 0.000000e+00 : f32
    %746 = vector.broadcast %cst_529 : f32 to vector<28x168xf32>
    %747 = arith.cmpf oge, %745, %746 : vector<28x168xf32>
    %cst_530 = arith.constant 0.00999999977 : f32
    %748 = vector.broadcast %cst_530 : f32 to vector<28x168xf32>
    %749 = arith.mulf %748, %745 : vector<28x168xf32>
    %750 = arith.select %747, %745, %749 : vector<28x168xi1>, vector<28x168xf32>
    %751 = vector.extract_strided_slice %750 {offsets = [0, 0], sizes = [28, 162], strides = [1, 1]} : vector<28x168xf32> to vector<28x162xf32>
    %752 = vector.extract_strided_slice %750 {offsets = [0, 6], sizes = [28, 162], strides = [1, 1]} : vector<28x168xf32> to vector<28x162xf32>
    %753 = arith.maximumf %751, %752 : vector<28x162xf32>
    %754 = arith.truncf %753 : vector<28x162xf32> to vector<28x162xbf16>
    %c0_531 = arith.constant 0 : index
    %c0_532 = arith.constant 0 : index
    %755 = vector.load %arg3[%c0_531, %c0_532] : memref<162x84xbf16, #tpu.memory_space<vmem>>, vector<162x84xbf16>
    %cst_533 = arith.constant dense<0.000000e+00> : vector<28x84xf32>
    %756 = tpu.matmul %754, %755, %cst_533 {dimension_numbers = #tpu.dot_dimension_numbers<[1], [0], [0], [1], [0, 0, 1, 1], [], []>} : vector<28x162xbf16>, vector<162x84xbf16>, vector<28x84xf32> -> vector<28x84xf32>
    %757 = vector.extract_strided_slice %756 {offsets = [0, 0], sizes = [27, 84], strides = [1, 1]} : vector<28x84xf32> to vector<27x84xf32>
    %758 = vector.extract_strided_slice %756 {offsets = [1, 0], sizes = [27, 84], strides = [1, 1]} : vector<28x84xf32> to vector<27x84xf32>
    %759 = arith.maximumf %757, %758 : vector<27x84xf32>
    %c0_534 = arith.constant 0 : index
    %c0_535 = arith.constant 0 : index
    %760 = vector.load %arg4[%c0_534, %c0_535] : memref<14x27xbf16, #tpu.memory_space<vmem>>, vector<14x27xbf16>
    %761 = arith.truncf %759 : vector<27x84xf32> to vector<27x84xbf16>
    %cst_536 = arith.constant dense<0.000000e+00> : vector<14x84xf32>
    %762 = tpu.matmul %760, %761, %cst_536 {dimension_numbers = #tpu.dot_dimension_numbers<[1], [0], [0], [1], [0, 0, 1, 1], [], []>} : vector<14x27xbf16>, vector<27x84xbf16>, vector<14x84xf32> -> vector<14x84xf32>
    %763 = vector.extract_strided_slice %762 {offsets = [0, 0], sizes = [10, 84], strides = [1, 1]} : vector<14x84xf32> to vector<10x84xf32>
    %764 = arith.truncf %763 : vector<10x84xf32> to vector<10x84xbf16>
    %c0_537 = arith.constant 0 : index
    %c0_538 = arith.constant 0 : index
    %c0_539 = arith.constant 0 : index
    %765 = vector.load %arg5[%c0_537, %c0_538, %c0_539] : memref<5x84x160xbf16, #tpu.memory_space<vmem>>, vector<1x84x160xbf16>
    %766 = vector.shape_cast %765 : vector<1x84x160xbf16> to vector<84x160xbf16>
    %cst_540 = arith.constant dense<0.000000e+00> : vector<10x160xf32>
    %767 = tpu.matmul %764, %766, %cst_540 {dimension_numbers = #tpu.dot_dimension_numbers<[1], [0], [0], [1], [0, 0, 1, 1], [], []>} : vector<10x84xbf16>, vector<84x160xbf16>, vector<10x160xf32> -> vector<10x160xf32>
    %768 = vector.extract_strided_slice %762 {offsets = [1, 0], sizes = [10, 84], strides = [1, 1]} : vector<14x84xf32> to vector<10x84xf32>
    %769 = arith.truncf %768 : vector<10x84xf32> to vector<10x84xbf16>
    %c1_541 = arith.constant 1 : index
    %c0_542 = arith.constant 0 : index
    %c0_543 = arith.constant 0 : index
    %770 = vector.load %arg5[%c1_541, %c0_542, %c0_543] : memref<5x84x160xbf16, #tpu.memory_space<vmem>>, vector<1x84x160xbf16>
    %771 = vector.shape_cast %770 : vector<1x84x160xbf16> to vector<84x160xbf16>
    %cst_544 = arith.constant dense<0.000000e+00> : vector<10x160xf32>
    %772 = tpu.matmul %769, %771, %cst_544 {dimension_numbers = #tpu.dot_dimension_numbers<[1], [0], [0], [1], [0, 0, 1, 1], [], []>} : vector<10x84xbf16>, vector<84x160xbf16>, vector<10x160xf32> -> vector<10x160xf32>
    %773 = arith.addf %767, %772 : vector<10x160xf32>
    %774 = vector.extract_strided_slice %762 {offsets = [2, 0], sizes = [10, 84], strides = [1, 1]} : vector<14x84xf32> to vector<10x84xf32>
    %775 = arith.truncf %774 : vector<10x84xf32> to vector<10x84xbf16>
    %c2_545 = arith.constant 2 : index
    %c0_546 = arith.constant 0 : index
    %c0_547 = arith.constant 0 : index
    %776 = vector.load %arg5[%c2_545, %c0_546, %c0_547] : memref<5x84x160xbf16, #tpu.memory_space<vmem>>, vector<1x84x160xbf16>
    %777 = vector.shape_cast %776 : vector<1x84x160xbf16> to vector<84x160xbf16>
    %cst_548 = arith.constant dense<0.000000e+00> : vector<10x160xf32>
    %778 = tpu.matmul %775, %777, %cst_548 {dimension_numbers = #tpu.dot_dimension_numbers<[1], [0], [0], [1], [0, 0, 1, 1], [], []>} : vector<10x84xbf16>, vector<84x160xbf16>, vector<10x160xf32> -> vector<10x160xf32>
    %779 = arith.addf %773, %778 : vector<10x160xf32>
    %780 = vector.extract_strided_slice %762 {offsets = [3, 0], sizes = [10, 84], strides = [1, 1]} : vector<14x84xf32> to vector<10x84xf32>
    %781 = arith.truncf %780 : vector<10x84xf32> to vector<10x84xbf16>
    %c3_549 = arith.constant 3 : index
    %c0_550 = arith.constant 0 : index
    %c0_551 = arith.constant 0 : index
    %782 = vector.load %arg5[%c3_549, %c0_550, %c0_551] : memref<5x84x160xbf16, #tpu.memory_space<vmem>>, vector<1x84x160xbf16>
    %783 = vector.shape_cast %782 : vector<1x84x160xbf16> to vector<84x160xbf16>
    %cst_552 = arith.constant dense<0.000000e+00> : vector<10x160xf32>
    %784 = tpu.matmul %781, %783, %cst_552 {dimension_numbers = #tpu.dot_dimension_numbers<[1], [0], [0], [1], [0, 0, 1, 1], [], []>} : vector<10x84xbf16>, vector<84x160xbf16>, vector<10x160xf32> -> vector<10x160xf32>
    %785 = arith.addf %779, %784 : vector<10x160xf32>
    %786 = vector.extract_strided_slice %762 {offsets = [4, 0], sizes = [10, 84], strides = [1, 1]} : vector<14x84xf32> to vector<10x84xf32>
    %787 = arith.truncf %786 : vector<10x84xf32> to vector<10x84xbf16>
    %c4_553 = arith.constant 4 : index
    %c0_554 = arith.constant 0 : index
    %c0_555 = arith.constant 0 : index
    %788 = vector.load %arg5[%c4_553, %c0_554, %c0_555] : memref<5x84x160xbf16, #tpu.memory_space<vmem>>, vector<1x84x160xbf16>
    %789 = vector.shape_cast %788 : vector<1x84x160xbf16> to vector<84x160xbf16>
    %cst_556 = arith.constant dense<0.000000e+00> : vector<10x160xf32>
    %790 = tpu.matmul %787, %789, %cst_556 {dimension_numbers = #tpu.dot_dimension_numbers<[1], [0], [0], [1], [0, 0, 1, 1], [], []>} : vector<10x84xbf16>, vector<84x160xbf16>, vector<10x160xf32> -> vector<10x160xf32>
    %791 = arith.addf %785, %790 : vector<10x160xf32>
    %792 = vector.broadcast %1 : vector<1x160xf32> to vector<10x160xf32>
    %793 = arith.addf %791, %792 : vector<10x160xf32>
    %cst_557 = arith.constant 0.000000e+00 : f32
    %794 = vector.broadcast %cst_557 : f32 to vector<10x160xf32>
    %795 = arith.cmpf oge, %793, %794 : vector<10x160xf32>
    %cst_558 = arith.constant 0.00999999977 : f32
    %796 = vector.broadcast %cst_558 : f32 to vector<10x160xf32>
    %797 = arith.mulf %796, %793 : vector<10x160xf32>
    %798 = arith.select %795, %793, %797 : vector<10x160xi1>, vector<10x160xf32>
    %799 = vector.extract_strided_slice %798 {offsets = [0, 0], sizes = [10, 144], strides = [1, 1]} : vector<10x160xf32> to vector<10x144xf32>
    %800 = vector.extract_strided_slice %798 {offsets = [0, 16], sizes = [10, 144], strides = [1, 1]} : vector<10x160xf32> to vector<10x144xf32>
    %801 = arith.maximumf %799, %800 : vector<10x144xf32>
    %802 = arith.truncf %801 : vector<10x144xf32> to vector<10x144xbf16>
    %c0_559 = arith.constant 0 : index
    %c0_560 = arith.constant 0 : index
    %803 = vector.load %arg6[%c0_559, %c0_560] : memref<144x80xbf16, #tpu.memory_space<vmem>>, vector<144x80xbf16>
    %cst_561 = arith.constant dense<0.000000e+00> : vector<10x80xf32>
    %804 = tpu.matmul %802, %803, %cst_561 {dimension_numbers = #tpu.dot_dimension_numbers<[1], [0], [0], [1], [0, 0, 1, 1], [], []>} : vector<10x144xbf16>, vector<144x80xbf16>, vector<10x80xf32> -> vector<10x80xf32>
    %805 = vector.extract_strided_slice %804 {offsets = [0, 0], sizes = [9, 80], strides = [1, 1]} : vector<10x80xf32> to vector<9x80xf32>
    %806 = vector.extract_strided_slice %804 {offsets = [1, 0], sizes = [9, 80], strides = [1, 1]} : vector<10x80xf32> to vector<9x80xf32>
    %807 = arith.maximumf %805, %806 : vector<9x80xf32>
    %c0_562 = arith.constant 0 : index
    %c0_563 = arith.constant 0 : index
    %808 = vector.load %arg7[%c0_562, %c0_563] : memref<5x9xbf16, #tpu.memory_space<vmem>>, vector<5x9xbf16>
    %809 = arith.truncf %807 : vector<9x80xf32> to vector<9x80xbf16>
    %cst_564 = arith.constant dense<0.000000e+00> : vector<5x80xf32>
    %810 = tpu.matmul %808, %809, %cst_564 {dimension_numbers = #tpu.dot_dimension_numbers<[1], [0], [0], [1], [0, 0, 1, 1], [], []>} : vector<5x9xbf16>, vector<9x80xbf16>, vector<5x80xf32> -> vector<5x80xf32>
    %811 = tpu.iota {dimensions = array<i32: 0>} : vector<8x80xi32>
    %cst_565 = arith.constant 0.000000e+00 : f32
    %812 = vector.broadcast %cst_565 : f32 to vector<8x128xf32>
    %cst_566 = arith.constant 0.000000e+00 : f32
    %813 = vector.broadcast %cst_566 : f32 to vector<8x80xf32>
    %c0_i32 = arith.constant 0 : i32
    %814 = vector.broadcast %c0_i32 : i32 to vector<8x80xi32>
    %815 = arith.cmpi eq, %811, %814 : vector<8x80xi32>
    %816 = vector.extract_strided_slice %103 {offsets = [0, 0], sizes = [1, 80], strides = [1, 1]} : vector<5x80xf32> to vector<1x80xf32>
    %817 = vector.shape_cast %816 : vector<1x80xf32> to vector<1x80xf32>
    %818 = vector.broadcast %817 : vector<1x80xf32> to vector<8x80xf32>
    %819 = arith.select %815, %818, %813 : vector<8x80xi1>, vector<8x80xf32>
    %c1_i32 = arith.constant 1 : i32
    %820 = vector.broadcast %c1_i32 : i32 to vector<8x80xi32>
    %821 = arith.cmpi eq, %811, %820 : vector<8x80xi32>
    %822 = vector.extract_strided_slice %204 {offsets = [0, 0], sizes = [1, 80], strides = [1, 1]} : vector<5x80xf32> to vector<1x80xf32>
    %823 = vector.shape_cast %822 : vector<1x80xf32> to vector<1x80xf32>
    %824 = vector.broadcast %823 : vector<1x80xf32> to vector<8x80xf32>
    %825 = arith.select %821, %824, %819 : vector<8x80xi1>, vector<8x80xf32>
    %c2_i32 = arith.constant 2 : i32
    %826 = vector.broadcast %c2_i32 : i32 to vector<8x80xi32>
    %827 = arith.cmpi eq, %811, %826 : vector<8x80xi32>
    %828 = vector.extract_strided_slice %305 {offsets = [0, 0], sizes = [1, 80], strides = [1, 1]} : vector<5x80xf32> to vector<1x80xf32>
    %829 = vector.shape_cast %828 : vector<1x80xf32> to vector<1x80xf32>
    %830 = vector.broadcast %829 : vector<1x80xf32> to vector<8x80xf32>
    %831 = arith.select %827, %830, %825 : vector<8x80xi1>, vector<8x80xf32>
    %c3_i32 = arith.constant 3 : i32
    %832 = vector.broadcast %c3_i32 : i32 to vector<8x80xi32>
    %833 = arith.cmpi eq, %811, %832 : vector<8x80xi32>
    %834 = vector.extract_strided_slice %406 {offsets = [0, 0], sizes = [1, 80], strides = [1, 1]} : vector<5x80xf32> to vector<1x80xf32>
    %835 = vector.shape_cast %834 : vector<1x80xf32> to vector<1x80xf32>
    %836 = vector.broadcast %835 : vector<1x80xf32> to vector<8x80xf32>
    %837 = arith.select %833, %836, %831 : vector<8x80xi1>, vector<8x80xf32>
    %c4_i32 = arith.constant 4 : i32
    %838 = vector.broadcast %c4_i32 : i32 to vector<8x80xi32>
    %839 = arith.cmpi eq, %811, %838 : vector<8x80xi32>
    %840 = vector.extract_strided_slice %507 {offsets = [0, 0], sizes = [1, 80], strides = [1, 1]} : vector<5x80xf32> to vector<1x80xf32>
    %841 = vector.shape_cast %840 : vector<1x80xf32> to vector<1x80xf32>
    %842 = vector.broadcast %841 : vector<1x80xf32> to vector<8x80xf32>
    %843 = arith.select %839, %842, %837 : vector<8x80xi1>, vector<8x80xf32>
    %c5_i32 = arith.constant 5 : i32
    %844 = vector.broadcast %c5_i32 : i32 to vector<8x80xi32>
    %845 = arith.cmpi eq, %811, %844 : vector<8x80xi32>
    %846 = vector.extract_strided_slice %608 {offsets = [0, 0], sizes = [1, 80], strides = [1, 1]} : vector<5x80xf32> to vector<1x80xf32>
    %847 = vector.shape_cast %846 : vector<1x80xf32> to vector<1x80xf32>
    %848 = vector.broadcast %847 : vector<1x80xf32> to vector<8x80xf32>
    %849 = arith.select %845, %848, %843 : vector<8x80xi1>, vector<8x80xf32>
    %c6_i32 = arith.constant 6 : i32
    %850 = vector.broadcast %c6_i32 : i32 to vector<8x80xi32>
    %851 = arith.cmpi eq, %811, %850 : vector<8x80xi32>
    %852 = vector.extract_strided_slice %709 {offsets = [0, 0], sizes = [1, 80], strides = [1, 1]} : vector<5x80xf32> to vector<1x80xf32>
    %853 = vector.shape_cast %852 : vector<1x80xf32> to vector<1x80xf32>
    %854 = vector.broadcast %853 : vector<1x80xf32> to vector<8x80xf32>
    %855 = arith.select %851, %854, %849 : vector<8x80xi1>, vector<8x80xf32>
    %c7_i32 = arith.constant 7 : i32
    %856 = vector.broadcast %c7_i32 : i32 to vector<8x80xi32>
    %857 = arith.cmpi eq, %811, %856 : vector<8x80xi32>
    %858 = vector.extract_strided_slice %810 {offsets = [0, 0], sizes = [1, 80], strides = [1, 1]} : vector<5x80xf32> to vector<1x80xf32>
    %859 = vector.shape_cast %858 : vector<1x80xf32> to vector<1x80xf32>
    %860 = vector.broadcast %859 : vector<1x80xf32> to vector<8x80xf32>
    %861 = arith.select %857, %860, %855 : vector<8x80xi1>, vector<8x80xf32>
    %862 = arith.truncf %861 : vector<8x80xf32> to vector<8x80xbf16>
    %c0_567 = arith.constant 0 : index
    %c0_568 = arith.constant 0 : index
    %c0_569 = arith.constant 0 : index
    %863 = vector.load %arg8[%c0_567, %c0_568, %c0_569] : memref<5x80x128xbf16, #tpu.memory_space<vmem>>, vector<1x80x128xbf16>
    %864 = vector.shape_cast %863 : vector<1x80x128xbf16> to vector<80x128xbf16>
    %cst_570 = arith.constant dense<0.000000e+00> : vector<8x128xf32>
    %865 = tpu.matmul %862, %864, %cst_570 {dimension_numbers = #tpu.dot_dimension_numbers<[1], [0], [0], [1], [0, 0, 1, 1], [], []>} : vector<8x80xbf16>, vector<80x128xbf16>, vector<8x128xf32> -> vector<8x128xf32>
    %866 = arith.addf %812, %865 : vector<8x128xf32>
    %cst_571 = arith.constant 0.000000e+00 : f32
    %867 = vector.broadcast %cst_571 : f32 to vector<8x80xf32>
    %c0_i32_572 = arith.constant 0 : i32
    %868 = vector.broadcast %c0_i32_572 : i32 to vector<8x80xi32>
    %869 = arith.cmpi eq, %811, %868 : vector<8x80xi32>
    %870 = vector.extract_strided_slice %103 {offsets = [1, 0], sizes = [1, 80], strides = [1, 1]} : vector<5x80xf32> to vector<1x80xf32>
    %871 = vector.shape_cast %870 : vector<1x80xf32> to vector<1x80xf32>
    %872 = vector.broadcast %871 : vector<1x80xf32> to vector<8x80xf32>
    %873 = arith.select %869, %872, %867 : vector<8x80xi1>, vector<8x80xf32>
    %c1_i32_573 = arith.constant 1 : i32
    %874 = vector.broadcast %c1_i32_573 : i32 to vector<8x80xi32>
    %875 = arith.cmpi eq, %811, %874 : vector<8x80xi32>
    %876 = vector.extract_strided_slice %204 {offsets = [1, 0], sizes = [1, 80], strides = [1, 1]} : vector<5x80xf32> to vector<1x80xf32>
    %877 = vector.shape_cast %876 : vector<1x80xf32> to vector<1x80xf32>
    %878 = vector.broadcast %877 : vector<1x80xf32> to vector<8x80xf32>
    %879 = arith.select %875, %878, %873 : vector<8x80xi1>, vector<8x80xf32>
    %c2_i32_574 = arith.constant 2 : i32
    %880 = vector.broadcast %c2_i32_574 : i32 to vector<8x80xi32>
    %881 = arith.cmpi eq, %811, %880 : vector<8x80xi32>
    %882 = vector.extract_strided_slice %305 {offsets = [1, 0], sizes = [1, 80], strides = [1, 1]} : vector<5x80xf32> to vector<1x80xf32>
    %883 = vector.shape_cast %882 : vector<1x80xf32> to vector<1x80xf32>
    %884 = vector.broadcast %883 : vector<1x80xf32> to vector<8x80xf32>
    %885 = arith.select %881, %884, %879 : vector<8x80xi1>, vector<8x80xf32>
    %c3_i32_575 = arith.constant 3 : i32
    %886 = vector.broadcast %c3_i32_575 : i32 to vector<8x80xi32>
    %887 = arith.cmpi eq, %811, %886 : vector<8x80xi32>
    %888 = vector.extract_strided_slice %406 {offsets = [1, 0], sizes = [1, 80], strides = [1, 1]} : vector<5x80xf32> to vector<1x80xf32>
    %889 = vector.shape_cast %888 : vector<1x80xf32> to vector<1x80xf32>
    %890 = vector.broadcast %889 : vector<1x80xf32> to vector<8x80xf32>
    %891 = arith.select %887, %890, %885 : vector<8x80xi1>, vector<8x80xf32>
    %c4_i32_576 = arith.constant 4 : i32
    %892 = vector.broadcast %c4_i32_576 : i32 to vector<8x80xi32>
    %893 = arith.cmpi eq, %811, %892 : vector<8x80xi32>
    %894 = vector.extract_strided_slice %507 {offsets = [1, 0], sizes = [1, 80], strides = [1, 1]} : vector<5x80xf32> to vector<1x80xf32>
    %895 = vector.shape_cast %894 : vector<1x80xf32> to vector<1x80xf32>
    %896 = vector.broadcast %895 : vector<1x80xf32> to vector<8x80xf32>
    %897 = arith.select %893, %896, %891 : vector<8x80xi1>, vector<8x80xf32>
    %c5_i32_577 = arith.constant 5 : i32
    %898 = vector.broadcast %c5_i32_577 : i32 to vector<8x80xi32>
    %899 = arith.cmpi eq, %811, %898 : vector<8x80xi32>
    %900 = vector.extract_strided_slice %608 {offsets = [1, 0], sizes = [1, 80], strides = [1, 1]} : vector<5x80xf32> to vector<1x80xf32>
    %901 = vector.shape_cast %900 : vector<1x80xf32> to vector<1x80xf32>
    %902 = vector.broadcast %901 : vector<1x80xf32> to vector<8x80xf32>
    %903 = arith.select %899, %902, %897 : vector<8x80xi1>, vector<8x80xf32>
    %c6_i32_578 = arith.constant 6 : i32
    %904 = vector.broadcast %c6_i32_578 : i32 to vector<8x80xi32>
    %905 = arith.cmpi eq, %811, %904 : vector<8x80xi32>
    %906 = vector.extract_strided_slice %709 {offsets = [1, 0], sizes = [1, 80], strides = [1, 1]} : vector<5x80xf32> to vector<1x80xf32>
    %907 = vector.shape_cast %906 : vector<1x80xf32> to vector<1x80xf32>
    %908 = vector.broadcast %907 : vector<1x80xf32> to vector<8x80xf32>
    %909 = arith.select %905, %908, %903 : vector<8x80xi1>, vector<8x80xf32>
    %c7_i32_579 = arith.constant 7 : i32
    %910 = vector.broadcast %c7_i32_579 : i32 to vector<8x80xi32>
    %911 = arith.cmpi eq, %811, %910 : vector<8x80xi32>
    %912 = vector.extract_strided_slice %810 {offsets = [1, 0], sizes = [1, 80], strides = [1, 1]} : vector<5x80xf32> to vector<1x80xf32>
    %913 = vector.shape_cast %912 : vector<1x80xf32> to vector<1x80xf32>
    %914 = vector.broadcast %913 : vector<1x80xf32> to vector<8x80xf32>
    %915 = arith.select %911, %914, %909 : vector<8x80xi1>, vector<8x80xf32>
    %916 = arith.truncf %915 : vector<8x80xf32> to vector<8x80xbf16>
    %c1_580 = arith.constant 1 : index
    %c0_581 = arith.constant 0 : index
    %c0_582 = arith.constant 0 : index
    %917 = vector.load %arg8[%c1_580, %c0_581, %c0_582] : memref<5x80x128xbf16, #tpu.memory_space<vmem>>, vector<1x80x128xbf16>
    %918 = vector.shape_cast %917 : vector<1x80x128xbf16> to vector<80x128xbf16>
    %cst_583 = arith.constant dense<0.000000e+00> : vector<8x128xf32>
    %919 = tpu.matmul %916, %918, %cst_583 {dimension_numbers = #tpu.dot_dimension_numbers<[1], [0], [0], [1], [0, 0, 1, 1], [], []>} : vector<8x80xbf16>, vector<80x128xbf16>, vector<8x128xf32> -> vector<8x128xf32>
    %920 = arith.addf %866, %919 : vector<8x128xf32>
    %cst_584 = arith.constant 0.000000e+00 : f32
    %921 = vector.broadcast %cst_584 : f32 to vector<8x80xf32>
    %c0_i32_585 = arith.constant 0 : i32
    %922 = vector.broadcast %c0_i32_585 : i32 to vector<8x80xi32>
    %923 = arith.cmpi eq, %811, %922 : vector<8x80xi32>
    %924 = vector.extract_strided_slice %103 {offsets = [2, 0], sizes = [1, 80], strides = [1, 1]} : vector<5x80xf32> to vector<1x80xf32>
    %925 = vector.shape_cast %924 : vector<1x80xf32> to vector<1x80xf32>
    %926 = vector.broadcast %925 : vector<1x80xf32> to vector<8x80xf32>
    %927 = arith.select %923, %926, %921 : vector<8x80xi1>, vector<8x80xf32>
    %c1_i32_586 = arith.constant 1 : i32
    %928 = vector.broadcast %c1_i32_586 : i32 to vector<8x80xi32>
    %929 = arith.cmpi eq, %811, %928 : vector<8x80xi32>
    %930 = vector.extract_strided_slice %204 {offsets = [2, 0], sizes = [1, 80], strides = [1, 1]} : vector<5x80xf32> to vector<1x80xf32>
    %931 = vector.shape_cast %930 : vector<1x80xf32> to vector<1x80xf32>
    %932 = vector.broadcast %931 : vector<1x80xf32> to vector<8x80xf32>
    %933 = arith.select %929, %932, %927 : vector<8x80xi1>, vector<8x80xf32>
    %c2_i32_587 = arith.constant 2 : i32
    %934 = vector.broadcast %c2_i32_587 : i32 to vector<8x80xi32>
    %935 = arith.cmpi eq, %811, %934 : vector<8x80xi32>
    %936 = vector.extract_strided_slice %305 {offsets = [2, 0], sizes = [1, 80], strides = [1, 1]} : vector<5x80xf32> to vector<1x80xf32>
    %937 = vector.shape_cast %936 : vector<1x80xf32> to vector<1x80xf32>
    %938 = vector.broadcast %937 : vector<1x80xf32> to vector<8x80xf32>
    %939 = arith.select %935, %938, %933 : vector<8x80xi1>, vector<8x80xf32>
    %c3_i32_588 = arith.constant 3 : i32
    %940 = vector.broadcast %c3_i32_588 : i32 to vector<8x80xi32>
    %941 = arith.cmpi eq, %811, %940 : vector<8x80xi32>
    %942 = vector.extract_strided_slice %406 {offsets = [2, 0], sizes = [1, 80], strides = [1, 1]} : vector<5x80xf32> to vector<1x80xf32>
    %943 = vector.shape_cast %942 : vector<1x80xf32> to vector<1x80xf32>
    %944 = vector.broadcast %943 : vector<1x80xf32> to vector<8x80xf32>
    %945 = arith.select %941, %944, %939 : vector<8x80xi1>, vector<8x80xf32>
    %c4_i32_589 = arith.constant 4 : i32
    %946 = vector.broadcast %c4_i32_589 : i32 to vector<8x80xi32>
    %947 = arith.cmpi eq, %811, %946 : vector<8x80xi32>
    %948 = vector.extract_strided_slice %507 {offsets = [2, 0], sizes = [1, 80], strides = [1, 1]} : vector<5x80xf32> to vector<1x80xf32>
    %949 = vector.shape_cast %948 : vector<1x80xf32> to vector<1x80xf32>
    %950 = vector.broadcast %949 : vector<1x80xf32> to vector<8x80xf32>
    %951 = arith.select %947, %950, %945 : vector<8x80xi1>, vector<8x80xf32>
    %c5_i32_590 = arith.constant 5 : i32
    %952 = vector.broadcast %c5_i32_590 : i32 to vector<8x80xi32>
    %953 = arith.cmpi eq, %811, %952 : vector<8x80xi32>
    %954 = vector.extract_strided_slice %608 {offsets = [2, 0], sizes = [1, 80], strides = [1, 1]} : vector<5x80xf32> to vector<1x80xf32>
    %955 = vector.shape_cast %954 : vector<1x80xf32> to vector<1x80xf32>
    %956 = vector.broadcast %955 : vector<1x80xf32> to vector<8x80xf32>
    %957 = arith.select %953, %956, %951 : vector<8x80xi1>, vector<8x80xf32>
    %c6_i32_591 = arith.constant 6 : i32
    %958 = vector.broadcast %c6_i32_591 : i32 to vector<8x80xi32>
    %959 = arith.cmpi eq, %811, %958 : vector<8x80xi32>
    %960 = vector.extract_strided_slice %709 {offsets = [2, 0], sizes = [1, 80], strides = [1, 1]} : vector<5x80xf32> to vector<1x80xf32>
    %961 = vector.shape_cast %960 : vector<1x80xf32> to vector<1x80xf32>
    %962 = vector.broadcast %961 : vector<1x80xf32> to vector<8x80xf32>
    %963 = arith.select %959, %962, %957 : vector<8x80xi1>, vector<8x80xf32>
    %c7_i32_592 = arith.constant 7 : i32
    %964 = vector.broadcast %c7_i32_592 : i32 to vector<8x80xi32>
    %965 = arith.cmpi eq, %811, %964 : vector<8x80xi32>
    %966 = vector.extract_strided_slice %810 {offsets = [2, 0], sizes = [1, 80], strides = [1, 1]} : vector<5x80xf32> to vector<1x80xf32>
    %967 = vector.shape_cast %966 : vector<1x80xf32> to vector<1x80xf32>
    %968 = vector.broadcast %967 : vector<1x80xf32> to vector<8x80xf32>
    %969 = arith.select %965, %968, %963 : vector<8x80xi1>, vector<8x80xf32>
    %970 = arith.truncf %969 : vector<8x80xf32> to vector<8x80xbf16>
    %c2_593 = arith.constant 2 : index
    %c0_594 = arith.constant 0 : index
    %c0_595 = arith.constant 0 : index
    %971 = vector.load %arg8[%c2_593, %c0_594, %c0_595] : memref<5x80x128xbf16, #tpu.memory_space<vmem>>, vector<1x80x128xbf16>
    %972 = vector.shape_cast %971 : vector<1x80x128xbf16> to vector<80x128xbf16>
    %cst_596 = arith.constant dense<0.000000e+00> : vector<8x128xf32>
    %973 = tpu.matmul %970, %972, %cst_596 {dimension_numbers = #tpu.dot_dimension_numbers<[1], [0], [0], [1], [0, 0, 1, 1], [], []>} : vector<8x80xbf16>, vector<80x128xbf16>, vector<8x128xf32> -> vector<8x128xf32>
    %974 = arith.addf %920, %973 : vector<8x128xf32>
    %cst_597 = arith.constant 0.000000e+00 : f32
    %975 = vector.broadcast %cst_597 : f32 to vector<8x80xf32>
    %c0_i32_598 = arith.constant 0 : i32
    %976 = vector.broadcast %c0_i32_598 : i32 to vector<8x80xi32>
    %977 = arith.cmpi eq, %811, %976 : vector<8x80xi32>
    %978 = vector.extract_strided_slice %103 {offsets = [3, 0], sizes = [1, 80], strides = [1, 1]} : vector<5x80xf32> to vector<1x80xf32>
    %979 = vector.shape_cast %978 : vector<1x80xf32> to vector<1x80xf32>
    %980 = vector.broadcast %979 : vector<1x80xf32> to vector<8x80xf32>
    %981 = arith.select %977, %980, %975 : vector<8x80xi1>, vector<8x80xf32>
    %c1_i32_599 = arith.constant 1 : i32
    %982 = vector.broadcast %c1_i32_599 : i32 to vector<8x80xi32>
    %983 = arith.cmpi eq, %811, %982 : vector<8x80xi32>
    %984 = vector.extract_strided_slice %204 {offsets = [3, 0], sizes = [1, 80], strides = [1, 1]} : vector<5x80xf32> to vector<1x80xf32>
    %985 = vector.shape_cast %984 : vector<1x80xf32> to vector<1x80xf32>
    %986 = vector.broadcast %985 : vector<1x80xf32> to vector<8x80xf32>
    %987 = arith.select %983, %986, %981 : vector<8x80xi1>, vector<8x80xf32>
    %c2_i32_600 = arith.constant 2 : i32
    %988 = vector.broadcast %c2_i32_600 : i32 to vector<8x80xi32>
    %989 = arith.cmpi eq, %811, %988 : vector<8x80xi32>
    %990 = vector.extract_strided_slice %305 {offsets = [3, 0], sizes = [1, 80], strides = [1, 1]} : vector<5x80xf32> to vector<1x80xf32>
    %991 = vector.shape_cast %990 : vector<1x80xf32> to vector<1x80xf32>
    %992 = vector.broadcast %991 : vector<1x80xf32> to vector<8x80xf32>
    %993 = arith.select %989, %992, %987 : vector<8x80xi1>, vector<8x80xf32>
    %c3_i32_601 = arith.constant 3 : i32
    %994 = vector.broadcast %c3_i32_601 : i32 to vector<8x80xi32>
    %995 = arith.cmpi eq, %811, %994 : vector<8x80xi32>
    %996 = vector.extract_strided_slice %406 {offsets = [3, 0], sizes = [1, 80], strides = [1, 1]} : vector<5x80xf32> to vector<1x80xf32>
    %997 = vector.shape_cast %996 : vector<1x80xf32> to vector<1x80xf32>
    %998 = vector.broadcast %997 : vector<1x80xf32> to vector<8x80xf32>
    %999 = arith.select %995, %998, %993 : vector<8x80xi1>, vector<8x80xf32>
    %c4_i32_602 = arith.constant 4 : i32
    %1000 = vector.broadcast %c4_i32_602 : i32 to vector<8x80xi32>
    %1001 = arith.cmpi eq, %811, %1000 : vector<8x80xi32>
    %1002 = vector.extract_strided_slice %507 {offsets = [3, 0], sizes = [1, 80], strides = [1, 1]} : vector<5x80xf32> to vector<1x80xf32>
    %1003 = vector.shape_cast %1002 : vector<1x80xf32> to vector<1x80xf32>
    %1004 = vector.broadcast %1003 : vector<1x80xf32> to vector<8x80xf32>
    %1005 = arith.select %1001, %1004, %999 : vector<8x80xi1>, vector<8x80xf32>
    %c5_i32_603 = arith.constant 5 : i32
    %1006 = vector.broadcast %c5_i32_603 : i32 to vector<8x80xi32>
    %1007 = arith.cmpi eq, %811, %1006 : vector<8x80xi32>
    %1008 = vector.extract_strided_slice %608 {offsets = [3, 0], sizes = [1, 80], strides = [1, 1]} : vector<5x80xf32> to vector<1x80xf32>
    %1009 = vector.shape_cast %1008 : vector<1x80xf32> to vector<1x80xf32>
    %1010 = vector.broadcast %1009 : vector<1x80xf32> to vector<8x80xf32>
    %1011 = arith.select %1007, %1010, %1005 : vector<8x80xi1>, vector<8x80xf32>
    %c6_i32_604 = arith.constant 6 : i32
    %1012 = vector.broadcast %c6_i32_604 : i32 to vector<8x80xi32>
    %1013 = arith.cmpi eq, %811, %1012 : vector<8x80xi32>
    %1014 = vector.extract_strided_slice %709 {offsets = [3, 0], sizes = [1, 80], strides = [1, 1]} : vector<5x80xf32> to vector<1x80xf32>
    %1015 = vector.shape_cast %1014 : vector<1x80xf32> to vector<1x80xf32>
    %1016 = vector.broadcast %1015 : vector<1x80xf32> to vector<8x80xf32>
    %1017 = arith.select %1013, %1016, %1011 : vector<8x80xi1>, vector<8x80xf32>
    %c7_i32_605 = arith.constant 7 : i32
    %1018 = vector.broadcast %c7_i32_605 : i32 to vector<8x80xi32>
    %1019 = arith.cmpi eq, %811, %1018 : vector<8x80xi32>
    %1020 = vector.extract_strided_slice %810 {offsets = [3, 0], sizes = [1, 80], strides = [1, 1]} : vector<5x80xf32> to vector<1x80xf32>
    %1021 = vector.shape_cast %1020 : vector<1x80xf32> to vector<1x80xf32>
    %1022 = vector.broadcast %1021 : vector<1x80xf32> to vector<8x80xf32>
    %1023 = arith.select %1019, %1022, %1017 : vector<8x80xi1>, vector<8x80xf32>
    %1024 = arith.truncf %1023 : vector<8x80xf32> to vector<8x80xbf16>
    %c3_606 = arith.constant 3 : index
    %c0_607 = arith.constant 0 : index
    %c0_608 = arith.constant 0 : index
    %1025 = vector.load %arg8[%c3_606, %c0_607, %c0_608] : memref<5x80x128xbf16, #tpu.memory_space<vmem>>, vector<1x80x128xbf16>
    %1026 = vector.shape_cast %1025 : vector<1x80x128xbf16> to vector<80x128xbf16>
    %cst_609 = arith.constant dense<0.000000e+00> : vector<8x128xf32>
    %1027 = tpu.matmul %1024, %1026, %cst_609 {dimension_numbers = #tpu.dot_dimension_numbers<[1], [0], [0], [1], [0, 0, 1, 1], [], []>} : vector<8x80xbf16>, vector<80x128xbf16>, vector<8x128xf32> -> vector<8x128xf32>
    %1028 = arith.addf %974, %1027 : vector<8x128xf32>
    %cst_610 = arith.constant 0.000000e+00 : f32
    %1029 = vector.broadcast %cst_610 : f32 to vector<8x80xf32>
    %c0_i32_611 = arith.constant 0 : i32
    %1030 = vector.broadcast %c0_i32_611 : i32 to vector<8x80xi32>
    %1031 = arith.cmpi eq, %811, %1030 : vector<8x80xi32>
    %1032 = vector.extract_strided_slice %103 {offsets = [4, 0], sizes = [1, 80], strides = [1, 1]} : vector<5x80xf32> to vector<1x80xf32>
    %1033 = vector.shape_cast %1032 : vector<1x80xf32> to vector<1x80xf32>
    %1034 = vector.broadcast %1033 : vector<1x80xf32> to vector<8x80xf32>
    %1035 = arith.select %1031, %1034, %1029 : vector<8x80xi1>, vector<8x80xf32>
    %c1_i32_612 = arith.constant 1 : i32
    %1036 = vector.broadcast %c1_i32_612 : i32 to vector<8x80xi32>
    %1037 = arith.cmpi eq, %811, %1036 : vector<8x80xi32>
    %1038 = vector.extract_strided_slice %204 {offsets = [4, 0], sizes = [1, 80], strides = [1, 1]} : vector<5x80xf32> to vector<1x80xf32>
    %1039 = vector.shape_cast %1038 : vector<1x80xf32> to vector<1x80xf32>
    %1040 = vector.broadcast %1039 : vector<1x80xf32> to vector<8x80xf32>
    %1041 = arith.select %1037, %1040, %1035 : vector<8x80xi1>, vector<8x80xf32>
    %c2_i32_613 = arith.constant 2 : i32
    %1042 = vector.broadcast %c2_i32_613 : i32 to vector<8x80xi32>
    %1043 = arith.cmpi eq, %811, %1042 : vector<8x80xi32>
    %1044 = vector.extract_strided_slice %305 {offsets = [4, 0], sizes = [1, 80], strides = [1, 1]} : vector<5x80xf32> to vector<1x80xf32>
    %1045 = vector.shape_cast %1044 : vector<1x80xf32> to vector<1x80xf32>
    %1046 = vector.broadcast %1045 : vector<1x80xf32> to vector<8x80xf32>
    %1047 = arith.select %1043, %1046, %1041 : vector<8x80xi1>, vector<8x80xf32>
    %c3_i32_614 = arith.constant 3 : i32
    %1048 = vector.broadcast %c3_i32_614 : i32 to vector<8x80xi32>
    %1049 = arith.cmpi eq, %811, %1048 : vector<8x80xi32>
    %1050 = vector.extract_strided_slice %406 {offsets = [4, 0], sizes = [1, 80], strides = [1, 1]} : vector<5x80xf32> to vector<1x80xf32>
    %1051 = vector.shape_cast %1050 : vector<1x80xf32> to vector<1x80xf32>
    %1052 = vector.broadcast %1051 : vector<1x80xf32> to vector<8x80xf32>
    %1053 = arith.select %1049, %1052, %1047 : vector<8x80xi1>, vector<8x80xf32>
    %c4_i32_615 = arith.constant 4 : i32
    %1054 = vector.broadcast %c4_i32_615 : i32 to vector<8x80xi32>
    %1055 = arith.cmpi eq, %811, %1054 : vector<8x80xi32>
    %1056 = vector.extract_strided_slice %507 {offsets = [4, 0], sizes = [1, 80], strides = [1, 1]} : vector<5x80xf32> to vector<1x80xf32>
    %1057 = vector.shape_cast %1056 : vector<1x80xf32> to vector<1x80xf32>
    %1058 = vector.broadcast %1057 : vector<1x80xf32> to vector<8x80xf32>
    %1059 = arith.select %1055, %1058, %1053 : vector<8x80xi1>, vector<8x80xf32>
    %c5_i32_616 = arith.constant 5 : i32
    %1060 = vector.broadcast %c5_i32_616 : i32 to vector<8x80xi32>
    %1061 = arith.cmpi eq, %811, %1060 : vector<8x80xi32>
    %1062 = vector.extract_strided_slice %608 {offsets = [4, 0], sizes = [1, 80], strides = [1, 1]} : vector<5x80xf32> to vector<1x80xf32>
    %1063 = vector.shape_cast %1062 : vector<1x80xf32> to vector<1x80xf32>
    %1064 = vector.broadcast %1063 : vector<1x80xf32> to vector<8x80xf32>
    %1065 = arith.select %1061, %1064, %1059 : vector<8x80xi1>, vector<8x80xf32>
    %c6_i32_617 = arith.constant 6 : i32
    %1066 = vector.broadcast %c6_i32_617 : i32 to vector<8x80xi32>
    %1067 = arith.cmpi eq, %811, %1066 : vector<8x80xi32>
    %1068 = vector.extract_strided_slice %709 {offsets = [4, 0], sizes = [1, 80], strides = [1, 1]} : vector<5x80xf32> to vector<1x80xf32>
    %1069 = vector.shape_cast %1068 : vector<1x80xf32> to vector<1x80xf32>
    %1070 = vector.broadcast %1069 : vector<1x80xf32> to vector<8x80xf32>
    %1071 = arith.select %1067, %1070, %1065 : vector<8x80xi1>, vector<8x80xf32>
    %c7_i32_618 = arith.constant 7 : i32
    %1072 = vector.broadcast %c7_i32_618 : i32 to vector<8x80xi32>
    %1073 = arith.cmpi eq, %811, %1072 : vector<8x80xi32>
    %1074 = vector.extract_strided_slice %810 {offsets = [4, 0], sizes = [1, 80], strides = [1, 1]} : vector<5x80xf32> to vector<1x80xf32>
    %1075 = vector.shape_cast %1074 : vector<1x80xf32> to vector<1x80xf32>
    %1076 = vector.broadcast %1075 : vector<1x80xf32> to vector<8x80xf32>
    %1077 = arith.select %1073, %1076, %1071 : vector<8x80xi1>, vector<8x80xf32>
    %1078 = arith.truncf %1077 : vector<8x80xf32> to vector<8x80xbf16>
    %c4_619 = arith.constant 4 : index
    %c0_620 = arith.constant 0 : index
    %c0_621 = arith.constant 0 : index
    %1079 = vector.load %arg8[%c4_619, %c0_620, %c0_621] : memref<5x80x128xbf16, #tpu.memory_space<vmem>>, vector<1x80x128xbf16>
    %1080 = vector.shape_cast %1079 : vector<1x80x128xbf16> to vector<80x128xbf16>
    %cst_622 = arith.constant dense<0.000000e+00> : vector<8x128xf32>
    %1081 = tpu.matmul %1078, %1080, %cst_622 {dimension_numbers = #tpu.dot_dimension_numbers<[1], [0], [0], [1], [0, 0, 1, 1], [], []>} : vector<8x80xbf16>, vector<80x128xbf16>, vector<8x128xf32> -> vector<8x128xf32>
    %1082 = arith.addf %1028, %1081 : vector<8x128xf32>
    %1083 = vector.broadcast %2 : vector<1x128xf32> to vector<8x128xf32>
    %1084 = arith.addf %1082, %1083 : vector<8x128xf32>
    %cst_623 = arith.constant 0.000000e+00 : f32
    %1085 = vector.broadcast %cst_623 : f32 to vector<8x128xf32>
    %1086 = arith.cmpf oge, %1084, %1085 : vector<8x128xf32>
    %cst_624 = arith.constant 0.00999999977 : f32
    %1087 = vector.broadcast %cst_624 : f32 to vector<8x128xf32>
    %1088 = arith.mulf %1087, %1084 : vector<8x128xf32>
    %1089 = arith.select %1086, %1084, %1088 : vector<8x128xi1>, vector<8x128xf32>
    %c0_625 = arith.constant 0 : index
    %c0_626 = arith.constant 0 : index
    %1090 = vector.load %arg10[%c0_625, %c0_626] : memref<8x128xf32, #tpu.memory_space<vmem>>, vector<8x128xf32>
    tpu.vector_store %arg10[%c0_625, %c0_626], %1089 {strides = array<i32>} : memref<8x128xf32, #tpu.memory_space<vmem>>, vector<8x128xf32>,
    return
  }
  func.func @transform_0(%arg0: i32) -> (i32, i32, i32) {
    %c0_i32 = arith.constant 0 : i32
    %c0_i32_0 = arith.constant 0 : i32
    %c0_i32_1 = arith.constant 0 : i32
    return %arg0, %c0_i32, %c0_i32_0 : i32, i32, i32
  }
  func.func @transform_1(%arg0: i32) -> (i32, i32, i32) {
    %c0_i32 = arith.constant 0 : i32
    %c0_i32_0 = arith.constant 0 : i32
    %c0_i32_1 = arith.constant 0 : i32
    %c0_i32_2 = arith.constant 0 : i32
    return %c0_i32, %c0_i32_0, %c0_i32_1 : i32, i32, i32
  }
  func.func @transform_2(%arg0: i32) -> (i32, i32) {
    %c0_i32 = arith.constant 0 : i32
    %c0_i32_0 = arith.constant 0 : i32
    %c0_i32_1 = arith.constant 0 : i32
    return %c0_i32, %c0_i32_0 : i32, i32
  }
  func.func @transform_3(%arg0: i32) -> (i32, i32) {
    %c0_i32 = arith.constant 0 : i32
    %c0_i32_0 = arith.constant 0 : i32
    %c0_i32_1 = arith.constant 0 : i32
    return %c0_i32, %c0_i32_0 : i32, i32
  }
  func.func @transform_4(%arg0: i32) -> (i32, i32, i32) {
    %c0_i32 = arith.constant 0 : i32
    %c0_i32_0 = arith.constant 0 : i32
    %c0_i32_1 = arith.constant 0 : i32
    %c0_i32_2 = arith.constant 0 : i32
    return %c0_i32, %c0_i32_0, %c0_i32_1 : i32, i32, i32
  }
  func.func @transform_5(%arg0: i32) -> (i32, i32) {
    %c0_i32 = arith.constant 0 : i32
    %c0_i32_0 = arith.constant 0 : i32
    %c0_i32_1 = arith.constant 0 : i32
    return %c0_i32, %c0_i32_0 : i32, i32
  }
  func.func @transform_6(%arg0: i32) -> (i32, i32) {
    %c0_i32 = arith.constant 0 : i32
    %c0_i32_0 = arith.constant 0 : i32
    %c0_i32_1 = arith.constant 0 : i32
    return %c0_i32, %c0_i32_0 : i32, i32
  }
  func.func @transform_7(%arg0: i32) -> (i32, i32, i32) {
    %c0_i32 = arith.constant 0 : i32
    %c0_i32_0 = arith.constant 0 : i32
    %c0_i32_1 = arith.constant 0 : i32
    %c0_i32_2 = arith.constant 0 : i32
    return %c0_i32, %c0_i32_0, %c0_i32_1 : i32, i32, i32
  }
  func.func @transform_8(%arg0: i32) -> (i32, i32) {
    %c0_i32 = arith.constant 0 : i32
    %c0_i32_0 = arith.constant 0 : i32
    %c0_i32_1 = arith.constant 0 : i32
    return %c0_i32, %c0_i32_0 : i32, i32
  }
  func.func @transform_9(%arg0: i32) -> (i32, i32) {
    %c0_i32 = arith.constant 0 : i32
    %c0_i32_0 = arith.constant 0 : i32
    return %arg0, %c0_i32 : i32, i32
  }
}

</mosaic_0001>

<llo_original>
// kernel: tile.13
$region0: #{tile.13}
  #allocation0 [shape = 's32[1]{0}', space=sflag, size = 0x4, scoped, tag = 'scoped memory for tile.13']
  %s0 = inlined_call_operand.vmem [shape: f32[6], index: 0, kind: input, shape index: {}]
  %s1 = inlined_call_operand.vmem [shape: f32[28,6], index: 1, kind: output, shape index: {}]
  // Predicated region
  $region2: #{tile.13} parent=0 // pred_check
    _
  $region3: #{tile.13} parent=0 // pred_check_branch
    %3 = sbr.rel (0) target = $region5
  $region4: #{tile.13} parent=0 // pred_region
    _
  $region5: #{tile.13} parent=0 // pred_fallthru
    _
  %v4 = vld [vmem:[%s0] ss:$0 sm:$0xff]
  %5 = vst [vmem:[%s1] sm:$0xff] %v4
  %s6 = scalar_lea.vmem %s1, 8
  %7 = vst [vmem:[%s6] sm:$0xff] %v4
  %s8 = scalar_lea.vmem %s1, 16
  %9 = vst [vmem:[%s8] sm:$0xff] %v4
  %s10 = scalar_lea.vmem %s1, 24
  %11 = vst [vmem:[%s10] sm:$0xff] %v4

// kernel: tile.18
$region0: #{tile.18}
  #allocation0 [shape = 's32[1]{0}', space=sflag, size = 0x4, scoped, tag = 'scoped memory for tile.18']
  %s0 = inlined_call_operand.vmem [shape: f32[16], index: 0, kind: input, shape index: {}]
  %s1 = inlined_call_operand.vmem [shape: f32[10,16], index: 1, kind: output, shape index: {}]
  // Predicated region
  $region2: #{tile.18} parent=0 // pred_check
    _
  $region3: #{tile.18} parent=0 // pred_check_branch
    %3 = sbr.rel (0) target = $region5
  $region4: #{tile.18} parent=0 // pred_region
    _
  $region5: #{tile.18} parent=0 // pred_fallthru
    _
  %v4 = vld [vmem:[%s0] ss:$0 sm:$0xff]
  %5 = vst [vmem:[%s1] sm:$0xff] %v4
  %s6 = scalar_lea.vmem %s1, 8
  %7 = vst [vmem:[%s6] sm:$0xff] %v4

// kernel: lenet_rep_forward.1
$region0: #{lenet_rep_forward.1}
  #allocation0 [shape = 'u32[]', space=smem, size = 0x4, offset = 0x4, fixed_abs, tag = 'smem constant byte address 0x4 - core index']
  #allocation1 [shape = 'u32[72,128]{1,0:T(1,128)}', space=vmem, size = 0x9000, scoped, tag = 'internal scratch']
  %s0 = inlined_call_operand.vmem [shape: f32[16,32,32], index: 0, kind: input, shape index: {}]
  %s1 = inlined_call_operand.vmem [shape: bf16[5,32,168], index: 1, kind: input, shape index: {}]
  %s2 = inlined_call_operand.vmem [shape: bf16[162,84], index: 2, kind: input, shape index: {}]
  %s3 = inlined_call_operand.vmem [shape: bf16[14,27], index: 3, kind: input, shape index: {}]
  %s4 = inlined_call_operand.vmem [shape: bf16[5,84,160], index: 4, kind: input, shape index: {}]
  %s5 = inlined_call_operand.vmem [shape: bf16[144,80], index: 5, kind: input, shape index: {}]
  %s6 = inlined_call_operand.vmem [shape: bf16[5,9], index: 6, kind: input, shape index: {}]
  %s7 = inlined_call_operand.vmem [shape: bf16[5,80,128], index: 7, kind: input, shape index: {}]
  %s8 = inlined_call_operand.vmem [shape: f32[3,168], index: 8, kind: input, shape index: {}]
  %s9 = inlined_call_operand.hbm [shape: f32[16,128], index: 9, kind: output, shape index: {}]
  %s10 = sld [smem:[#allocation0]]
  $region69: #{lenet_rep_forward.1} parent=0
    _
  %s12 = ssub.s32 1, %s10
  %s13 = scalar_select 0, %s12, %s10
  $region1: #{lenet_rep_forward.1} parent=0
    #allocation2 [shape = 'u8[8192]{0}', space=vmem, size = 0x2000, scoped, tag = 'output window, operand 0']
    #allocation3 [shape = 's32[2]{0}', space=sflag, size = 0x8, scoped, tag = 'scoped memory for lenet_rep_forward.1']
    %14 = vsyncpa [#allocation3], 0
    %s15 = scalar_lea.sflag [#allocation3], 1
    %16 = vsyncpa %s15, 0
    loop: start=0, step=1, limit=4
    $region2: #{lenet_rep_forward.1} parent=1 // loop_pre_header
      _
    $region3: #{lenet_rep_forward.1} parent=1 // loop_header
      %s18 = sphi 0, %s22
      %p19 = scmp.ge.s32.totalorder %s18, 4
      %s28 = sphi 0, %s30
      %s31 = sphi 0, %s28
      %s32 = sphi 0, %s31
      %s48 = sphi 0, %s32
      %s52 = sphi 0, %s52
      %s54 = sphi 0, %s52
      %s55 = sphi 0, %s54
      %s69 = sphi 0, %s55
      %s73 = sphi 0, %s73
      %s75 = sphi 0, %s73
      %s76 = sphi 0, %s75
      %s90 = sphi 0, %s76
      %s94 = sphi 0, %s94
      %s96 = sphi 0, %s94
      %s97 = sphi 0, %s96
      %s111 = sphi 0, %s97
      %s115 = sphi 0, %s115
      %s117 = sphi 0, %s115
      %s118 = sphi 0, %s117
      %s132 = sphi 0, %s118
      %s136 = sphi 0, %s136
      %s138 = sphi 0, %s136
      %s139 = sphi 0, %s138
      %s153 = sphi 0, %s139
      %s157 = sphi 0, %s157
      %s159 = sphi 0, %s157
      %s160 = sphi 0, %s159
      %s174 = sphi 0, %s160
      %s178 = sphi 0, %s178
      %s180 = sphi 0, %s178
      %s181 = sphi 0, %s180
      %s195 = sphi 0, %s181
      %s199 = sphi 0, %s199
      %s201 = sphi 0, %s199
      %s202 = sphi 0, %s201
      %s216 = sphi 0, %s202
      %s222 = sphi 0, %s224
      %s225 = sphi 0, %s222
      %s226 = sphi 0, %s225
      %s242 = sphi 0, %s226
    $region4: #{lenet_rep_forward.1} parent=1 // loop_header_branch
      %21 = sbr.rel (%p19) target = $region8
    $region5: #{lenet_rep_forward.1} parent=1 // loop_body
      %s23 = ssub.s32 %s18, 1
      %s24 = ssub.s32 %s18, 2
      %s25 = sadd.s32 %s18, 1
      %s26 = ssub.s32 %s18, %s25
      %p27 = scmp.eq.s32.totalorder %s26, 0
      %s29 = sadd.s32 %s28, 1
      %s30 = scalar_select %p27, %s28, %s29
      %p33 = pneg %p27
      %p34 = scmp.eq.s32.totalorder %s18, 1
      %p35 = por %p33, %p34
      %p36 = scmp.ne.s32.totalorder %s28, %s31
      %p37 = scmp.eq.s32.totalorder %s18, 0
      %p38 = por %p36, %p37
      %p39 = scmp.ne.s32.totalorder %s28, %s31
      %p40 = scmp.eq.s32.totalorder %s23, 1
      %p41 = por %p39, %p40
      %p42 = scmp.ne.s32.totalorder %s31, %s32
      %p43 = scmp.eq.s32.totalorder %s23, 0
      %p44 = por %p42, %p43
      %p45 = scmp.ne.s32.totalorder %s31, %s32
      %p46 = scmp.eq.s32.totalorder %s24, 1
      %p47 = por %p45, %p46
      %p49 = scmp.ne.s32.totalorder %s32, %s48
      %p50 = scmp.eq.s32.totalorder %s24, 0
      %p51 = por %p49, %p50
      %s53 = sadd.s32 %s52, 1
      %p56 = scmp.eq.s32.totalorder %s18, 1
      %p57 = scmp.ne.s32.totalorder %s52, %s54
      %p58 = scmp.eq.s32.totalorder %s18, 0
      %p59 = por %p57, %p58
      %p60 = scmp.ne.s32.totalorder %s52, %s54
      %p61 = scmp.eq.s32.totalorder %s23, 1
      %p62 = por %p60, %p61
      %p63 = scmp.ne.s32.totalorder %s54, %s55
      %p64 = scmp.eq.s32.totalorder %s23, 0
      %p65 = por %p63, %p64
      %p66 = scmp.ne.s32.totalorder %s54, %s55
      %p67 = scmp.eq.s32.totalorder %s24, 1
      %p68 = por %p66, %p67
      %p70 = scmp.ne.s32.totalorder %s55, %s69
      %p71 = scmp.eq.s32.totalorder %s24, 0
      %p72 = por %p70, %p71
      %s74 = sadd.s32 %s73, 1
      %p77 = scmp.eq.s32.totalorder %s18, 1
      %p78 = scmp.ne.s32.totalorder %s73, %s75
      %p79 = scmp.eq.s32.totalorder %s18, 0
      %p80 = por %p78, %p79
      %p81 = scmp.ne.s32.totalorder %s73, %s75
      %p82 = scmp.eq.s32.totalorder %s23, 1
      %p83 = por %p81, %p82
      %p84 = scmp.ne.s32.totalorder %s75, %s76
      %p85 = scmp.eq.s32.totalorder %s23, 0
      %p86 = por %p84, %p85
      %p87 = scmp.ne.s32.totalorder %s75, %s76
      %p88 = scmp.eq.s32.totalorder %s24, 1
      %p89 = por %p87, %p88
      %p91 = scmp.ne.s32.totalorder %s76, %s90
      %p92 = scmp.eq.s32.totalorder %s24, 0
      %p93 = por %p91, %p92
      %s95 = sadd.s32 %s94, 1
      %p98 = scmp.eq.s32.totalorder %s18, 1
      %p99 = scmp.ne.s32.totalorder %s94, %s96
      %p100 = scmp.eq.s32.totalorder %s18, 0
      %p101 = por %p99, %p100
      %p102 = scmp.ne.s32.totalorder %s94, %s96
      %p103 = scmp.eq.s32.totalorder %s23, 1
      %p104 = por %p102, %p103
      %p105 = scmp.ne.s32.totalorder %s96, %s97
      %p106 = scmp.eq.s32.totalorder %s23, 0
      %p107 = por %p105, %p106
      %p108 = scmp.ne.s32.totalorder %s96, %s97
      %p109 = scmp.eq.s32.totalorder %s24, 1
      %p110 = por %p108, %p109
      %p112 = scmp.ne.s32.totalorder %s97, %s111
      %p113 = scmp.eq.s32.totalorder %s24, 0
      %p114 = por %p112, %p113
      %s116 = sadd.s32 %s115, 1
      %p119 = scmp.eq.s32.totalorder %s18, 1
      %p120 = scmp.ne.s32.totalorder %s115, %s117
      %p121 = scmp.eq.s32.totalorder %s18, 0
      %p122 = por %p120, %p121
      %p123 = scmp.ne.s32.totalorder %s115, %s117
      %p124 = scmp.eq.s32.totalorder %s23, 1
      %p125 = por %p123, %p124
      %p126 = scmp.ne.s32.totalorder %s117, %s118
      %p127 = scmp.eq.s32.totalorder %s23, 0
      %p128 = por %p126, %p127
      %p129 = scmp.ne.s32.totalorder %s117, %s118
      %p130 = scmp.eq.s32.totalorder %s24, 1
      %p131 = por %p129, %p130
      %p133 = scmp.ne.s32.totalorder %s118, %s132
      %p134 = scmp.eq.s32.totalorder %s24, 0
      %p135 = por %p133, %p134
      %s137 = sadd.s32 %s136, 1
      %p140 = scmp.eq.s32.totalorder %s18, 1
      %p141 = scmp.ne.s32.totalorder %s136, %s138
      %p142 = scmp.eq.s32.totalorder %s18, 0
      %p143 = por %p141, %p142
      %p144 = scmp.ne.s32.totalorder %s136, %s138
      %p145 = scmp.eq.s32.totalorder %s23, 1
      %p146 = por %p144, %p145
      %p147 = scmp.ne.s32.totalorder %s138, %s139
      %p148 = scmp.eq.s32.totalorder %s23, 0
      %p149 = por %p147, %p148
      %p150 = scmp.ne.s32.totalorder %s138, %s139
      %p151 = scmp.eq.s32.totalorder %s24, 1
      %p152 = por %p150, %p151
      %p154 = scmp.ne.s32.totalorder %s139, %s153
      %p155 = scmp.eq.s32.totalorder %s24, 0
      %p156 = por %p154, %p155
      %s158 = sadd.s32 %s157, 1
      %p161 = scmp.eq.s32.totalorder %s18, 1
      %p162 = scmp.ne.s32.totalorder %s157, %s159
      %p163 = scmp.eq.s32.totalorder %s18, 0
      %p164 = por %p162, %p163
      %p165 = scmp.ne.s32.totalorder %s157, %s159
      %p166 = scmp.eq.s32.totalorder %s23, 1
      %p167 = por %p165, %p166
      %p168 = scmp.ne.s32.totalorder %s159, %s160
      %p169 = scmp.eq.s32.totalorder %s23, 0
      %p170 = por %p168, %p169
      %p171 = scmp.ne.s32.totalorder %s159, %s160
      %p172 = scmp.eq.s32.totalorder %s24, 1
      %p173 = por %p171, %p172
      %p175 = scmp.ne.s32.totalorder %s160, %s174
      %p176 = scmp.eq.s32.totalorder %s24, 0
      %p177 = por %p175, %p176
      %s179 = sadd.s32 %s178, 1
      %p182 = scmp.eq.s32.totalorder %s18, 1
      %p183 = scmp.ne.s32.totalorder %s178, %s180
      %p184 = scmp.eq.s32.totalorder %s18, 0
      %p185 = por %p183, %p184
      %p186 = scmp.ne.s32.totalorder %s178, %s180
      %p187 = scmp.eq.s32.totalorder %s23, 1
      %p188 = por %p186, %p187
      %p189 = scmp.ne.s32.totalorder %s180, %s181
      %p190 = scmp.eq.s32.totalorder %s23, 0
      %p191 = por %p189, %p190
      %p192 = scmp.ne.s32.totalorder %s180, %s181
      %p193 = scmp.eq.s32.totalorder %s24, 1
      %p194 = por %p192, %p193
      %p196 = scmp.ne.s32.totalorder %s181, %s195
      %p197 = scmp.eq.s32.totalorder %s24, 0
      %p198 = por %p196, %p197
      %s200 = sadd.s32 %s199, 1
      %p203 = scmp.eq.s32.totalorder %s18, 1
      %p204 = scmp.ne.s32.totalorder %s199, %s201
      %p205 = scmp.eq.s32.totalorder %s18, 0
      %p206 = por %p204, %p205
      %p207 = scmp.ne.s32.totalorder %s199, %s201
      %p208 = scmp.eq.s32.totalorder %s23, 1
      %p209 = por %p207, %p208
      %p210 = scmp.ne.s32.totalorder %s201, %s202
      %p211 = scmp.eq.s32.totalorder %s23, 0
      %p212 = por %p210, %p211
      %p213 = scmp.ne.s32.totalorder %s201, %s202
      %p214 = scmp.eq.s32.totalorder %s24, 1
      %p215 = por %p213, %p214
      %p217 = scmp.ne.s32.totalorder %s202, %s216
      %p218 = scmp.eq.s32.totalorder %s24, 0
      %p219 = por %p217, %p218
      %s220 = ssub.s32 %s18, %s25
      %p221 = scmp.eq.s32.totalorder %s220, 0
      %s223 = sadd.s32 %s222, 1
      %s224 = scalar_select %p221, %s222, %s223
      %p227 = pneg %p221
      %p228 = scmp.eq.s32.totalorder %s18, 1
      %p229 = por %p227, %p228
      %p230 = scmp.ne.s32.totalorder %s222, %s225
      %p231 = scmp.eq.s32.totalorder %s18, 0
      %p232 = por %p230, %p231
      %p233 = scmp.ne.s32.totalorder %s222, %s225
      %p234 = scmp.eq.s32.totalorder %s23, 1
      %p235 = por %p233, %p234
      %p236 = scmp.ne.s32.totalorder %s225, %s226
      %p237 = scmp.eq.s32.totalorder %s23, 0
      %p238 = por %p236, %p237
      %p239 = scmp.ne.s32.totalorder %s225, %s226
      %p240 = scmp.eq.s32.totalorder %s24, 1
      %p241 = por %p239, %p240
      %p243 = scmp.ne.s32.totalorder %s226, %s242
      %p244 = scmp.eq.s32.totalorder %s24, 0
      %p245 = por %p243, %p244
      %p246 = scmp.le.s32.totalorder 1, %s18
      %p247 = scmp.lt.s32.totalorder %s18, 3
      %p248 = pnand %p246, %p247
      %p249 = pneg %p248
      // Predicated region
      $region9: #{lenet_rep_forward.1} parent=5 // pred_check
        _
      $region10: #{lenet_rep_forward.1} parent=5 // pred_check_branch
        %251 = sbr.rel (%p248) target = $region12
      $region11: #{lenet_rep_forward.1} parent=5 // pred_region
        %s252 = ssub.s32 %s18, 1
        // Predicated region
        $region13: #{lenet_rep_forward.1} parent=11 // pred_check
          %p253 = pneg %p65
        $region14: #{lenet_rep_forward.1} parent=11 // pred_check_branch
          %255 = sbr.rel (%p253) target = $region16
        $region15: #{lenet_rep_forward.1} parent=11 // pred_region
          _
        $region16: #{lenet_rep_forward.1} parent=11 // pred_fallthru
          _
        // Predicated region
        $region17: #{lenet_rep_forward.1} parent=11 // pred_check
          %p256 = pneg %p86
        $region18: #{lenet_rep_forward.1} parent=11 // pred_check_branch
          %258 = sbr.rel (%p256) target = $region20
        $region19: #{lenet_rep_forward.1} parent=11 // pred_region
          _
        $region20: #{lenet_rep_forward.1} parent=11 // pred_fallthru
          _
        // Predicated region
        $region21: #{lenet_rep_forward.1} parent=11 // pred_check
          %p259 = pneg %p107
        $region22: #{lenet_rep_forward.1} parent=11 // pred_check_branch
          %261 = sbr.rel (%p259) target = $region24
        $region23: #{lenet_rep_forward.1} parent=11 // pred_region
          _
        $region24: #{lenet_rep_forward.1} parent=11 // pred_fallthru
          _
        // Predicated region
        $region25: #{lenet_rep_forward.1} parent=11 // pred_check
          %p262 = pneg %p128
        $region26: #{lenet_rep_forward.1} parent=11 // pred_check_branch
          %264 = sbr.rel (%p262) target = $region28
        $region27: #{lenet_rep_forward.1} parent=11 // pred_region
          _
        $region28: #{lenet_rep_forward.1} parent=11 // pred_fallthru
          _
        // Predicated region
        $region29: #{lenet_rep_forward.1} parent=11 // pred_check
          %p265 = pneg %p149
        $region30: #{lenet_rep_forward.1} parent=11 // pred_check_branch
          %267 = sbr.rel (%p265) target = $region32
        $region31: #{lenet_rep_forward.1} parent=11 // pred_region
          _
        $region32: #{lenet_rep_forward.1} parent=11 // pred_fallthru
          _
        // Predicated region
        $region33: #{lenet_rep_forward.1} parent=11 // pred_check
          %p268 = pneg %p170
        $region34: #{lenet_rep_forward.1} parent=11 // pred_check_branch
          %270 = sbr.rel (%p268) target = $region36
        $region35: #{lenet_rep_forward.1} parent=11 // pred_region
          _
        $region36: #{lenet_rep_forward.1} parent=11 // pred_fallthru
          _
        // Predicated region
        $region37: #{lenet_rep_forward.1} parent=11 // pred_check
          %p271 = pneg %p191
        $region38: #{lenet_rep_forward.1} parent=11 // pred_check_branch
          %273 = sbr.rel (%p271) target = $region40
        $region39: #{lenet_rep_forward.1} parent=11 // pred_region
          _
        $region40: #{lenet_rep_forward.1} parent=11 // pred_fallthru
          _
        // Predicated region
        $region41: #{lenet_rep_forward.1} parent=11 // pred_check
          %p274 = pneg %p212
        $region42: #{lenet_rep_forward.1} parent=11 // pred_check_branch
          %276 = sbr.rel (%p274) target = $region44
        $region43: #{lenet_rep_forward.1} parent=11 // pred_region
          _
        $region44: #{lenet_rep_forward.1} parent=11 // pred_fallthru
          _
      $region12: #{lenet_rep_forward.1} parent=5 // pred_fallthru
        _
      %p277 = scmp.lt.s32.totalorder %s18, 2
      // Predicated region
      $region45: #{lenet_rep_forward.1} parent=5 // pred_check
        %p278 = pneg %p277
      $region46: #{lenet_rep_forward.1} parent=5 // pred_check_branch
        %280 = sbr.rel (%p278) target = $region48
      $region47: #{lenet_rep_forward.1} parent=5 // pred_region
        // Predicated region
        $region49: #{lenet_rep_forward.1} parent=47 // pred_check
          %p281 = pneg %p38
        $region50: #{lenet_rep_forward.1} parent=47 // pred_check_branch
          %283 = sbr.rel (%p281) target = $region52
        $region51: #{lenet_rep_forward.1} parent=47 // pred_region
          %s284 = smul.u32 8, %s18
          %p285 = scmp.lt.s32.totalorder %s284, 15
          %s286 = scalar_select %p285, %s284, 15
          %s287 = smul.addr %s286, 4
          %s288 = smul.addr %s287, 8
          %s289 = scalar_lea.vmem %s0, %s288
          %s290 = smul.u32 8, %s18
        $region52: #{lenet_rep_forward.1} parent=47 // pred_fallthru
          _
      $region48: #{lenet_rep_forward.1} parent=5 // pred_fallthru
        _
      %p291 = scmp.le.s32.totalorder 1, %s18
      %p292 = scmp.lt.s32.totalorder %s18, 3
      %p293 = pnand %p291, %p292
      %p294 = pneg %p293
      // Predicated region
      $region53: #{lenet_rep_forward.1} parent=5 // pred_check
        _
      $region54: #{lenet_rep_forward.1} parent=5 // pred_check_branch
        %296 = sbr.rel (%p293) target = $region56
      $region55: #{lenet_rep_forward.1} parent=5 // pred_region
        %s297 = ssub.s32 %s18, 1
        %s298 = smul.u32 8, %s23
        %p299 = scmp.lt.s32.totalorder %s298, 15
        %s300 = scalar_select %p299, %s298, 15
        %s301 = smul.addr %s300, 4
        %s302 = smul.addr %s301, 8
        %s303 = scalar_lea.vmem %s0, %s302
        %p304 = pneg %p44
        %p305 = pneg %p41
        %p306 = pneg %p65
        %p307 = pneg %p62
        %p308 = pneg %p86
        %p309 = pneg %p83
        %p310 = pneg %p107
        %p311 = pneg %p104
        %p312 = pneg %p128
        %p313 = pneg %p125
        %p314 = pneg %p149
        %p315 = pneg %p146
        %p316 = pneg %p170
        %p317 = pneg %p167
        %p318 = pneg %p191
        %p319 = pneg %p188
        %p320 = pneg %p212
        %p321 = pneg %p209
        %p322 = pneg %p238
        %p323 = pneg %p235
        %s324 = sand.u32 %s225, 1
        %s325 = scalar_lea.sflag [#allocation3], %s324
        %s326 = sand.u32 %s225, 1
        %s327 = smul.addr %s326, 8
        %s328 = scalar_lea.vmem [#allocation2], %s327
        %s329 = smul.u32 8, %s23
        %p330 = scmp.lt.s32.totalorder %s329, 15
        %s331 = scalar_select %p330, %s329, 15
        %s332 = smul.addr %s331, 4
        %s333 = smul.addr %s332, 8
        %s334 = scalar_lea.vmem %s0, %s333
        %s335 = smul.u32 8, %s23
        %v337 = vld [vmem:[%s8] ss:$4 sm:$0x3]
        %s338 = scalar_lea.vmem %s8, 1
        %v339 = vld [vmem:[%s338] ss:$4 sm:$0x3]
        %v340 = vld [vmem:[%s8 + $0x2] sm:$0x1]
        %v341 = vld [vmem:[%s334] sm:$0xff]
        %v342 = vld [vmem:[%s334 + $0x8] sm:$0xff]
        %v343 = vld [vmem:[%s334 + $0x10] sm:$0xff]
        %v344 = vld [vmem:[%s334 + $0x18] sm:$0xf]
        %v345 = vpack.c.bf16 %v342, %v341
        %v346 = vpack.c.bf16 %v344, %v343
        %v347 = vld [vmem:[%s1] sm:$0xff]
        %v348 = vld [vmem:[%s1 + $0x8] sm:$0xff]
        %v349 = vld [vmem:[%s1 + $0x10] sm:$0xff]
        %v350 = vld [vmem:[%s1 + $0x18] sm:$0xff]
        %v351 = vld [vmem:[%s334 + $0x1] sm:$0xff]
        %v352 = vld [vmem:[%s334 + $0x9] sm:$0xff]
        %v353 = vld [vmem:[%s334 + $0x11] sm:$0xff]
        %v354 = vld [vmem:[%s334 + $0x19] sm:$0xf]
        %v355 = vpack.c.bf16 %v352, %v351
        %v356 = vpack.c.bf16 %v354, %v353
        %s357 = scalar_lea.vmem %s1, 32
        %v358 = vld [vmem:[%s357] sm:$0xff]
        %v359 = vld [vmem:[%s357 + $0x8] sm:$0xff]
        %v360 = vld [vmem:[%s357 + $0x10] sm:$0xff]
        %v361 = vld [vmem:[%s357 + $0x18] sm:$0xff]
        %v366 = vunpack.c.l.b16 %v358
        %v367 = vunpack.c.h.b16 %v358
        %v368 = vunpack.c.l.b16 %v359
        %v369 = vunpack.c.h.b16 %v359
        %v370 = vunpack.c.l.b16 %v360
        %v371 = vunpack.c.h.b16 %v360
        %v372 = vunpack.c.l.b16 %v361
        %v373 = vunpack.c.h.b16 %v361
        %v374 = vpack.c.b16 %v368, %v366
        %v375 = vpack.c.b16 %v369, %v367
        %v376 = vpack.c.b16 %v372, %v370
        %v377 = vpack.c.b16 %v373, %v371
        %vm382 = vcmask 261120
        %v384 = vsel %vm382, %v355, 0
        %v387 = vsel %vm382, %v356, 0
        %389 = vmatpush.bf16.msra.mxu0 0
        %390 = vmatpush.bf16.msra.mxu0 0
        %391 = vmatpush.bf16.msra.mxu0 0
        %392 = vmatpush.bf16.msra.mxu0 0
        %393 = vmatpush.bf16.msra.mxu0 0
        %394 = vmatpush.bf16.msra.mxu0 0
        %395 = vmatpush.bf16.msra.mxu0 %v376
        %396 = vmatpush.bf16.msra.mxu0 %v374
        %397 = vmatmul.bf16.gmra.mxu0 %v384
        %v398 = vpop.f32.mrf.mxu0
        %v399 = vadd.f32 0.0, %v398
        %v400 = vpop.f32.mrf.mxu0
        %v401 = vadd.f32 0.0, %v400
        %402 = vmatmul.bf16.gmra.mxu0 %v387
        %v403 = vpop.f32.mrf.mxu0
        %v404 = vadd.f32 0.0, %v403
        %v405 = vpop.f32.mrf.mxu0
        %v406 = vadd.f32 0.0, %v405
        %407 = vdwg.mxu0
        %408 = vmatpush.bf16.msra.mxu0 0
        %409 = vmatpush.bf16.msra.mxu0 0
        %410 = vmatpush.bf16.msra.mxu0 0
        %411 = vmatpush.bf16.msra.mxu0 0
        %412 = vmatpush.bf16.msra.mxu0 0
        %413 = vmatpush.bf16.msra.mxu0 0
        %414 = vmatpush.bf16.msra.mxu0 %v377
        %415 = vmatpush.bf16.msra.mxu0 %v375
        %416 = vmatmul.bf16.gmra.mxu0 %v384
        %v417 = vpop.f32.mrf.mxu0
        %v418 = vadd.f32 0.0, %v417
        %v419 = vpop.f32.mrf.mxu0
        %v420 = vadd.f32 0.0, %v419
        %421 = vmatmul.bf16.gmra.mxu0 %v387
        %v422 = vpop.f32.mrf.mxu0
        %v423 = vadd.f32 0.0, %v422
        %v424 = vpop.f32.mrf.mxu0
        %v425 = vadd.f32 0.0, %v424
        %426 = vdwg.mxu0
        %v431 = vunpack.c.l.b16 %v347
        %v432 = vunpack.c.h.b16 %v347
        %v433 = vunpack.c.l.b16 %v348
        %v434 = vunpack.c.h.b16 %v348
        %v435 = vunpack.c.l.b16 %v349
        %v436 = vunpack.c.h.b16 %v349
        %v437 = vunpack.c.l.b16 %v350
        %v438 = vunpack.c.h.b16 %v350
        %v439 = vpack.c.b16 %v433, %v431
        %v440 = vpack.c.b16 %v434, %v432
        %v441 = vpack.c.b16 %v437, %v435
        %v442 = vpack.c.b16 %v438, %v436
        %v448 = vsel %vm382, %v345, 0
        %v451 = vsel %vm382, %v346, 0
        %453 = vmatpush.bf16.msra.mxu0 0
        %454 = vmatpush.bf16.msra.mxu0 0
        %455 = vmatpush.bf16.msra.mxu0 0
        %456 = vmatpush.bf16.msra.mxu0 0
        %457 = vmatpush.bf16.msra.mxu0 0
        %458 = vmatpush.bf16.msra.mxu0 0
        %459 = vmatpush.bf16.msra.mxu0 %v441
        %460 = vmatpush.bf16.msra.mxu0 %v439
        %461 = vmatmul.bf16.gmra.mxu0 %v448
        %v462 = vpop.f32.mrf.mxu0
        %v463 = vadd.f32 %v399, %v462
        %v464 = vpop.f32.mrf.mxu0
        %v465 = vadd.f32 %v401, %v464
        %466 = vmatmul.bf16.gmra.mxu0 %v451
        %v467 = vpop.f32.mrf.mxu0
        %v468 = vadd.f32 %v404, %v467
        %v469 = vpop.f32.mrf.mxu0
        %v470 = vadd.f32 %v406, %v469
        %471 = vdwg.mxu0
        %472 = vmatpush.bf16.msra.mxu0 0
        %473 = vmatpush.bf16.msra.mxu0 0
        %474 = vmatpush.bf16.msra.mxu0 0
        %475 = vmatpush.bf16.msra.mxu0 0
        %476 = vmatpush.bf16.msra.mxu0 0
        %477 = vmatpush.bf16.msra.mxu0 0
        %478 = vmatpush.bf16.msra.mxu0 %v442
        %479 = vmatpush.bf16.msra.mxu0 %v440
        %480 = vmatmul.bf16.gmra.mxu0 %v448
        %v481 = vpop.f32.mrf.mxu0
        %v482 = vadd.f32 %v418, %v481
        %v483 = vpop.f32.mrf.mxu0
        %v484 = vadd.f32 %v420, %v483
        %485 = vmatmul.bf16.gmra.mxu0 %v451
        %v486 = vpop.f32.mrf.mxu0
        %v487 = vadd.f32 %v423, %v486
        %v488 = vpop.f32.mrf.mxu0
        %v489 = vadd.f32 %v425, %v488
        %490 = vdwg.mxu0
        %v491 = vld [vmem:[%s334 + $0x2] sm:$0xff]
        %v492 = vld [vmem:[%s334 + $0xa] sm:$0xff]
        %v493 = vld [vmem:[%s334 + $0x12] sm:$0xff]
        %v494 = vld [vmem:[%s334 + $0x1a] sm:$0xf]
        %v495 = vpack.c.bf16 %v492, %v491
        %v496 = vpack.c.bf16 %v494, %v493
        %s497 = scalar_lea.vmem %s1, 64
        %v498 = vld [vmem:[%s497] sm:$0xff]
        %v499 = vld [vmem:[%s497 + $0x8] sm:$0xff]
        %v500 = vld [vmem:[%s497 + $0x10] sm:$0xff]
        %v501 = vld [vmem:[%s497 + $0x18] sm:$0xff]
        %v506 = vunpack.c.l.b16 %v498
        %v507 = vunpack.c.h.b16 %v498
        %v508 = vunpack.c.l.b16 %v499
        %v509 = vunpack.c.h.b16 %v499
        %v510 = vunpack.c.l.b16 %v500
        %v511 = vunpack.c.h.b16 %v500
        %v512 = vunpack.c.l.b16 %v501
        %v513 = vunpack.c.h.b16 %v501
        %v514 = vpack.c.b16 %v508, %v506
        %v515 = vpack.c.b16 %v509, %v507
        %v516 = vpack.c.b16 %v512, %v510
        %v517 = vpack.c.b16 %v513, %v511
        %v523 = vsel %vm382, %v495, 0
        %v526 = vsel %vm382, %v496, 0
        %528 = vmatpush.bf16.msra.mxu0 0
        %529 = vmatpush.bf16.msra.mxu0 0
        %530 = vmatpush.bf16.msra.mxu0 0
        %531 = vmatpush.bf16.msra.mxu0 0
        %532 = vmatpush.bf16.msra.mxu0 0
        %533 = vmatpush.bf16.msra.mxu0 0
        %534 = vmatpush.bf16.msra.mxu0 %v516
        %535 = vmatpush.bf16.msra.mxu0 %v514
        %536 = vmatmul.bf16.gmra.mxu0 %v523
        %v537 = vpop.f32.mrf.mxu0
        %v538 = vadd.f32 0.0, %v537
        %v539 = vpop.f32.mrf.mxu0
        %v540 = vadd.f32 0.0, %v539
        %541 = vmatmul.bf16.gmra.mxu0 %v526
        %v542 = vpop.f32.mrf.mxu0
        %v543 = vadd.f32 0.0, %v542
        %v544 = vpop.f32.mrf.mxu0
        %v545 = vadd.f32 0.0, %v544
        %546 = vdwg.mxu0
        %547 = vmatpush.bf16.msra.mxu0 0
        %548 = vmatpush.bf16.msra.mxu0 0
        %549 = vmatpush.bf16.msra.mxu0 0
        %550 = vmatpush.bf16.msra.mxu0 0
        %551 = vmatpush.bf16.msra.mxu0 0
        %552 = vmatpush.bf16.msra.mxu0 0
        %553 = vmatpush.bf16.msra.mxu0 %v517
        %554 = vmatpush.bf16.msra.mxu0 %v515
        %555 = vmatmul.bf16.gmra.mxu0 %v523
        %v556 = vpop.f32.mrf.mxu0
        %v557 = vadd.f32 0.0, %v556
        %v558 = vpop.f32.mrf.mxu0
        %v559 = vadd.f32 0.0, %v558
        %560 = vmatmul.bf16.gmra.mxu0 %v526
        %v561 = vpop.f32.mrf.mxu0
        %v562 = vadd.f32 0.0, %v561
        %v563 = vpop.f32.mrf.mxu0
        %v564 = vadd.f32 0.0, %v563
        %565 = vdwg.mxu0
        %v566 = vadd.f32 %v463, %v538
        %v567 = vadd.f32 %v482, %v557
        %v568 = vadd.f32 %v465, %v540
        %v569 = vadd.f32 %v484, %v559
        %v570 = vadd.f32 %v468, %v543
        %v571 = vadd.f32 %v487, %v562
        %v572 = vadd.f32 %v470, %v545
        %v573 = vadd.f32 %v489, %v564
        %v574 = vld [vmem:[%s334 + $0x3] sm:$0xff]
        %v575 = vld [vmem:[%s334 + $0xb] sm:$0xff]
        %v576 = vld [vmem:[%s334 + $0x13] sm:$0xff]
        %v577 = vld [vmem:[%s334 + $0x1b] sm:$0xf]
        %v578 = vpack.c.bf16 %v575, %v574
        %v579 = vpack.c.bf16 %v577, %v576
        %s580 = scalar_lea.vmem %s1, 96
        %v581 = vld [vmem:[%s580] sm:$0xff]
        %v582 = vld [vmem:[%s580 + $0x8] sm:$0xff]
        %v583 = vld [vmem:[%s580 + $0x10] sm:$0xff]
        %v584 = vld [vmem:[%s580 + $0x18] sm:$0xff]
        %v589 = vunpack.c.l.b16 %v581
        %v590 = vunpack.c.h.b16 %v581
        %v591 = vunpack.c.l.b16 %v582
        %v592 = vunpack.c.h.b16 %v582
        %v593 = vunpack.c.l.b16 %v583
        %v594 = vunpack.c.h.b16 %v583
        %v595 = vunpack.c.l.b16 %v584
        %v596 = vunpack.c.h.b16 %v584
        %v597 = vpack.c.b16 %v591, %v589
        %v598 = vpack.c.b16 %v592, %v590
        %v599 = vpack.c.b16 %v595, %v593
        %v600 = vpack.c.b16 %v596, %v594
        %v606 = vsel %vm382, %v578, 0
        %v609 = vsel %vm382, %v579, 0
        %611 = vmatpush.bf16.msra.mxu0 0
        %612 = vmatpush.bf16.msra.mxu0 0
        %613 = vmatpush.bf16.msra.mxu0 0
        %614 = vmatpush.bf16.msra.mxu0 0
        %615 = vmatpush.bf16.msra.mxu0 0
        %616 = vmatpush.bf16.msra.mxu0 0
        %617 = vmatpush.bf16.msra.mxu0 %v599
        %618 = vmatpush.bf16.msra.mxu0 %v597
        %619 = vmatmul.bf16.gmra.mxu0 %v606
        %v620 = vpop.f32.mrf.mxu0
        %v621 = vadd.f32 0.0, %v620
        %v622 = vpop.f32.mrf.mxu0
        %v623 = vadd.f32 0.0, %v622
        %624 = vmatmul.bf16.gmra.mxu0 %v609
        %v625 = vpop.f32.mrf.mxu0
        %v626 = vadd.f32 0.0, %v625
        %v627 = vpop.f32.mrf.mxu0
        %v628 = vadd.f32 0.0, %v627
        %629 = vdwg.mxu0
        %630 = vmatpush.bf16.msra.mxu0 0
        %631 = vmatpush.bf16.msra.mxu0 0
        %632 = vmatpush.bf16.msra.mxu0 0
        %633 = vmatpush.bf16.msra.mxu0 0
        %634 = vmatpush.bf16.msra.mxu0 0
        %635 = vmatpush.bf16.msra.mxu0 0
        %636 = vmatpush.bf16.msra.mxu0 %v600
        %637 = vmatpush.bf16.msra.mxu0 %v598
        %638 = vmatmul.bf16.gmra.mxu0 %v606
        %v639 = vpop.f32.mrf.mxu0
        %v640 = vadd.f32 0.0, %v639
        %v641 = vpop.f32.mrf.mxu0
        %v642 = vadd.f32 0.0, %v641
        %643 = vmatmul.bf16.gmra.mxu0 %v609
        %v644 = vpop.f32.mrf.mxu0
        %v645 = vadd.f32 0.0, %v644
        %v646 = vpop.f32.mrf.mxu0
        %v647 = vadd.f32 0.0, %v646
        %648 = vdwg.mxu0
        %v649 = vadd.f32 %v566, %v621
        %v650 = vadd.f32 %v567, %v640
        %v651 = vadd.f32 %v568, %v623
        %v652 = vadd.f32 %v569, %v642
        %v653 = vadd.f32 %v570, %v626
        %v654 = vadd.f32 %v571, %v645
        %v655 = vadd.f32 %v572, %v628
        %v656 = vadd.f32 %v573, %v647
        %v657 = vld [vmem:[%s334 + $0x4] sm:$0xff]
        %v658 = vld [vmem:[%s334 + $0xc] sm:$0xff]
        %v659 = vld [vmem:[%s334 + $0x14] sm:$0xff]
        %v660 = vld [vmem:[%s334 + $0x1c] sm:$0xf]
        %v661 = vpack.c.bf16 %v658, %v657
        %v662 = vpack.c.bf16 %v660, %v659
        %s663 = scalar_lea.vmem %s1, 128
        %v664 = vld [vmem:[%s663] sm:$0xff]
        %v665 = vld [vmem:[%s663 + $0x8] sm:$0xff]
        %v666 = vld [vmem:[%s663 + $0x10] sm:$0xff]
        %v667 = vld [vmem:[%s663 + $0x18] sm:$0xff]
        %v672 = vunpack.c.l.b16 %v664
        %v673 = vunpack.c.h.b16 %v664
        %v674 = vunpack.c.l.b16 %v665
        %v675 = vunpack.c.h.b16 %v665
        %v676 = vunpack.c.l.b16 %v666
        %v677 = vunpack.c.h.b16 %v666
        %v678 = vunpack.c.l.b16 %v667
        %v679 = vunpack.c.h.b16 %v667
        %v680 = vpack.c.b16 %v674, %v672
        %v681 = vpack.c.b16 %v675, %v673
        %v682 = vpack.c.b16 %v678, %v676
        %v683 = vpack.c.b16 %v679, %v677
        %v689 = vsel %vm382, %v661, 0
        %v692 = vsel %vm382, %v662, 0
        %694 = vmatpush.bf16.msra.mxu0 0
        %695 = vmatpush.bf16.msra.mxu0 0
        %696 = vmatpush.bf16.msra.mxu0 0
        %697 = vmatpush.bf16.msra.mxu0 0
        %698 = vmatpush.bf16.msra.mxu0 0
        %699 = vmatpush.bf16.msra.mxu0 0
        %700 = vmatpush.bf16.msra.mxu0 %v682
        %701 = vmatpush.bf16.msra.mxu0 %v680
        %702 = vmatmul.bf16.gmra.mxu0 %v689
        %v703 = vpop.f32.mrf.mxu0
        %v704 = vadd.f32 0.0, %v703
        %v705 = vpop.f32.mrf.mxu0
        %v706 = vadd.f32 0.0, %v705
        %707 = vmatmul.bf16.gmra.mxu0 %v692
        %v708 = vpop.f32.mrf.mxu0
        %v709 = vadd.f32 0.0, %v708
        %v710 = vpop.f32.mrf.mxu0
        %v711 = vadd.f32 0.0, %v710
        %712 = vdwg.mxu0
        %713 = vmatpush.bf16.msra.mxu0 0
        %714 = vmatpush.bf16.msra.mxu0 0
        %715 = vmatpush.bf16.msra.mxu0 0
        %716 = vmatpush.bf16.msra.mxu0 0
        %717 = vmatpush.bf16.msra.mxu0 0
        %718 = vmatpush.bf16.msra.mxu0 0
        %719 = vmatpush.bf16.msra.mxu0 %v683
        %720 = vmatpush.bf16.msra.mxu0 %v681
        %721 = vmatmul.bf16.gmra.mxu0 %v689
        %v722 = vpop.f32.mrf.mxu0
        %v723 = vadd.f32 0.0, %v722
        %v724 = vpop.f32.mrf.mxu0
        %v725 = vadd.f32 0.0, %v724
        %726 = vmatmul.bf16.gmra.mxu0 %v692
        %v727 = vpop.f32.mrf.mxu0
        %v728 = vadd.f32 0.0, %v727
        %v729 = vpop.f32.mrf.mxu0
        %v730 = vadd.f32 0.0, %v729
        %731 = vdwg.mxu0
        %v732 = vadd.f32 %v649, %v704
        %v733 = vadd.f32 %v650, %v723
        %v734 = vadd.f32 %v651, %v706
        %v735 = vadd.f32 %v652, %v725
        %v736 = vadd.f32 %v653, %v709
        %v737 = vadd.f32 %v654, %v728
        %v738 = vadd.f32 %v655, %v711
        %v739 = vadd.f32 %v656, %v730
        %v741 = vperm.slane %v337, 0
        %v742 = vperm.slane %v337, 1
        %v745 = vadd.f32 %v732, %v741
        %v746 = vadd.f32 %v733, %v742
        %v747 = vadd.f32 %v734, %v741
        %v748 = vadd.f32 %v735, %v742
        %v749 = vadd.f32 %v736, %v741
        %v750 = vadd.f32 %v737, %v742
        %v751 = vadd.f32 %v738, %v741
        %v752 = vadd.f32 %v739, %v742
        %vm753 = vcmp.ge.f32.partialorder %v745, 0.0
        %vm754 = vcmp.ge.f32.partialorder %v746, 0.0
        %vm755 = vcmp.ge.f32.partialorder %v747, 0.0
        %vm756 = vcmp.ge.f32.partialorder %v748, 0.0
        %vm757 = vcmp.ge.f32.partialorder %v749, 0.0
        %vm758 = vcmp.ge.f32.partialorder %v750, 0.0
        %vm759 = vcmp.ge.f32.partialorder %v751, 0.0
        %vm760 = vcmp.ge.f32.partialorder %v752, 0.0
        %v761 = vmul.f32 %v745, 0.01
        %v762 = vmul.f32 %v746, 0.01
        %v763 = vmul.f32 %v747, 0.01
        %v764 = vmul.f32 %v748, 0.01
        %v765 = vmul.f32 %v749, 0.01
        %v766 = vmul.f32 %v750, 0.01
        %v767 = vmul.f32 %v751, 0.01
        %v768 = vmul.f32 %v752, 0.01
        %v769 = vsel %vm753, %v745, %v761
        %v770 = vsel %vm754, %v746, %v762
        %v771 = vsel %vm755, %v747, %v763
        %v772 = vsel %vm756, %v748, %v764
        %v773 = vsel %vm757, %v749, %v765
        %v774 = vsel %vm758, %v750, %v766
        %v775 = vsel %vm759, %v751, %v767
        %v776 = vsel %vm760, %v752, %v768
        %785 = vrot.lane.b32.xlu0 %v769, 122
        %v786 = vpop.permute.xlu0 %785
        %787 = vrot.lane.b32.xlu0 %v770, 122
        %v788 = vpop.permute.xlu0 %787
        %789 = vrot.lane.b32.xlu0 %v771, 122
        %v790 = vpop.permute.xlu0 %789
        %791 = vrot.lane.b32.xlu0 %v772, 122
        %v792 = vpop.permute.xlu0 %791
        %793 = vrot.lane.b32.xlu0 %v773, 122
        %v794 = vpop.permute.xlu0 %793
        %795 = vrot.lane.b32.xlu0 %v774, 122
        %v796 = vpop.permute.xlu0 %795
        %797 = vrot.lane.b32.xlu0 %v775, 122
        %v798 = vpop.permute.xlu0 %797
        %799 = vrot.lane.b32.xlu0 %v776, 122
        %v800 = vpop.permute.xlu0 %799
        %vm801 = vcmask 998400
        %v802 = vsel %vm801, %v786, %v788
        %v803 = vsel %vm801, %v790, %v792
        %v804 = vsel %vm801, %v794, %v796
        %v805 = vsel %vm801, %v798, %v800
        %v814 = vmax.f32 %v769, %v802
        %v815 = vmax.f32 %v770, %v788
        %v816 = vmax.f32 %v771, %v803
        %v817 = vmax.f32 %v772, %v792
        %v818 = vmax.f32 %v773, %v804
        %v819 = vmax.f32 %v774, %v796
        %v820 = vmax.f32 %v775, %v805
        %v821 = vmax.f32 %v776, %v800
        %v822 = vpack.c.bf16 %v816, %v814
        %v823 = vpack.c.bf16 %v817, %v815
        %v824 = vpack.c.bf16 %v820, %v818
        %v825 = vpack.c.bf16 %v821, %v819
        %v826 = vld [vmem:[%s2] sm:$0xf]
        %v827 = vld [vmem:[%s2 + $0x4] sm:$0xf]
        %v828 = vld [vmem:[%s2 + $0x8] sm:$0xf]
        %v829 = vld [vmem:[%s2 + $0xc] sm:$0xf]
        %v830 = vld [vmem:[%s2 + $0x10] sm:$0xf]
        %v831 = vld [vmem:[%s2 + $0x14] sm:$0xf]
        %v832 = vld [vmem:[%s2 + $0x18] sm:$0xf]
        %v833 = vld [vmem:[%s2 + $0x1c] sm:$0xf]
        %v834 = vld [vmem:[%s2 + $0x20] sm:$0xf]
        %v835 = vld [vmem:[%s2 + $0x24] sm:$0xf]
        %v836 = vld [vmem:[%s2 + $0x28] sm:$0xf]
        %v837 = vld [vmem:[%s2 + $0x2c] sm:$0xf]
        %v838 = vld [vmem:[%s2 + $0x30] sm:$0xf]
        %v839 = vld [vmem:[%s2 + $0x34] sm:$0xf]
        %v840 = vld [vmem:[%s2 + $0x38] sm:$0xf]
        %v841 = vld [vmem:[%s2 + $0x3c] sm:$0xf]
        %v842 = vld [vmem:[%s2 + $0x40] sm:$0xf]
        %v843 = vld [vmem:[%s2 + $0x44] sm:$0xf]
        %v844 = vld [vmem:[%s2 + $0x48] sm:$0xf]
        %v845 = vld [vmem:[%s2 + $0x4c] sm:$0xf]
        %v846 = vld [vmem:[%s2 + $0x50] sm:$0x1]
        %v868 = vunpack.c.l.b16 %v826
        %v869 = vunpack.c.l.b16 %v827
        %v870 = vunpack.c.l.b16 %v828
        %v871 = vunpack.c.l.b16 %v829
        %v872 = vunpack.c.l.b16 %v830
        %v873 = vunpack.c.l.b16 %v831
        %v874 = vunpack.c.l.b16 %v832
        %v875 = vunpack.c.l.b16 %v833
        %v876 = vunpack.c.l.b16 %v834
        %v877 = vunpack.c.l.b16 %v835
        %v878 = vunpack.c.l.b16 %v836
        %v879 = vunpack.c.l.b16 %v837
        %v880 = vunpack.c.l.b16 %v838
        %v881 = vunpack.c.l.b16 %v839
        %v882 = vunpack.c.l.b16 %v840
        %v883 = vunpack.c.l.b16 %v841
        %v884 = vunpack.c.l.b16 %v842
        %v885 = vunpack.c.l.b16 %v843
        %v886 = vunpack.c.l.b16 %v844
        %v887 = vunpack.c.l.b16 %v845
        %v888 = vunpack.c.l.b16 %v846
        %v889 = vpack.c.b16 %v869, %v868
        %v890 = vpack.c.b16 %v871, %v870
        %v891 = vpack.c.b16 %v873, %v872
        %v892 = vpack.c.b16 %v875, %v874
        %v893 = vpack.c.b16 %v877, %v876
        %v894 = vpack.c.b16 %v879, %v878
        %v895 = vpack.c.b16 %v881, %v880
        %v896 = vpack.c.b16 %v883, %v882
        %v897 = vpack.c.b16 %v885, %v884
        %v898 = vpack.c.b16 %v887, %v886
        %v899 = vpack.c.b16 %v888, %v888
        %vm910 = vcmask 277504
        %v912 = vsel %vm910, %v823, 0
        %v915 = vsel %vm910, %v825, 0
        %vm917 = vcmask 1040384
        %v919 = vsel %vm917, %v899, 0
        %921 = vmatpush.bf16.msra.mxu0 %v896
        %922 = vmatpush.bf16.msra.mxu0 %v895
        %923 = vmatpush.bf16.msra.mxu0 %v894
        %924 = vmatpush.bf16.msra.mxu0 %v893
        %925 = vmatpush.bf16.msra.mxu0 %v892
        %926 = vmatpush.bf16.msra.mxu0 %v891
        %927 = vmatpush.bf16.msra.mxu0 %v890
        %928 = vmatpush.bf16.msra.mxu0 %v889
        %929 = vmatmul.bf16.gmra.mxu0 %v822
        %v930 = vpop.f32.mrf.mxu0
        %v931 = vadd.f32 0.0, %v930
        %v932 = vpop.f32.mrf.mxu0
        %v933 = vadd.f32 0.0, %v932
        %934 = vmatmul.bf16.gmra.mxu0 %v824
        %v935 = vpop.f32.mrf.mxu0
        %v936 = vadd.f32 0.0, %v935
        %v937 = vpop.f32.mrf.mxu0
        %v938 = vadd.f32 0.0, %v937
        %939 = vdwg.mxu0
        %940 = vmatpush.bf16.msra.mxu0 0
        %941 = vmatpush.bf16.msra.mxu0 0
        %942 = vmatpush.bf16.msra.mxu0 0
        %943 = vmatpush.bf16.msra.mxu0 0
        %944 = vmatpush.bf16.msra.mxu0 0
        %945 = vmatpush.bf16.msra.mxu0 %v919
        %946 = vmatpush.bf16.msra.mxu0 %v898
        %947 = vmatpush.bf16.msra.mxu0 %v897
        %948 = vmatmul.bf16.gmra.mxu0 %v912
        %v949 = vpop.f32.mrf.mxu0
        %v950 = vadd.f32 %v931, %v949
        %v951 = vpop.f32.mrf.mxu0
        %v952 = vadd.f32 %v933, %v951
        %953 = vmatmul.bf16.gmra.mxu0 %v915
        %v954 = vpop.f32.mrf.mxu0
        %v955 = vadd.f32 %v936, %v954
        %v956 = vpop.f32.mrf.mxu0
        %v957 = vadd.f32 %v938, %v956
        %958 = vdwg.mxu0
        %vm963 = vcmask 1046528
        %v964 = vrot.slane %v950, 1
        %v965 = vrot.slane %v952, 1
        %v966 = vsel %vm963, %v964, %v965
        %v967 = vrot.slane %v955, 1
        %v968 = vsel %vm963, %v965, %v967
        %v969 = vrot.slane %v957, 1
        %v970 = vsel %vm963, %v967, %v969
        %v975 = vmax.f32 %v950, %v966
        %v976 = vmax.f32 %v952, %v968
        %v977 = vmax.f32 %v955, %v970
        %v978 = vmax.f32 %v957, %v969
        %v979 = vld [vmem:[%s3] sm:$0xf]
        %v980 = vld [vmem:[%s3 + $0x4] sm:$0x7]
        %v981 = vpack.c.bf16 %v976, %v975
        %v982 = vpack.c.bf16 %v978, %v977
        %v985 = vunpack.c.l.b16 %v979
        %v986 = vunpack.c.l.b16 %v980
        %v987 = vpack.c.b16 %v986, %v985
        %vm988 = vcmask 220160
        %v990 = vsel %vm988, %v987, 0
        %vm992 = vcmask 1044480
        %vm993 = vcmask 1045504
        %v994 = vsel %vm992, 4294967295, 65535
        %v995 = vsel %vm993, %v994, 0
        %v997 = vand.u32 %v982, %v995
        %999 = vmatpush.bf16.msra.mxu0 0
        %1000 = vmatpush.bf16.msra.mxu0 0
        %1001 = vmatpush.bf16.msra.mxu0 0
        %1002 = vmatpush.bf16.msra.mxu0 0
        %1003 = vmatpush.bf16.msra.mxu0 0
        %1004 = vmatpush.bf16.msra.mxu0 0
        %1005 = vmatpush.bf16.msra.mxu0 %v997
        %1006 = vmatpush.bf16.msra.mxu0 %v981
        %1007 = vmatmul.bf16.gmra.mxu0 %v990
        %v1008 = vpop.f32.mrf.mxu0
        %v1009 = vadd.f32 0.0, %v1008
        %v1010 = vpop.f32.mrf.mxu0
        %v1011 = vadd.f32 0.0, %v1010
        %1012 = vdwg.mxu0
        %v1013 = vpack.c.bf16 %v1011, %v1009
        %v1014 = vld [vmem:[%s4] sm:$0xff]
        %v1015 = vld [vmem:[%s4 + $0x8] sm:$0xff]
        %v1016 = vld [vmem:[%s4 + $0x10] sm:$0xff]
        %v1017 = vld [vmem:[%s4 + $0x18] sm:$0xff]
        %v1018 = vld [vmem:[%s4 + $0x20] sm:$0xff]
        %v1019 = vld [vmem:[%s4 + $0x28] sm:$0xff]
        %v1020 = vld [vmem:[%s4 + $0x30] sm:$0xff]
        %v1021 = vld [vmem:[%s4 + $0x38] sm:$0xff]
        %v1022 = vld [vmem:[%s4 + $0x40] sm:$0xff]
        %v1023 = vld [vmem:[%s4 + $0x48] sm:$0xff]
        %v1024 = vld [vmem:[%s4 + $0x50] sm:$0x33]
        %s1025 = scalar_lea.vmem %s4, 88
        %v1026 = vld [vmem:[%s1025] sm:$0xff]
        %v1027 = vld [vmem:[%s1025 + $0x8] sm:$0xff]
        %v1028 = vld [vmem:[%s1025 + $0x10] sm:$0xff]
        %v1029 = vld [vmem:[%s1025 + $0x18] sm:$0xff]
        %v1030 = vld [vmem:[%s1025 + $0x20] sm:$0xff]
        %v1031 = vld [vmem:[%s1025 + $0x28] sm:$0xff]
        %v1032 = vld [vmem:[%s1025 + $0x30] sm:$0xff]
        %v1033 = vld [vmem:[%s1025 + $0x38] sm:$0xff]
        %v1034 = vld [vmem:[%s1025 + $0x40] sm:$0xff]
        %v1035 = vld [vmem:[%s1025 + $0x48] sm:$0xff]
        %v1036 = vld [vmem:[%s1025 + $0x50] sm:$0x33]
        %v1038 = vshrl.u32 %v1013, 16
        %v1040 = vshll.u32 %v1013, 16
        %v1042 = vrot.slane %v1040, 1
        %v1043 = vor.u32 %v1038, %v1042
        %v1055 = vunpack.c.l.b16 %v1026
        %v1056 = vunpack.c.h.b16 %v1026
        %v1057 = vunpack.c.l.b16 %v1027
        %v1058 = vunpack.c.h.b16 %v1027
        %v1059 = vunpack.c.l.b16 %v1028
        %v1060 = vunpack.c.h.b16 %v1028
        %v1061 = vunpack.c.l.b16 %v1029
        %v1062 = vunpack.c.h.b16 %v1029
        %v1063 = vunpack.c.l.b16 %v1030
        %v1064 = vunpack.c.h.b16 %v1030
        %v1065 = vunpack.c.l.b16 %v1031
        %v1066 = vunpack.c.h.b16 %v1031
        %v1067 = vunpack.c.l.b16 %v1032
        %v1068 = vunpack.c.h.b16 %v1032
        %v1069 = vunpack.c.l.b16 %v1033
        %v1070 = vunpack.c.h.b16 %v1033
        %v1071 = vunpack.c.l.b16 %v1034
        %v1072 = vunpack.c.h.b16 %v1034
        %v1073 = vunpack.c.l.b16 %v1035
        %v1074 = vunpack.c.h.b16 %v1035
        %v1075 = vunpack.c.l.b16 %v1036
        %v1076 = vunpack.c.h.b16 %v1036
        %v1077 = vpack.c.b16 %v1057, %v1055
        %v1078 = vpack.c.b16 %v1058, %v1056
        %v1079 = vpack.c.b16 %v1061, %v1059
        %v1080 = vpack.c.b16 %v1062, %v1060
        %v1081 = vpack.c.b16 %v1065, %v1063
        %v1082 = vpack.c.b16 %v1066, %v1064
        %v1083 = vpack.c.b16 %v1069, %v1067
        %v1084 = vpack.c.b16 %v1070, %v1068
        %v1085 = vpack.c.b16 %v1073, %v1071
        %v1086 = vpack.c.b16 %v1074, %v1072
        %v1087 = vpack.c.b16 %v1075, %v1075
        %v1088 = vpack.c.b16 %v1076, %v1076
        %vm1099 = vcmask 687104
        %v1101 = vsel %vm1099, %v1043, 0
        %vm1103 = vcmask 1041408
        %v1105 = vsel %vm1103, %v1087, 0
        %v1108 = vsel %vm1103, %v1088, 0
        %1110 = vmatpush.bf16.msra.mxu0 0
        %1111 = vmatpush.bf16.msra.mxu0 0
        %1112 = vmatpush.bf16.msra.mxu0 %v1105
        %1113 = vmatpush.bf16.msra.mxu0 %v1085
        %1114 = vmatpush.bf16.msra.mxu0 %v1083
        %1115 = vmatpush.bf16.msra.mxu0 %v1081
        %1116 = vmatpush.bf16.msra.mxu0 %v1079
        %1117 = vmatpush.bf16.msra.mxu0 %v1077
        %1118 = vmatmul.bf16.gmra.mxu0 %v1101
        %v1119 = vpop.f32.mrf.mxu0
        %v1120 = vadd.f32 0.0, %v1119
        %v1121 = vpop.f32.mrf.mxu0
        %v1122 = vadd.f32 0.0, %v1121
        %1123 = vdwg.mxu0
        %1124 = vmatpush.bf16.msra.mxu0 0
        %1125 = vmatpush.bf16.msra.mxu0 0
        %1126 = vmatpush.bf16.msra.mxu0 %v1108
        %1127 = vmatpush.bf16.msra.mxu0 %v1086
        %1128 = vmatpush.bf16.msra.mxu0 %v1084
        %1129 = vmatpush.bf16.msra.mxu0 %v1082
        %1130 = vmatpush.bf16.msra.mxu0 %v1080
        %1131 = vmatpush.bf16.msra.mxu0 %v1078
        %1132 = vmatmul.bf16.gmra.mxu0 %v1101
        %v1133 = vpop.f32.mrf.mxu0
        %v1134 = vadd.f32 0.0, %v1133
        %v1135 = vpop.f32.mrf.mxu0
        %v1136 = vadd.f32 0.0, %v1135
        %1137 = vdwg.mxu0
        %v1149 = vunpack.c.l.b16 %v1014
        %v1150 = vunpack.c.h.b16 %v1014
        %v1151 = vunpack.c.l.b16 %v1015
        %v1152 = vunpack.c.h.b16 %v1015
        %v1153 = vunpack.c.l.b16 %v1016
        %v1154 = vunpack.c.h.b16 %v1016
        %v1155 = vunpack.c.l.b16 %v1017
        %v1156 = vunpack.c.h.b16 %v1017
        %v1157 = vunpack.c.l.b16 %v1018
        %v1158 = vunpack.c.h.b16 %v1018
        %v1159 = vunpack.c.l.b16 %v1019
        %v1160 = vunpack.c.h.b16 %v1019
        %v1161 = vunpack.c.l.b16 %v1020
        %v1162 = vunpack.c.h.b16 %v1020
        %v1163 = vunpack.c.l.b16 %v1021
        %v1164 = vunpack.c.h.b16 %v1021
        %v1165 = vunpack.c.l.b16 %v1022
        %v1166 = vunpack.c.h.b16 %v1022
        %v1167 = vunpack.c.l.b16 %v1023
        %v1168 = vunpack.c.h.b16 %v1023
        %v1169 = vunpack.c.l.b16 %v1024
        %v1170 = vunpack.c.h.b16 %v1024
        %v1171 = vpack.c.b16 %v1151, %v1149
        %v1172 = vpack.c.b16 %v1152, %v1150
        %v1173 = vpack.c.b16 %v1155, %v1153
        %v1174 = vpack.c.b16 %v1156, %v1154
        %v1175 = vpack.c.b16 %v1159, %v1157
        %v1176 = vpack.c.b16 %v1160, %v1158
        %v1177 = vpack.c.b16 %v1163, %v1161
        %v1178 = vpack.c.b16 %v1164, %v1162
        %v1179 = vpack.c.b16 %v1167, %v1165
        %v1180 = vpack.c.b16 %v1168, %v1166
        %v1181 = vpack.c.b16 %v1169, %v1169
        %v1182 = vpack.c.b16 %v1170, %v1170
        %v1193 = vsel %vm1099, %v1013, 0
        %v1196 = vsel %vm1103, %v1181, 0
        %v1199 = vsel %vm1103, %v1182, 0
        %1201 = vmatpush.bf16.msra.mxu0 0
        %1202 = vmatpush.bf16.msra.mxu0 0
        %1203 = vmatpush.bf16.msra.mxu0 %v1196
        %1204 = vmatpush.bf16.msra.mxu0 %v1179
        %1205 = vmatpush.bf16.msra.mxu0 %v1177
        %1206 = vmatpush.bf16.msra.mxu0 %v1175
        %1207 = vmatpush.bf16.msra.mxu0 %v1173
        %1208 = vmatpush.bf16.msra.mxu0 %v1171
        %1209 = vmatmul.bf16.gmra.mxu0 %v1193
        %v1210 = vpop.f32.mrf.mxu0
        %v1211 = vadd.f32 %v1120, %v1210
        %v1212 = vpop.f32.mrf.mxu0
        %v1213 = vadd.f32 %v1122, %v1212
        %1214 = vdwg.mxu0
        %1215 = vmatpush.bf16.msra.mxu0 0
        %1216 = vmatpush.bf16.msra.mxu0 0
        %1217 = vmatpush.bf16.msra.mxu0 %v1199
        %1218 = vmatpush.bf16.msra.mxu0 %v1180
        %1219 = vmatpush.bf16.msra.mxu0 %v1178
        %1220 = vmatpush.bf16.msra.mxu0 %v1176
        %1221 = vmatpush.bf16.msra.mxu0 %v1174
        %1222 = vmatpush.bf16.msra.mxu0 %v1172
        %1223 = vmatmul.bf16.gmra.mxu0 %v1193
        %v1224 = vpop.f32.mrf.mxu0
        %v1225 = vadd.f32 %v1134, %v1224
        %v1226 = vpop.f32.mrf.mxu0
        %v1227 = vadd.f32 %v1136, %v1226
        %1228 = vdwg.mxu0
        %s1229 = scalar_lea.vmem %s4, 176
        %v1230 = vld [vmem:[%s1229] sm:$0xff]
        %v1231 = vld [vmem:[%s1229 + $0x8] sm:$0xff]
        %v1232 = vld [vmem:[%s1229 + $0x10] sm:$0xff]
        %v1233 = vld [vmem:[%s1229 + $0x18] sm:$0xff]
        %v1234 = vld [vmem:[%s1229 + $0x20] sm:$0xff]
        %v1235 = vld [vmem:[%s1229 + $0x28] sm:$0xff]
        %v1236 = vld [vmem:[%s1229 + $0x30] sm:$0xff]
        %v1237 = vld [vmem:[%s1229 + $0x38] sm:$0xff]
        %v1238 = vld [vmem:[%s1229 + $0x40] sm:$0xff]
        %v1239 = vld [vmem:[%s1229 + $0x48] sm:$0xff]
        %v1240 = vld [vmem:[%s1229 + $0x50] sm:$0x33]
        %v1242 = vrot.slane %v1013, 1
        %v1254 = vunpack.c.l.b16 %v1230
        %v1255 = vunpack.c.h.b16 %v1230
        %v1256 = vunpack.c.l.b16 %v1231
        %v1257 = vunpack.c.h.b16 %v1231
        %v1258 = vunpack.c.l.b16 %v1232
        %v1259 = vunpack.c.h.b16 %v1232
        %v1260 = vunpack.c.l.b16 %v1233
        %v1261 = vunpack.c.h.b16 %v1233
        %v1262 = vunpack.c.l.b16 %v1234
        %v1263 = vunpack.c.h.b16 %v1234
        %v1264 = vunpack.c.l.b16 %v1235
        %v1265 = vunpack.c.h.b16 %v1235
        %v1266 = vunpack.c.l.b16 %v1236
        %v1267 = vunpack.c.h.b16 %v1236
        %v1268 = vunpack.c.l.b16 %v1237
        %v1269 = vunpack.c.h.b16 %v1237
        %v1270 = vunpack.c.l.b16 %v1238
        %v1271 = vunpack.c.h.b16 %v1238
        %v1272 = vunpack.c.l.b16 %v1239
        %v1273 = vunpack.c.h.b16 %v1239
        %v1274 = vunpack.c.l.b16 %v1240
        %v1275 = vunpack.c.h.b16 %v1240
        %v1276 = vpack.c.b16 %v1256, %v1254
        %v1277 = vpack.c.b16 %v1257, %v1255
        %v1278 = vpack.c.b16 %v1260, %v1258
        %v1279 = vpack.c.b16 %v1261, %v1259
        %v1280 = vpack.c.b16 %v1264, %v1262
        %v1281 = vpack.c.b16 %v1265, %v1263
        %v1282 = vpack.c.b16 %v1268, %v1266
        %v1283 = vpack.c.b16 %v1269, %v1267
        %v1284 = vpack.c.b16 %v1272, %v1270
        %v1285 = vpack.c.b16 %v1273, %v1271
        %v1286 = vpack.c.b16 %v1274, %v1274
        %v1287 = vpack.c.b16 %v1275, %v1275
        %v1299 = vsel %vm1099, %v1242, 0
        %v1302 = vsel %vm1103, %v1286, 0
        %v1305 = vsel %vm1103, %v1287, 0
        %1307 = vmatpush.bf16.msra.mxu0 0
        %1308 = vmatpush.bf16.msra.mxu0 0
        %1309 = vmatpush.bf16.msra.mxu0 %v1302
        %1310 = vmatpush.bf16.msra.mxu0 %v1284
        %1311 = vmatpush.bf16.msra.mxu0 %v1282
        %1312 = vmatpush.bf16.msra.mxu0 %v1280
        %1313 = vmatpush.bf16.msra.mxu0 %v1278
        %1314 = vmatpush.bf16.msra.mxu0 %v1276
        %1315 = vmatmul.bf16.gmra.mxu0 %v1299
        %v1316 = vpop.f32.mrf.mxu0
        %v1317 = vadd.f32 0.0, %v1316
        %v1318 = vpop.f32.mrf.mxu0
        %v1319 = vadd.f32 0.0, %v1318
        %1320 = vdwg.mxu0
        %1321 = vmatpush.bf16.msra.mxu0 0
        %1322 = vmatpush.bf16.msra.mxu0 0
        %1323 = vmatpush.bf16.msra.mxu0 %v1305
        %1324 = vmatpush.bf16.msra.mxu0 %v1285
        %1325 = vmatpush.bf16.msra.mxu0 %v1283
        %1326 = vmatpush.bf16.msra.mxu0 %v1281
        %1327 = vmatpush.bf16.msra.mxu0 %v1279
        %1328 = vmatpush.bf16.msra.mxu0 %v1277
        %1329 = vmatmul.bf16.gmra.mxu0 %v1299
        %v1330 = vpop.f32.mrf.mxu0
        %v1331 = vadd.f32 0.0, %v1330
        %v1332 = vpop.f32.mrf.mxu0
        %v1333 = vadd.f32 0.0, %v1332
        %1334 = vdwg.mxu0
        %v1335 = vadd.f32 %v1211, %v1317
        %v1336 = vadd.f32 %v1225, %v1331
        %v1337 = vadd.f32 %v1213, %v1319
        %v1338 = vadd.f32 %v1227, %v1333
        %s1339 = scalar_lea.vmem %s4, 264
        %v1340 = vld [vmem:[%s1339] sm:$0xff]
        %v1341 = vld [vmem:[%s1339 + $0x8] sm:$0xff]
        %v1342 = vld [vmem:[%s1339 + $0x10] sm:$0xff]
        %v1343 = vld [vmem:[%s1339 + $0x18] sm:$0xff]
        %v1344 = vld [vmem:[%s1339 + $0x20] sm:$0xff]
        %v1345 = vld [vmem:[%s1339 + $0x28] sm:$0xff]
        %v1346 = vld [vmem:[%s1339 + $0x30] sm:$0xff]
        %v1347 = vld [vmem:[%s1339 + $0x38] sm:$0xff]
        %v1348 = vld [vmem:[%s1339 + $0x40] sm:$0xff]
        %v1349 = vld [vmem:[%s1339 + $0x48] sm:$0xff]
        %v1350 = vld [vmem:[%s1339 + $0x50] sm:$0x33]
        %v1351 = vrot.slane %v1038, 1
        %v1352 = vrot.slane %v1040, 2
        %v1353 = vor.u32 %v1351, %v1352
        %v1365 = vunpack.c.l.b16 %v1340
        %v1366 = vunpack.c.h.b16 %v1340
        %v1367 = vunpack.c.l.b16 %v1341
        %v1368 = vunpack.c.h.b16 %v1341
        %v1369 = vunpack.c.l.b16 %v1342
        %v1370 = vunpack.c.h.b16 %v1342
        %v1371 = vunpack.c.l.b16 %v1343
        %v1372 = vunpack.c.h.b16 %v1343
        %v1373 = vunpack.c.l.b16 %v1344
        %v1374 = vunpack.c.h.b16 %v1344
        %v1375 = vunpack.c.l.b16 %v1345
        %v1376 = vunpack.c.h.b16 %v1345
        %v1377 = vunpack.c.l.b16 %v1346
        %v1378 = vunpack.c.h.b16 %v1346
        %v1379 = vunpack.c.l.b16 %v1347
        %v1380 = vunpack.c.h.b16 %v1347
        %v1381 = vunpack.c.l.b16 %v1348
        %v1382 = vunpack.c.h.b16 %v1348
        %v1383 = vunpack.c.l.b16 %v1349
        %v1384 = vunpack.c.h.b16 %v1349
        %v1385 = vunpack.c.l.b16 %v1350
        %v1386 = vunpack.c.h.b16 %v1350
        %v1387 = vpack.c.b16 %v1367, %v1365
        %v1388 = vpack.c.b16 %v1368, %v1366
        %v1389 = vpack.c.b16 %v1371, %v1369
        %v1390 = vpack.c.b16 %v1372, %v1370
        %v1391 = vpack.c.b16 %v1375, %v1373
        %v1392 = vpack.c.b16 %v1376, %v1374
        %v1393 = vpack.c.b16 %v1379, %v1377
        %v1394 = vpack.c.b16 %v1380, %v1378
        %v1395 = vpack.c.b16 %v1383, %v1381
        %v1396 = vpack.c.b16 %v1384, %v1382
        %v1397 = vpack.c.b16 %v1385, %v1385
        %v1398 = vpack.c.b16 %v1386, %v1386
        %v1410 = vsel %vm1099, %v1353, 0
        %v1413 = vsel %vm1103, %v1397, 0
        %v1416 = vsel %vm1103, %v1398, 0
        %1418 = vmatpush.bf16.msra.mxu0 0
        %1419 = vmatpush.bf16.msra.mxu0 0
        %1420 = vmatpush.bf16.msra.mxu0 %v1413
        %1421 = vmatpush.bf16.msra.mxu0 %v1395
        %1422 = vmatpush.bf16.msra.mxu0 %v1393
        %1423 = vmatpush.bf16.msra.mxu0 %v1391
        %1424 = vmatpush.bf16.msra.mxu0 %v1389
        %1425 = vmatpush.bf16.msra.mxu0 %v1387
        %1426 = vmatmul.bf16.gmra.mxu0 %v1410
        %v1427 = vpop.f32.mrf.mxu0
        %v1428 = vadd.f32 0.0, %v1427
        %v1429 = vpop.f32.mrf.mxu0
        %v1430 = vadd.f32 0.0, %v1429
        %1431 = vdwg.mxu0
        %1432 = vmatpush.bf16.msra.mxu0 0
        %1433 = vmatpush.bf16.msra.mxu0 0
        %1434 = vmatpush.bf16.msra.mxu0 %v1416
        %1435 = vmatpush.bf16.msra.mxu0 %v1396
        %1436 = vmatpush.bf16.msra.mxu0 %v1394
        %1437 = vmatpush.bf16.msra.mxu0 %v1392
        %1438 = vmatpush.bf16.msra.mxu0 %v1390
        %1439 = vmatpush.bf16.msra.mxu0 %v1388
        %1440 = vmatmul.bf16.gmra.mxu0 %v1410
        %v1441 = vpop.f32.mrf.mxu0
        %v1442 = vadd.f32 0.0, %v1441
        %v1443 = vpop.f32.mrf.mxu0
        %v1444 = vadd.f32 0.0, %v1443
        %1445 = vdwg.mxu0
        %v1446 = vadd.f32 %v1335, %v1428
        %v1447 = vadd.f32 %v1336, %v1442
        %v1448 = vadd.f32 %v1337, %v1430
        %v1449 = vadd.f32 %v1338, %v1444
        %s1450 = scalar_lea.vmem %s4, 352
        %v1451 = vld [vmem:[%s1450] sm:$0xff]
        %v1452 = vld [vmem:[%s1450 + $0x8] sm:$0xff]
        %v1453 = vld [vmem:[%s1450 + $0x10] sm:$0xff]
        %v1454 = vld [vmem:[%s1450 + $0x18] sm:$0xff]
        %v1455 = vld [vmem:[%s1450 + $0x20] sm:$0xff]
        %v1456 = vld [vmem:[%s1450 + $0x28] sm:$0xff]
        %v1457 = vld [vmem:[%s1450 + $0x30] sm:$0xff]
        %v1458 = vld [vmem:[%s1450 + $0x38] sm:$0xff]
        %v1459 = vld [vmem:[%s1450 + $0x40] sm:$0xff]
        %v1460 = vld [vmem:[%s1450 + $0x48] sm:$0xff]
        %v1461 = vld [vmem:[%s1450 + $0x50] sm:$0x33]
        %v1462 = vrot.slane %v1013, 2
        %v1474 = vunpack.c.l.b16 %v1451
        %v1475 = vunpack.c.h.b16 %v1451
        %v1476 = vunpack.c.l.b16 %v1452
        %v1477 = vunpack.c.h.b16 %v1452
        %v1478 = vunpack.c.l.b16 %v1453
        %v1479 = vunpack.c.h.b16 %v1453
        %v1480 = vunpack.c.l.b16 %v1454
        %v1481 = vunpack.c.h.b16 %v1454
        %v1482 = vunpack.c.l.b16 %v1455
        %v1483 = vunpack.c.h.b16 %v1455
        %v1484 = vunpack.c.l.b16 %v1456
        %v1485 = vunpack.c.h.b16 %v1456
        %v1486 = vunpack.c.l.b16 %v1457
        %v1487 = vunpack.c.h.b16 %v1457
        %v1488 = vunpack.c.l.b16 %v1458
        %v1489 = vunpack.c.h.b16 %v1458
        %v1490 = vunpack.c.l.b16 %v1459
        %v1491 = vunpack.c.h.b16 %v1459
        %v1492 = vunpack.c.l.b16 %v1460
        %v1493 = vunpack.c.h.b16 %v1460
        %v1494 = vunpack.c.l.b16 %v1461
        %v1495 = vunpack.c.h.b16 %v1461
        %v1496 = vpack.c.b16 %v1476, %v1474
        %v1497 = vpack.c.b16 %v1477, %v1475
        %v1498 = vpack.c.b16 %v1480, %v1478
        %v1499 = vpack.c.b16 %v1481, %v1479
        %v1500 = vpack.c.b16 %v1484, %v1482
        %v1501 = vpack.c.b16 %v1485, %v1483
        %v1502 = vpack.c.b16 %v1488, %v1486
        %v1503 = vpack.c.b16 %v1489, %v1487
        %v1504 = vpack.c.b16 %v1492, %v1490
        %v1505 = vpack.c.b16 %v1493, %v1491
        %v1506 = vpack.c.b16 %v1494, %v1494
        %v1507 = vpack.c.b16 %v1495, %v1495
        %v1519 = vsel %vm1099, %v1462, 0
        %v1522 = vsel %vm1103, %v1506, 0
        %v1525 = vsel %vm1103, %v1507, 0
        %1527 = vmatpush.bf16.msra.mxu0 0
        %1528 = vmatpush.bf16.msra.mxu0 0
        %1529 = vmatpush.bf16.msra.mxu0 %v1522
        %1530 = vmatpush.bf16.msra.mxu0 %v1504
        %1531 = vmatpush.bf16.msra.mxu0 %v1502
        %1532 = vmatpush.bf16.msra.mxu0 %v1500
        %1533 = vmatpush.bf16.msra.mxu0 %v1498
        %1534 = vmatpush.bf16.msra.mxu0 %v1496
        %1535 = vmatmul.bf16.gmra.mxu0 %v1519
        %v1536 = vpop.f32.mrf.mxu0
        %v1537 = vadd.f32 0.0, %v1536
        %v1538 = vpop.f32.mrf.mxu0
        %v1539 = vadd.f32 0.0, %v1538
        %1540 = vdwg.mxu0
        %1541 = vmatpush.bf16.msra.mxu0 0
        %1542 = vmatpush.bf16.msra.mxu0 0
        %1543 = vmatpush.bf16.msra.mxu0 %v1525
        %1544 = vmatpush.bf16.msra.mxu0 %v1505
        %1545 = vmatpush.bf16.msra.mxu0 %v1503
        %1546 = vmatpush.bf16.msra.mxu0 %v1501
        %1547 = vmatpush.bf16.msra.mxu0 %v1499
        %1548 = vmatpush.bf16.msra.mxu0 %v1497
        %1549 = vmatmul.bf16.gmra.mxu0 %v1519
        %v1550 = vpop.f32.mrf.mxu0
        %v1551 = vadd.f32 0.0, %v1550
        %v1552 = vpop.f32.mrf.mxu0
        %v1553 = vadd.f32 0.0, %v1552
        %1554 = vdwg.mxu0
        %v1555 = vadd.f32 %v1446, %v1537
        %v1556 = vadd.f32 %v1447, %v1551
        %v1557 = vadd.f32 %v1448, %v1539
        %v1558 = vadd.f32 %v1449, %v1553
        %v1560 = vperm.slane %v339, 0
        %v1561 = vperm.slane %v339, 1
        %v1564 = vadd.f32 %v1555, %v1560
        %v1565 = vadd.f32 %v1556, %v1561
        %v1566 = vadd.f32 %v1557, %v1560
        %v1567 = vadd.f32 %v1558, %v1561
        %vm1568 = vcmp.ge.f32.partialorder %v1564, 0.0
        %vm1569 = vcmp.ge.f32.partialorder %v1565, 0.0
        %vm1570 = vcmp.ge.f32.partialorder %v1566, 0.0
        %vm1571 = vcmp.ge.f32.partialorder %v1567, 0.0
        %v1572 = vmul.f32 %v1564, 0.01
        %v1573 = vmul.f32 %v1565, 0.01
        %v1574 = vmul.f32 %v1566, 0.01
        %v1575 = vmul.f32 %v1567, 0.01
        %v1576 = vsel %vm1568, %v1564, %v1572
        %v1577 = vsel %vm1569, %v1565, %v1573
        %v1578 = vsel %vm1570, %v1566, %v1574
        %v1579 = vsel %vm1571, %v1567, %v1575
        %1584 = vrot.lane.b32.xlu0 %v1576, 112
        %v1585 = vpop.permute.xlu0 %1584
        %1586 = vrot.lane.b32.xlu0 %v1577, 112
        %v1587 = vpop.permute.xlu0 %1586
        %1588 = vrot.lane.b32.xlu0 %v1578, 112
        %v1589 = vpop.permute.xlu0 %1588
        %1590 = vrot.lane.b32.xlu0 %v1579, 112
        %v1591 = vpop.permute.xlu0 %1590
        %vm1592 = vcmask 916480
        %v1593 = vsel %vm1592, %v1585, %v1587
        %v1594 = vsel %vm1592, %v1589, %v1591
        %v1599 = vmax.f32 %v1576, %v1593
        %v1600 = vmax.f32 %v1577, %v1587
        %v1601 = vmax.f32 %v1578, %v1594
        %v1602 = vmax.f32 %v1579, %v1591
        %v1603 = vpack.c.bf16 %v1601, %v1599
        %v1604 = vpack.c.bf16 %v1602, %v1600
        %v1605 = vld [vmem:[%s5] sm:$0xf]
        %v1606 = vld [vmem:[%s5 + $0x4] sm:$0xf]
        %v1607 = vld [vmem:[%s5 + $0x8] sm:$0xf]
        %v1608 = vld [vmem:[%s5 + $0xc] sm:$0xf]
        %v1609 = vld [vmem:[%s5 + $0x10] sm:$0xf]
        %v1610 = vld [vmem:[%s5 + $0x14] sm:$0xf]
        %v1611 = vld [vmem:[%s5 + $0x18] sm:$0xf]
        %v1612 = vld [vmem:[%s5 + $0x1c] sm:$0xf]
        %v1613 = vld [vmem:[%s5 + $0x20] sm:$0xf]
        %v1614 = vld [vmem:[%s5 + $0x24] sm:$0xf]
        %v1615 = vld [vmem:[%s5 + $0x28] sm:$0xf]
        %v1616 = vld [vmem:[%s5 + $0x2c] sm:$0xf]
        %v1617 = vld [vmem:[%s5 + $0x30] sm:$0xf]
        %v1618 = vld [vmem:[%s5 + $0x34] sm:$0xf]
        %v1619 = vld [vmem:[%s5 + $0x38] sm:$0xf]
        %v1620 = vld [vmem:[%s5 + $0x3c] sm:$0xf]
        %v1621 = vld [vmem:[%s5 + $0x40] sm:$0xf]
        %v1622 = vld [vmem:[%s5 + $0x44] sm:$0xf]
        %v1641 = vunpack.c.l.b16 %v1605
        %v1642 = vunpack.c.l.b16 %v1606
        %v1643 = vunpack.c.l.b16 %v1607
        %v1644 = vunpack.c.l.b16 %v1608
        %v1645 = vunpack.c.l.b16 %v1609
        %v1646 = vunpack.c.l.b16 %v1610
        %v1647 = vunpack.c.l.b16 %v1611
        %v1648 = vunpack.c.l.b16 %v1612
        %v1649 = vunpack.c.l.b16 %v1613
        %v1650 = vunpack.c.l.b16 %v1614
        %v1651 = vunpack.c.l.b16 %v1615
        %v1652 = vunpack.c.l.b16 %v1616
        %v1653 = vunpack.c.l.b16 %v1617
        %v1654 = vunpack.c.l.b16 %v1618
        %v1655 = vunpack.c.l.b16 %v1619
        %v1656 = vunpack.c.l.b16 %v1620
        %v1657 = vunpack.c.l.b16 %v1621
        %v1658 = vunpack.c.l.b16 %v1622
        %v1659 = vpack.c.b16 %v1642, %v1641
        %v1660 = vpack.c.b16 %v1644, %v1643
        %v1661 = vpack.c.b16 %v1646, %v1645
        %v1662 = vpack.c.b16 %v1648, %v1647
        %v1663 = vpack.c.b16 %v1650, %v1649
        %v1664 = vpack.c.b16 %v1652, %v1651
        %v1665 = vpack.c.b16 %v1654, %v1653
        %v1666 = vpack.c.b16 %v1656, %v1655
        %v1667 = vpack.c.b16 %v1658, %v1657
        %vm1677 = vcmask 130048
        %v1679 = vsel %vm1677, %v1604, 0
        %1681 = vmatpush.bf16.msra.mxu0 %v1666
        %1682 = vmatpush.bf16.msra.mxu0 %v1665
        %1683 = vmatpush.bf16.msra.mxu0 %v1664
        %1684 = vmatpush.bf16.msra.mxu0 %v1663
        %1685 = vmatpush.bf16.msra.mxu0 %v1662
        %1686 = vmatpush.bf16.msra.mxu0 %v1661
        %1687 = vmatpush.bf16.msra.mxu0 %v1660
        %1688 = vmatpush.bf16.msra.mxu0 %v1659
        %1689 = vmatmul.bf16.gmra.mxu0 %v1603
        %v1690 = vpop.f32.mrf.mxu0
        %v1691 = vadd.f32 0.0, %v1690
        %v1692 = vpop.f32.mrf.mxu0
        %v1693 = vadd.f32 0.0, %v1692
        %1694 = vdwg.mxu0
        %1695 = vmatpush.bf16.msra.mxu0 0
        %1696 = vmatpush.bf16.msra.mxu0 0
        %1697 = vmatpush.bf16.msra.mxu0 0
        %1698 = vmatpush.bf16.msra.mxu0 0
        %1699 = vmatpush.bf16.msra.mxu0 0
        %1700 = vmatpush.bf16.msra.mxu0 0
        %1701 = vmatpush.bf16.msra.mxu0 0
        %1702 = vmatpush.bf16.msra.mxu0 %v1667
        %1703 = vmatmul.bf16.gmra.mxu0 %v1679
        %v1704 = vpop.f32.mrf.mxu0
        %v1705 = vadd.f32 %v1691, %v1704
        %v1706 = vpop.f32.mrf.mxu0
        %v1707 = vadd.f32 %v1693, %v1706
        %1708 = vdwg.mxu0
        %v1711 = vrot.slane %v1705, 1
        %v1712 = vrot.slane %v1707, 1
        %v1713 = vsel %vm963, %v1711, %v1712
        %v1716 = vmax.f32 %v1705, %v1713
        %v1717 = vmax.f32 %v1707, %v1712
        %v1718 = vld [vmem:[%s6] sm:$0x7]
        %v1719 = vpack.c.bf16 %v1717, %v1716
        %vm1720 = vcmask 72704
        %v1722 = vsel %vm1720, %v1718, 0
        %vm1724 = vcmask 1043456
        %v1725 = vsel %vm1724, 4294967295, 65535
        %v1726 = vsel %vm992, %v1725, 0
        %v1728 = vand.u32 %v1719, %v1726
        %1730 = vmatpush.bf16.msra.mxu0 0
        %1731 = vmatpush.bf16.msra.mxu0 0
        %1732 = vmatpush.bf16.msra.mxu0 0
        %1733 = vmatpush.bf16.msra.mxu0 0
        %1734 = vmatpush.bf16.msra.mxu0 0
        %1735 = vmatpush.bf16.msra.mxu0 0
        %1736 = vmatpush.bf16.msra.mxu0 0
        %1737 = vmatpush.bf16.msra.mxu0 %v1728
        %1738 = vmatmul.bf16.gmra.mxu0 %v1722
        %v1739 = vpop.f32.mrf.mxu0
        %v1740 = vadd.f32 0.0, %v1739
        %v1741 = vpop.f32.mrf.mxu0
        %1742 = vdwg.mxu0
        %s1743 = scalar_lea.vmem %s334, 32
        %v1744 = vld [vmem:[%s1743] sm:$0xff]
        %v1745 = vld [vmem:[%s1743 + $0x8] sm:$0xff]
        %v1746 = vld [vmem:[%s1743 + $0x10] sm:$0xff]
        %v1747 = vld [vmem:[%s1743 + $0x18] sm:$0xf]
        %v1748 = vpack.c.bf16 %v1745, %v1744
        %v1749 = vpack.c.bf16 %v1747, %v1746
        %v1750 = vld [vmem:[%s1743 + $0x1] sm:$0xff]
        %v1751 = vld [vmem:[%s1743 + $0x9] sm:$0xff]
        %v1752 = vld [vmem:[%s1743 + $0x11] sm:$0xff]
        %v1753 = vld [vmem:[%s1743 + $0x19] sm:$0xf]
        %v1754 = vpack.c.bf16 %v1751, %v1750
        %v1755 = vpack.c.bf16 %v1753, %v1752
        %v1757 = vsel %vm382, %v1754, 0
        %v1760 = vsel %vm382, %v1755, 0
        %1762 = vmatpush.bf16.msra.mxu0 0
        %1763 = vmatpush.bf16.msra.mxu0 0
        %1764 = vmatpush.bf16.msra.mxu0 0
        %1765 = vmatpush.bf16.msra.mxu0 0
        %1766 = vmatpush.bf16.msra.mxu0 0
        %1767 = vmatpush.bf16.msra.mxu0 0
        %1768 = vmatpush.bf16.msra.mxu0 %v376
        %1769 = vmatpush.bf16.msra.mxu0 %v374
        %1770 = vmatmul.bf16.gmra.mxu0 %v1757
        %v1771 = vpop.f32.mrf.mxu0
        %v1772 = vadd.f32 0.0, %v1771
        %v1773 = vpop.f32.mrf.mxu0
        %v1774 = vadd.f32 0.0, %v1773
        %1775 = vmatmul.bf16.gmra.mxu0 %v1760
        %v1776 = vpop.f32.mrf.mxu0
        %v1777 = vadd.f32 0.0, %v1776
        %v1778 = vpop.f32.mrf.mxu0
        %v1779 = vadd.f32 0.0, %v1778
        %1780 = vdwg.mxu0
        %1781 = vmatpush.bf16.msra.mxu0 0
        %1782 = vmatpush.bf16.msra.mxu0 0
        %1783 = vmatpush.bf16.msra.mxu0 0
        %1784 = vmatpush.bf16.msra.mxu0 0
        %1785 = vmatpush.bf16.msra.mxu0 0
        %1786 = vmatpush.bf16.msra.mxu0 0
        %1787 = vmatpush.bf16.msra.mxu0 %v377
        %1788 = vmatpush.bf16.msra.mxu0 %v375
        %1789 = vmatmul.bf16.gmra.mxu0 %v1757
        %v1790 = vpop.f32.mrf.mxu0
        %v1791 = vadd.f32 0.0, %v1790
        %v1792 = vpop.f32.mrf.mxu0
        %v1793 = vadd.f32 0.0, %v1792
        %1794 = vmatmul.bf16.gmra.mxu0 %v1760
        %v1795 = vpop.f32.mrf.mxu0
        %v1796 = vadd.f32 0.0, %v1795
        %v1797 = vpop.f32.mrf.mxu0
        %v1798 = vadd.f32 0.0, %v1797
        %1799 = vdwg.mxu0
        %v1801 = vsel %vm382, %v1748, 0
        %v1804 = vsel %vm382, %v1749, 0
        %1806 = vmatpush.bf16.msra.mxu0 0
        %1807 = vmatpush.bf16.msra.mxu0 0
        %1808 = vmatpush.bf16.msra.mxu0 0
        %1809 = vmatpush.bf16.msra.mxu0 0
        %1810 = vmatpush.bf16.msra.mxu0 0
        %1811 = vmatpush.bf16.msra.mxu0 0
        %1812 = vmatpush.bf16.msra.mxu0 %v441
        %1813 = vmatpush.bf16.msra.mxu0 %v439
        %1814 = vmatmul.bf16.gmra.mxu0 %v1801
        %v1815 = vpop.f32.mrf.mxu0
        %v1816 = vadd.f32 %v1772, %v1815
        %v1817 = vpop.f32.mrf.mxu0
        %v1818 = vadd.f32 %v1774, %v1817
        %1819 = vmatmul.bf16.gmra.mxu0 %v1804
        %v1820 = vpop.f32.mrf.mxu0
        %v1821 = vadd.f32 %v1777, %v1820
        %v1822 = vpop.f32.mrf.mxu0
        %v1823 = vadd.f32 %v1779, %v1822
        %1824 = vdwg.mxu0
        %1825 = vmatpush.bf16.msra.mxu0 0
        %1826 = vmatpush.bf16.msra.mxu0 0
        %1827 = vmatpush.bf16.msra.mxu0 0
        %1828 = vmatpush.bf16.msra.mxu0 0
        %1829 = vmatpush.bf16.msra.mxu0 0
        %1830 = vmatpush.bf16.msra.mxu0 0
        %1831 = vmatpush.bf16.msra.mxu0 %v442
        %1832 = vmatpush.bf16.msra.mxu0 %v440
        %1833 = vmatmul.bf16.gmra.mxu0 %v1801
        %v1834 = vpop.f32.mrf.mxu0
        %v1835 = vadd.f32 %v1791, %v1834
        %v1836 = vpop.f32.mrf.mxu0
        %v1837 = vadd.f32 %v1793, %v1836
        %1838 = vmatmul.bf16.gmra.mxu0 %v1804
        %v1839 = vpop.f32.mrf.mxu0
        %v1840 = vadd.f32 %v1796, %v1839
        %v1841 = vpop.f32.mrf.mxu0
        %v1842 = vadd.f32 %v1798, %v1841
        %1843 = vdwg.mxu0
        %v1844 = vld [vmem:[%s1743 + $0x2] sm:$0xff]
        %v1845 = vld [vmem:[%s1743 + $0xa] sm:$0xff]
        %v1846 = vld [vmem:[%s1743 + $0x12] sm:$0xff]
        %v1847 = vld [vmem:[%s1743 + $0x1a] sm:$0xf]
        %v1848 = vpack.c.bf16 %v1845, %v1844
        %v1849 = vpack.c.bf16 %v1847, %v1846
        %v1851 = vsel %vm382, %v1848, 0
        %v1854 = vsel %vm382, %v1849, 0
        %1856 = vmatpush.bf16.msra.mxu0 0
        %1857 = vmatpush.bf16.msra.mxu0 0
        %1858 = vmatpush.bf16.msra.mxu0 0
        %1859 = vmatpush.bf16.msra.mxu0 0
        %1860 = vmatpush.bf16.msra.mxu0 0
        %1861 = vmatpush.bf16.msra.mxu0 0
        %1862 = vmatpush.bf16.msra.mxu0 %v516
        %1863 = vmatpush.bf16.msra.mxu0 %v514
        %1864 = vmatmul.bf16.gmra.mxu0 %v1851
        %v1865 = vpop.f32.mrf.mxu0
        %v1866 = vadd.f32 0.0, %v1865
        %v1867 = vpop.f32.mrf.mxu0
        %v1868 = vadd.f32 0.0, %v1867
        %1869 = vmatmul.bf16.gmra.mxu0 %v1854
        %v1870 = vpop.f32.mrf.mxu0
        %v1871 = vadd.f32 0.0, %v1870
        %v1872 = vpop.f32.mrf.mxu0
        %v1873 = vadd.f32 0.0, %v1872
        %1874 = vdwg.mxu0
        %1875 = vmatpush.bf16.msra.mxu0 0
        %1876 = vmatpush.bf16.msra.mxu0 0
        %1877 = vmatpush.bf16.msra.mxu0 0
        %1878 = vmatpush.bf16.msra.mxu0 0
        %1879 = vmatpush.bf16.msra.mxu0 0
        %1880 = vmatpush.bf16.msra.mxu0 0
        %1881 = vmatpush.bf16.msra.mxu0 %v517
        %1882 = vmatpush.bf16.msra.mxu0 %v515
        %1883 = vmatmul.bf16.gmra.mxu0 %v1851
        %v1884 = vpop.f32.mrf.mxu0
        %v1885 = vadd.f32 0.0, %v1884
        %v1886 = vpop.f32.mrf.mxu0
        %v1887 = vadd.f32 0.0, %v1886
        %1888 = vmatmul.bf16.gmra.mxu0 %v1854
        %v1889 = vpop.f32.mrf.mxu0
        %v1890 = vadd.f32 0.0, %v1889
        %v1891 = vpop.f32.mrf.mxu0
        %v1892 = vadd.f32 0.0, %v1891
        %1893 = vdwg.mxu0
        %v1894 = vadd.f32 %v1816, %v1866
        %v1895 = vadd.f32 %v1835, %v1885
        %v1896 = vadd.f32 %v1818, %v1868
        %v1897 = vadd.f32 %v1837, %v1887
        %v1898 = vadd.f32 %v1821, %v1871
        %v1899 = vadd.f32 %v1840, %v1890
        %v1900 = vadd.f32 %v1823, %v1873
        %v1901 = vadd.f32 %v1842, %v1892
        %v1902 = vld [vmem:[%s1743 + $0x3] sm:$0xff]
        %v1903 = vld [vmem:[%s1743 + $0xb] sm:$0xff]
        %v1904 = vld [vmem:[%s1743 + $0x13] sm:$0xff]
        %v1905 = vld [vmem:[%s1743 + $0x1b] sm:$0xf]
        %v1906 = vpack.c.bf16 %v1903, %v1902
        %v1907 = vpack.c.bf16 %v1905, %v1904
        %v1909 = vsel %vm382, %v1906, 0
        %v1912 = vsel %vm382, %v1907, 0
        %1914 = vmatpush.bf16.msra.mxu0 0
        %1915 = vmatpush.bf16.msra.mxu0 0
        %1916 = vmatpush.bf16.msra.mxu0 0
        %1917 = vmatpush.bf16.msra.mxu0 0
        %1918 = vmatpush.bf16.msra.mxu0 0
        %1919 = vmatpush.bf16.msra.mxu0 0
        %1920 = vmatpush.bf16.msra.mxu0 %v599
        %1921 = vmatpush.bf16.msra.mxu0 %v597
        %1922 = vmatmul.bf16.gmra.mxu0 %v1909
        %v1923 = vpop.f32.mrf.mxu0
        %v1924 = vadd.f32 0.0, %v1923
        %v1925 = vpop.f32.mrf.mxu0
        %v1926 = vadd.f32 0.0, %v1925
        %1927 = vmatmul.bf16.gmra.mxu0 %v1912
        %v1928 = vpop.f32.mrf.mxu0
        %v1929 = vadd.f32 0.0, %v1928
        %v1930 = vpop.f32.mrf.mxu0
        %v1931 = vadd.f32 0.0, %v1930
        %1932 = vdwg.mxu0
        %1933 = vmatpush.bf16.msra.mxu0 0
        %1934 = vmatpush.bf16.msra.mxu0 0
        %1935 = vmatpush.bf16.msra.mxu0 0
        %1936 = vmatpush.bf16.msra.mxu0 0
        %1937 = vmatpush.bf16.msra.mxu0 0
        %1938 = vmatpush.bf16.msra.mxu0 0
        %1939 = vmatpush.bf16.msra.mxu0 %v600
        %1940 = vmatpush.bf16.msra.mxu0 %v598
        %1941 = vmatmul.bf16.gmra.mxu0 %v1909
        %v1942 = vpop.f32.mrf.mxu0
        %v1943 = vadd.f32 0.0, %v1942
        %v1944 = vpop.f32.mrf.mxu0
        %v1945 = vadd.f32 0.0, %v1944
        %1946 = vmatmul.bf16.gmra.mxu0 %v1912
        %v1947 = vpop.f32.mrf.mxu0
        %v1948 = vadd.f32 0.0, %v1947
        %v1949 = vpop.f32.mrf.mxu0
        %v1950 = vadd.f32 0.0, %v1949
        %1951 = vdwg.mxu0
        %v1952 = vadd.f32 %v1894, %v1924
        %v1953 = vadd.f32 %v1895, %v1943
        %v1954 = vadd.f32 %v1896, %v1926
        %v1955 = vadd.f32 %v1897, %v1945
        %v1956 = vadd.f32 %v1898, %v1929
        %v1957 = vadd.f32 %v1899, %v1948
        %v1958 = vadd.f32 %v1900, %v1931
        %v1959 = vadd.f32 %v1901, %v1950
        %v1960 = vld [vmem:[%s1743 + $0x4] sm:$0xff]
        %v1961 = vld [vmem:[%s1743 + $0xc] sm:$0xff]
        %v1962 = vld [vmem:[%s1743 + $0x14] sm:$0xff]
        %v1963 = vld [vmem:[%s1743 + $0x1c] sm:$0xf]
        %v1964 = vpack.c.bf16 %v1961, %v1960
        %v1965 = vpack.c.bf16 %v1963, %v1962
        %v1967 = vsel %vm382, %v1964, 0
        %v1970 = vsel %vm382, %v1965, 0
        %1972 = vmatpush.bf16.msra.mxu0 0
        %1973 = vmatpush.bf16.msra.mxu0 0
        %1974 = vmatpush.bf16.msra.mxu0 0
        %1975 = vmatpush.bf16.msra.mxu0 0
        %1976 = vmatpush.bf16.msra.mxu0 0
        %1977 = vmatpush.bf16.msra.mxu0 0
        %1978 = vmatpush.bf16.msra.mxu0 %v682
        %1979 = vmatpush.bf16.msra.mxu0 %v680
        %1980 = vmatmul.bf16.gmra.mxu0 %v1967
        %v1981 = vpop.f32.mrf.mxu0
        %v1982 = vadd.f32 0.0, %v1981
        %v1983 = vpop.f32.mrf.mxu0
        %v1984 = vadd.f32 0.0, %v1983
        %1985 = vmatmul.bf16.gmra.mxu0 %v1970
        %v1986 = vpop.f32.mrf.mxu0
        %v1987 = vadd.f32 0.0, %v1986
        %v1988 = vpop.f32.mrf.mxu0
        %v1989 = vadd.f32 0.0, %v1988
        %1990 = vdwg.mxu0
        %1991 = vmatpush.bf16.msra.mxu0 0
        %1992 = vmatpush.bf16.msra.mxu0 0
        %1993 = vmatpush.bf16.msra.mxu0 0
        %1994 = vmatpush.bf16.msra.mxu0 0
        %1995 = vmatpush.bf16.msra.mxu0 0
        %1996 = vmatpush.bf16.msra.mxu0 0
        %1997 = vmatpush.bf16.msra.mxu0 %v683
        %1998 = vmatpush.bf16.msra.mxu0 %v681
        %1999 = vmatmul.bf16.gmra.mxu0 %v1967
        %v2000 = vpop.f32.mrf.mxu0
        %v2001 = vadd.f32 0.0, %v2000
        %v2002 = vpop.f32.mrf.mxu0
        %v2003 = vadd.f32 0.0, %v2002
        %2004 = vmatmul.bf16.gmra.mxu0 %v1970
        %v2005 = vpop.f32.mrf.mxu0
        %v2006 = vadd.f32 0.0, %v2005
        %v2007 = vpop.f32.mrf.mxu0
        %v2008 = vadd.f32 0.0, %v2007
        %2009 = vdwg.mxu0
        %v2010 = vadd.f32 %v1952, %v1982
        %v2011 = vadd.f32 %v1953, %v2001
        %v2012 = vadd.f32 %v1954, %v1984
        %v2013 = vadd.f32 %v1955, %v2003
        %v2014 = vadd.f32 %v1956, %v1987
        %v2015 = vadd.f32 %v1957, %v2006
        %v2016 = vadd.f32 %v1958, %v1989
        %v2017 = vadd.f32 %v1959, %v2008
        %v2018 = vadd.f32 %v2010, %v741
        %v2019 = vadd.f32 %v2011, %v742
        %v2020 = vadd.f32 %v2012, %v741
        %v2021 = vadd.f32 %v2013, %v742
        %v2022 = vadd.f32 %v2014, %v741
        %v2023 = vadd.f32 %v2015, %v742
        %v2024 = vadd.f32 %v2016, %v741
        %v2025 = vadd.f32 %v2017, %v742
        %vm2026 = vcmp.ge.f32.partialorder %v2018, 0.0
        %vm2027 = vcmp.ge.f32.partialorder %v2019, 0.0
        %vm2028 = vcmp.ge.f32.partialorder %v2020, 0.0
        %vm2029 = vcmp.ge.f32.partialorder %v2021, 0.0
        %vm2030 = vcmp.ge.f32.partialorder %v2022, 0.0
        %vm2031 = vcmp.ge.f32.partialorder %v2023, 0.0
        %vm2032 = vcmp.ge.f32.partialorder %v2024, 0.0
        %vm2033 = vcmp.ge.f32.partialorder %v2025, 0.0
        %v2034 = vmul.f32 %v2018, 0.01
        %v2035 = vmul.f32 %v2019, 0.01
        %v2036 = vmul.f32 %v2020, 0.01
        %v2037 = vmul.f32 %v2021, 0.01
        %v2038 = vmul.f32 %v2022, 0.01
        %v2039 = vmul.f32 %v2023, 0.01
        %v2040 = vmul.f32 %v2024, 0.01
        %v2041 = vmul.f32 %v2025, 0.01
        %v2042 = vsel %vm2026, %v2018, %v2034
        %v2043 = vsel %vm2027, %v2019, %v2035
        %v2044 = vsel %vm2028, %v2020, %v2036
        %v2045 = vsel %vm2029, %v2021, %v2037
        %v2046 = vsel %vm2030, %v2022, %v2038
        %v2047 = vsel %vm2031, %v2023, %v2039
        %v2048 = vsel %vm2032, %v2024, %v2040
        %v2049 = vsel %vm2033, %v2025, %v2041
        %2058 = vrot.lane.b32.xlu0 %v2042, 122
        %v2059 = vpop.permute.xlu0 %2058
        %2060 = vrot.lane.b32.xlu0 %v2043, 122
        %v2061 = vpop.permute.xlu0 %2060
        %2062 = vrot.lane.b32.xlu0 %v2044, 122
        %v2063 = vpop.permute.xlu0 %2062
        %2064 = vrot.lane.b32.xlu0 %v2045, 122
        %v2065 = vpop.permute.xlu0 %2064
        %2066 = vrot.lane.b32.xlu0 %v2046, 122
        %v2067 = vpop.permute.xlu0 %2066
        %2068 = vrot.lane.b32.xlu0 %v2047, 122
        %v2069 = vpop.permute.xlu0 %2068
        %2070 = vrot.lane.b32.xlu0 %v2048, 122
        %v2071 = vpop.permute.xlu0 %2070
        %2072 = vrot.lane.b32.xlu0 %v2049, 122
        %v2073 = vpop.permute.xlu0 %2072
        %v2074 = vsel %vm801, %v2059, %v2061
        %v2075 = vsel %vm801, %v2063, %v2065
        %v2076 = vsel %vm801, %v2067, %v2069
        %v2077 = vsel %vm801, %v2071, %v2073
        %v2086 = vmax.f32 %v2042, %v2074
        %v2087 = vmax.f32 %v2043, %v2061
        %v2088 = vmax.f32 %v2044, %v2075
        %v2089 = vmax.f32 %v2045, %v2065
        %v2090 = vmax.f32 %v2046, %v2076
        %v2091 = vmax.f32 %v2047, %v2069
        %v2092 = vmax.f32 %v2048, %v2077
        %v2093 = vmax.f32 %v2049, %v2073
        %v2094 = vpack.c.bf16 %v2088, %v2086
        %v2095 = vpack.c.bf16 %v2089, %v2087
        %v2096 = vpack.c.bf16 %v2092, %v2090
        %v2097 = vpack.c.bf16 %v2093, %v2091
        %v2099 = vsel %vm910, %v2095, 0
        %v2102 = vsel %vm910, %v2097, 0
        %2104 = vmatpush.bf16.msra.mxu0 %v896
        %2105 = vmatpush.bf16.msra.mxu0 %v895
        %2106 = vmatpush.bf16.msra.mxu0 %v894
        %2107 = vmatpush.bf16.msra.mxu0 %v893
        %2108 = vmatpush.bf16.msra.mxu0 %v892
        %2109 = vmatpush.bf16.msra.mxu0 %v891
        %2110 = vmatpush.bf16.msra.mxu0 %v890
        %2111 = vmatpush.bf16.msra.mxu0 %v889
        %2112 = vmatmul.bf16.gmra.mxu0 %v2094
        %v2113 = vpop.f32.mrf.mxu0
        %v2114 = vadd.f32 0.0, %v2113
        %v2115 = vpop.f32.mrf.mxu0
        %v2116 = vadd.f32 0.0, %v2115
        %2117 = vmatmul.bf16.gmra.mxu0 %v2096
        %v2118 = vpop.f32.mrf.mxu0
        %v2119 = vadd.f32 0.0, %v2118
        %v2120 = vpop.f32.mrf.mxu0
        %v2121 = vadd.f32 0.0, %v2120
        %2122 = vdwg.mxu0
        %2123 = vmatpush.bf16.msra.mxu0 0
        %2124 = vmatpush.bf16.msra.mxu0 0
        %2125 = vmatpush.bf16.msra.mxu0 0
        %2126 = vmatpush.bf16.msra.mxu0 0
        %2127 = vmatpush.bf16.msra.mxu0 0
        %2128 = vmatpush.bf16.msra.mxu0 %v919
        %2129 = vmatpush.bf16.msra.mxu0 %v898
        %2130 = vmatpush.bf16.msra.mxu0 %v897
        %2131 = vmatmul.bf16.gmra.mxu0 %v2099
        %v2132 = vpop.f32.mrf.mxu0
        %v2133 = vadd.f32 %v2114, %v2132
        %v2134 = vpop.f32.mrf.mxu0
        %v2135 = vadd.f32 %v2116, %v2134
        %2136 = vmatmul.bf16.gmra.mxu0 %v2102
        %v2137 = vpop.f32.mrf.mxu0
        %v2138 = vadd.f32 %v2119, %v2137
        %v2139 = vpop.f32.mrf.mxu0
        %v2140 = vadd.f32 %v2121, %v2139
        %2141 = vdwg.mxu0
        %v2146 = vrot.slane %v2133, 1
        %v2147 = vrot.slane %v2135, 1
        %v2148 = vsel %vm963, %v2146, %v2147
        %v2149 = vrot.slane %v2138, 1
        %v2150 = vsel %vm963, %v2147, %v2149
        %v2151 = vrot.slane %v2140, 1
        %v2152 = vsel %vm963, %v2149, %v2151
        %v2157 = vmax.f32 %v2133, %v2148
        %v2158 = vmax.f32 %v2135, %v2150
        %v2159 = vmax.f32 %v2138, %v2152
        %v2160 = vmax.f32 %v2140, %v2151
        %v2161 = vpack.c.bf16 %v2158, %v2157
        %v2162 = vpack.c.bf16 %v2160, %v2159
        %v2164 = vand.u32 %v2162, %v995
        %2166 = vmatpush.bf16.msra.mxu0 0
        %2167 = vmatpush.bf16.msra.mxu0 0
        %2168 = vmatpush.bf16.msra.mxu0 0
        %2169 = vmatpush.bf16.msra.mxu0 0
        %2170 = vmatpush.bf16.msra.mxu0 0
        %2171 = vmatpush.bf16.msra.mxu0 0
        %2172 = vmatpush.bf16.msra.mxu0 %v2164
        %2173 = vmatpush.bf16.msra.mxu0 %v2161
        %2174 = vmatmul.bf16.gmra.mxu0 %v990
        %v2175 = vpop.f32.mrf.mxu0
        %v2176 = vadd.f32 0.0, %v2175
        %v2177 = vpop.f32.mrf.mxu0
        %v2178 = vadd.f32 0.0, %v2177
        %2179 = vdwg.mxu0
        %v2180 = vpack.c.bf16 %v2178, %v2176
        %v2182 = vshrl.u32 %v2180, 16
        %v2184 = vshll.u32 %v2180, 16
        %v2186 = vrot.slane %v2184, 1
        %v2187 = vor.u32 %v2182, %v2186
        %v2189 = vsel %vm1099, %v2187, 0
        %2191 = vmatpush.bf16.msra.mxu0 0
        %2192 = vmatpush.bf16.msra.mxu0 0
        %2193 = vmatpush.bf16.msra.mxu0 %v1105
        %2194 = vmatpush.bf16.msra.mxu0 %v1085
        %2195 = vmatpush.bf16.msra.mxu0 %v1083
        %2196 = vmatpush.bf16.msra.mxu0 %v1081
        %2197 = vmatpush.bf16.msra.mxu0 %v1079
        %2198 = vmatpush.bf16.msra.mxu0 %v1077
        %2199 = vmatmul.bf16.gmra.mxu0 %v2189
        %v2200 = vpop.f32.mrf.mxu0
        %v2201 = vadd.f32 0.0, %v2200
        %v2202 = vpop.f32.mrf.mxu0
        %v2203 = vadd.f32 0.0, %v2202
        %2204 = vdwg.mxu0
        %2205 = vmatpush.bf16.msra.mxu0 0
        %2206 = vmatpush.bf16.msra.mxu0 0
        %2207 = vmatpush.bf16.msra.mxu0 %v1108
        %2208 = vmatpush.bf16.msra.mxu0 %v1086
        %2209 = vmatpush.bf16.msra.mxu0 %v1084
        %2210 = vmatpush.bf16.msra.mxu0 %v1082
        %2211 = vmatpush.bf16.msra.mxu0 %v1080
        %2212 = vmatpush.bf16.msra.mxu0 %v1078
        %2213 = vmatmul.bf16.gmra.mxu0 %v2189
        %v2214 = vpop.f32.mrf.mxu0
        %v2215 = vadd.f32 0.0, %v2214
        %v2216 = vpop.f32.mrf.mxu0
        %v2217 = vadd.f32 0.0, %v2216
        %2218 = vdwg.mxu0
        %v2219 = vsel %vm1099, %v2180, 0
        %2221 = vmatpush.bf16.msra.mxu0 0
        %2222 = vmatpush.bf16.msra.mxu0 0
        %2223 = vmatpush.bf16.msra.mxu0 %v1196
        %2224 = vmatpush.bf16.msra.mxu0 %v1179
        %2225 = vmatpush.bf16.msra.mxu0 %v1177
        %2226 = vmatpush.bf16.msra.mxu0 %v1175
        %2227 = vmatpush.bf16.msra.mxu0 %v1173
        %2228 = vmatpush.bf16.msra.mxu0 %v1171
        %2229 = vmatmul.bf16.gmra.mxu0 %v2219
        %v2230 = vpop.f32.mrf.mxu0
        %v2231 = vadd.f32 %v2201, %v2230
        %v2232 = vpop.f32.mrf.mxu0
        %v2233 = vadd.f32 %v2203, %v2232
        %2234 = vdwg.mxu0
        %2235 = vmatpush.bf16.msra.mxu0 0
        %2236 = vmatpush.bf16.msra.mxu0 0
        %2237 = vmatpush.bf16.msra.mxu0 %v1199
        %2238 = vmatpush.bf16.msra.mxu0 %v1180
        %2239 = vmatpush.bf16.msra.mxu0 %v1178
        %2240 = vmatpush.bf16.msra.mxu0 %v1176
        %2241 = vmatpush.bf16.msra.mxu0 %v1174
        %2242 = vmatpush.bf16.msra.mxu0 %v1172
        %2243 = vmatmul.bf16.gmra.mxu0 %v2219
        %v2244 = vpop.f32.mrf.mxu0
        %v2245 = vadd.f32 %v2215, %v2244
        %v2246 = vpop.f32.mrf.mxu0
        %v2247 = vadd.f32 %v2217, %v2246
        %2248 = vdwg.mxu0
        %v2250 = vrot.slane %v2180, 1
        %v2252 = vsel %vm1099, %v2250, 0
        %2254 = vmatpush.bf16.msra.mxu0 0
        %2255 = vmatpush.bf16.msra.mxu0 0
        %2256 = vmatpush.bf16.msra.mxu0 %v1302
        %2257 = vmatpush.bf16.msra.mxu0 %v1284
        %2258 = vmatpush.bf16.msra.mxu0 %v1282
        %2259 = vmatpush.bf16.msra.mxu0 %v1280
        %2260 = vmatpush.bf16.msra.mxu0 %v1278
        %2261 = vmatpush.bf16.msra.mxu0 %v1276
        %2262 = vmatmul.bf16.gmra.mxu0 %v2252
        %v2263 = vpop.f32.mrf.mxu0
        %v2264 = vadd.f32 0.0, %v2263
        %v2265 = vpop.f32.mrf.mxu0
        %v2266 = vadd.f32 0.0, %v2265
        %2267 = vdwg.mxu0
        %2268 = vmatpush.bf16.msra.mxu0 0
        %2269 = vmatpush.bf16.msra.mxu0 0
        %2270 = vmatpush.bf16.msra.mxu0 %v1305
        %2271 = vmatpush.bf16.msra.mxu0 %v1285
        %2272 = vmatpush.bf16.msra.mxu0 %v1283
        %2273 = vmatpush.bf16.msra.mxu0 %v1281
        %2274 = vmatpush.bf16.msra.mxu0 %v1279
        %2275 = vmatpush.bf16.msra.mxu0 %v1277
        %2276 = vmatmul.bf16.gmra.mxu0 %v2252
        %v2277 = vpop.f32.mrf.mxu0
        %v2278 = vadd.f32 0.0, %v2277
        %v2279 = vpop.f32.mrf.mxu0
        %v2280 = vadd.f32 0.0, %v2279
        %2281 = vdwg.mxu0
        %v2282 = vadd.f32 %v2231, %v2264
        %v2283 = vadd.f32 %v2245, %v2278
        %v2284 = vadd.f32 %v2233, %v2266
        %v2285 = vadd.f32 %v2247, %v2280
        %v2286 = vrot.slane %v2182, 1
        %v2287 = vrot.slane %v2184, 2
        %v2288 = vor.u32 %v2286, %v2287
        %v2290 = vsel %vm1099, %v2288, 0
        %2292 = vmatpush.bf16.msra.mxu0 0
        %2293 = vmatpush.bf16.msra.mxu0 0
        %2294 = vmatpush.bf16.msra.mxu0 %v1413
        %2295 = vmatpush.bf16.msra.mxu0 %v1395
        %2296 = vmatpush.bf16.msra.mxu0 %v1393
        %2297 = vmatpush.bf16.msra.mxu0 %v1391
        %2298 = vmatpush.bf16.msra.mxu0 %v1389
        %2299 = vmatpush.bf16.msra.mxu0 %v1387
        %2300 = vmatmul.bf16.gmra.mxu0 %v2290
        %v2301 = vpop.f32.mrf.mxu0
        %v2302 = vadd.f32 0.0, %v2301
        %v2303 = vpop.f32.mrf.mxu0
        %v2304 = vadd.f32 0.0, %v2303
        %2305 = vdwg.mxu0
        %2306 = vmatpush.bf16.msra.mxu0 0
        %2307 = vmatpush.bf16.msra.mxu0 0
        %2308 = vmatpush.bf16.msra.mxu0 %v1416
        %2309 = vmatpush.bf16.msra.mxu0 %v1396
        %2310 = vmatpush.bf16.msra.mxu0 %v1394
        %2311 = vmatpush.bf16.msra.mxu0 %v1392
        %2312 = vmatpush.bf16.msra.mxu0 %v1390
        %2313 = vmatpush.bf16.msra.mxu0 %v1388
        %2314 = vmatmul.bf16.gmra.mxu0 %v2290
        %v2315 = vpop.f32.mrf.mxu0
        %v2316 = vadd.f32 0.0, %v2315
        %v2317 = vpop.f32.mrf.mxu0
        %v2318 = vadd.f32 0.0, %v2317
        %2319 = vdwg.mxu0
        %v2320 = vadd.f32 %v2282, %v2302
        %v2321 = vadd.f32 %v2283, %v2316
        %v2322 = vadd.f32 %v2284, %v2304
        %v2323 = vadd.f32 %v2285, %v2318
        %v2324 = vrot.slane %v2180, 2
        %v2326 = vsel %vm1099, %v2324, 0
        %2328 = vmatpush.bf16.msra.mxu0 0
        %2329 = vmatpush.bf16.msra.mxu0 0
        %2330 = vmatpush.bf16.msra.mxu0 %v1522
        %2331 = vmatpush.bf16.msra.mxu0 %v1504
        %2332 = vmatpush.bf16.msra.mxu0 %v1502
        %2333 = vmatpush.bf16.msra.mxu0 %v1500
        %2334 = vmatpush.bf16.msra.mxu0 %v1498
        %2335 = vmatpush.bf16.msra.mxu0 %v1496
        %2336 = vmatmul.bf16.gmra.mxu0 %v2326
        %v2337 = vpop.f32.mrf.mxu0
        %v2338 = vadd.f32 0.0, %v2337
        %v2339 = vpop.f32.mrf.mxu0
        %v2340 = vadd.f32 0.0, %v2339
        %2341 = vdwg.mxu0
        %2342 = vmatpush.bf16.msra.mxu0 0
        %2343 = vmatpush.bf16.msra.mxu0 0
        %2344 = vmatpush.bf16.msra.mxu0 %v1525
        %2345 = vmatpush.bf16.msra.mxu0 %v1505
        %2346 = vmatpush.bf16.msra.mxu0 %v1503
        %2347 = vmatpush.bf16.msra.mxu0 %v1501
        %2348 = vmatpush.bf16.msra.mxu0 %v1499
        %2349 = vmatpush.bf16.msra.mxu0 %v1497
        %2350 = vmatmul.bf16.gmra.mxu0 %v2326
        %v2351 = vpop.f32.mrf.mxu0
        %v2352 = vadd.f32 0.0, %v2351
        %v2353 = vpop.f32.mrf.mxu0
        %v2354 = vadd.f32 0.0, %v2353
        %2355 = vdwg.mxu0
        %v2356 = vadd.f32 %v2320, %v2338
        %v2357 = vadd.f32 %v2321, %v2352
        %v2358 = vadd.f32 %v2322, %v2340
        %v2359 = vadd.f32 %v2323, %v2354
        %v2360 = vadd.f32 %v2356, %v1560
        %v2361 = vadd.f32 %v2357, %v1561
        %v2362 = vadd.f32 %v2358, %v1560
        %v2363 = vadd.f32 %v2359, %v1561
        %vm2364 = vcmp.ge.f32.partialorder %v2360, 0.0
        %vm2365 = vcmp.ge.f32.partialorder %v2361, 0.0
        %vm2366 = vcmp.ge.f32.partialorder %v2362, 0.0
        %vm2367 = vcmp.ge.f32.partialorder %v2363, 0.0
        %v2368 = vmul.f32 %v2360, 0.01
        %v2369 = vmul.f32 %v2361, 0.01
        %v2370 = vmul.f32 %v2362, 0.01
        %v2371 = vmul.f32 %v2363, 0.01
        %v2372 = vsel %vm2364, %v2360, %v2368
        %v2373 = vsel %vm2365, %v2361, %v2369
        %v2374 = vsel %vm2366, %v2362, %v2370
        %v2375 = vsel %vm2367, %v2363, %v2371
        %2380 = vrot.lane.b32.xlu0 %v2372, 112
        %v2381 = vpop.permute.xlu0 %2380
        %2382 = vrot.lane.b32.xlu0 %v2373, 112
        %v2383 = vpop.permute.xlu0 %2382
        %2384 = vrot.lane.b32.xlu0 %v2374, 112
        %v2385 = vpop.permute.xlu0 %2384
        %2386 = vrot.lane.b32.xlu0 %v2375, 112
        %v2387 = vpop.permute.xlu0 %2386
        %v2388 = vsel %vm1592, %v2381, %v2383
        %v2389 = vsel %vm1592, %v2385, %v2387
        %v2394 = vmax.f32 %v2372, %v2388
        %v2395 = vmax.f32 %v2373, %v2383
        %v2396 = vmax.f32 %v2374, %v2389
        %v2397 = vmax.f32 %v2375, %v2387
        %v2398 = vpack.c.bf16 %v2396, %v2394
        %v2399 = vpack.c.bf16 %v2397, %v2395
        %v2401 = vsel %vm1677, %v2399, 0
        %2403 = vmatpush.bf16.msra.mxu0 %v1666
        %2404 = vmatpush.bf16.msra.mxu0 %v1665
        %2405 = vmatpush.bf16.msra.mxu0 %v1664
        %2406 = vmatpush.bf16.msra.mxu0 %v1663
        %2407 = vmatpush.bf16.msra.mxu0 %v1662
        %2408 = vmatpush.bf16.msra.mxu0 %v1661
        %2409 = vmatpush.bf16.msra.mxu0 %v1660
        %2410 = vmatpush.bf16.msra.mxu0 %v1659
        %2411 = vmatmul.bf16.gmra.mxu0 %v2398
        %v2412 = vpop.f32.mrf.mxu0
        %v2413 = vadd.f32 0.0, %v2412
        %v2414 = vpop.f32.mrf.mxu0
        %v2415 = vadd.f32 0.0, %v2414
        %2416 = vdwg.mxu0
        %2417 = vmatpush.bf16.msra.mxu0 0
        %2418 = vmatpush.bf16.msra.mxu0 0
        %2419 = vmatpush.bf16.msra.mxu0 0
        %2420 = vmatpush.bf16.msra.mxu0 0
        %2421 = vmatpush.bf16.msra.mxu0 0
        %2422 = vmatpush.bf16.msra.mxu0 0
        %2423 = vmatpush.bf16.msra.mxu0 0
        %2424 = vmatpush.bf16.msra.mxu0 %v1667
        %2425 = vmatmul.bf16.gmra.mxu0 %v2401
        %v2426 = vpop.f32.mrf.mxu0
        %v2427 = vadd.f32 %v2413, %v2426
        %v2428 = vpop.f32.mrf.mxu0
        %v2429 = vadd.f32 %v2415, %v2428
        %2430 = vdwg.mxu0
        %v2433 = vrot.slane %v2427, 1
        %v2434 = vrot.slane %v2429, 1
        %v2435 = vsel %vm963, %v2433, %v2434
        %v2438 = vmax.f32 %v2427, %v2435
        %v2439 = vmax.f32 %v2429, %v2434
        %v2440 = vpack.c.bf16 %v2439, %v2438
        %v2442 = vand.u32 %v2440, %v1726
        %2444 = vmatpush.bf16.msra.mxu0 0
        %2445 = vmatpush.bf16.msra.mxu0 0
        %2446 = vmatpush.bf16.msra.mxu0 0
        %2447 = vmatpush.bf16.msra.mxu0 0
        %2448 = vmatpush.bf16.msra.mxu0 0
        %2449 = vmatpush.bf16.msra.mxu0 0
        %2450 = vmatpush.bf16.msra.mxu0 0
        %2451 = vmatpush.bf16.msra.mxu0 %v2442
        %2452 = vmatmul.bf16.gmra.mxu0 %v1722
        %v2453 = vpop.f32.mrf.mxu0
        %v2454 = vadd.f32 0.0, %v2453
        %v2455 = vpop.f32.mrf.mxu0
        %2456 = vdwg.mxu0
        %s2457 = scalar_lea.vmem %s334, 64
        %v2458 = vld [vmem:[%s2457] sm:$0xff]
        %v2459 = vld [vmem:[%s2457 + $0x8] sm:$0xff]
        %v2460 = vld [vmem:[%s2457 + $0x10] sm:$0xff]
        %v2461 = vld [vmem:[%s2457 + $0x18] sm:$0xf]
        %v2462 = vpack.c.bf16 %v2459, %v2458
        %v2463 = vpack.c.bf16 %v2461, %v2460
        %v2464 = vld [vmem:[%s2457 + $0x1] sm:$0xff]
        %v2465 = vld [vmem:[%s2457 + $0x9] sm:$0xff]
        %v2466 = vld [vmem:[%s2457 + $0x11] sm:$0xff]
        %v2467 = vld [vmem:[%s2457 + $0x19] sm:$0xf]
        %v2468 = vpack.c.bf16 %v2465, %v2464
        %v2469 = vpack.c.bf16 %v2467, %v2466
        %v2471 = vsel %vm382, %v2468, 0
        %v2474 = vsel %vm382, %v2469, 0
        %2476 = vmatpush.bf16.msra.mxu0 0
        %2477 = vmatpush.bf16.msra.mxu0 0
        %2478 = vmatpush.bf16.msra.mxu0 0
        %2479 = vmatpush.bf16.msra.mxu0 0
        %2480 = vmatpush.bf16.msra.mxu0 0
        %2481 = vmatpush.bf16.msra.mxu0 0
        %2482 = vmatpush.bf16.msra.mxu0 %v376
        %2483 = vmatpush.bf16.msra.mxu0 %v374
        %2484 = vmatmul.bf16.gmra.mxu0 %v2471
        %v2485 = vpop.f32.mrf.mxu0
        %v2486 = vadd.f32 0.0, %v2485
        %v2487 = vpop.f32.mrf.mxu0
        %v2488 = vadd.f32 0.0, %v2487
        %2489 = vmatmul.bf16.gmra.mxu0 %v2474
        %v2490 = vpop.f32.mrf.mxu0
        %v2491 = vadd.f32 0.0, %v2490
        %v2492 = vpop.f32.mrf.mxu0
        %v2493 = vadd.f32 0.0, %v2492
        %2494 = vdwg.mxu0
        %2495 = vmatpush.bf16.msra.mxu0 0
        %2496 = vmatpush.bf16.msra.mxu0 0
        %2497 = vmatpush.bf16.msra.mxu0 0
        %2498 = vmatpush.bf16.msra.mxu0 0
        %2499 = vmatpush.bf16.msra.mxu0 0
        %2500 = vmatpush.bf16.msra.mxu0 0
        %2501 = vmatpush.bf16.msra.mxu0 %v377
        %2502 = vmatpush.bf16.msra.mxu0 %v375
        %2503 = vmatmul.bf16.gmra.mxu0 %v2471
        %v2504 = vpop.f32.mrf.mxu0
        %v2505 = vadd.f32 0.0, %v2504
        %v2506 = vpop.f32.mrf.mxu0
        %v2507 = vadd.f32 0.0, %v2506
        %2508 = vmatmul.bf16.gmra.mxu0 %v2474
        %v2509 = vpop.f32.mrf.mxu0
        %v2510 = vadd.f32 0.0, %v2509
        %v2511 = vpop.f32.mrf.mxu0
        %v2512 = vadd.f32 0.0, %v2511
        %2513 = vdwg.mxu0
        %v2515 = vsel %vm382, %v2462, 0
        %v2518 = vsel %vm382, %v2463, 0
        %2520 = vmatpush.bf16.msra.mxu0 0
        %2521 = vmatpush.bf16.msra.mxu0 0
        %2522 = vmatpush.bf16.msra.mxu0 0
        %2523 = vmatpush.bf16.msra.mxu0 0
        %2524 = vmatpush.bf16.msra.mxu0 0
        %2525 = vmatpush.bf16.msra.mxu0 0
        %2526 = vmatpush.bf16.msra.mxu0 %v441
        %2527 = vmatpush.bf16.msra.mxu0 %v439
        %2528 = vmatmul.bf16.gmra.mxu0 %v2515
        %v2529 = vpop.f32.mrf.mxu0
        %v2530 = vadd.f32 %v2486, %v2529
        %v2531 = vpop.f32.mrf.mxu0
        %v2532 = vadd.f32 %v2488, %v2531
        %2533 = vmatmul.bf16.gmra.mxu0 %v2518
        %v2534 = vpop.f32.mrf.mxu0
        %v2535 = vadd.f32 %v2491, %v2534
        %v2536 = vpop.f32.mrf.mxu0
        %v2537 = vadd.f32 %v2493, %v2536
        %2538 = vdwg.mxu0
        %2539 = vmatpush.bf16.msra.mxu0 0
        %2540 = vmatpush.bf16.msra.mxu0 0
        %2541 = vmatpush.bf16.msra.mxu0 0
        %2542 = vmatpush.bf16.msra.mxu0 0
        %2543 = vmatpush.bf16.msra.mxu0 0
        %2544 = vmatpush.bf16.msra.mxu0 0
        %2545 = vmatpush.bf16.msra.mxu0 %v442
        %2546 = vmatpush.bf16.msra.mxu0 %v440
        %2547 = vmatmul.bf16.gmra.mxu0 %v2515
        %v2548 = vpop.f32.mrf.mxu0
        %v2549 = vadd.f32 %v2505, %v2548
        %v2550 = vpop.f32.mrf.mxu0
        %v2551 = vadd.f32 %v2507, %v2550
        %2552 = vmatmul.bf16.gmra.mxu0 %v2518
        %v2553 = vpop.f32.mrf.mxu0
        %v2554 = vadd.f32 %v2510, %v2553
        %v2555 = vpop.f32.mrf.mxu0
        %v2556 = vadd.f32 %v2512, %v2555
        %2557 = vdwg.mxu0
        %v2558 = vld [vmem:[%s2457 + $0x2] sm:$0xff]
        %v2559 = vld [vmem:[%s2457 + $0xa] sm:$0xff]
        %v2560 = vld [vmem:[%s2457 + $0x12] sm:$0xff]
        %v2561 = vld [vmem:[%s2457 + $0x1a] sm:$0xf]
        %v2562 = vpack.c.bf16 %v2559, %v2558
        %v2563 = vpack.c.bf16 %v2561, %v2560
        %v2565 = vsel %vm382, %v2562, 0
        %v2568 = vsel %vm382, %v2563, 0
        %2570 = vmatpush.bf16.msra.mxu0 0
        %2571 = vmatpush.bf16.msra.mxu0 0
        %2572 = vmatpush.bf16.msra.mxu0 0
        %2573 = vmatpush.bf16.msra.mxu0 0
        %2574 = vmatpush.bf16.msra.mxu0 0
        %2575 = vmatpush.bf16.msra.mxu0 0
        %2576 = vmatpush.bf16.msra.mxu0 %v516
        %2577 = vmatpush.bf16.msra.mxu0 %v514
        %2578 = vmatmul.bf16.gmra.mxu0 %v2565
        %v2579 = vpop.f32.mrf.mxu0
        %v2580 = vadd.f32 0.0, %v2579
        %v2581 = vpop.f32.mrf.mxu0
        %v2582 = vadd.f32 0.0, %v2581
        %2583 = vmatmul.bf16.gmra.mxu0 %v2568
        %v2584 = vpop.f32.mrf.mxu0
        %v2585 = vadd.f32 0.0, %v2584
        %v2586 = vpop.f32.mrf.mxu0
        %v2587 = vadd.f32 0.0, %v2586
        %2588 = vdwg.mxu0
        %2589 = vmatpush.bf16.msra.mxu0 0
        %2590 = vmatpush.bf16.msra.mxu0 0
        %2591 = vmatpush.bf16.msra.mxu0 0
        %2592 = vmatpush.bf16.msra.mxu0 0
        %2593 = vmatpush.bf16.msra.mxu0 0
        %2594 = vmatpush.bf16.msra.mxu0 0
        %2595 = vmatpush.bf16.msra.mxu0 %v517
        %2596 = vmatpush.bf16.msra.mxu0 %v515
        %2597 = vmatmul.bf16.gmra.mxu0 %v2565
        %v2598 = vpop.f32.mrf.mxu0
        %v2599 = vadd.f32 0.0, %v2598
        %v2600 = vpop.f32.mrf.mxu0
        %v2601 = vadd.f32 0.0, %v2600
        %2602 = vmatmul.bf16.gmra.mxu0 %v2568
        %v2603 = vpop.f32.mrf.mxu0
        %v2604 = vadd.f32 0.0, %v2603
        %v2605 = vpop.f32.mrf.mxu0
        %v2606 = vadd.f32 0.0, %v2605
        %2607 = vdwg.mxu0
        %v2608 = vadd.f32 %v2530, %v2580
        %v2609 = vadd.f32 %v2549, %v2599
        %v2610 = vadd.f32 %v2532, %v2582
        %v2611 = vadd.f32 %v2551, %v2601
        %v2612 = vadd.f32 %v2535, %v2585
        %v2613 = vadd.f32 %v2554, %v2604
        %v2614 = vadd.f32 %v2537, %v2587
        %v2615 = vadd.f32 %v2556, %v2606
        %v2616 = vld [vmem:[%s2457 + $0x3] sm:$0xff]
        %v2617 = vld [vmem:[%s2457 + $0xb] sm:$0xff]
        %v2618 = vld [vmem:[%s2457 + $0x13] sm:$0xff]
        %v2619 = vld [vmem:[%s2457 + $0x1b] sm:$0xf]
        %v2620 = vpack.c.bf16 %v2617, %v2616
        %v2621 = vpack.c.bf16 %v2619, %v2618
        %v2623 = vsel %vm382, %v2620, 0
        %v2626 = vsel %vm382, %v2621, 0
        %2628 = vmatpush.bf16.msra.mxu0 0
        %2629 = vmatpush.bf16.msra.mxu0 0
        %2630 = vmatpush.bf16.msra.mxu0 0
        %2631 = vmatpush.bf16.msra.mxu0 0
        %2632 = vmatpush.bf16.msra.mxu0 0
        %2633 = vmatpush.bf16.msra.mxu0 0
        %2634 = vmatpush.bf16.msra.mxu0 %v599
        %2635 = vmatpush.bf16.msra.mxu0 %v597
        %2636 = vmatmul.bf16.gmra.mxu0 %v2623
        %v2637 = vpop.f32.mrf.mxu0
        %v2638 = vadd.f32 0.0, %v2637
        %v2639 = vpop.f32.mrf.mxu0
        %v2640 = vadd.f32 0.0, %v2639
        %2641 = vmatmul.bf16.gmra.mxu0 %v2626
        %v2642 = vpop.f32.mrf.mxu0
        %v2643 = vadd.f32 0.0, %v2642
        %v2644 = vpop.f32.mrf.mxu0
        %v2645 = vadd.f32 0.0, %v2644
        %2646 = vdwg.mxu0
        %2647 = vmatpush.bf16.msra.mxu0 0
        %2648 = vmatpush.bf16.msra.mxu0 0
        %2649 = vmatpush.bf16.msra.mxu0 0
        %2650 = vmatpush.bf16.msra.mxu0 0
        %2651 = vmatpush.bf16.msra.mxu0 0
        %2652 = vmatpush.bf16.msra.mxu0 0
        %2653 = vmatpush.bf16.msra.mxu0 %v600
        %2654 = vmatpush.bf16.msra.mxu0 %v598
        %2655 = vmatmul.bf16.gmra.mxu0 %v2623
        %v2656 = vpop.f32.mrf.mxu0
        %v2657 = vadd.f32 0.0, %v2656
        %v2658 = vpop.f32.mrf.mxu0
        %v2659 = vadd.f32 0.0, %v2658
        %2660 = vmatmul.bf16.gmra.mxu0 %v2626
        %v2661 = vpop.f32.mrf.mxu0
        %v2662 = vadd.f32 0.0, %v2661
        %v2663 = vpop.f32.mrf.mxu0
        %v2664 = vadd.f32 0.0, %v2663
        %2665 = vdwg.mxu0
        %v2666 = vadd.f32 %v2608, %v2638
        %v2667 = vadd.f32 %v2609, %v2657
        %v2668 = vadd.f32 %v2610, %v2640
        %v2669 = vadd.f32 %v2611, %v2659
        %v2670 = vadd.f32 %v2612, %v2643
        %v2671 = vadd.f32 %v2613, %v2662
        %v2672 = vadd.f32 %v2614, %v2645
        %v2673 = vadd.f32 %v2615, %v2664
        %v2674 = vld [vmem:[%s2457 + $0x4] sm:$0xff]
        %v2675 = vld [vmem:[%s2457 + $0xc] sm:$0xff]
        %v2676 = vld [vmem:[%s2457 + $0x14] sm:$0xff]
        %v2677 = vld [vmem:[%s2457 + $0x1c] sm:$0xf]
        %v2678 = vpack.c.bf16 %v2675, %v2674
        %v2679 = vpack.c.bf16 %v2677, %v2676
        %v2681 = vsel %vm382, %v2678, 0
        %v2684 = vsel %vm382, %v2679, 0
        %2686 = vmatpush.bf16.msra.mxu0 0
        %2687 = vmatpush.bf16.msra.mxu0 0
        %2688 = vmatpush.bf16.msra.mxu0 0
        %2689 = vmatpush.bf16.msra.mxu0 0
        %2690 = vmatpush.bf16.msra.mxu0 0
        %2691 = vmatpush.bf16.msra.mxu0 0
        %2692 = vmatpush.bf16.msra.mxu0 %v682
        %2693 = vmatpush.bf16.msra.mxu0 %v680
        %2694 = vmatmul.bf16.gmra.mxu0 %v2681
        %v2695 = vpop.f32.mrf.mxu0
        %v2696 = vadd.f32 0.0, %v2695
        %v2697 = vpop.f32.mrf.mxu0
        %v2698 = vadd.f32 0.0, %v2697
        %2699 = vmatmul.bf16.gmra.mxu0 %v2684
        %v2700 = vpop.f32.mrf.mxu0
        %v2701 = vadd.f32 0.0, %v2700
        %v2702 = vpop.f32.mrf.mxu0
        %v2703 = vadd.f32 0.0, %v2702
        %2704 = vdwg.mxu0
        %2705 = vmatpush.bf16.msra.mxu0 0
        %2706 = vmatpush.bf16.msra.mxu0 0
        %2707 = vmatpush.bf16.msra.mxu0 0
        %2708 = vmatpush.bf16.msra.mxu0 0
        %2709 = vmatpush.bf16.msra.mxu0 0
        %2710 = vmatpush.bf16.msra.mxu0 0
        %2711 = vmatpush.bf16.msra.mxu0 %v683
        %2712 = vmatpush.bf16.msra.mxu0 %v681
        %2713 = vmatmul.bf16.gmra.mxu0 %v2681
        %v2714 = vpop.f32.mrf.mxu0
        %v2715 = vadd.f32 0.0, %v2714
        %v2716 = vpop.f32.mrf.mxu0
        %v2717 = vadd.f32 0.0, %v2716
        %2718 = vmatmul.bf16.gmra.mxu0 %v2684
        %v2719 = vpop.f32.mrf.mxu0
        %v2720 = vadd.f32 0.0, %v2719
        %v2721 = vpop.f32.mrf.mxu0
        %v2722 = vadd.f32 0.0, %v2721
        %2723 = vdwg.mxu0
        %v2724 = vadd.f32 %v2666, %v2696
        %v2725 = vadd.f32 %v2667, %v2715
        %v2726 = vadd.f32 %v2668, %v2698
        %v2727 = vadd.f32 %v2669, %v2717
        %v2728 = vadd.f32 %v2670, %v2701
        %v2729 = vadd.f32 %v2671, %v2720
        %v2730 = vadd.f32 %v2672, %v2703
        %v2731 = vadd.f32 %v2673, %v2722
        %v2732 = vadd.f32 %v2724, %v741
        %v2733 = vadd.f32 %v2725, %v742
        %v2734 = vadd.f32 %v2726, %v741
        %v2735 = vadd.f32 %v2727, %v742
        %v2736 = vadd.f32 %v2728, %v741
        %v2737 = vadd.f32 %v2729, %v742
        %v2738 = vadd.f32 %v2730, %v741
        %v2739 = vadd.f32 %v2731, %v742
        %vm2740 = vcmp.ge.f32.partialorder %v2732, 0.0
        %vm2741 = vcmp.ge.f32.partialorder %v2733, 0.0
        %vm2742 = vcmp.ge.f32.partialorder %v2734, 0.0
        %vm2743 = vcmp.ge.f32.partialorder %v2735, 0.0
        %vm2744 = vcmp.ge.f32.partialorder %v2736, 0.0
        %vm2745 = vcmp.ge.f32.partialorder %v2737, 0.0
        %vm2746 = vcmp.ge.f32.partialorder %v2738, 0.0
        %vm2747 = vcmp.ge.f32.partialorder %v2739, 0.0
        %v2748 = vmul.f32 %v2732, 0.01
        %v2749 = vmul.f32 %v2733, 0.01
        %v2750 = vmul.f32 %v2734, 0.01
        %v2751 = vmul.f32 %v2735, 0.01
        %v2752 = vmul.f32 %v2736, 0.01
        %v2753 = vmul.f32 %v2737, 0.01
        %v2754 = vmul.f32 %v2738, 0.01
        %v2755 = vmul.f32 %v2739, 0.01
        %v2756 = vsel %vm2740, %v2732, %v2748
        %v2757 = vsel %vm2741, %v2733, %v2749
        %v2758 = vsel %vm2742, %v2734, %v2750
        %v2759 = vsel %vm2743, %v2735, %v2751
        %v2760 = vsel %vm2744, %v2736, %v2752
        %v2761 = vsel %vm2745, %v2737, %v2753
        %v2762 = vsel %vm2746, %v2738, %v2754
        %v2763 = vsel %vm2747, %v2739, %v2755
        %2772 = vrot.lane.b32.xlu0 %v2756, 122
        %v2773 = vpop.permute.xlu0 %2772
        %2774 = vrot.lane.b32.xlu0 %v2757, 122
        %v2775 = vpop.permute.xlu0 %2774
        %2776 = vrot.lane.b32.xlu0 %v2758, 122
        %v2777 = vpop.permute.xlu0 %2776
        %2778 = vrot.lane.b32.xlu0 %v2759, 122
        %v2779 = vpop.permute.xlu0 %2778
        %2780 = vrot.lane.b32.xlu0 %v2760, 122
        %v2781 = vpop.permute.xlu0 %2780
        %2782 = vrot.lane.b32.xlu0 %v2761, 122
        %v2783 = vpop.permute.xlu0 %2782
        %2784 = vrot.lane.b32.xlu0 %v2762, 122
        %v2785 = vpop.permute.xlu0 %2784
        %2786 = vrot.lane.b32.xlu0 %v2763, 122
        %v2787 = vpop.permute.xlu0 %2786
        %v2788 = vsel %vm801, %v2773, %v2775
        %v2789 = vsel %vm801, %v2777, %v2779
        %v2790 = vsel %vm801, %v2781, %v2783
        %v2791 = vsel %vm801, %v2785, %v2787
        %v2800 = vmax.f32 %v2756, %v2788
        %v2801 = vmax.f32 %v2757, %v2775
        %v2802 = vmax.f32 %v2758, %v2789
        %v2803 = vmax.f32 %v2759, %v2779
        %v2804 = vmax.f32 %v2760, %v2790
        %v2805 = vmax.f32 %v2761, %v2783
        %v2806 = vmax.f32 %v2762, %v2791
        %v2807 = vmax.f32 %v2763, %v2787
        %v2808 = vpack.c.bf16 %v2802, %v2800
        %v2809 = vpack.c.bf16 %v2803, %v2801
        %v2810 = vpack.c.bf16 %v2806, %v2804
        %v2811 = vpack.c.bf16 %v2807, %v2805
        %v2813 = vsel %vm910, %v2809, 0
        %v2816 = vsel %vm910, %v2811, 0
        %2818 = vmatpush.bf16.msra.mxu0 %v896
        %2819 = vmatpush.bf16.msra.mxu0 %v895
        %2820 = vmatpush.bf16.msra.mxu0 %v894
        %2821 = vmatpush.bf16.msra.mxu0 %v893
        %2822 = vmatpush.bf16.msra.mxu0 %v892
        %2823 = vmatpush.bf16.msra.mxu0 %v891
        %2824 = vmatpush.bf16.msra.mxu0 %v890
        %2825 = vmatpush.bf16.msra.mxu0 %v889
        %2826 = vmatmul.bf16.gmra.mxu0 %v2808
        %v2827 = vpop.f32.mrf.mxu0
        %v2828 = vadd.f32 0.0, %v2827
        %v2829 = vpop.f32.mrf.mxu0
        %v2830 = vadd.f32 0.0, %v2829
        %2831 = vmatmul.bf16.gmra.mxu0 %v2810
        %v2832 = vpop.f32.mrf.mxu0
        %v2833 = vadd.f32 0.0, %v2832
        %v2834 = vpop.f32.mrf.mxu0
        %v2835 = vadd.f32 0.0, %v2834
        %2836 = vdwg.mxu0
        %2837 = vmatpush.bf16.msra.mxu0 0
        %2838 = vmatpush.bf16.msra.mxu0 0
        %2839 = vmatpush.bf16.msra.mxu0 0
        %2840 = vmatpush.bf16.msra.mxu0 0
        %2841 = vmatpush.bf16.msra.mxu0 0
        %2842 = vmatpush.bf16.msra.mxu0 %v919
        %2843 = vmatpush.bf16.msra.mxu0 %v898
        %2844 = vmatpush.bf16.msra.mxu0 %v897
        %2845 = vmatmul.bf16.gmra.mxu0 %v2813
        %v2846 = vpop.f32.mrf.mxu0
        %v2847 = vadd.f32 %v2828, %v2846
        %v2848 = vpop.f32.mrf.mxu0
        %v2849 = vadd.f32 %v2830, %v2848
        %2850 = vmatmul.bf16.gmra.mxu0 %v2816
        %v2851 = vpop.f32.mrf.mxu0
        %v2852 = vadd.f32 %v2833, %v2851
        %v2853 = vpop.f32.mrf.mxu0
        %v2854 = vadd.f32 %v2835, %v2853
        %2855 = vdwg.mxu0
        %v2860 = vrot.slane %v2847, 1
        %v2861 = vrot.slane %v2849, 1
        %v2862 = vsel %vm963, %v2860, %v2861
        %v2863 = vrot.slane %v2852, 1
        %v2864 = vsel %vm963, %v2861, %v2863
        %v2865 = vrot.slane %v2854, 1
        %v2866 = vsel %vm963, %v2863, %v2865
        %v2871 = vmax.f32 %v2847, %v2862
        %v2872 = vmax.f32 %v2849, %v2864
        %v2873 = vmax.f32 %v2852, %v2866
        %v2874 = vmax.f32 %v2854, %v2865
        %v2875 = vpack.c.bf16 %v2872, %v2871
        %v2876 = vpack.c.bf16 %v2874, %v2873
        %v2878 = vand.u32 %v2876, %v995
        %2880 = vmatpush.bf16.msra.mxu0 0
        %2881 = vmatpush.bf16.msra.mxu0 0
        %2882 = vmatpush.bf16.msra.mxu0 0
        %2883 = vmatpush.bf16.msra.mxu0 0
        %2884 = vmatpush.bf16.msra.mxu0 0
        %2885 = vmatpush.bf16.msra.mxu0 0
        %2886 = vmatpush.bf16.msra.mxu0 %v2878
        %2887 = vmatpush.bf16.msra.mxu0 %v2875
        %2888 = vmatmul.bf16.gmra.mxu0 %v990
        %v2889 = vpop.f32.mrf.mxu0
        %v2890 = vadd.f32 0.0, %v2889
        %v2891 = vpop.f32.mrf.mxu0
        %v2892 = vadd.f32 0.0, %v2891
        %2893 = vdwg.mxu0
        %v2894 = vpack.c.bf16 %v2892, %v2890
        %v2896 = vshrl.u32 %v2894, 16
        %v2898 = vshll.u32 %v2894, 16
        %v2900 = vrot.slane %v2898, 1
        %v2901 = vor.u32 %v2896, %v2900
        %v2903 = vsel %vm1099, %v2901, 0
        %2905 = vmatpush.bf16.msra.mxu0 0
        %2906 = vmatpush.bf16.msra.mxu0 0
        %2907 = vmatpush.bf16.msra.mxu0 %v1105
        %2908 = vmatpush.bf16.msra.mxu0 %v1085
        %2909 = vmatpush.bf16.msra.mxu0 %v1083
        %2910 = vmatpush.bf16.msra.mxu0 %v1081
        %2911 = vmatpush.bf16.msra.mxu0 %v1079
        %2912 = vmatpush.bf16.msra.mxu0 %v1077
        %2913 = vmatmul.bf16.gmra.mxu0 %v2903
        %v2914 = vpop.f32.mrf.mxu0
        %v2915 = vadd.f32 0.0, %v2914
        %v2916 = vpop.f32.mrf.mxu0
        %v2917 = vadd.f32 0.0, %v2916
        %2918 = vdwg.mxu0
        %2919 = vmatpush.bf16.msra.mxu0 0
        %2920 = vmatpush.bf16.msra.mxu0 0
        %2921 = vmatpush.bf16.msra.mxu0 %v1108
        %2922 = vmatpush.bf16.msra.mxu0 %v1086
        %2923 = vmatpush.bf16.msra.mxu0 %v1084
        %2924 = vmatpush.bf16.msra.mxu0 %v1082
        %2925 = vmatpush.bf16.msra.mxu0 %v1080
        %2926 = vmatpush.bf16.msra.mxu0 %v1078
        %2927 = vmatmul.bf16.gmra.mxu0 %v2903
        %v2928 = vpop.f32.mrf.mxu0
        %v2929 = vadd.f32 0.0, %v2928
        %v2930 = vpop.f32.mrf.mxu0
        %v2931 = vadd.f32 0.0, %v2930
        %2932 = vdwg.mxu0
        %v2933 = vsel %vm1099, %v2894, 0
        %2935 = vmatpush.bf16.msra.mxu0 0
        %2936 = vmatpush.bf16.msra.mxu0 0
        %2937 = vmatpush.bf16.msra.mxu0 %v1196
        %2938 = vmatpush.bf16.msra.mxu0 %v1179
        %2939 = vmatpush.bf16.msra.mxu0 %v1177
        %2940 = vmatpush.bf16.msra.mxu0 %v1175
        %2941 = vmatpush.bf16.msra.mxu0 %v1173
        %2942 = vmatpush.bf16.msra.mxu0 %v1171
        %2943 = vmatmul.bf16.gmra.mxu0 %v2933
        %v2944 = vpop.f32.mrf.mxu0
        %v2945 = vadd.f32 %v2915, %v2944
        %v2946 = vpop.f32.mrf.mxu0
        %v2947 = vadd.f32 %v2917, %v2946
        %2948 = vdwg.mxu0
        %2949 = vmatpush.bf16.msra.mxu0 0
        %2950 = vmatpush.bf16.msra.mxu0 0
        %2951 = vmatpush.bf16.msra.mxu0 %v1199
        %2952 = vmatpush.bf16.msra.mxu0 %v1180
        %2953 = vmatpush.bf16.msra.mxu0 %v1178
        %2954 = vmatpush.bf16.msra.mxu0 %v1176
        %2955 = vmatpush.bf16.msra.mxu0 %v1174
        %2956 = vmatpush.bf16.msra.mxu0 %v1172
        %2957 = vmatmul.bf16.gmra.mxu0 %v2933
        %v2958 = vpop.f32.mrf.mxu0
        %v2959 = vadd.f32 %v2929, %v2958
        %v2960 = vpop.f32.mrf.mxu0
        %v2961 = vadd.f32 %v2931, %v2960
        %2962 = vdwg.mxu0
        %v2964 = vrot.slane %v2894, 1
        %v2966 = vsel %vm1099, %v2964, 0
        %2968 = vmatpush.bf16.msra.mxu0 0
        %2969 = vmatpush.bf16.msra.mxu0 0
        %2970 = vmatpush.bf16.msra.mxu0 %v1302
        %2971 = vmatpush.bf16.msra.mxu0 %v1284
        %2972 = vmatpush.bf16.msra.mxu0 %v1282
        %2973 = vmatpush.bf16.msra.mxu0 %v1280
        %2974 = vmatpush.bf16.msra.mxu0 %v1278
        %2975 = vmatpush.bf16.msra.mxu0 %v1276
        %2976 = vmatmul.bf16.gmra.mxu0 %v2966
        %v2977 = vpop.f32.mrf.mxu0
        %v2978 = vadd.f32 0.0, %v2977
        %v2979 = vpop.f32.mrf.mxu0
        %v2980 = vadd.f32 0.0, %v2979
        %2981 = vdwg.mxu0
        %2982 = vmatpush.bf16.msra.mxu0 0
        %2983 = vmatpush.bf16.msra.mxu0 0
        %2984 = vmatpush.bf16.msra.mxu0 %v1305
        %2985 = vmatpush.bf16.msra.mxu0 %v1285
        %2986 = vmatpush.bf16.msra.mxu0 %v1283
        %2987 = vmatpush.bf16.msra.mxu0 %v1281
        %2988 = vmatpush.bf16.msra.mxu0 %v1279
        %2989 = vmatpush.bf16.msra.mxu0 %v1277
        %2990 = vmatmul.bf16.gmra.mxu0 %v2966
        %v2991 = vpop.f32.mrf.mxu0
        %v2992 = vadd.f32 0.0, %v2991
        %v2993 = vpop.f32.mrf.mxu0
        %v2994 = vadd.f32 0.0, %v2993
        %2995 = vdwg.mxu0
        %v2996 = vadd.f32 %v2945, %v2978
        %v2997 = vadd.f32 %v2959, %v2992
        %v2998 = vadd.f32 %v2947, %v2980
        %v2999 = vadd.f32 %v2961, %v2994
        %v3000 = vrot.slane %v2896, 1
        %v3001 = vrot.slane %v2898, 2
        %v3002 = vor.u32 %v3000, %v3001
        %v3004 = vsel %vm1099, %v3002, 0
        %3006 = vmatpush.bf16.msra.mxu0 0
        %3007 = vmatpush.bf16.msra.mxu0 0
        %3008 = vmatpush.bf16.msra.mxu0 %v1413
        %3009 = vmatpush.bf16.msra.mxu0 %v1395
        %3010 = vmatpush.bf16.msra.mxu0 %v1393
        %3011 = vmatpush.bf16.msra.mxu0 %v1391
        %3012 = vmatpush.bf16.msra.mxu0 %v1389
        %3013 = vmatpush.bf16.msra.mxu0 %v1387
        %3014 = vmatmul.bf16.gmra.mxu0 %v3004
        %v3015 = vpop.f32.mrf.mxu0
        %v3016 = vadd.f32 0.0, %v3015
        %v3017 = vpop.f32.mrf.mxu0
        %v3018 = vadd.f32 0.0, %v3017
        %3019 = vdwg.mxu0
        %3020 = vmatpush.bf16.msra.mxu0 0
        %3021 = vmatpush.bf16.msra.mxu0 0
        %3022 = vmatpush.bf16.msra.mxu0 %v1416
        %3023 = vmatpush.bf16.msra.mxu0 %v1396
        %3024 = vmatpush.bf16.msra.mxu0 %v1394
        %3025 = vmatpush.bf16.msra.mxu0 %v1392
        %3026 = vmatpush.bf16.msra.mxu0 %v1390
        %3027 = vmatpush.bf16.msra.mxu0 %v1388
        %3028 = vmatmul.bf16.gmra.mxu0 %v3004
        %v3029 = vpop.f32.mrf.mxu0
        %v3030 = vadd.f32 0.0, %v3029
        %v3031 = vpop.f32.mrf.mxu0
        %v3032 = vadd.f32 0.0, %v3031
        %3033 = vdwg.mxu0
        %v3034 = vadd.f32 %v2996, %v3016
        %v3035 = vadd.f32 %v2997, %v3030
        %v3036 = vadd.f32 %v2998, %v3018
        %v3037 = vadd.f32 %v2999, %v3032
        %v3038 = vrot.slane %v2894, 2
        %v3040 = vsel %vm1099, %v3038, 0
        %3042 = vmatpush.bf16.msra.mxu0 0
        %3043 = vmatpush.bf16.msra.mxu0 0
        %3044 = vmatpush.bf16.msra.mxu0 %v1522
        %3045 = vmatpush.bf16.msra.mxu0 %v1504
        %3046 = vmatpush.bf16.msra.mxu0 %v1502
        %3047 = vmatpush.bf16.msra.mxu0 %v1500
        %3048 = vmatpush.bf16.msra.mxu0 %v1498
        %3049 = vmatpush.bf16.msra.mxu0 %v1496
        %3050 = vmatmul.bf16.gmra.mxu0 %v3040
        %v3051 = vpop.f32.mrf.mxu0
        %v3052 = vadd.f32 0.0, %v3051
        %v3053 = vpop.f32.mrf.mxu0
        %v3054 = vadd.f32 0.0, %v3053
        %3055 = vdwg.mxu0
        %3056 = vmatpush.bf16.msra.mxu0 0
        %3057 = vmatpush.bf16.msra.mxu0 0
        %3058 = vmatpush.bf16.msra.mxu0 %v1525
        %3059 = vmatpush.bf16.msra.mxu0 %v1505
        %3060 = vmatpush.bf16.msra.mxu0 %v1503
        %3061 = vmatpush.bf16.msra.mxu0 %v1501
        %3062 = vmatpush.bf16.msra.mxu0 %v1499
        %3063 = vmatpush.bf16.msra.mxu0 %v1497
        %3064 = vmatmul.bf16.gmra.mxu0 %v3040
        %v3065 = vpop.f32.mrf.mxu0
        %v3066 = vadd.f32 0.0, %v3065
        %v3067 = vpop.f32.mrf.mxu0
        %v3068 = vadd.f32 0.0, %v3067
        %3069 = vdwg.mxu0
        %v3070 = vadd.f32 %v3034, %v3052
        %v3071 = vadd.f32 %v3035, %v3066
        %v3072 = vadd.f32 %v3036, %v3054
        %v3073 = vadd.f32 %v3037, %v3068
        %v3074 = vadd.f32 %v3070, %v1560
        %v3075 = vadd.f32 %v3071, %v1561
        %v3076 = vadd.f32 %v3072, %v1560
        %v3077 = vadd.f32 %v3073, %v1561
        %vm3078 = vcmp.ge.f32.partialorder %v3074, 0.0
        %vm3079 = vcmp.ge.f32.partialorder %v3075, 0.0
        %vm3080 = vcmp.ge.f32.partialorder %v3076, 0.0
        %vm3081 = vcmp.ge.f32.partialorder %v3077, 0.0
        %v3082 = vmul.f32 %v3074, 0.01
        %v3083 = vmul.f32 %v3075, 0.01
        %v3084 = vmul.f32 %v3076, 0.01
        %v3085 = vmul.f32 %v3077, 0.01
        %v3086 = vsel %vm3078, %v3074, %v3082
        %v3087 = vsel %vm3079, %v3075, %v3083
        %v3088 = vsel %vm3080, %v3076, %v3084
        %v3089 = vsel %vm3081, %v3077, %v3085
        %3094 = vrot.lane.b32.xlu0 %v3086, 112
        %v3095 = vpop.permute.xlu0 %3094
        %3096 = vrot.lane.b32.xlu0 %v3087, 112
        %v3097 = vpop.permute.xlu0 %3096
        %3098 = vrot.lane.b32.xlu0 %v3088, 112
        %v3099 = vpop.permute.xlu0 %3098
        %3100 = vrot.lane.b32.xlu0 %v3089, 112
        %v3101 = vpop.permute.xlu0 %3100
        %v3102 = vsel %vm1592, %v3095, %v3097
        %v3103 = vsel %vm1592, %v3099, %v3101
        %v3108 = vmax.f32 %v3086, %v3102
        %v3109 = vmax.f32 %v3087, %v3097
        %v3110 = vmax.f32 %v3088, %v3103
        %v3111 = vmax.f32 %v3089, %v3101
        %v3112 = vpack.c.bf16 %v3110, %v3108
        %v3113 = vpack.c.bf16 %v3111, %v3109
        %v3115 = vsel %vm1677, %v3113, 0
        %3117 = vmatpush.bf16.msra.mxu0 %v1666
        %3118 = vmatpush.bf16.msra.mxu0 %v1665
        %3119 = vmatpush.bf16.msra.mxu0 %v1664
        %3120 = vmatpush.bf16.msra.mxu0 %v1663
        %3121 = vmatpush.bf16.msra.mxu0 %v1662
        %3122 = vmatpush.bf16.msra.mxu0 %v1661
        %3123 = vmatpush.bf16.msra.mxu0 %v1660
        %3124 = vmatpush.bf16.msra.mxu0 %v1659
        %3125 = vmatmul.bf16.gmra.mxu0 %v3112
        %v3126 = vpop.f32.mrf.mxu0
        %v3127 = vadd.f32 0.0, %v3126
        %v3128 = vpop.f32.mrf.mxu0
        %v3129 = vadd.f32 0.0, %v3128
        %3130 = vdwg.mxu0
        %3131 = vmatpush.bf16.msra.mxu0 0
        %3132 = vmatpush.bf16.msra.mxu0 0
        %3133 = vmatpush.bf16.msra.mxu0 0
        %3134 = vmatpush.bf16.msra.mxu0 0
        %3135 = vmatpush.bf16.msra.mxu0 0
        %3136 = vmatpush.bf16.msra.mxu0 0
        %3137 = vmatpush.bf16.msra.mxu0 0
        %3138 = vmatpush.bf16.msra.mxu0 %v1667
        %3139 = vmatmul.bf16.gmra.mxu0 %v3115
        %v3140 = vpop.f32.mrf.mxu0
        %v3141 = vadd.f32 %v3127, %v3140
        %v3142 = vpop.f32.mrf.mxu0
        %v3143 = vadd.f32 %v3129, %v3142
        %3144 = vdwg.mxu0
        %v3147 = vrot.slane %v3141, 1
        %v3148 = vrot.slane %v3143, 1
        %v3149 = vsel %vm963, %v3147, %v3148
        %v3152 = vmax.f32 %v3141, %v3149
        %v3153 = vmax.f32 %v3143, %v3148
        %v3154 = vpack.c.bf16 %v3153, %v3152
        %v3156 = vand.u32 %v3154, %v1726
        %3158 = vmatpush.bf16.msra.mxu0 0
        %3159 = vmatpush.bf16.msra.mxu0 0
        %3160 = vmatpush.bf16.msra.mxu0 0
        %3161 = vmatpush.bf16.msra.mxu0 0
        %3162 = vmatpush.bf16.msra.mxu0 0
        %3163 = vmatpush.bf16.msra.mxu0 0
        %3164 = vmatpush.bf16.msra.mxu0 0
        %3165 = vmatpush.bf16.msra.mxu0 %v3156
        %3166 = vmatmul.bf16.gmra.mxu0 %v1722
        %v3167 = vpop.f32.mrf.mxu0
        %v3168 = vadd.f32 0.0, %v3167
        %v3169 = vpop.f32.mrf.mxu0
        %3170 = vdwg.mxu0
        %s3171 = scalar_lea.vmem %s334, 96
        %v3172 = vld [vmem:[%s3171] sm:$0xff]
        %v3173 = vld [vmem:[%s3171 + $0x8] sm:$0xff]
        %v3174 = vld [vmem:[%s3171 + $0x10] sm:$0xff]
        %v3175 = vld [vmem:[%s3171 + $0x18] sm:$0xf]
        %v3176 = vpack.c.bf16 %v3173, %v3172
        %v3177 = vpack.c.bf16 %v3175, %v3174
        %v3178 = vld [vmem:[%s3171 + $0x1] sm:$0xff]
        %v3179 = vld [vmem:[%s3171 + $0x9] sm:$0xff]
        %v3180 = vld [vmem:[%s3171 + $0x11] sm:$0xff]
        %v3181 = vld [vmem:[%s3171 + $0x19] sm:$0xf]
        %v3182 = vpack.c.bf16 %v3179, %v3178
        %v3183 = vpack.c.bf16 %v3181, %v3180
        %v3185 = vsel %vm382, %v3182, 0
        %v3188 = vsel %vm382, %v3183, 0
        %3190 = vmatpush.bf16.msra.mxu0 0
        %3191 = vmatpush.bf16.msra.mxu0 0
        %3192 = vmatpush.bf16.msra.mxu0 0
        %3193 = vmatpush.bf16.msra.mxu0 0
        %3194 = vmatpush.bf16.msra.mxu0 0
        %3195 = vmatpush.bf16.msra.mxu0 0
        %3196 = vmatpush.bf16.msra.mxu0 %v376
        %3197 = vmatpush.bf16.msra.mxu0 %v374
        %3198 = vmatmul.bf16.gmra.mxu0 %v3185
        %v3199 = vpop.f32.mrf.mxu0
        %v3200 = vadd.f32 0.0, %v3199
        %v3201 = vpop.f32.mrf.mxu0
        %v3202 = vadd.f32 0.0, %v3201
        %3203 = vmatmul.bf16.gmra.mxu0 %v3188
        %v3204 = vpop.f32.mrf.mxu0
        %v3205 = vadd.f32 0.0, %v3204
        %v3206 = vpop.f32.mrf.mxu0
        %v3207 = vadd.f32 0.0, %v3206
        %3208 = vdwg.mxu0
        %3209 = vmatpush.bf16.msra.mxu0 0
        %3210 = vmatpush.bf16.msra.mxu0 0
        %3211 = vmatpush.bf16.msra.mxu0 0
        %3212 = vmatpush.bf16.msra.mxu0 0
        %3213 = vmatpush.bf16.msra.mxu0 0
        %3214 = vmatpush.bf16.msra.mxu0 0
        %3215 = vmatpush.bf16.msra.mxu0 %v377
        %3216 = vmatpush.bf16.msra.mxu0 %v375
        %3217 = vmatmul.bf16.gmra.mxu0 %v3185
        %v3218 = vpop.f32.mrf.mxu0
        %v3219 = vadd.f32 0.0, %v3218
        %v3220 = vpop.f32.mrf.mxu0
        %v3221 = vadd.f32 0.0, %v3220
        %3222 = vmatmul.bf16.gmra.mxu0 %v3188
        %v3223 = vpop.f32.mrf.mxu0
        %v3224 = vadd.f32 0.0, %v3223
        %v3225 = vpop.f32.mrf.mxu0
        %v3226 = vadd.f32 0.0, %v3225
        %3227 = vdwg.mxu0
        %v3229 = vsel %vm382, %v3176, 0
        %v3232 = vsel %vm382, %v3177, 0
        %3234 = vmatpush.bf16.msra.mxu0 0
        %3235 = vmatpush.bf16.msra.mxu0 0
        %3236 = vmatpush.bf16.msra.mxu0 0
        %3237 = vmatpush.bf16.msra.mxu0 0
        %3238 = vmatpush.bf16.msra.mxu0 0
        %3239 = vmatpush.bf16.msra.mxu0 0
        %3240 = vmatpush.bf16.msra.mxu0 %v441
        %3241 = vmatpush.bf16.msra.mxu0 %v439
        %3242 = vmatmul.bf16.gmra.mxu0 %v3229
        %v3243 = vpop.f32.mrf.mxu0
        %v3244 = vadd.f32 %v3200, %v3243
        %v3245 = vpop.f32.mrf.mxu0
        %v3246 = vadd.f32 %v3202, %v3245
        %3247 = vmatmul.bf16.gmra.mxu0 %v3232
        %v3248 = vpop.f32.mrf.mxu0
        %v3249 = vadd.f32 %v3205, %v3248
        %v3250 = vpop.f32.mrf.mxu0
        %v3251 = vadd.f32 %v3207, %v3250
        %3252 = vdwg.mxu0
        %3253 = vmatpush.bf16.msra.mxu0 0
        %3254 = vmatpush.bf16.msra.mxu0 0
        %3255 = vmatpush.bf16.msra.mxu0 0
        %3256 = vmatpush.bf16.msra.mxu0 0
        %3257 = vmatpush.bf16.msra.mxu0 0
        %3258 = vmatpush.bf16.msra.mxu0 0
        %3259 = vmatpush.bf16.msra.mxu0 %v442
        %3260 = vmatpush.bf16.msra.mxu0 %v440
        %3261 = vmatmul.bf16.gmra.mxu0 %v3229
        %v3262 = vpop.f32.mrf.mxu0
        %v3263 = vadd.f32 %v3219, %v3262
        %v3264 = vpop.f32.mrf.mxu0
        %v3265 = vadd.f32 %v3221, %v3264
        %3266 = vmatmul.bf16.gmra.mxu0 %v3232
        %v3267 = vpop.f32.mrf.mxu0
        %v3268 = vadd.f32 %v3224, %v3267
        %v3269 = vpop.f32.mrf.mxu0
        %v3270 = vadd.f32 %v3226, %v3269
        %3271 = vdwg.mxu0
        %v3272 = vld [vmem:[%s3171 + $0x2] sm:$0xff]
        %v3273 = vld [vmem:[%s3171 + $0xa] sm:$0xff]
        %v3274 = vld [vmem:[%s3171 + $0x12] sm:$0xff]
        %v3275 = vld [vmem:[%s3171 + $0x1a] sm:$0xf]
        %v3276 = vpack.c.bf16 %v3273, %v3272
        %v3277 = vpack.c.bf16 %v3275, %v3274
        %v3279 = vsel %vm382, %v3276, 0
        %v3282 = vsel %vm382, %v3277, 0
        %3284 = vmatpush.bf16.msra.mxu0 0
        %3285 = vmatpush.bf16.msra.mxu0 0
        %3286 = vmatpush.bf16.msra.mxu0 0
        %3287 = vmatpush.bf16.msra.mxu0 0
        %3288 = vmatpush.bf16.msra.mxu0 0
        %3289 = vmatpush.bf16.msra.mxu0 0
        %3290 = vmatpush.bf16.msra.mxu0 %v516
        %3291 = vmatpush.bf16.msra.mxu0 %v514
        %3292 = vmatmul.bf16.gmra.mxu0 %v3279
        %v3293 = vpop.f32.mrf.mxu0
        %v3294 = vadd.f32 0.0, %v3293
        %v3295 = vpop.f32.mrf.mxu0
        %v3296 = vadd.f32 0.0, %v3295
        %3297 = vmatmul.bf16.gmra.mxu0 %v3282
        %v3298 = vpop.f32.mrf.mxu0
        %v3299 = vadd.f32 0.0, %v3298
        %v3300 = vpop.f32.mrf.mxu0
        %v3301 = vadd.f32 0.0, %v3300
        %3302 = vdwg.mxu0
        %3303 = vmatpush.bf16.msra.mxu0 0
        %3304 = vmatpush.bf16.msra.mxu0 0
        %3305 = vmatpush.bf16.msra.mxu0 0
        %3306 = vmatpush.bf16.msra.mxu0 0
        %3307 = vmatpush.bf16.msra.mxu0 0
        %3308 = vmatpush.bf16.msra.mxu0 0
        %3309 = vmatpush.bf16.msra.mxu0 %v517
        %3310 = vmatpush.bf16.msra.mxu0 %v515
        %3311 = vmatmul.bf16.gmra.mxu0 %v3279
        %v3312 = vpop.f32.mrf.mxu0
        %v3313 = vadd.f32 0.0, %v3312
        %v3314 = vpop.f32.mrf.mxu0
        %v3315 = vadd.f32 0.0, %v3314
        %3316 = vmatmul.bf16.gmra.mxu0 %v3282
        %v3317 = vpop.f32.mrf.mxu0
        %v3318 = vadd.f32 0.0, %v3317
        %v3319 = vpop.f32.mrf.mxu0
        %v3320 = vadd.f32 0.0, %v3319
        %3321 = vdwg.mxu0
        %v3322 = vadd.f32 %v3244, %v3294
        %v3323 = vadd.f32 %v3263, %v3313
        %v3324 = vadd.f32 %v3246, %v3296
        %v3325 = vadd.f32 %v3265, %v3315
        %v3326 = vadd.f32 %v3249, %v3299
        %v3327 = vadd.f32 %v3268, %v3318
        %v3328 = vadd.f32 %v3251, %v3301
        %v3329 = vadd.f32 %v3270, %v3320
        %v3330 = vld [vmem:[%s3171 + $0x3] sm:$0xff]
        %v3331 = vld [vmem:[%s3171 + $0xb] sm:$0xff]
        %v3332 = vld [vmem:[%s3171 + $0x13] sm:$0xff]
        %v3333 = vld [vmem:[%s3171 + $0x1b] sm:$0xf]
        %v3334 = vpack.c.bf16 %v3331, %v3330
        %v3335 = vpack.c.bf16 %v3333, %v3332
        %v3337 = vsel %vm382, %v3334, 0
        %v3340 = vsel %vm382, %v3335, 0
        %3342 = vmatpush.bf16.msra.mxu0 0
        %3343 = vmatpush.bf16.msra.mxu0 0
        %3344 = vmatpush.bf16.msra.mxu0 0
        %3345 = vmatpush.bf16.msra.mxu0 0
        %3346 = vmatpush.bf16.msra.mxu0 0
        %3347 = vmatpush.bf16.msra.mxu0 0
        %3348 = vmatpush.bf16.msra.mxu0 %v599
        %3349 = vmatpush.bf16.msra.mxu0 %v597
        %3350 = vmatmul.bf16.gmra.mxu0 %v3337
        %v3351 = vpop.f32.mrf.mxu0
        %v3352 = vadd.f32 0.0, %v3351
        %v3353 = vpop.f32.mrf.mxu0
        %v3354 = vadd.f32 0.0, %v3353
        %3355 = vmatmul.bf16.gmra.mxu0 %v3340
        %v3356 = vpop.f32.mrf.mxu0
        %v3357 = vadd.f32 0.0, %v3356
        %v3358 = vpop.f32.mrf.mxu0
        %v3359 = vadd.f32 0.0, %v3358
        %3360 = vdwg.mxu0
        %3361 = vmatpush.bf16.msra.mxu0 0
        %3362 = vmatpush.bf16.msra.mxu0 0
        %3363 = vmatpush.bf16.msra.mxu0 0
        %3364 = vmatpush.bf16.msra.mxu0 0
        %3365 = vmatpush.bf16.msra.mxu0 0
        %3366 = vmatpush.bf16.msra.mxu0 0
        %3367 = vmatpush.bf16.msra.mxu0 %v600
        %3368 = vmatpush.bf16.msra.mxu0 %v598
        %3369 = vmatmul.bf16.gmra.mxu0 %v3337
        %v3370 = vpop.f32.mrf.mxu0
        %v3371 = vadd.f32 0.0, %v3370
        %v3372 = vpop.f32.mrf.mxu0
        %v3373 = vadd.f32 0.0, %v3372
        %3374 = vmatmul.bf16.gmra.mxu0 %v3340
        %v3375 = vpop.f32.mrf.mxu0
        %v3376 = vadd.f32 0.0, %v3375
        %v3377 = vpop.f32.mrf.mxu0
        %v3378 = vadd.f32 0.0, %v3377
        %3379 = vdwg.mxu0
        %v3380 = vadd.f32 %v3322, %v3352
        %v3381 = vadd.f32 %v3323, %v3371
        %v3382 = vadd.f32 %v3324, %v3354
        %v3383 = vadd.f32 %v3325, %v3373
        %v3384 = vadd.f32 %v3326, %v3357
        %v3385 = vadd.f32 %v3327, %v3376
        %v3386 = vadd.f32 %v3328, %v3359
        %v3387 = vadd.f32 %v3329, %v3378
        %v3388 = vld [vmem:[%s3171 + $0x4] sm:$0xff]
        %v3389 = vld [vmem:[%s3171 + $0xc] sm:$0xff]
        %v3390 = vld [vmem:[%s3171 + $0x14] sm:$0xff]
        %v3391 = vld [vmem:[%s3171 + $0x1c] sm:$0xf]
        %v3392 = vpack.c.bf16 %v3389, %v3388
        %v3393 = vpack.c.bf16 %v3391, %v3390
        %v3395 = vsel %vm382, %v3392, 0
        %v3398 = vsel %vm382, %v3393, 0
        %3400 = vmatpush.bf16.msra.mxu0 0
        %3401 = vmatpush.bf16.msra.mxu0 0
        %3402 = vmatpush.bf16.msra.mxu0 0
        %3403 = vmatpush.bf16.msra.mxu0 0
        %3404 = vmatpush.bf16.msra.mxu0 0
        %3405 = vmatpush.bf16.msra.mxu0 0
        %3406 = vmatpush.bf16.msra.mxu0 %v682
        %3407 = vmatpush.bf16.msra.mxu0 %v680
        %3408 = vmatmul.bf16.gmra.mxu0 %v3395
        %v3409 = vpop.f32.mrf.mxu0
        %v3410 = vadd.f32 0.0, %v3409
        %v3411 = vpop.f32.mrf.mxu0
        %v3412 = vadd.f32 0.0, %v3411
        %3413 = vmatmul.bf16.gmra.mxu0 %v3398
        %v3414 = vpop.f32.mrf.mxu0
        %v3415 = vadd.f32 0.0, %v3414
        %v3416 = vpop.f32.mrf.mxu0
        %v3417 = vadd.f32 0.0, %v3416
        %3418 = vdwg.mxu0
        %3419 = vmatpush.bf16.msra.mxu0 0
        %3420 = vmatpush.bf16.msra.mxu0 0
        %3421 = vmatpush.bf16.msra.mxu0 0
        %3422 = vmatpush.bf16.msra.mxu0 0
        %3423 = vmatpush.bf16.msra.mxu0 0
        %3424 = vmatpush.bf16.msra.mxu0 0
        %3425 = vmatpush.bf16.msra.mxu0 %v683
        %3426 = vmatpush.bf16.msra.mxu0 %v681
        %3427 = vmatmul.bf16.gmra.mxu0 %v3395
        %v3428 = vpop.f32.mrf.mxu0
        %v3429 = vadd.f32 0.0, %v3428
        %v3430 = vpop.f32.mrf.mxu0
        %v3431 = vadd.f32 0.0, %v3430
        %3432 = vmatmul.bf16.gmra.mxu0 %v3398
        %v3433 = vpop.f32.mrf.mxu0
        %v3434 = vadd.f32 0.0, %v3433
        %v3435 = vpop.f32.mrf.mxu0
        %v3436 = vadd.f32 0.0, %v3435
        %3437 = vdwg.mxu0
        %v3438 = vadd.f32 %v3380, %v3410
        %v3439 = vadd.f32 %v3381, %v3429
        %v3440 = vadd.f32 %v3382, %v3412
        %v3441 = vadd.f32 %v3383, %v3431
        %v3442 = vadd.f32 %v3384, %v3415
        %v3443 = vadd.f32 %v3385, %v3434
        %v3444 = vadd.f32 %v3386, %v3417
        %v3445 = vadd.f32 %v3387, %v3436
        %v3446 = vadd.f32 %v3438, %v741
        %v3447 = vadd.f32 %v3439, %v742
        %v3448 = vadd.f32 %v3440, %v741
        %v3449 = vadd.f32 %v3441, %v742
        %v3450 = vadd.f32 %v3442, %v741
        %v3451 = vadd.f32 %v3443, %v742
        %v3452 = vadd.f32 %v3444, %v741
        %v3453 = vadd.f32 %v3445, %v742
        %vm3454 = vcmp.ge.f32.partialorder %v3446, 0.0
        %vm3455 = vcmp.ge.f32.partialorder %v3447, 0.0
        %vm3456 = vcmp.ge.f32.partialorder %v3448, 0.0
        %vm3457 = vcmp.ge.f32.partialorder %v3449, 0.0
        %vm3458 = vcmp.ge.f32.partialorder %v3450, 0.0
        %vm3459 = vcmp.ge.f32.partialorder %v3451, 0.0
        %vm3460 = vcmp.ge.f32.partialorder %v3452, 0.0
        %vm3461 = vcmp.ge.f32.partialorder %v3453, 0.0
        %v3462 = vmul.f32 %v3446, 0.01
        %v3463 = vmul.f32 %v3447, 0.01
        %v3464 = vmul.f32 %v3448, 0.01
        %v3465 = vmul.f32 %v3449, 0.01
        %v3466 = vmul.f32 %v3450, 0.01
        %v3467 = vmul.f32 %v3451, 0.01
        %v3468 = vmul.f32 %v3452, 0.01
        %v3469 = vmul.f32 %v3453, 0.01
        %v3470 = vsel %vm3454, %v3446, %v3462
        %v3471 = vsel %vm3455, %v3447, %v3463
        %v3472 = vsel %vm3456, %v3448, %v3464
        %v3473 = vsel %vm3457, %v3449, %v3465
        %v3474 = vsel %vm3458, %v3450, %v3466
        %v3475 = vsel %vm3459, %v3451, %v3467
        %v3476 = vsel %vm3460, %v3452, %v3468
        %v3477 = vsel %vm3461, %v3453, %v3469
        %3486 = vrot.lane.b32.xlu0 %v3470, 122
        %v3487 = vpop.permute.xlu0 %3486
        %3488 = vrot.lane.b32.xlu0 %v3471, 122
        %v3489 = vpop.permute.xlu0 %3488
        %3490 = vrot.lane.b32.xlu0 %v3472, 122
        %v3491 = vpop.permute.xlu0 %3490
        %3492 = vrot.lane.b32.xlu0 %v3473, 122
        %v3493 = vpop.permute.xlu0 %3492
        %3494 = vrot.lane.b32.xlu0 %v3474, 122
        %v3495 = vpop.permute.xlu0 %3494
        %3496 = vrot.lane.b32.xlu0 %v3475, 122
        %v3497 = vpop.permute.xlu0 %3496
        %3498 = vrot.lane.b32.xlu0 %v3476, 122
        %v3499 = vpop.permute.xlu0 %3498
        %3500 = vrot.lane.b32.xlu0 %v3477, 122
        %v3501 = vpop.permute.xlu0 %3500
        %v3502 = vsel %vm801, %v3487, %v3489
        %v3503 = vsel %vm801, %v3491, %v3493
        %v3504 = vsel %vm801, %v3495, %v3497
        %v3505 = vsel %vm801, %v3499, %v3501
        %v3514 = vmax.f32 %v3470, %v3502
        %v3515 = vmax.f32 %v3471, %v3489
        %v3516 = vmax.f32 %v3472, %v3503
        %v3517 = vmax.f32 %v3473, %v3493
        %v3518 = vmax.f32 %v3474, %v3504
        %v3519 = vmax.f32 %v3475, %v3497
        %v3520 = vmax.f32 %v3476, %v3505
        %v3521 = vmax.f32 %v3477, %v3501
        %v3522 = vpack.c.bf16 %v3516, %v3514
        %v3523 = vpack.c.bf16 %v3517, %v3515
        %v3524 = vpack.c.bf16 %v3520, %v3518
        %v3525 = vpack.c.bf16 %v3521, %v3519
        %v3527 = vsel %vm910, %v3523, 0
        %v3530 = vsel %vm910, %v3525, 0
        %3532 = vmatpush.bf16.msra.mxu0 %v896
        %3533 = vmatpush.bf16.msra.mxu0 %v895
        %3534 = vmatpush.bf16.msra.mxu0 %v894
        %3535 = vmatpush.bf16.msra.mxu0 %v893
        %3536 = vmatpush.bf16.msra.mxu0 %v892
        %3537 = vmatpush.bf16.msra.mxu0 %v891
        %3538 = vmatpush.bf16.msra.mxu0 %v890
        %3539 = vmatpush.bf16.msra.mxu0 %v889
        %3540 = vmatmul.bf16.gmra.mxu0 %v3522
        %v3541 = vpop.f32.mrf.mxu0
        %v3542 = vadd.f32 0.0, %v3541
        %v3543 = vpop.f32.mrf.mxu0
        %v3544 = vadd.f32 0.0, %v3543
        %3545 = vmatmul.bf16.gmra.mxu0 %v3524
        %v3546 = vpop.f32.mrf.mxu0
        %v3547 = vadd.f32 0.0, %v3546
        %v3548 = vpop.f32.mrf.mxu0
        %v3549 = vadd.f32 0.0, %v3548
        %3550 = vdwg.mxu0
        %3551 = vmatpush.bf16.msra.mxu0 0
        %3552 = vmatpush.bf16.msra.mxu0 0
        %3553 = vmatpush.bf16.msra.mxu0 0
        %3554 = vmatpush.bf16.msra.mxu0 0
        %3555 = vmatpush.bf16.msra.mxu0 0
        %3556 = vmatpush.bf16.msra.mxu0 %v919
        %3557 = vmatpush.bf16.msra.mxu0 %v898
        %3558 = vmatpush.bf16.msra.mxu0 %v897
        %3559 = vmatmul.bf16.gmra.mxu0 %v3527
        %v3560 = vpop.f32.mrf.mxu0
        %v3561 = vadd.f32 %v3542, %v3560
        %v3562 = vpop.f32.mrf.mxu0
        %v3563 = vadd.f32 %v3544, %v3562
        %3564 = vmatmul.bf16.gmra.mxu0 %v3530
        %v3565 = vpop.f32.mrf.mxu0
        %v3566 = vadd.f32 %v3547, %v3565
        %v3567 = vpop.f32.mrf.mxu0
        %v3568 = vadd.f32 %v3549, %v3567
        %3569 = vdwg.mxu0
        %v3574 = vrot.slane %v3561, 1
        %v3575 = vrot.slane %v3563, 1
        %v3576 = vsel %vm963, %v3574, %v3575
        %v3577 = vrot.slane %v3566, 1
        %v3578 = vsel %vm963, %v3575, %v3577
        %v3579 = vrot.slane %v3568, 1
        %v3580 = vsel %vm963, %v3577, %v3579
        %v3585 = vmax.f32 %v3561, %v3576
        %v3586 = vmax.f32 %v3563, %v3578
        %v3587 = vmax.f32 %v3566, %v3580
        %v3588 = vmax.f32 %v3568, %v3579
        %v3589 = vpack.c.bf16 %v3586, %v3585
        %v3590 = vpack.c.bf16 %v3588, %v3587
        %v3592 = vand.u32 %v3590, %v995
        %3594 = vmatpush.bf16.msra.mxu0 0
        %3595 = vmatpush.bf16.msra.mxu0 0
        %3596 = vmatpush.bf16.msra.mxu0 0
        %3597 = vmatpush.bf16.msra.mxu0 0
        %3598 = vmatpush.bf16.msra.mxu0 0
        %3599 = vmatpush.bf16.msra.mxu0 0
        %3600 = vmatpush.bf16.msra.mxu0 %v3592
        %3601 = vmatpush.bf16.msra.mxu0 %v3589
        %3602 = vmatmul.bf16.gmra.mxu0 %v990
        %v3603 = vpop.f32.mrf.mxu0
        %v3604 = vadd.f32 0.0, %v3603
        %v3605 = vpop.f32.mrf.mxu0
        %v3606 = vadd.f32 0.0, %v3605
        %3607 = vdwg.mxu0
        %v3608 = vpack.c.bf16 %v3606, %v3604
        %v3610 = vshrl.u32 %v3608, 16
        %v3612 = vshll.u32 %v3608, 16
        %v3614 = vrot.slane %v3612, 1
        %v3615 = vor.u32 %v3610, %v3614
        %v3617 = vsel %vm1099, %v3615, 0
        %3619 = vmatpush.bf16.msra.mxu0 0
        %3620 = vmatpush.bf16.msra.mxu0 0
        %3621 = vmatpush.bf16.msra.mxu0 %v1105
        %3622 = vmatpush.bf16.msra.mxu0 %v1085
        %3623 = vmatpush.bf16.msra.mxu0 %v1083
        %3624 = vmatpush.bf16.msra.mxu0 %v1081
        %3625 = vmatpush.bf16.msra.mxu0 %v1079
        %3626 = vmatpush.bf16.msra.mxu0 %v1077
        %3627 = vmatmul.bf16.gmra.mxu0 %v3617
        %v3628 = vpop.f32.mrf.mxu0
        %v3629 = vadd.f32 0.0, %v3628
        %v3630 = vpop.f32.mrf.mxu0
        %v3631 = vadd.f32 0.0, %v3630
        %3632 = vdwg.mxu0
        %3633 = vmatpush.bf16.msra.mxu0 0
        %3634 = vmatpush.bf16.msra.mxu0 0
        %3635 = vmatpush.bf16.msra.mxu0 %v1108
        %3636 = vmatpush.bf16.msra.mxu0 %v1086
        %3637 = vmatpush.bf16.msra.mxu0 %v1084
        %3638 = vmatpush.bf16.msra.mxu0 %v1082
        %3639 = vmatpush.bf16.msra.mxu0 %v1080
        %3640 = vmatpush.bf16.msra.mxu0 %v1078
        %3641 = vmatmul.bf16.gmra.mxu0 %v3617
        %v3642 = vpop.f32.mrf.mxu0
        %v3643 = vadd.f32 0.0, %v3642
        %v3644 = vpop.f32.mrf.mxu0
        %v3645 = vadd.f32 0.0, %v3644
        %3646 = vdwg.mxu0
        %v3647 = vsel %vm1099, %v3608, 0
        %3649 = vmatpush.bf16.msra.mxu0 0
        %3650 = vmatpush.bf16.msra.mxu0 0
        %3651 = vmatpush.bf16.msra.mxu0 %v1196
        %3652 = vmatpush.bf16.msra.mxu0 %v1179
        %3653 = vmatpush.bf16.msra.mxu0 %v1177
        %3654 = vmatpush.bf16.msra.mxu0 %v1175
        %3655 = vmatpush.bf16.msra.mxu0 %v1173
        %3656 = vmatpush.bf16.msra.mxu0 %v1171
        %3657 = vmatmul.bf16.gmra.mxu0 %v3647
        %v3658 = vpop.f32.mrf.mxu0
        %v3659 = vadd.f32 %v3629, %v3658
        %v3660 = vpop.f32.mrf.mxu0
        %v3661 = vadd.f32 %v3631, %v3660
        %3662 = vdwg.mxu0
        %3663 = vmatpush.bf16.msra.mxu0 0
        %3664 = vmatpush.bf16.msra.mxu0 0
        %3665 = vmatpush.bf16.msra.mxu0 %v1199
        %3666 = vmatpush.bf16.msra.mxu0 %v1180
        %3667 = vmatpush.bf16.msra.mxu0 %v1178
        %3668 = vmatpush.bf16.msra.mxu0 %v1176
        %3669 = vmatpush.bf16.msra.mxu0 %v1174
        %3670 = vmatpush.bf16.msra.mxu0 %v1172
        %3671 = vmatmul.bf16.gmra.mxu0 %v3647
        %v3672 = vpop.f32.mrf.mxu0
        %v3673 = vadd.f32 %v3643, %v3672
        %v3674 = vpop.f32.mrf.mxu0
        %v3675 = vadd.f32 %v3645, %v3674
        %3676 = vdwg.mxu0
        %v3678 = vrot.slane %v3608, 1
        %v3680 = vsel %vm1099, %v3678, 0
        %3682 = vmatpush.bf16.msra.mxu0 0
        %3683 = vmatpush.bf16.msra.mxu0 0
        %3684 = vmatpush.bf16.msra.mxu0 %v1302
        %3685 = vmatpush.bf16.msra.mxu0 %v1284
        %3686 = vmatpush.bf16.msra.mxu0 %v1282
        %3687 = vmatpush.bf16.msra.mxu0 %v1280
        %3688 = vmatpush.bf16.msra.mxu0 %v1278
        %3689 = vmatpush.bf16.msra.mxu0 %v1276
        %3690 = vmatmul.bf16.gmra.mxu0 %v3680
        %v3691 = vpop.f32.mrf.mxu0
        %v3692 = vadd.f32 0.0, %v3691
        %v3693 = vpop.f32.mrf.mxu0
        %v3694 = vadd.f32 0.0, %v3693
        %3695 = vdwg.mxu0
        %3696 = vmatpush.bf16.msra.mxu0 0
        %3697 = vmatpush.bf16.msra.mxu0 0
        %3698 = vmatpush.bf16.msra.mxu0 %v1305
        %3699 = vmatpush.bf16.msra.mxu0 %v1285
        %3700 = vmatpush.bf16.msra.mxu0 %v1283
        %3701 = vmatpush.bf16.msra.mxu0 %v1281
        %3702 = vmatpush.bf16.msra.mxu0 %v1279
        %3703 = vmatpush.bf16.msra.mxu0 %v1277
        %3704 = vmatmul.bf16.gmra.mxu0 %v3680
        %v3705 = vpop.f32.mrf.mxu0
        %v3706 = vadd.f32 0.0, %v3705
        %v3707 = vpop.f32.mrf.mxu0
        %v3708 = vadd.f32 0.0, %v3707
        %3709 = vdwg.mxu0
        %v3710 = vadd.f32 %v3659, %v3692
        %v3711 = vadd.f32 %v3673, %v3706
        %v3712 = vadd.f32 %v3661, %v3694
        %v3713 = vadd.f32 %v3675, %v3708
        %v3714 = vrot.slane %v3610, 1
        %v3715 = vrot.slane %v3612, 2
        %v3716 = vor.u32 %v3714, %v3715
        %v3718 = vsel %vm1099, %v3716, 0
        %3720 = vmatpush.bf16.msra.mxu0 0
        %3721 = vmatpush.bf16.msra.mxu0 0
        %3722 = vmatpush.bf16.msra.mxu0 %v1413
        %3723 = vmatpush.bf16.msra.mxu0 %v1395
        %3724 = vmatpush.bf16.msra.mxu0 %v1393
        %3725 = vmatpush.bf16.msra.mxu0 %v1391
        %3726 = vmatpush.bf16.msra.mxu0 %v1389
        %3727 = vmatpush.bf16.msra.mxu0 %v1387
        %3728 = vmatmul.bf16.gmra.mxu0 %v3718
        %v3729 = vpop.f32.mrf.mxu0
        %v3730 = vadd.f32 0.0, %v3729
        %v3731 = vpop.f32.mrf.mxu0
        %v3732 = vadd.f32 0.0, %v3731
        %3733 = vdwg.mxu0
        %3734 = vmatpush.bf16.msra.mxu0 0
        %3735 = vmatpush.bf16.msra.mxu0 0
        %3736 = vmatpush.bf16.msra.mxu0 %v1416
        %3737 = vmatpush.bf16.msra.mxu0 %v1396
        %3738 = vmatpush.bf16.msra.mxu0 %v1394
        %3739 = vmatpush.bf16.msra.mxu0 %v1392
        %3740 = vmatpush.bf16.msra.mxu0 %v1390
        %3741 = vmatpush.bf16.msra.mxu0 %v1388
        %3742 = vmatmul.bf16.gmra.mxu0 %v3718
        %v3743 = vpop.f32.mrf.mxu0
        %v3744 = vadd.f32 0.0, %v3743
        %v3745 = vpop.f32.mrf.mxu0
        %v3746 = vadd.f32 0.0, %v3745
        %3747 = vdwg.mxu0
        %v3748 = vadd.f32 %v3710, %v3730
        %v3749 = vadd.f32 %v3711, %v3744
        %v3750 = vadd.f32 %v3712, %v3732
        %v3751 = vadd.f32 %v3713, %v3746
        %v3752 = vrot.slane %v3608, 2
        %v3754 = vsel %vm1099, %v3752, 0
        %3756 = vmatpush.bf16.msra.mxu0 0
        %3757 = vmatpush.bf16.msra.mxu0 0
        %3758 = vmatpush.bf16.msra.mxu0 %v1522
        %3759 = vmatpush.bf16.msra.mxu0 %v1504
        %3760 = vmatpush.bf16.msra.mxu0 %v1502
        %3761 = vmatpush.bf16.msra.mxu0 %v1500
        %3762 = vmatpush.bf16.msra.mxu0 %v1498
        %3763 = vmatpush.bf16.msra.mxu0 %v1496
        %3764 = vmatmul.bf16.gmra.mxu0 %v3754
        %v3765 = vpop.f32.mrf.mxu0
        %v3766 = vadd.f32 0.0, %v3765
        %v3767 = vpop.f32.mrf.mxu0
        %v3768 = vadd.f32 0.0, %v3767
        %3769 = vdwg.mxu0
        %3770 = vmatpush.bf16.msra.mxu0 0
        %3771 = vmatpush.bf16.msra.mxu0 0
        %3772 = vmatpush.bf16.msra.mxu0 %v1525
        %3773 = vmatpush.bf16.msra.mxu0 %v1505
        %3774 = vmatpush.bf16.msra.mxu0 %v1503
        %3775 = vmatpush.bf16.msra.mxu0 %v1501
        %3776 = vmatpush.bf16.msra.mxu0 %v1499
        %3777 = vmatpush.bf16.msra.mxu0 %v1497
        %3778 = vmatmul.bf16.gmra.mxu0 %v3754
        %v3779 = vpop.f32.mrf.mxu0
        %v3780 = vadd.f32 0.0, %v3779
        %v3781 = vpop.f32.mrf.mxu0
        %v3782 = vadd.f32 0.0, %v3781
        %3783 = vdwg.mxu0
        %v3784 = vadd.f32 %v3748, %v3766
        %v3785 = vadd.f32 %v3749, %v3780
        %v3786 = vadd.f32 %v3750, %v3768
        %v3787 = vadd.f32 %v3751, %v3782
        %v3788 = vadd.f32 %v3784, %v1560
        %v3789 = vadd.f32 %v3785, %v1561
        %v3790 = vadd.f32 %v3786, %v1560
        %v3791 = vadd.f32 %v3787, %v1561
        %vm3792 = vcmp.ge.f32.partialorder %v3788, 0.0
        %vm3793 = vcmp.ge.f32.partialorder %v3789, 0.0
        %vm3794 = vcmp.ge.f32.partialorder %v3790, 0.0
        %vm3795 = vcmp.ge.f32.partialorder %v3791, 0.0
        %v3796 = vmul.f32 %v3788, 0.01
        %v3797 = vmul.f32 %v3789, 0.01
        %v3798 = vmul.f32 %v3790, 0.01
        %v3799 = vmul.f32 %v3791, 0.01
        %v3800 = vsel %vm3792, %v3788, %v3796
        %v3801 = vsel %vm3793, %v3789, %v3797
        %v3802 = vsel %vm3794, %v3790, %v3798
        %v3803 = vsel %vm3795, %v3791, %v3799
        %3808 = vrot.lane.b32.xlu0 %v3800, 112
        %v3809 = vpop.permute.xlu0 %3808
        %3810 = vrot.lane.b32.xlu0 %v3801, 112
        %v3811 = vpop.permute.xlu0 %3810
        %3812 = vrot.lane.b32.xlu0 %v3802, 112
        %v3813 = vpop.permute.xlu0 %3812
        %3814 = vrot.lane.b32.xlu0 %v3803, 112
        %v3815 = vpop.permute.xlu0 %3814
        %v3816 = vsel %vm1592, %v3809, %v3811
        %v3817 = vsel %vm1592, %v3813, %v3815
        %v3822 = vmax.f32 %v3800, %v3816
        %v3823 = vmax.f32 %v3801, %v3811
        %v3824 = vmax.f32 %v3802, %v3817
        %v3825 = vmax.f32 %v3803, %v3815
        %v3826 = vpack.c.bf16 %v3824, %v3822
        %v3827 = vpack.c.bf16 %v3825, %v3823
        %v3829 = vsel %vm1677, %v3827, 0
        %3831 = vmatpush.bf16.msra.mxu0 %v1666
        %3832 = vmatpush.bf16.msra.mxu0 %v1665
        %3833 = vmatpush.bf16.msra.mxu0 %v1664
        %3834 = vmatpush.bf16.msra.mxu0 %v1663
        %3835 = vmatpush.bf16.msra.mxu0 %v1662
        %3836 = vmatpush.bf16.msra.mxu0 %v1661
        %3837 = vmatpush.bf16.msra.mxu0 %v1660
        %3838 = vmatpush.bf16.msra.mxu0 %v1659
        %3839 = vmatmul.bf16.gmra.mxu0 %v3826
        %v3840 = vpop.f32.mrf.mxu0
        %v3841 = vadd.f32 0.0, %v3840
        %v3842 = vpop.f32.mrf.mxu0
        %v3843 = vadd.f32 0.0, %v3842
        %3844 = vdwg.mxu0
        %3845 = vmatpush.bf16.msra.mxu0 0
        %3846 = vmatpush.bf16.msra.mxu0 0
        %3847 = vmatpush.bf16.msra.mxu0 0
        %3848 = vmatpush.bf16.msra.mxu0 0
        %3849 = vmatpush.bf16.msra.mxu0 0
        %3850 = vmatpush.bf16.msra.mxu0 0
        %3851 = vmatpush.bf16.msra.mxu0 0
        %3852 = vmatpush.bf16.msra.mxu0 %v1667
        %3853 = vmatmul.bf16.gmra.mxu0 %v3829
        %v3854 = vpop.f32.mrf.mxu0
        %v3855 = vadd.f32 %v3841, %v3854
        %v3856 = vpop.f32.mrf.mxu0
        %v3857 = vadd.f32 %v3843, %v3856
        %3858 = vdwg.mxu0
        %v3861 = vrot.slane %v3855, 1
        %v3862 = vrot.slane %v3857, 1
        %v3863 = vsel %vm963, %v3861, %v3862
        %v3866 = vmax.f32 %v3855, %v3863
        %v3867 = vmax.f32 %v3857, %v3862
        %v3868 = vpack.c.bf16 %v3867, %v3866
        %v3870 = vand.u32 %v3868, %v1726
        %3872 = vmatpush.bf16.msra.mxu0 0
        %3873 = vmatpush.bf16.msra.mxu0 0
        %3874 = vmatpush.bf16.msra.mxu0 0
        %3875 = vmatpush.bf16.msra.mxu0 0
        %3876 = vmatpush.bf16.msra.mxu0 0
        %3877 = vmatpush.bf16.msra.mxu0 0
        %3878 = vmatpush.bf16.msra.mxu0 0
        %3879 = vmatpush.bf16.msra.mxu0 %v3870
        %3880 = vmatmul.bf16.gmra.mxu0 %v1722
        %v3881 = vpop.f32.mrf.mxu0
        %v3882 = vadd.f32 0.0, %v3881
        %v3883 = vpop.f32.mrf.mxu0
        %3884 = vdwg.mxu0
        %s3885 = scalar_lea.vmem %s334, 128
        %v3886 = vld [vmem:[%s3885] sm:$0xff]
        %v3887 = vld [vmem:[%s3885 + $0x8] sm:$0xff]
        %v3888 = vld [vmem:[%s3885 + $0x10] sm:$0xff]
        %v3889 = vld [vmem:[%s3885 + $0x18] sm:$0xf]
        %v3890 = vpack.c.bf16 %v3887, %v3886
        %v3891 = vpack.c.bf16 %v3889, %v3888
        %v3892 = vld [vmem:[%s3885 + $0x1] sm:$0xff]
        %v3893 = vld [vmem:[%s3885 + $0x9] sm:$0xff]
        %v3894 = vld [vmem:[%s3885 + $0x11] sm:$0xff]
        %v3895 = vld [vmem:[%s3885 + $0x19] sm:$0xf]
        %v3896 = vpack.c.bf16 %v3893, %v3892
        %v3897 = vpack.c.bf16 %v3895, %v3894
        %v3899 = vsel %vm382, %v3896, 0
        %v3902 = vsel %vm382, %v3897, 0
        %3904 = vmatpush.bf16.msra.mxu0 0
        %3905 = vmatpush.bf16.msra.mxu0 0
        %3906 = vmatpush.bf16.msra.mxu0 0
        %3907 = vmatpush.bf16.msra.mxu0 0
        %3908 = vmatpush.bf16.msra.mxu0 0
        %3909 = vmatpush.bf16.msra.mxu0 0
        %3910 = vmatpush.bf16.msra.mxu0 %v376
        %3911 = vmatpush.bf16.msra.mxu0 %v374
        %3912 = vmatmul.bf16.gmra.mxu0 %v3899
        %v3913 = vpop.f32.mrf.mxu0
        %v3914 = vadd.f32 0.0, %v3913
        %v3915 = vpop.f32.mrf.mxu0
        %v3916 = vadd.f32 0.0, %v3915
        %3917 = vmatmul.bf16.gmra.mxu0 %v3902
        %v3918 = vpop.f32.mrf.mxu0
        %v3919 = vadd.f32 0.0, %v3918
        %v3920 = vpop.f32.mrf.mxu0
        %v3921 = vadd.f32 0.0, %v3920
        %3922 = vdwg.mxu0
        %3923 = vmatpush.bf16.msra.mxu0 0
        %3924 = vmatpush.bf16.msra.mxu0 0
        %3925 = vmatpush.bf16.msra.mxu0 0
        %3926 = vmatpush.bf16.msra.mxu0 0
        %3927 = vmatpush.bf16.msra.mxu0 0
        %3928 = vmatpush.bf16.msra.mxu0 0
        %3929 = vmatpush.bf16.msra.mxu0 %v377
        %3930 = vmatpush.bf16.msra.mxu0 %v375
        %3931 = vmatmul.bf16.gmra.mxu0 %v3899
        %v3932 = vpop.f32.mrf.mxu0
        %v3933 = vadd.f32 0.0, %v3932
        %v3934 = vpop.f32.mrf.mxu0
        %v3935 = vadd.f32 0.0, %v3934
        %3936 = vmatmul.bf16.gmra.mxu0 %v3902
        %v3937 = vpop.f32.mrf.mxu0
        %v3938 = vadd.f32 0.0, %v3937
        %v3939 = vpop.f32.mrf.mxu0
        %v3940 = vadd.f32 0.0, %v3939
        %3941 = vdwg.mxu0
        %v3943 = vsel %vm382, %v3890, 0
        %v3946 = vsel %vm382, %v3891, 0
        %3948 = vmatpush.bf16.msra.mxu0 0
        %3949 = vmatpush.bf16.msra.mxu0 0
        %3950 = vmatpush.bf16.msra.mxu0 0
        %3951 = vmatpush.bf16.msra.mxu0 0
        %3952 = vmatpush.bf16.msra.mxu0 0
        %3953 = vmatpush.bf16.msra.mxu0 0
        %3954 = vmatpush.bf16.msra.mxu0 %v441
        %3955 = vmatpush.bf16.msra.mxu0 %v439
        %3956 = vmatmul.bf16.gmra.mxu0 %v3943
        %v3957 = vpop.f32.mrf.mxu0
        %v3958 = vadd.f32 %v3914, %v3957
        %v3959 = vpop.f32.mrf.mxu0
        %v3960 = vadd.f32 %v3916, %v3959
        %3961 = vmatmul.bf16.gmra.mxu0 %v3946
        %v3962 = vpop.f32.mrf.mxu0
        %v3963 = vadd.f32 %v3919, %v3962
        %v3964 = vpop.f32.mrf.mxu0
        %v3965 = vadd.f32 %v3921, %v3964
        %3966 = vdwg.mxu0
        %3967 = vmatpush.bf16.msra.mxu0 0
        %3968 = vmatpush.bf16.msra.mxu0 0
        %3969 = vmatpush.bf16.msra.mxu0 0
        %3970 = vmatpush.bf16.msra.mxu0 0
        %3971 = vmatpush.bf16.msra.mxu0 0
        %3972 = vmatpush.bf16.msra.mxu0 0
        %3973 = vmatpush.bf16.msra.mxu0 %v442
        %3974 = vmatpush.bf16.msra.mxu0 %v440
        %3975 = vmatmul.bf16.gmra.mxu0 %v3943
        %v3976 = vpop.f32.mrf.mxu0
        %v3977 = vadd.f32 %v3933, %v3976
        %v3978 = vpop.f32.mrf.mxu0
        %v3979 = vadd.f32 %v3935, %v3978
        %3980 = vmatmul.bf16.gmra.mxu0 %v3946
        %v3981 = vpop.f32.mrf.mxu0
        %v3982 = vadd.f32 %v3938, %v3981
        %v3983 = vpop.f32.mrf.mxu0
        %v3984 = vadd.f32 %v3940, %v3983
        %3985 = vdwg.mxu0
        %v3986 = vld [vmem:[%s3885 + $0x2] sm:$0xff]
        %v3987 = vld [vmem:[%s3885 + $0xa] sm:$0xff]
        %v3988 = vld [vmem:[%s3885 + $0x12] sm:$0xff]
        %v3989 = vld [vmem:[%s3885 + $0x1a] sm:$0xf]
        %v3990 = vpack.c.bf16 %v3987, %v3986
        %v3991 = vpack.c.bf16 %v3989, %v3988
        %v3993 = vsel %vm382, %v3990, 0
        %v3996 = vsel %vm382, %v3991, 0
        %3998 = vmatpush.bf16.msra.mxu0 0
        %3999 = vmatpush.bf16.msra.mxu0 0
        %4000 = vmatpush.bf16.msra.mxu0 0
        %4001 = vmatpush.bf16.msra.mxu0 0
        %4002 = vmatpush.bf16.msra.mxu0 0
        %4003 = vmatpush.bf16.msra.mxu0 0
        %4004 = vmatpush.bf16.msra.mxu0 %v516
        %4005 = vmatpush.bf16.msra.mxu0 %v514
        %4006 = vmatmul.bf16.gmra.mxu0 %v3993
        %v4007 = vpop.f32.mrf.mxu0
        %v4008 = vadd.f32 0.0, %v4007
        %v4009 = vpop.f32.mrf.mxu0
        %v4010 = vadd.f32 0.0, %v4009
        %4011 = vmatmul.bf16.gmra.mxu0 %v3996
        %v4012 = vpop.f32.mrf.mxu0
        %v4013 = vadd.f32 0.0, %v4012
        %v4014 = vpop.f32.mrf.mxu0
        %v4015 = vadd.f32 0.0, %v4014
        %4016 = vdwg.mxu0
        %4017 = vmatpush.bf16.msra.mxu0 0
        %4018 = vmatpush.bf16.msra.mxu0 0
        %4019 = vmatpush.bf16.msra.mxu0 0
        %4020 = vmatpush.bf16.msra.mxu0 0
        %4021 = vmatpush.bf16.msra.mxu0 0
        %4022 = vmatpush.bf16.msra.mxu0 0
        %4023 = vmatpush.bf16.msra.mxu0 %v517
        %4024 = vmatpush.bf16.msra.mxu0 %v515
        %4025 = vmatmul.bf16.gmra.mxu0 %v3993
        %v4026 = vpop.f32.mrf.mxu0
        %v4027 = vadd.f32 0.0, %v4026
        %v4028 = vpop.f32.mrf.mxu0
        %v4029 = vadd.f32 0.0, %v4028
        %4030 = vmatmul.bf16.gmra.mxu0 %v3996
        %v4031 = vpop.f32.mrf.mxu0
        %v4032 = vadd.f32 0.0, %v4031
        %v4033 = vpop.f32.mrf.mxu0
        %v4034 = vadd.f32 0.0, %v4033
        %4035 = vdwg.mxu0
        %v4036 = vadd.f32 %v3958, %v4008
        %v4037 = vadd.f32 %v3977, %v4027
        %v4038 = vadd.f32 %v3960, %v4010
        %v4039 = vadd.f32 %v3979, %v4029
        %v4040 = vadd.f32 %v3963, %v4013
        %v4041 = vadd.f32 %v3982, %v4032
        %v4042 = vadd.f32 %v3965, %v4015
        %v4043 = vadd.f32 %v3984, %v4034
        %v4044 = vld [vmem:[%s3885 + $0x3] sm:$0xff]
        %v4045 = vld [vmem:[%s3885 + $0xb] sm:$0xff]
        %v4046 = vld [vmem:[%s3885 + $0x13] sm:$0xff]
        %v4047 = vld [vmem:[%s3885 + $0x1b] sm:$0xf]
        %v4048 = vpack.c.bf16 %v4045, %v4044
        %v4049 = vpack.c.bf16 %v4047, %v4046
        %v4051 = vsel %vm382, %v4048, 0
        %v4054 = vsel %vm382, %v4049, 0
        %4056 = vmatpush.bf16.msra.mxu0 0
        %4057 = vmatpush.bf16.msra.mxu0 0
        %4058 = vmatpush.bf16.msra.mxu0 0
        %4059 = vmatpush.bf16.msra.mxu0 0
        %4060 = vmatpush.bf16.msra.mxu0 0
        %4061 = vmatpush.bf16.msra.mxu0 0
        %4062 = vmatpush.bf16.msra.mxu0 %v599
        %4063 = vmatpush.bf16.msra.mxu0 %v597
        %4064 = vmatmul.bf16.gmra.mxu0 %v4051
        %v4065 = vpop.f32.mrf.mxu0
        %v4066 = vadd.f32 0.0, %v4065
        %v4067 = vpop.f32.mrf.mxu0
        %v4068 = vadd.f32 0.0, %v4067
        %4069 = vmatmul.bf16.gmra.mxu0 %v4054
        %v4070 = vpop.f32.mrf.mxu0
        %v4071 = vadd.f32 0.0, %v4070
        %v4072 = vpop.f32.mrf.mxu0
        %v4073 = vadd.f32 0.0, %v4072
        %4074 = vdwg.mxu0
        %4075 = vmatpush.bf16.msra.mxu0 0
        %4076 = vmatpush.bf16.msra.mxu0 0
        %4077 = vmatpush.bf16.msra.mxu0 0
        %4078 = vmatpush.bf16.msra.mxu0 0
        %4079 = vmatpush.bf16.msra.mxu0 0
        %4080 = vmatpush.bf16.msra.mxu0 0
        %4081 = vmatpush.bf16.msra.mxu0 %v600
        %4082 = vmatpush.bf16.msra.mxu0 %v598
        %4083 = vmatmul.bf16.gmra.mxu0 %v4051
        %v4084 = vpop.f32.mrf.mxu0
        %v4085 = vadd.f32 0.0, %v4084
        %v4086 = vpop.f32.mrf.mxu0
        %v4087 = vadd.f32 0.0, %v4086
        %4088 = vmatmul.bf16.gmra.mxu0 %v4054
        %v4089 = vpop.f32.mrf.mxu0
        %v4090 = vadd.f32 0.0, %v4089
        %v4091 = vpop.f32.mrf.mxu0
        %v4092 = vadd.f32 0.0, %v4091
        %4093 = vdwg.mxu0
        %v4094 = vadd.f32 %v4036, %v4066
        %v4095 = vadd.f32 %v4037, %v4085
        %v4096 = vadd.f32 %v4038, %v4068
        %v4097 = vadd.f32 %v4039, %v4087
        %v4098 = vadd.f32 %v4040, %v4071
        %v4099 = vadd.f32 %v4041, %v4090
        %v4100 = vadd.f32 %v4042, %v4073
        %v4101 = vadd.f32 %v4043, %v4092
        %v4102 = vld [vmem:[%s3885 + $0x4] sm:$0xff]
        %v4103 = vld [vmem:[%s3885 + $0xc] sm:$0xff]
        %v4104 = vld [vmem:[%s3885 + $0x14] sm:$0xff]
        %v4105 = vld [vmem:[%s3885 + $0x1c] sm:$0xf]
        %v4106 = vpack.c.bf16 %v4103, %v4102
        %v4107 = vpack.c.bf16 %v4105, %v4104
        %v4109 = vsel %vm382, %v4106, 0
        %v4112 = vsel %vm382, %v4107, 0
        %4114 = vmatpush.bf16.msra.mxu0 0
        %4115 = vmatpush.bf16.msra.mxu0 0
        %4116 = vmatpush.bf16.msra.mxu0 0
        %4117 = vmatpush.bf16.msra.mxu0 0
        %4118 = vmatpush.bf16.msra.mxu0 0
        %4119 = vmatpush.bf16.msra.mxu0 0
        %4120 = vmatpush.bf16.msra.mxu0 %v682
        %4121 = vmatpush.bf16.msra.mxu0 %v680
        %4122 = vmatmul.bf16.gmra.mxu0 %v4109
        %v4123 = vpop.f32.mrf.mxu0
        %v4124 = vadd.f32 0.0, %v4123
        %v4125 = vpop.f32.mrf.mxu0
        %v4126 = vadd.f32 0.0, %v4125
        %4127 = vmatmul.bf16.gmra.mxu0 %v4112
        %v4128 = vpop.f32.mrf.mxu0
        %v4129 = vadd.f32 0.0, %v4128
        %v4130 = vpop.f32.mrf.mxu0
        %v4131 = vadd.f32 0.0, %v4130
        %4132 = vdwg.mxu0
        %4133 = vmatpush.bf16.msra.mxu0 0
        %4134 = vmatpush.bf16.msra.mxu0 0
        %4135 = vmatpush.bf16.msra.mxu0 0
        %4136 = vmatpush.bf16.msra.mxu0 0
        %4137 = vmatpush.bf16.msra.mxu0 0
        %4138 = vmatpush.bf16.msra.mxu0 0
        %4139 = vmatpush.bf16.msra.mxu0 %v683
        %4140 = vmatpush.bf16.msra.mxu0 %v681
        %4141 = vmatmul.bf16.gmra.mxu0 %v4109
        %v4142 = vpop.f32.mrf.mxu0
        %v4143 = vadd.f32 0.0, %v4142
        %v4144 = vpop.f32.mrf.mxu0
        %v4145 = vadd.f32 0.0, %v4144
        %4146 = vmatmul.bf16.gmra.mxu0 %v4112
        %v4147 = vpop.f32.mrf.mxu0
        %v4148 = vadd.f32 0.0, %v4147
        %v4149 = vpop.f32.mrf.mxu0
        %v4150 = vadd.f32 0.0, %v4149
        %4151 = vdwg.mxu0
        %v4152 = vadd.f32 %v4094, %v4124
        %v4153 = vadd.f32 %v4095, %v4143
        %v4154 = vadd.f32 %v4096, %v4126
        %v4155 = vadd.f32 %v4097, %v4145
        %v4156 = vadd.f32 %v4098, %v4129
        %v4157 = vadd.f32 %v4099, %v4148
        %v4158 = vadd.f32 %v4100, %v4131
        %v4159 = vadd.f32 %v4101, %v4150
        %v4160 = vadd.f32 %v4152, %v741
        %v4161 = vadd.f32 %v4153, %v742
        %v4162 = vadd.f32 %v4154, %v741
        %v4163 = vadd.f32 %v4155, %v742
        %v4164 = vadd.f32 %v4156, %v741
        %v4165 = vadd.f32 %v4157, %v742
        %v4166 = vadd.f32 %v4158, %v741
        %v4167 = vadd.f32 %v4159, %v742
        %vm4168 = vcmp.ge.f32.partialorder %v4160, 0.0
        %vm4169 = vcmp.ge.f32.partialorder %v4161, 0.0
        %vm4170 = vcmp.ge.f32.partialorder %v4162, 0.0
        %vm4171 = vcmp.ge.f32.partialorder %v4163, 0.0
        %vm4172 = vcmp.ge.f32.partialorder %v4164, 0.0
        %vm4173 = vcmp.ge.f32.partialorder %v4165, 0.0
        %vm4174 = vcmp.ge.f32.partialorder %v4166, 0.0
        %vm4175 = vcmp.ge.f32.partialorder %v4167, 0.0
        %v4176 = vmul.f32 %v4160, 0.01
        %v4177 = vmul.f32 %v4161, 0.01
        %v4178 = vmul.f32 %v4162, 0.01
        %v4179 = vmul.f32 %v4163, 0.01
        %v4180 = vmul.f32 %v4164, 0.01
        %v4181 = vmul.f32 %v4165, 0.01
        %v4182 = vmul.f32 %v4166, 0.01
        %v4183 = vmul.f32 %v4167, 0.01
        %v4184 = vsel %vm4168, %v4160, %v4176
        %v4185 = vsel %vm4169, %v4161, %v4177
        %v4186 = vsel %vm4170, %v4162, %v4178
        %v4187 = vsel %vm4171, %v4163, %v4179
        %v4188 = vsel %vm4172, %v4164, %v4180
        %v4189 = vsel %vm4173, %v4165, %v4181
        %v4190 = vsel %vm4174, %v4166, %v4182
        %v4191 = vsel %vm4175, %v4167, %v4183
        %4200 = vrot.lane.b32.xlu0 %v4184, 122
        %v4201 = vpop.permute.xlu0 %4200
        %4202 = vrot.lane.b32.xlu0 %v4185, 122
        %v4203 = vpop.permute.xlu0 %4202
        %4204 = vrot.lane.b32.xlu0 %v4186, 122
        %v4205 = vpop.permute.xlu0 %4204
        %4206 = vrot.lane.b32.xlu0 %v4187, 122
        %v4207 = vpop.permute.xlu0 %4206
        %4208 = vrot.lane.b32.xlu0 %v4188, 122
        %v4209 = vpop.permute.xlu0 %4208
        %4210 = vrot.lane.b32.xlu0 %v4189, 122
        %v4211 = vpop.permute.xlu0 %4210
        %4212 = vrot.lane.b32.xlu0 %v4190, 122
        %v4213 = vpop.permute.xlu0 %4212
        %4214 = vrot.lane.b32.xlu0 %v4191, 122
        %v4215 = vpop.permute.xlu0 %4214
        %v4216 = vsel %vm801, %v4201, %v4203
        %v4217 = vsel %vm801, %v4205, %v4207
        %v4218 = vsel %vm801, %v4209, %v4211
        %v4219 = vsel %vm801, %v4213, %v4215
        %v4228 = vmax.f32 %v4184, %v4216
        %v4229 = vmax.f32 %v4185, %v4203
        %v4230 = vmax.f32 %v4186, %v4217
        %v4231 = vmax.f32 %v4187, %v4207
        %v4232 = vmax.f32 %v4188, %v4218
        %v4233 = vmax.f32 %v4189, %v4211
        %v4234 = vmax.f32 %v4190, %v4219
        %v4235 = vmax.f32 %v4191, %v4215
        %v4236 = vpack.c.bf16 %v4230, %v4228
        %v4237 = vpack.c.bf16 %v4231, %v4229
        %v4238 = vpack.c.bf16 %v4234, %v4232
        %v4239 = vpack.c.bf16 %v4235, %v4233
        %v4241 = vsel %vm910, %v4237, 0
        %v4244 = vsel %vm910, %v4239, 0
        %4246 = vmatpush.bf16.msra.mxu0 %v896
        %4247 = vmatpush.bf16.msra.mxu0 %v895
        %4248 = vmatpush.bf16.msra.mxu0 %v894
        %4249 = vmatpush.bf16.msra.mxu0 %v893
        %4250 = vmatpush.bf16.msra.mxu0 %v892
        %4251 = vmatpush.bf16.msra.mxu0 %v891
        %4252 = vmatpush.bf16.msra.mxu0 %v890
        %4253 = vmatpush.bf16.msra.mxu0 %v889
        %4254 = vmatmul.bf16.gmra.mxu0 %v4236
        %v4255 = vpop.f32.mrf.mxu0
        %v4256 = vadd.f32 0.0, %v4255
        %v4257 = vpop.f32.mrf.mxu0
        %v4258 = vadd.f32 0.0, %v4257
        %4259 = vmatmul.bf16.gmra.mxu0 %v4238
        %v4260 = vpop.f32.mrf.mxu0
        %v4261 = vadd.f32 0.0, %v4260
        %v4262 = vpop.f32.mrf.mxu0
        %v4263 = vadd.f32 0.0, %v4262
        %4264 = vdwg.mxu0
        %4265 = vmatpush.bf16.msra.mxu0 0
        %4266 = vmatpush.bf16.msra.mxu0 0
        %4267 = vmatpush.bf16.msra.mxu0 0
        %4268 = vmatpush.bf16.msra.mxu0 0
        %4269 = vmatpush.bf16.msra.mxu0 0
        %4270 = vmatpush.bf16.msra.mxu0 %v919
        %4271 = vmatpush.bf16.msra.mxu0 %v898
        %4272 = vmatpush.bf16.msra.mxu0 %v897
        %4273 = vmatmul.bf16.gmra.mxu0 %v4241
        %v4274 = vpop.f32.mrf.mxu0
        %v4275 = vadd.f32 %v4256, %v4274
        %v4276 = vpop.f32.mrf.mxu0
        %v4277 = vadd.f32 %v4258, %v4276
        %4278 = vmatmul.bf16.gmra.mxu0 %v4244
        %v4279 = vpop.f32.mrf.mxu0
        %v4280 = vadd.f32 %v4261, %v4279
        %v4281 = vpop.f32.mrf.mxu0
        %v4282 = vadd.f32 %v4263, %v4281
        %4283 = vdwg.mxu0
        %v4288 = vrot.slane %v4275, 1
        %v4289 = vrot.slane %v4277, 1
        %v4290 = vsel %vm963, %v4288, %v4289
        %v4291 = vrot.slane %v4280, 1
        %v4292 = vsel %vm963, %v4289, %v4291
        %v4293 = vrot.slane %v4282, 1
        %v4294 = vsel %vm963, %v4291, %v4293
        %v4299 = vmax.f32 %v4275, %v4290
        %v4300 = vmax.f32 %v4277, %v4292
        %v4301 = vmax.f32 %v4280, %v4294
        %v4302 = vmax.f32 %v4282, %v4293
        %v4303 = vpack.c.bf16 %v4300, %v4299
        %v4304 = vpack.c.bf16 %v4302, %v4301
        %v4306 = vand.u32 %v4304, %v995
        %4308 = vmatpush.bf16.msra.mxu0 0
        %4309 = vmatpush.bf16.msra.mxu0 0
        %4310 = vmatpush.bf16.msra.mxu0 0
        %4311 = vmatpush.bf16.msra.mxu0 0
        %4312 = vmatpush.bf16.msra.mxu0 0
        %4313 = vmatpush.bf16.msra.mxu0 0
        %4314 = vmatpush.bf16.msra.mxu0 %v4306
        %4315 = vmatpush.bf16.msra.mxu0 %v4303
        %4316 = vmatmul.bf16.gmra.mxu0 %v990
        %v4317 = vpop.f32.mrf.mxu0
        %v4318 = vadd.f32 0.0, %v4317
        %v4319 = vpop.f32.mrf.mxu0
        %v4320 = vadd.f32 0.0, %v4319
        %4321 = vdwg.mxu0
        %v4322 = vpack.c.bf16 %v4320, %v4318
        %v4324 = vshrl.u32 %v4322, 16
        %v4326 = vshll.u32 %v4322, 16
        %v4328 = vrot.slane %v4326, 1
        %v4329 = vor.u32 %v4324, %v4328
        %v4331 = vsel %vm1099, %v4329, 0
        %4333 = vmatpush.bf16.msra.mxu0 0
        %4334 = vmatpush.bf16.msra.mxu0 0
        %4335 = vmatpush.bf16.msra.mxu0 %v1105
        %4336 = vmatpush.bf16.msra.mxu0 %v1085
        %4337 = vmatpush.bf16.msra.mxu0 %v1083
        %4338 = vmatpush.bf16.msra.mxu0 %v1081
        %4339 = vmatpush.bf16.msra.mxu0 %v1079
        %4340 = vmatpush.bf16.msra.mxu0 %v1077
        %4341 = vmatmul.bf16.gmra.mxu0 %v4331
        %v4342 = vpop.f32.mrf.mxu0
        %v4343 = vadd.f32 0.0, %v4342
        %v4344 = vpop.f32.mrf.mxu0
        %v4345 = vadd.f32 0.0, %v4344
        %4346 = vdwg.mxu0
        %4347 = vmatpush.bf16.msra.mxu0 0
        %4348 = vmatpush.bf16.msra.mxu0 0
        %4349 = vmatpush.bf16.msra.mxu0 %v1108
        %4350 = vmatpush.bf16.msra.mxu0 %v1086
        %4351 = vmatpush.bf16.msra.mxu0 %v1084
        %4352 = vmatpush.bf16.msra.mxu0 %v1082
        %4353 = vmatpush.bf16.msra.mxu0 %v1080
        %4354 = vmatpush.bf16.msra.mxu0 %v1078
        %4355 = vmatmul.bf16.gmra.mxu0 %v4331
        %v4356 = vpop.f32.mrf.mxu0
        %v4357 = vadd.f32 0.0, %v4356
        %v4358 = vpop.f32.mrf.mxu0
        %v4359 = vadd.f32 0.0, %v4358
        %4360 = vdwg.mxu0
        %v4361 = vsel %vm1099, %v4322, 0
        %4363 = vmatpush.bf16.msra.mxu0 0
        %4364 = vmatpush.bf16.msra.mxu0 0
        %4365 = vmatpush.bf16.msra.mxu0 %v1196
        %4366 = vmatpush.bf16.msra.mxu0 %v1179
        %4367 = vmatpush.bf16.msra.mxu0 %v1177
        %4368 = vmatpush.bf16.msra.mxu0 %v1175
        %4369 = vmatpush.bf16.msra.mxu0 %v1173
        %4370 = vmatpush.bf16.msra.mxu0 %v1171
        %4371 = vmatmul.bf16.gmra.mxu0 %v4361
        %v4372 = vpop.f32.mrf.mxu0
        %v4373 = vadd.f32 %v4343, %v4372
        %v4374 = vpop.f32.mrf.mxu0
        %v4375 = vadd.f32 %v4345, %v4374
        %4376 = vdwg.mxu0
        %4377 = vmatpush.bf16.msra.mxu0 0
        %4378 = vmatpush.bf16.msra.mxu0 0
        %4379 = vmatpush.bf16.msra.mxu0 %v1199
        %4380 = vmatpush.bf16.msra.mxu0 %v1180
        %4381 = vmatpush.bf16.msra.mxu0 %v1178
        %4382 = vmatpush.bf16.msra.mxu0 %v1176
        %4383 = vmatpush.bf16.msra.mxu0 %v1174
        %4384 = vmatpush.bf16.msra.mxu0 %v1172
        %4385 = vmatmul.bf16.gmra.mxu0 %v4361
        %v4386 = vpop.f32.mrf.mxu0
        %v4387 = vadd.f32 %v4357, %v4386
        %v4388 = vpop.f32.mrf.mxu0
        %v4389 = vadd.f32 %v4359, %v4388
        %4390 = vdwg.mxu0
        %v4392 = vrot.slane %v4322, 1
        %v4394 = vsel %vm1099, %v4392, 0
        %4396 = vmatpush.bf16.msra.mxu0 0
        %4397 = vmatpush.bf16.msra.mxu0 0
        %4398 = vmatpush.bf16.msra.mxu0 %v1302
        %4399 = vmatpush.bf16.msra.mxu0 %v1284
        %4400 = vmatpush.bf16.msra.mxu0 %v1282
        %4401 = vmatpush.bf16.msra.mxu0 %v1280
        %4402 = vmatpush.bf16.msra.mxu0 %v1278
        %4403 = vmatpush.bf16.msra.mxu0 %v1276
        %4404 = vmatmul.bf16.gmra.mxu0 %v4394
        %v4405 = vpop.f32.mrf.mxu0
        %v4406 = vadd.f32 0.0, %v4405
        %v4407 = vpop.f32.mrf.mxu0
        %v4408 = vadd.f32 0.0, %v4407
        %4409 = vdwg.mxu0
        %4410 = vmatpush.bf16.msra.mxu0 0
        %4411 = vmatpush.bf16.msra.mxu0 0
        %4412 = vmatpush.bf16.msra.mxu0 %v1305
        %4413 = vmatpush.bf16.msra.mxu0 %v1285
        %4414 = vmatpush.bf16.msra.mxu0 %v1283
        %4415 = vmatpush.bf16.msra.mxu0 %v1281
        %4416 = vmatpush.bf16.msra.mxu0 %v1279
        %4417 = vmatpush.bf16.msra.mxu0 %v1277
        %4418 = vmatmul.bf16.gmra.mxu0 %v4394
        %v4419 = vpop.f32.mrf.mxu0
        %v4420 = vadd.f32 0.0, %v4419
        %v4421 = vpop.f32.mrf.mxu0
        %v4422 = vadd.f32 0.0, %v4421
        %4423 = vdwg.mxu0
        %v4424 = vadd.f32 %v4373, %v4406
        %v4425 = vadd.f32 %v4387, %v4420
        %v4426 = vadd.f32 %v4375, %v4408
        %v4427 = vadd.f32 %v4389, %v4422
        %v4428 = vrot.slane %v4324, 1
        %v4429 = vrot.slane %v4326, 2
        %v4430 = vor.u32 %v4428, %v4429
        %v4432 = vsel %vm1099, %v4430, 0
        %4434 = vmatpush.bf16.msra.mxu0 0
        %4435 = vmatpush.bf16.msra.mxu0 0
        %4436 = vmatpush.bf16.msra.mxu0 %v1413
        %4437 = vmatpush.bf16.msra.mxu0 %v1395
        %4438 = vmatpush.bf16.msra.mxu0 %v1393
        %4439 = vmatpush.bf16.msra.mxu0 %v1391
        %4440 = vmatpush.bf16.msra.mxu0 %v1389
        %4441 = vmatpush.bf16.msra.mxu0 %v1387
        %4442 = vmatmul.bf16.gmra.mxu0 %v4432
        %v4443 = vpop.f32.mrf.mxu0
        %v4444 = vadd.f32 0.0, %v4443
        %v4445 = vpop.f32.mrf.mxu0
        %v4446 = vadd.f32 0.0, %v4445
        %4447 = vdwg.mxu0
        %4448 = vmatpush.bf16.msra.mxu0 0
        %4449 = vmatpush.bf16.msra.mxu0 0
        %4450 = vmatpush.bf16.msra.mxu0 %v1416
        %4451 = vmatpush.bf16.msra.mxu0 %v1396
        %4452 = vmatpush.bf16.msra.mxu0 %v1394
        %4453 = vmatpush.bf16.msra.mxu0 %v1392
        %4454 = vmatpush.bf16.msra.mxu0 %v1390
        %4455 = vmatpush.bf16.msra.mxu0 %v1388
        %4456 = vmatmul.bf16.gmra.mxu0 %v4432
        %v4457 = vpop.f32.mrf.mxu0
        %v4458 = vadd.f32 0.0, %v4457
        %v4459 = vpop.f32.mrf.mxu0
        %v4460 = vadd.f32 0.0, %v4459
        %4461 = vdwg.mxu0
        %v4462 = vadd.f32 %v4424, %v4444
        %v4463 = vadd.f32 %v4425, %v4458
        %v4464 = vadd.f32 %v4426, %v4446
        %v4465 = vadd.f32 %v4427, %v4460
        %v4466 = vrot.slane %v4322, 2
        %v4468 = vsel %vm1099, %v4466, 0
        %4470 = vmatpush.bf16.msra.mxu0 0
        %4471 = vmatpush.bf16.msra.mxu0 0
        %4472 = vmatpush.bf16.msra.mxu0 %v1522
        %4473 = vmatpush.bf16.msra.mxu0 %v1504
        %4474 = vmatpush.bf16.msra.mxu0 %v1502
        %4475 = vmatpush.bf16.msra.mxu0 %v1500
        %4476 = vmatpush.bf16.msra.mxu0 %v1498
        %4477 = vmatpush.bf16.msra.mxu0 %v1496
        %4478 = vmatmul.bf16.gmra.mxu0 %v4468
        %v4479 = vpop.f32.mrf.mxu0
        %v4480 = vadd.f32 0.0, %v4479
        %v4481 = vpop.f32.mrf.mxu0
        %v4482 = vadd.f32 0.0, %v4481
        %4483 = vdwg.mxu0
        %4484 = vmatpush.bf16.msra.mxu0 0
        %4485 = vmatpush.bf16.msra.mxu0 0
        %4486 = vmatpush.bf16.msra.mxu0 %v1525
        %4487 = vmatpush.bf16.msra.mxu0 %v1505
        %4488 = vmatpush.bf16.msra.mxu0 %v1503
        %4489 = vmatpush.bf16.msra.mxu0 %v1501
        %4490 = vmatpush.bf16.msra.mxu0 %v1499
        %4491 = vmatpush.bf16.msra.mxu0 %v1497
        %4492 = vmatmul.bf16.gmra.mxu0 %v4468
        %v4493 = vpop.f32.mrf.mxu0
        %v4494 = vadd.f32 0.0, %v4493
        %v4495 = vpop.f32.mrf.mxu0
        %v4496 = vadd.f32 0.0, %v4495
        %4497 = vdwg.mxu0
        %v4498 = vadd.f32 %v4462, %v4480
        %v4499 = vadd.f32 %v4463, %v4494
        %v4500 = vadd.f32 %v4464, %v4482
        %v4501 = vadd.f32 %v4465, %v4496
        %v4502 = vadd.f32 %v4498, %v1560
        %v4503 = vadd.f32 %v4499, %v1561
        %v4504 = vadd.f32 %v4500, %v1560
        %v4505 = vadd.f32 %v4501, %v1561
        %vm4506 = vcmp.ge.f32.partialorder %v4502, 0.0
        %vm4507 = vcmp.ge.f32.partialorder %v4503, 0.0
        %vm4508 = vcmp.ge.f32.partialorder %v4504, 0.0
        %vm4509 = vcmp.ge.f32.partialorder %v4505, 0.0
        %v4510 = vmul.f32 %v4502, 0.01
        %v4511 = vmul.f32 %v4503, 0.01
        %v4512 = vmul.f32 %v4504, 0.01
        %v4513 = vmul.f32 %v4505, 0.01
        %v4514 = vsel %vm4506, %v4502, %v4510
        %v4515 = vsel %vm4507, %v4503, %v4511
        %v4516 = vsel %vm4508, %v4504, %v4512
        %v4517 = vsel %vm4509, %v4505, %v4513
        %4522 = vrot.lane.b32.xlu0 %v4514, 112
        %v4523 = vpop.permute.xlu0 %4522
        %4524 = vrot.lane.b32.xlu0 %v4515, 112
        %v4525 = vpop.permute.xlu0 %4524
        %4526 = vrot.lane.b32.xlu0 %v4516, 112
        %v4527 = vpop.permute.xlu0 %4526
        %4528 = vrot.lane.b32.xlu0 %v4517, 112
        %v4529 = vpop.permute.xlu0 %4528
        %v4530 = vsel %vm1592, %v4523, %v4525
        %v4531 = vsel %vm1592, %v4527, %v4529
        %v4536 = vmax.f32 %v4514, %v4530
        %v4537 = vmax.f32 %v4515, %v4525
        %v4538 = vmax.f32 %v4516, %v4531
        %v4539 = vmax.f32 %v4517, %v4529
        %v4540 = vpack.c.bf16 %v4538, %v4536
        %v4541 = vpack.c.bf16 %v4539, %v4537
        %v4543 = vsel %vm1677, %v4541, 0
        %4545 = vmatpush.bf16.msra.mxu0 %v1666
        %4546 = vmatpush.bf16.msra.mxu0 %v1665
        %4547 = vmatpush.bf16.msra.mxu0 %v1664
        %4548 = vmatpush.bf16.msra.mxu0 %v1663
        %4549 = vmatpush.bf16.msra.mxu0 %v1662
        %4550 = vmatpush.bf16.msra.mxu0 %v1661
        %4551 = vmatpush.bf16.msra.mxu0 %v1660
        %4552 = vmatpush.bf16.msra.mxu0 %v1659
        %4553 = vmatmul.bf16.gmra.mxu0 %v4540
        %v4554 = vpop.f32.mrf.mxu0
        %v4555 = vadd.f32 0.0, %v4554
        %v4556 = vpop.f32.mrf.mxu0
        %v4557 = vadd.f32 0.0, %v4556
        %4558 = vdwg.mxu0
        %4559 = vmatpush.bf16.msra.mxu0 0
        %4560 = vmatpush.bf16.msra.mxu0 0
        %4561 = vmatpush.bf16.msra.mxu0 0
        %4562 = vmatpush.bf16.msra.mxu0 0
        %4563 = vmatpush.bf16.msra.mxu0 0
        %4564 = vmatpush.bf16.msra.mxu0 0
        %4565 = vmatpush.bf16.msra.mxu0 0
        %4566 = vmatpush.bf16.msra.mxu0 %v1667
        %4567 = vmatmul.bf16.gmra.mxu0 %v4543
        %v4568 = vpop.f32.mrf.mxu0
        %v4569 = vadd.f32 %v4555, %v4568
        %v4570 = vpop.f32.mrf.mxu0
        %v4571 = vadd.f32 %v4557, %v4570
        %4572 = vdwg.mxu0
        %v4575 = vrot.slane %v4569, 1
        %v4576 = vrot.slane %v4571, 1
        %v4577 = vsel %vm963, %v4575, %v4576
        %v4580 = vmax.f32 %v4569, %v4577
        %v4581 = vmax.f32 %v4571, %v4576
        %v4582 = vpack.c.bf16 %v4581, %v4580
        %v4584 = vand.u32 %v4582, %v1726
        %4586 = vmatpush.bf16.msra.mxu0 0
        %4587 = vmatpush.bf16.msra.mxu0 0
        %4588 = vmatpush.bf16.msra.mxu0 0
        %4589 = vmatpush.bf16.msra.mxu0 0
        %4590 = vmatpush.bf16.msra.mxu0 0
        %4591 = vmatpush.bf16.msra.mxu0 0
        %4592 = vmatpush.bf16.msra.mxu0 0
        %4593 = vmatpush.bf16.msra.mxu0 %v4584
        %4594 = vmatmul.bf16.gmra.mxu0 %v1722
        %v4595 = vpop.f32.mrf.mxu0
        %v4596 = vadd.f32 0.0, %v4595
        %v4597 = vpop.f32.mrf.mxu0
        %4598 = vdwg.mxu0
        %s4599 = scalar_lea.vmem %s334, 160
        %v4600 = vld [vmem:[%s4599] sm:$0xff]
        %v4601 = vld [vmem:[%s4599 + $0x8] sm:$0xff]
        %v4602 = vld [vmem:[%s4599 + $0x10] sm:$0xff]
        %v4603 = vld [vmem:[%s4599 + $0x18] sm:$0xf]
        %v4604 = vpack.c.bf16 %v4601, %v4600
        %v4605 = vpack.c.bf16 %v4603, %v4602
        %v4606 = vld [vmem:[%s4599 + $0x1] sm:$0xff]
        %v4607 = vld [vmem:[%s4599 + $0x9] sm:$0xff]
        %v4608 = vld [vmem:[%s4599 + $0x11] sm:$0xff]
        %v4609 = vld [vmem:[%s4599 + $0x19] sm:$0xf]
        %v4610 = vpack.c.bf16 %v4607, %v4606
        %v4611 = vpack.c.bf16 %v4609, %v4608
        %v4613 = vsel %vm382, %v4610, 0
        %v4616 = vsel %vm382, %v4611, 0
        %4618 = vmatpush.bf16.msra.mxu0 0
        %4619 = vmatpush.bf16.msra.mxu0 0
        %4620 = vmatpush.bf16.msra.mxu0 0
        %4621 = vmatpush.bf16.msra.mxu0 0
        %4622 = vmatpush.bf16.msra.mxu0 0
        %4623 = vmatpush.bf16.msra.mxu0 0
        %4624 = vmatpush.bf16.msra.mxu0 %v376
        %4625 = vmatpush.bf16.msra.mxu0 %v374
        %4626 = vmatmul.bf16.gmra.mxu0 %v4613
        %v4627 = vpop.f32.mrf.mxu0
        %v4628 = vadd.f32 0.0, %v4627
        %v4629 = vpop.f32.mrf.mxu0
        %v4630 = vadd.f32 0.0, %v4629
        %4631 = vmatmul.bf16.gmra.mxu0 %v4616
        %v4632 = vpop.f32.mrf.mxu0
        %v4633 = vadd.f32 0.0, %v4632
        %v4634 = vpop.f32.mrf.mxu0
        %v4635 = vadd.f32 0.0, %v4634
        %4636 = vdwg.mxu0
        %4637 = vmatpush.bf16.msra.mxu0 0
        %4638 = vmatpush.bf16.msra.mxu0 0
        %4639 = vmatpush.bf16.msra.mxu0 0
        %4640 = vmatpush.bf16.msra.mxu0 0
        %4641 = vmatpush.bf16.msra.mxu0 0
        %4642 = vmatpush.bf16.msra.mxu0 0
        %4643 = vmatpush.bf16.msra.mxu0 %v377
        %4644 = vmatpush.bf16.msra.mxu0 %v375
        %4645 = vmatmul.bf16.gmra.mxu0 %v4613
        %v4646 = vpop.f32.mrf.mxu0
        %v4647 = vadd.f32 0.0, %v4646
        %v4648 = vpop.f32.mrf.mxu0
        %v4649 = vadd.f32 0.0, %v4648
        %4650 = vmatmul.bf16.gmra.mxu0 %v4616
        %v4651 = vpop.f32.mrf.mxu0
        %v4652 = vadd.f32 0.0, %v4651
        %v4653 = vpop.f32.mrf.mxu0
        %v4654 = vadd.f32 0.0, %v4653
        %4655 = vdwg.mxu0
        %v4657 = vsel %vm382, %v4604, 0
        %v4660 = vsel %vm382, %v4605, 0
        %4662 = vmatpush.bf16.msra.mxu0 0
        %4663 = vmatpush.bf16.msra.mxu0 0
        %4664 = vmatpush.bf16.msra.mxu0 0
        %4665 = vmatpush.bf16.msra.mxu0 0
        %4666 = vmatpush.bf16.msra.mxu0 0
        %4667 = vmatpush.bf16.msra.mxu0 0
        %4668 = vmatpush.bf16.msra.mxu0 %v441
        %4669 = vmatpush.bf16.msra.mxu0 %v439
        %4670 = vmatmul.bf16.gmra.mxu0 %v4657
        %v4671 = vpop.f32.mrf.mxu0
        %v4672 = vadd.f32 %v4628, %v4671
        %v4673 = vpop.f32.mrf.mxu0
        %v4674 = vadd.f32 %v4630, %v4673
        %4675 = vmatmul.bf16.gmra.mxu0 %v4660
        %v4676 = vpop.f32.mrf.mxu0
        %v4677 = vadd.f32 %v4633, %v4676
        %v4678 = vpop.f32.mrf.mxu0
        %v4679 = vadd.f32 %v4635, %v4678
        %4680 = vdwg.mxu0
        %4681 = vmatpush.bf16.msra.mxu0 0
        %4682 = vmatpush.bf16.msra.mxu0 0
        %4683 = vmatpush.bf16.msra.mxu0 0
        %4684 = vmatpush.bf16.msra.mxu0 0
        %4685 = vmatpush.bf16.msra.mxu0 0
        %4686 = vmatpush.bf16.msra.mxu0 0
        %4687 = vmatpush.bf16.msra.mxu0 %v442
        %4688 = vmatpush.bf16.msra.mxu0 %v440
        %4689 = vmatmul.bf16.gmra.mxu0 %v4657
        %v4690 = vpop.f32.mrf.mxu0
        %v4691 = vadd.f32 %v4647, %v4690
        %v4692 = vpop.f32.mrf.mxu0
        %v4693 = vadd.f32 %v4649, %v4692
        %4694 = vmatmul.bf16.gmra.mxu0 %v4660
        %v4695 = vpop.f32.mrf.mxu0
        %v4696 = vadd.f32 %v4652, %v4695
        %v4697 = vpop.f32.mrf.mxu0
        %v4698 = vadd.f32 %v4654, %v4697
        %4699 = vdwg.mxu0
        %v4700 = vld [vmem:[%s4599 + $0x2] sm:$0xff]
        %v4701 = vld [vmem:[%s4599 + $0xa] sm:$0xff]
        %v4702 = vld [vmem:[%s4599 + $0x12] sm:$0xff]
        %v4703 = vld [vmem:[%s4599 + $0x1a] sm:$0xf]
        %v4704 = vpack.c.bf16 %v4701, %v4700
        %v4705 = vpack.c.bf16 %v4703, %v4702
        %v4707 = vsel %vm382, %v4704, 0
        %v4710 = vsel %vm382, %v4705, 0
        %4712 = vmatpush.bf16.msra.mxu0 0
        %4713 = vmatpush.bf16.msra.mxu0 0
        %4714 = vmatpush.bf16.msra.mxu0 0
        %4715 = vmatpush.bf16.msra.mxu0 0
        %4716 = vmatpush.bf16.msra.mxu0 0
        %4717 = vmatpush.bf16.msra.mxu0 0
        %4718 = vmatpush.bf16.msra.mxu0 %v516
        %4719 = vmatpush.bf16.msra.mxu0 %v514
        %4720 = vmatmul.bf16.gmra.mxu0 %v4707
        %v4721 = vpop.f32.mrf.mxu0
        %v4722 = vadd.f32 0.0, %v4721
        %v4723 = vpop.f32.mrf.mxu0
        %v4724 = vadd.f32 0.0, %v4723
        %4725 = vmatmul.bf16.gmra.mxu0 %v4710
        %v4726 = vpop.f32.mrf.mxu0
        %v4727 = vadd.f32 0.0, %v4726
        %v4728 = vpop.f32.mrf.mxu0
        %v4729 = vadd.f32 0.0, %v4728
        %4730 = vdwg.mxu0
        %4731 = vmatpush.bf16.msra.mxu0 0
        %4732 = vmatpush.bf16.msra.mxu0 0
        %4733 = vmatpush.bf16.msra.mxu0 0
        %4734 = vmatpush.bf16.msra.mxu0 0
        %4735 = vmatpush.bf16.msra.mxu0 0
        %4736 = vmatpush.bf16.msra.mxu0 0
        %4737 = vmatpush.bf16.msra.mxu0 %v517
        %4738 = vmatpush.bf16.msra.mxu0 %v515
        %4739 = vmatmul.bf16.gmra.mxu0 %v4707
        %v4740 = vpop.f32.mrf.mxu0
        %v4741 = vadd.f32 0.0, %v4740
        %v4742 = vpop.f32.mrf.mxu0
        %v4743 = vadd.f32 0.0, %v4742
        %4744 = vmatmul.bf16.gmra.mxu0 %v4710
        %v4745 = vpop.f32.mrf.mxu0
        %v4746 = vadd.f32 0.0, %v4745
        %v4747 = vpop.f32.mrf.mxu0
        %v4748 = vadd.f32 0.0, %v4747
        %4749 = vdwg.mxu0
        %v4750 = vadd.f32 %v4672, %v4722
        %v4751 = vadd.f32 %v4691, %v4741
        %v4752 = vadd.f32 %v4674, %v4724
        %v4753 = vadd.f32 %v4693, %v4743
        %v4754 = vadd.f32 %v4677, %v4727
        %v4755 = vadd.f32 %v4696, %v4746
        %v4756 = vadd.f32 %v4679, %v4729
        %v4757 = vadd.f32 %v4698, %v4748
        %v4758 = vld [vmem:[%s4599 + $0x3] sm:$0xff]
        %v4759 = vld [vmem:[%s4599 + $0xb] sm:$0xff]
        %v4760 = vld [vmem:[%s4599 + $0x13] sm:$0xff]
        %v4761 = vld [vmem:[%s4599 + $0x1b] sm:$0xf]
        %v4762 = vpack.c.bf16 %v4759, %v4758
        %v4763 = vpack.c.bf16 %v4761, %v4760
        %v4765 = vsel %vm382, %v4762, 0
        %v4768 = vsel %vm382, %v4763, 0
        %4770 = vmatpush.bf16.msra.mxu0 0
        %4771 = vmatpush.bf16.msra.mxu0 0
        %4772 = vmatpush.bf16.msra.mxu0 0
        %4773 = vmatpush.bf16.msra.mxu0 0
        %4774 = vmatpush.bf16.msra.mxu0 0
        %4775 = vmatpush.bf16.msra.mxu0 0
        %4776 = vmatpush.bf16.msra.mxu0 %v599
        %4777 = vmatpush.bf16.msra.mxu0 %v597
        %4778 = vmatmul.bf16.gmra.mxu0 %v4765
        %v4779 = vpop.f32.mrf.mxu0
        %v4780 = vadd.f32 0.0, %v4779
        %v4781 = vpop.f32.mrf.mxu0
        %v4782 = vadd.f32 0.0, %v4781
        %4783 = vmatmul.bf16.gmra.mxu0 %v4768
        %v4784 = vpop.f32.mrf.mxu0
        %v4785 = vadd.f32 0.0, %v4784
        %v4786 = vpop.f32.mrf.mxu0
        %v4787 = vadd.f32 0.0, %v4786
        %4788 = vdwg.mxu0
        %4789 = vmatpush.bf16.msra.mxu0 0
        %4790 = vmatpush.bf16.msra.mxu0 0
        %4791 = vmatpush.bf16.msra.mxu0 0
        %4792 = vmatpush.bf16.msra.mxu0 0
        %4793 = vmatpush.bf16.msra.mxu0 0
        %4794 = vmatpush.bf16.msra.mxu0 0
        %4795 = vmatpush.bf16.msra.mxu0 %v600
        %4796 = vmatpush.bf16.msra.mxu0 %v598
        %4797 = vmatmul.bf16.gmra.mxu0 %v4765
        %v4798 = vpop.f32.mrf.mxu0
        %v4799 = vadd.f32 0.0, %v4798
        %v4800 = vpop.f32.mrf.mxu0
        %v4801 = vadd.f32 0.0, %v4800
        %4802 = vmatmul.bf16.gmra.mxu0 %v4768
        %v4803 = vpop.f32.mrf.mxu0
        %v4804 = vadd.f32 0.0, %v4803
        %v4805 = vpop.f32.mrf.mxu0
        %v4806 = vadd.f32 0.0, %v4805
        %4807 = vdwg.mxu0
        %v4808 = vadd.f32 %v4750, %v4780
        %v4809 = vadd.f32 %v4751, %v4799
        %v4810 = vadd.f32 %v4752, %v4782
        %v4811 = vadd.f32 %v4753, %v4801
        %v4812 = vadd.f32 %v4754, %v4785
        %v4813 = vadd.f32 %v4755, %v4804
        %v4814 = vadd.f32 %v4756, %v4787
        %v4815 = vadd.f32 %v4757, %v4806
        %v4816 = vld [vmem:[%s4599 + $0x4] sm:$0xff]
        %v4817 = vld [vmem:[%s4599 + $0xc] sm:$0xff]
        %v4818 = vld [vmem:[%s4599 + $0x14] sm:$0xff]
        %v4819 = vld [vmem:[%s4599 + $0x1c] sm:$0xf]
        %v4820 = vpack.c.bf16 %v4817, %v4816
        %v4821 = vpack.c.bf16 %v4819, %v4818
        %v4823 = vsel %vm382, %v4820, 0
        %v4826 = vsel %vm382, %v4821, 0
        %4828 = vmatpush.bf16.msra.mxu0 0
        %4829 = vmatpush.bf16.msra.mxu0 0
        %4830 = vmatpush.bf16.msra.mxu0 0
        %4831 = vmatpush.bf16.msra.mxu0 0
        %4832 = vmatpush.bf16.msra.mxu0 0
        %4833 = vmatpush.bf16.msra.mxu0 0
        %4834 = vmatpush.bf16.msra.mxu0 %v682
        %4835 = vmatpush.bf16.msra.mxu0 %v680
        %4836 = vmatmul.bf16.gmra.mxu0 %v4823
        %v4837 = vpop.f32.mrf.mxu0
        %v4838 = vadd.f32 0.0, %v4837
        %v4839 = vpop.f32.mrf.mxu0
        %v4840 = vadd.f32 0.0, %v4839
        %4841 = vmatmul.bf16.gmra.mxu0 %v4826
        %v4842 = vpop.f32.mrf.mxu0
        %v4843 = vadd.f32 0.0, %v4842
        %v4844 = vpop.f32.mrf.mxu0
        %v4845 = vadd.f32 0.0, %v4844
        %4846 = vdwg.mxu0
        %4847 = vmatpush.bf16.msra.mxu0 0
        %4848 = vmatpush.bf16.msra.mxu0 0
        %4849 = vmatpush.bf16.msra.mxu0 0
        %4850 = vmatpush.bf16.msra.mxu0 0
        %4851 = vmatpush.bf16.msra.mxu0 0
        %4852 = vmatpush.bf16.msra.mxu0 0
        %4853 = vmatpush.bf16.msra.mxu0 %v683
        %4854 = vmatpush.bf16.msra.mxu0 %v681
        %4855 = vmatmul.bf16.gmra.mxu0 %v4823
        %v4856 = vpop.f32.mrf.mxu0
        %v4857 = vadd.f32 0.0, %v4856
        %v4858 = vpop.f32.mrf.mxu0
        %v4859 = vadd.f32 0.0, %v4858
        %4860 = vmatmul.bf16.gmra.mxu0 %v4826
        %v4861 = vpop.f32.mrf.mxu0
        %v4862 = vadd.f32 0.0, %v4861
        %v4863 = vpop.f32.mrf.mxu0
        %v4864 = vadd.f32 0.0, %v4863
        %4865 = vdwg.mxu0
        %v4866 = vadd.f32 %v4808, %v4838
        %v4867 = vadd.f32 %v4809, %v4857
        %v4868 = vadd.f32 %v4810, %v4840
        %v4869 = vadd.f32 %v4811, %v4859
        %v4870 = vadd.f32 %v4812, %v4843
        %v4871 = vadd.f32 %v4813, %v4862
        %v4872 = vadd.f32 %v4814, %v4845
        %v4873 = vadd.f32 %v4815, %v4864
        %v4874 = vadd.f32 %v4866, %v741
        %v4875 = vadd.f32 %v4867, %v742
        %v4876 = vadd.f32 %v4868, %v741
        %v4877 = vadd.f32 %v4869, %v742
        %v4878 = vadd.f32 %v4870, %v741
        %v4879 = vadd.f32 %v4871, %v742
        %v4880 = vadd.f32 %v4872, %v741
        %v4881 = vadd.f32 %v4873, %v742
        %vm4882 = vcmp.ge.f32.partialorder %v4874, 0.0
        %vm4883 = vcmp.ge.f32.partialorder %v4875, 0.0
        %vm4884 = vcmp.ge.f32.partialorder %v4876, 0.0
        %vm4885 = vcmp.ge.f32.partialorder %v4877, 0.0
        %vm4886 = vcmp.ge.f32.partialorder %v4878, 0.0
        %vm4887 = vcmp.ge.f32.partialorder %v4879, 0.0
        %vm4888 = vcmp.ge.f32.partialorder %v4880, 0.0
        %vm4889 = vcmp.ge.f32.partialorder %v4881, 0.0
        %v4890 = vmul.f32 %v4874, 0.01
        %v4891 = vmul.f32 %v4875, 0.01
        %v4892 = vmul.f32 %v4876, 0.01
        %v4893 = vmul.f32 %v4877, 0.01
        %v4894 = vmul.f32 %v4878, 0.01
        %v4895 = vmul.f32 %v4879, 0.01
        %v4896 = vmul.f32 %v4880, 0.01
        %v4897 = vmul.f32 %v4881, 0.01
        %v4898 = vsel %vm4882, %v4874, %v4890
        %v4899 = vsel %vm4883, %v4875, %v4891
        %v4900 = vsel %vm4884, %v4876, %v4892
        %v4901 = vsel %vm4885, %v4877, %v4893
        %v4902 = vsel %vm4886, %v4878, %v4894
        %v4903 = vsel %vm4887, %v4879, %v4895
        %v4904 = vsel %vm4888, %v4880, %v4896
        %v4905 = vsel %vm4889, %v4881, %v4897
        %4914 = vrot.lane.b32.xlu0 %v4898, 122
        %v4915 = vpop.permute.xlu0 %4914
        %4916 = vrot.lane.b32.xlu0 %v4899, 122
        %v4917 = vpop.permute.xlu0 %4916
        %4918 = vrot.lane.b32.xlu0 %v4900, 122
        %v4919 = vpop.permute.xlu0 %4918
        %4920 = vrot.lane.b32.xlu0 %v4901, 122
        %v4921 = vpop.permute.xlu0 %4920
        %4922 = vrot.lane.b32.xlu0 %v4902, 122
        %v4923 = vpop.permute.xlu0 %4922
        %4924 = vrot.lane.b32.xlu0 %v4903, 122
        %v4925 = vpop.permute.xlu0 %4924
        %4926 = vrot.lane.b32.xlu0 %v4904, 122
        %v4927 = vpop.permute.xlu0 %4926
        %4928 = vrot.lane.b32.xlu0 %v4905, 122
        %v4929 = vpop.permute.xlu0 %4928
        %v4930 = vsel %vm801, %v4915, %v4917
        %v4931 = vsel %vm801, %v4919, %v4921
        %v4932 = vsel %vm801, %v4923, %v4925
        %v4933 = vsel %vm801, %v4927, %v4929
        %v4942 = vmax.f32 %v4898, %v4930
        %v4943 = vmax.f32 %v4899, %v4917
        %v4944 = vmax.f32 %v4900, %v4931
        %v4945 = vmax.f32 %v4901, %v4921
        %v4946 = vmax.f32 %v4902, %v4932
        %v4947 = vmax.f32 %v4903, %v4925
        %v4948 = vmax.f32 %v4904, %v4933
        %v4949 = vmax.f32 %v4905, %v4929
        %v4950 = vpack.c.bf16 %v4944, %v4942
        %v4951 = vpack.c.bf16 %v4945, %v4943
        %v4952 = vpack.c.bf16 %v4948, %v4946
        %v4953 = vpack.c.bf16 %v4949, %v4947
        %v4955 = vsel %vm910, %v4951, 0
        %v4958 = vsel %vm910, %v4953, 0
        %4960 = vmatpush.bf16.msra.mxu0 %v896
        %4961 = vmatpush.bf16.msra.mxu0 %v895
        %4962 = vmatpush.bf16.msra.mxu0 %v894
        %4963 = vmatpush.bf16.msra.mxu0 %v893
        %4964 = vmatpush.bf16.msra.mxu0 %v892
        %4965 = vmatpush.bf16.msra.mxu0 %v891
        %4966 = vmatpush.bf16.msra.mxu0 %v890
        %4967 = vmatpush.bf16.msra.mxu0 %v889
        %4968 = vmatmul.bf16.gmra.mxu0 %v4950
        %v4969 = vpop.f32.mrf.mxu0
        %v4970 = vadd.f32 0.0, %v4969
        %v4971 = vpop.f32.mrf.mxu0
        %v4972 = vadd.f32 0.0, %v4971
        %4973 = vmatmul.bf16.gmra.mxu0 %v4952
        %v4974 = vpop.f32.mrf.mxu0
        %v4975 = vadd.f32 0.0, %v4974
        %v4976 = vpop.f32.mrf.mxu0
        %v4977 = vadd.f32 0.0, %v4976
        %4978 = vdwg.mxu0
        %4979 = vmatpush.bf16.msra.mxu0 0
        %4980 = vmatpush.bf16.msra.mxu0 0
        %4981 = vmatpush.bf16.msra.mxu0 0
        %4982 = vmatpush.bf16.msra.mxu0 0
        %4983 = vmatpush.bf16.msra.mxu0 0
        %4984 = vmatpush.bf16.msra.mxu0 %v919
        %4985 = vmatpush.bf16.msra.mxu0 %v898
        %4986 = vmatpush.bf16.msra.mxu0 %v897
        %4987 = vmatmul.bf16.gmra.mxu0 %v4955
        %v4988 = vpop.f32.mrf.mxu0
        %v4989 = vadd.f32 %v4970, %v4988
        %v4990 = vpop.f32.mrf.mxu0
        %v4991 = vadd.f32 %v4972, %v4990
        %4992 = vmatmul.bf16.gmra.mxu0 %v4958
        %v4993 = vpop.f32.mrf.mxu0
        %v4994 = vadd.f32 %v4975, %v4993
        %v4995 = vpop.f32.mrf.mxu0
        %v4996 = vadd.f32 %v4977, %v4995
        %4997 = vdwg.mxu0
        %v5002 = vrot.slane %v4989, 1
        %v5003 = vrot.slane %v4991, 1
        %v5004 = vsel %vm963, %v5002, %v5003
        %v5005 = vrot.slane %v4994, 1
        %v5006 = vsel %vm963, %v5003, %v5005
        %v5007 = vrot.slane %v4996, 1
        %v5008 = vsel %vm963, %v5005, %v5007
        %v5013 = vmax.f32 %v4989, %v5004
        %v5014 = vmax.f32 %v4991, %v5006
        %v5015 = vmax.f32 %v4994, %v5008
        %v5016 = vmax.f32 %v4996, %v5007
        %v5017 = vpack.c.bf16 %v5014, %v5013
        %v5018 = vpack.c.bf16 %v5016, %v5015
        %v5020 = vand.u32 %v5018, %v995
        %5022 = vmatpush.bf16.msra.mxu0 0
        %5023 = vmatpush.bf16.msra.mxu0 0
        %5024 = vmatpush.bf16.msra.mxu0 0
        %5025 = vmatpush.bf16.msra.mxu0 0
        %5026 = vmatpush.bf16.msra.mxu0 0
        %5027 = vmatpush.bf16.msra.mxu0 0
        %5028 = vmatpush.bf16.msra.mxu0 %v5020
        %5029 = vmatpush.bf16.msra.mxu0 %v5017
        %5030 = vmatmul.bf16.gmra.mxu0 %v990
        %v5031 = vpop.f32.mrf.mxu0
        %v5032 = vadd.f32 0.0, %v5031
        %v5033 = vpop.f32.mrf.mxu0
        %v5034 = vadd.f32 0.0, %v5033
        %5035 = vdwg.mxu0
        %v5036 = vpack.c.bf16 %v5034, %v5032
        %v5038 = vshrl.u32 %v5036, 16
        %v5040 = vshll.u32 %v5036, 16
        %v5042 = vrot.slane %v5040, 1
        %v5043 = vor.u32 %v5038, %v5042
        %v5045 = vsel %vm1099, %v5043, 0
        %5047 = vmatpush.bf16.msra.mxu0 0
        %5048 = vmatpush.bf16.msra.mxu0 0
        %5049 = vmatpush.bf16.msra.mxu0 %v1105
        %5050 = vmatpush.bf16.msra.mxu0 %v1085
        %5051 = vmatpush.bf16.msra.mxu0 %v1083
        %5052 = vmatpush.bf16.msra.mxu0 %v1081
        %5053 = vmatpush.bf16.msra.mxu0 %v1079
        %5054 = vmatpush.bf16.msra.mxu0 %v1077
        %5055 = vmatmul.bf16.gmra.mxu0 %v5045
        %v5056 = vpop.f32.mrf.mxu0
        %v5057 = vadd.f32 0.0, %v5056
        %v5058 = vpop.f32.mrf.mxu0
        %v5059 = vadd.f32 0.0, %v5058
        %5060 = vdwg.mxu0
        %5061 = vmatpush.bf16.msra.mxu0 0
        %5062 = vmatpush.bf16.msra.mxu0 0
        %5063 = vmatpush.bf16.msra.mxu0 %v1108
        %5064 = vmatpush.bf16.msra.mxu0 %v1086
        %5065 = vmatpush.bf16.msra.mxu0 %v1084
        %5066 = vmatpush.bf16.msra.mxu0 %v1082
        %5067 = vmatpush.bf16.msra.mxu0 %v1080
        %5068 = vmatpush.bf16.msra.mxu0 %v1078
        %5069 = vmatmul.bf16.gmra.mxu0 %v5045
        %v5070 = vpop.f32.mrf.mxu0
        %v5071 = vadd.f32 0.0, %v5070
        %v5072 = vpop.f32.mrf.mxu0
        %v5073 = vadd.f32 0.0, %v5072
        %5074 = vdwg.mxu0
        %v5075 = vsel %vm1099, %v5036, 0
        %5077 = vmatpush.bf16.msra.mxu0 0
        %5078 = vmatpush.bf16.msra.mxu0 0
        %5079 = vmatpush.bf16.msra.mxu0 %v1196
        %5080 = vmatpush.bf16.msra.mxu0 %v1179
        %5081 = vmatpush.bf16.msra.mxu0 %v1177
        %5082 = vmatpush.bf16.msra.mxu0 %v1175
        %5083 = vmatpush.bf16.msra.mxu0 %v1173
        %5084 = vmatpush.bf16.msra.mxu0 %v1171
        %5085 = vmatmul.bf16.gmra.mxu0 %v5075
        %v5086 = vpop.f32.mrf.mxu0
        %v5087 = vadd.f32 %v5057, %v5086
        %v5088 = vpop.f32.mrf.mxu0
        %v5089 = vadd.f32 %v5059, %v5088
        %5090 = vdwg.mxu0
        %5091 = vmatpush.bf16.msra.mxu0 0
        %5092 = vmatpush.bf16.msra.mxu0 0
        %5093 = vmatpush.bf16.msra.mxu0 %v1199
        %5094 = vmatpush.bf16.msra.mxu0 %v1180
        %5095 = vmatpush.bf16.msra.mxu0 %v1178
        %5096 = vmatpush.bf16.msra.mxu0 %v1176
        %5097 = vmatpush.bf16.msra.mxu0 %v1174
        %5098 = vmatpush.bf16.msra.mxu0 %v1172
        %5099 = vmatmul.bf16.gmra.mxu0 %v5075
        %v5100 = vpop.f32.mrf.mxu0
        %v5101 = vadd.f32 %v5071, %v5100
        %v5102 = vpop.f32.mrf.mxu0
        %v5103 = vadd.f32 %v5073, %v5102
        %5104 = vdwg.mxu0
        %v5106 = vrot.slane %v5036, 1
        %v5108 = vsel %vm1099, %v5106, 0
        %5110 = vmatpush.bf16.msra.mxu0 0
        %5111 = vmatpush.bf16.msra.mxu0 0
        %5112 = vmatpush.bf16.msra.mxu0 %v1302
        %5113 = vmatpush.bf16.msra.mxu0 %v1284
        %5114 = vmatpush.bf16.msra.mxu0 %v1282
        %5115 = vmatpush.bf16.msra.mxu0 %v1280
        %5116 = vmatpush.bf16.msra.mxu0 %v1278
        %5117 = vmatpush.bf16.msra.mxu0 %v1276
        %5118 = vmatmul.bf16.gmra.mxu0 %v5108
        %v5119 = vpop.f32.mrf.mxu0
        %v5120 = vadd.f32 0.0, %v5119
        %v5121 = vpop.f32.mrf.mxu0
        %v5122 = vadd.f32 0.0, %v5121
        %5123 = vdwg.mxu0
        %5124 = vmatpush.bf16.msra.mxu0 0
        %5125 = vmatpush.bf16.msra.mxu0 0
        %5126 = vmatpush.bf16.msra.mxu0 %v1305
        %5127 = vmatpush.bf16.msra.mxu0 %v1285
        %5128 = vmatpush.bf16.msra.mxu0 %v1283
        %5129 = vmatpush.bf16.msra.mxu0 %v1281
        %5130 = vmatpush.bf16.msra.mxu0 %v1279
        %5131 = vmatpush.bf16.msra.mxu0 %v1277
        %5132 = vmatmul.bf16.gmra.mxu0 %v5108
        %v5133 = vpop.f32.mrf.mxu0
        %v5134 = vadd.f32 0.0, %v5133
        %v5135 = vpop.f32.mrf.mxu0
        %v5136 = vadd.f32 0.0, %v5135
        %5137 = vdwg.mxu0
        %v5138 = vadd.f32 %v5087, %v5120
        %v5139 = vadd.f32 %v5101, %v5134
        %v5140 = vadd.f32 %v5089, %v5122
        %v5141 = vadd.f32 %v5103, %v5136
        %v5142 = vrot.slane %v5038, 1
        %v5143 = vrot.slane %v5040, 2
        %v5144 = vor.u32 %v5142, %v5143
        %v5146 = vsel %vm1099, %v5144, 0
        %5148 = vmatpush.bf16.msra.mxu0 0
        %5149 = vmatpush.bf16.msra.mxu0 0
        %5150 = vmatpush.bf16.msra.mxu0 %v1413
        %5151 = vmatpush.bf16.msra.mxu0 %v1395
        %5152 = vmatpush.bf16.msra.mxu0 %v1393
        %5153 = vmatpush.bf16.msra.mxu0 %v1391
        %5154 = vmatpush.bf16.msra.mxu0 %v1389
        %5155 = vmatpush.bf16.msra.mxu0 %v1387
        %5156 = vmatmul.bf16.gmra.mxu0 %v5146
        %v5157 = vpop.f32.mrf.mxu0
        %v5158 = vadd.f32 0.0, %v5157
        %v5159 = vpop.f32.mrf.mxu0
        %v5160 = vadd.f32 0.0, %v5159
        %5161 = vdwg.mxu0
        %5162 = vmatpush.bf16.msra.mxu0 0
        %5163 = vmatpush.bf16.msra.mxu0 0
        %5164 = vmatpush.bf16.msra.mxu0 %v1416
        %5165 = vmatpush.bf16.msra.mxu0 %v1396
        %5166 = vmatpush.bf16.msra.mxu0 %v1394
        %5167 = vmatpush.bf16.msra.mxu0 %v1392
        %5168 = vmatpush.bf16.msra.mxu0 %v1390
        %5169 = vmatpush.bf16.msra.mxu0 %v1388
        %5170 = vmatmul.bf16.gmra.mxu0 %v5146
        %v5171 = vpop.f32.mrf.mxu0
        %v5172 = vadd.f32 0.0, %v5171
        %v5173 = vpop.f32.mrf.mxu0
        %v5174 = vadd.f32 0.0, %v5173
        %5175 = vdwg.mxu0
        %v5176 = vadd.f32 %v5138, %v5158
        %v5177 = vadd.f32 %v5139, %v5172
        %v5178 = vadd.f32 %v5140, %v5160
        %v5179 = vadd.f32 %v5141, %v5174
        %v5180 = vrot.slane %v5036, 2
        %v5182 = vsel %vm1099, %v5180, 0
        %5184 = vmatpush.bf16.msra.mxu0 0
        %5185 = vmatpush.bf16.msra.mxu0 0
        %5186 = vmatpush.bf16.msra.mxu0 %v1522
        %5187 = vmatpush.bf16.msra.mxu0 %v1504
        %5188 = vmatpush.bf16.msra.mxu0 %v1502
        %5189 = vmatpush.bf16.msra.mxu0 %v1500
        %5190 = vmatpush.bf16.msra.mxu0 %v1498
        %5191 = vmatpush.bf16.msra.mxu0 %v1496
        %5192 = vmatmul.bf16.gmra.mxu0 %v5182
        %v5193 = vpop.f32.mrf.mxu0
        %v5194 = vadd.f32 0.0, %v5193
        %v5195 = vpop.f32.mrf.mxu0
        %v5196 = vadd.f32 0.0, %v5195
        %5197 = vdwg.mxu0
        %5198 = vmatpush.bf16.msra.mxu0 0
        %5199 = vmatpush.bf16.msra.mxu0 0
        %5200 = vmatpush.bf16.msra.mxu0 %v1525
        %5201 = vmatpush.bf16.msra.mxu0 %v1505
        %5202 = vmatpush.bf16.msra.mxu0 %v1503
        %5203 = vmatpush.bf16.msra.mxu0 %v1501
        %5204 = vmatpush.bf16.msra.mxu0 %v1499
        %5205 = vmatpush.bf16.msra.mxu0 %v1497
        %5206 = vmatmul.bf16.gmra.mxu0 %v5182
        %v5207 = vpop.f32.mrf.mxu0
        %v5208 = vadd.f32 0.0, %v5207
        %v5209 = vpop.f32.mrf.mxu0
        %v5210 = vadd.f32 0.0, %v5209
        %5211 = vdwg.mxu0
        %v5212 = vadd.f32 %v5176, %v5194
        %v5213 = vadd.f32 %v5177, %v5208
        %v5214 = vadd.f32 %v5178, %v5196
        %v5215 = vadd.f32 %v5179, %v5210
        %v5216 = vadd.f32 %v5212, %v1560
        %v5217 = vadd.f32 %v5213, %v1561
        %v5218 = vadd.f32 %v5214, %v1560
        %v5219 = vadd.f32 %v5215, %v1561
        %vm5220 = vcmp.ge.f32.partialorder %v5216, 0.0
        %vm5221 = vcmp.ge.f32.partialorder %v5217, 0.0
        %vm5222 = vcmp.ge.f32.partialorder %v5218, 0.0
        %vm5223 = vcmp.ge.f32.partialorder %v5219, 0.0
        %v5224 = vmul.f32 %v5216, 0.01
        %v5225 = vmul.f32 %v5217, 0.01
        %v5226 = vmul.f32 %v5218, 0.01
        %v5227 = vmul.f32 %v5219, 0.01
        %v5228 = vsel %vm5220, %v5216, %v5224
        %v5229 = vsel %vm5221, %v5217, %v5225
        %v5230 = vsel %vm5222, %v5218, %v5226
        %v5231 = vsel %vm5223, %v5219, %v5227
        %5236 = vrot.lane.b32.xlu0 %v5228, 112
        %v5237 = vpop.permute.xlu0 %5236
        %5238 = vrot.lane.b32.xlu0 %v5229, 112
        %v5239 = vpop.permute.xlu0 %5238
        %5240 = vrot.lane.b32.xlu0 %v5230, 112
        %v5241 = vpop.permute.xlu0 %5240
        %5242 = vrot.lane.b32.xlu0 %v5231, 112
        %v5243 = vpop.permute.xlu0 %5242
        %v5244 = vsel %vm1592, %v5237, %v5239
        %v5245 = vsel %vm1592, %v5241, %v5243
        %v5250 = vmax.f32 %v5228, %v5244
        %v5251 = vmax.f32 %v5229, %v5239
        %v5252 = vmax.f32 %v5230, %v5245
        %v5253 = vmax.f32 %v5231, %v5243
        %v5254 = vpack.c.bf16 %v5252, %v5250
        %v5255 = vpack.c.bf16 %v5253, %v5251
        %v5257 = vsel %vm1677, %v5255, 0
        %5259 = vmatpush.bf16.msra.mxu0 %v1666
        %5260 = vmatpush.bf16.msra.mxu0 %v1665
        %5261 = vmatpush.bf16.msra.mxu0 %v1664
        %5262 = vmatpush.bf16.msra.mxu0 %v1663
        %5263 = vmatpush.bf16.msra.mxu0 %v1662
        %5264 = vmatpush.bf16.msra.mxu0 %v1661
        %5265 = vmatpush.bf16.msra.mxu0 %v1660
        %5266 = vmatpush.bf16.msra.mxu0 %v1659
        %5267 = vmatmul.bf16.gmra.mxu0 %v5254
        %v5268 = vpop.f32.mrf.mxu0
        %v5269 = vadd.f32 0.0, %v5268
        %v5270 = vpop.f32.mrf.mxu0
        %v5271 = vadd.f32 0.0, %v5270
        %5272 = vdwg.mxu0
        %5273 = vmatpush.bf16.msra.mxu0 0
        %5274 = vmatpush.bf16.msra.mxu0 0
        %5275 = vmatpush.bf16.msra.mxu0 0
        %5276 = vmatpush.bf16.msra.mxu0 0
        %5277 = vmatpush.bf16.msra.mxu0 0
        %5278 = vmatpush.bf16.msra.mxu0 0
        %5279 = vmatpush.bf16.msra.mxu0 0
        %5280 = vmatpush.bf16.msra.mxu0 %v1667
        %5281 = vmatmul.bf16.gmra.mxu0 %v5257
        %v5282 = vpop.f32.mrf.mxu0
        %v5283 = vadd.f32 %v5269, %v5282
        %v5284 = vpop.f32.mrf.mxu0
        %v5285 = vadd.f32 %v5271, %v5284
        %5286 = vdwg.mxu0
        %v5289 = vrot.slane %v5283, 1
        %v5290 = vrot.slane %v5285, 1
        %v5291 = vsel %vm963, %v5289, %v5290
        %v5294 = vmax.f32 %v5283, %v5291
        %v5295 = vmax.f32 %v5285, %v5290
        %v5296 = vpack.c.bf16 %v5295, %v5294
        %v5298 = vand.u32 %v5296, %v1726
        %5300 = vmatpush.bf16.msra.mxu0 0
        %5301 = vmatpush.bf16.msra.mxu0 0
        %5302 = vmatpush.bf16.msra.mxu0 0
        %5303 = vmatpush.bf16.msra.mxu0 0
        %5304 = vmatpush.bf16.msra.mxu0 0
        %5305 = vmatpush.bf16.msra.mxu0 0
        %5306 = vmatpush.bf16.msra.mxu0 0
        %5307 = vmatpush.bf16.msra.mxu0 %v5298
        %5308 = vmatmul.bf16.gmra.mxu0 %v1722
        %v5309 = vpop.f32.mrf.mxu0
        %v5310 = vadd.f32 0.0, %v5309
        %v5311 = vpop.f32.mrf.mxu0
        %5312 = vdwg.mxu0
        %s5313 = scalar_lea.vmem %s334, 192
        %v5314 = vld [vmem:[%s5313] sm:$0xff]
        %v5315 = vld [vmem:[%s5313 + $0x8] sm:$0xff]
        %v5316 = vld [vmem:[%s5313 + $0x10] sm:$0xff]
        %v5317 = vld [vmem:[%s5313 + $0x18] sm:$0xf]
        %v5318 = vpack.c.bf16 %v5315, %v5314
        %v5319 = vpack.c.bf16 %v5317, %v5316
        %v5320 = vld [vmem:[%s5313 + $0x1] sm:$0xff]
        %v5321 = vld [vmem:[%s5313 + $0x9] sm:$0xff]
        %v5322 = vld [vmem:[%s5313 + $0x11] sm:$0xff]
        %v5323 = vld [vmem:[%s5313 + $0x19] sm:$0xf]
        %v5324 = vpack.c.bf16 %v5321, %v5320
        %v5325 = vpack.c.bf16 %v5323, %v5322
        %v5327 = vsel %vm382, %v5324, 0
        %v5330 = vsel %vm382, %v5325, 0
        %5332 = vmatpush.bf16.msra.mxu0 0
        %5333 = vmatpush.bf16.msra.mxu0 0
        %5334 = vmatpush.bf16.msra.mxu0 0
        %5335 = vmatpush.bf16.msra.mxu0 0
        %5336 = vmatpush.bf16.msra.mxu0 0
        %5337 = vmatpush.bf16.msra.mxu0 0
        %5338 = vmatpush.bf16.msra.mxu0 %v376
        %5339 = vmatpush.bf16.msra.mxu0 %v374
        %5340 = vmatmul.bf16.gmra.mxu0 %v5327
        %v5341 = vpop.f32.mrf.mxu0
        %v5342 = vadd.f32 0.0, %v5341
        %v5343 = vpop.f32.mrf.mxu0
        %v5344 = vadd.f32 0.0, %v5343
        %5345 = vmatmul.bf16.gmra.mxu0 %v5330
        %v5346 = vpop.f32.mrf.mxu0
        %v5347 = vadd.f32 0.0, %v5346
        %v5348 = vpop.f32.mrf.mxu0
        %v5349 = vadd.f32 0.0, %v5348
        %5350 = vdwg.mxu0
        %5351 = vmatpush.bf16.msra.mxu0 0
        %5352 = vmatpush.bf16.msra.mxu0 0
        %5353 = vmatpush.bf16.msra.mxu0 0
        %5354 = vmatpush.bf16.msra.mxu0 0
        %5355 = vmatpush.bf16.msra.mxu0 0
        %5356 = vmatpush.bf16.msra.mxu0 0
        %5357 = vmatpush.bf16.msra.mxu0 %v377
        %5358 = vmatpush.bf16.msra.mxu0 %v375
        %5359 = vmatmul.bf16.gmra.mxu0 %v5327
        %v5360 = vpop.f32.mrf.mxu0
        %v5361 = vadd.f32 0.0, %v5360
        %v5362 = vpop.f32.mrf.mxu0
        %v5363 = vadd.f32 0.0, %v5362
        %5364 = vmatmul.bf16.gmra.mxu0 %v5330
        %v5365 = vpop.f32.mrf.mxu0
        %v5366 = vadd.f32 0.0, %v5365
        %v5367 = vpop.f32.mrf.mxu0
        %v5368 = vadd.f32 0.0, %v5367
        %5369 = vdwg.mxu0
        %v5371 = vsel %vm382, %v5318, 0
        %v5374 = vsel %vm382, %v5319, 0
        %5376 = vmatpush.bf16.msra.mxu0 0
        %5377 = vmatpush.bf16.msra.mxu0 0
        %5378 = vmatpush.bf16.msra.mxu0 0
        %5379 = vmatpush.bf16.msra.mxu0 0
        %5380 = vmatpush.bf16.msra.mxu0 0
        %5381 = vmatpush.bf16.msra.mxu0 0
        %5382 = vmatpush.bf16.msra.mxu0 %v441
        %5383 = vmatpush.bf16.msra.mxu0 %v439
        %5384 = vmatmul.bf16.gmra.mxu0 %v5371
        %v5385 = vpop.f32.mrf.mxu0
        %v5386 = vadd.f32 %v5342, %v5385
        %v5387 = vpop.f32.mrf.mxu0
        %v5388 = vadd.f32 %v5344, %v5387
        %5389 = vmatmul.bf16.gmra.mxu0 %v5374
        %v5390 = vpop.f32.mrf.mxu0
        %v5391 = vadd.f32 %v5347, %v5390
        %v5392 = vpop.f32.mrf.mxu0
        %v5393 = vadd.f32 %v5349, %v5392
        %5394 = vdwg.mxu0
        %5395 = vmatpush.bf16.msra.mxu0 0
        %5396 = vmatpush.bf16.msra.mxu0 0
        %5397 = vmatpush.bf16.msra.mxu0 0
        %5398 = vmatpush.bf16.msra.mxu0 0
        %5399 = vmatpush.bf16.msra.mxu0 0
        %5400 = vmatpush.bf16.msra.mxu0 0
        %5401 = vmatpush.bf16.msra.mxu0 %v442
        %5402 = vmatpush.bf16.msra.mxu0 %v440
        %5403 = vmatmul.bf16.gmra.mxu0 %v5371
        %v5404 = vpop.f32.mrf.mxu0
        %v5405 = vadd.f32 %v5361, %v5404
        %v5406 = vpop.f32.mrf.mxu0
        %v5407 = vadd.f32 %v5363, %v5406
        %5408 = vmatmul.bf16.gmra.mxu0 %v5374
        %v5409 = vpop.f32.mrf.mxu0
        %v5410 = vadd.f32 %v5366, %v5409
        %v5411 = vpop.f32.mrf.mxu0
        %v5412 = vadd.f32 %v5368, %v5411
        %5413 = vdwg.mxu0
        %v5414 = vld [vmem:[%s5313 + $0x2] sm:$0xff]
        %v5415 = vld [vmem:[%s5313 + $0xa] sm:$0xff]
        %v5416 = vld [vmem:[%s5313 + $0x12] sm:$0xff]
        %v5417 = vld [vmem:[%s5313 + $0x1a] sm:$0xf]
        %v5418 = vpack.c.bf16 %v5415, %v5414
        %v5419 = vpack.c.bf16 %v5417, %v5416
        %v5421 = vsel %vm382, %v5418, 0
        %v5424 = vsel %vm382, %v5419, 0
        %5426 = vmatpush.bf16.msra.mxu0 0
        %5427 = vmatpush.bf16.msra.mxu0 0
        %5428 = vmatpush.bf16.msra.mxu0 0
        %5429 = vmatpush.bf16.msra.mxu0 0
        %5430 = vmatpush.bf16.msra.mxu0 0
        %5431 = vmatpush.bf16.msra.mxu0 0
        %5432 = vmatpush.bf16.msra.mxu0 %v516
        %5433 = vmatpush.bf16.msra.mxu0 %v514
        %5434 = vmatmul.bf16.gmra.mxu0 %v5421
        %v5435 = vpop.f32.mrf.mxu0
        %v5436 = vadd.f32 0.0, %v5435
        %v5437 = vpop.f32.mrf.mxu0
        %v5438 = vadd.f32 0.0, %v5437
        %5439 = vmatmul.bf16.gmra.mxu0 %v5424
        %v5440 = vpop.f32.mrf.mxu0
        %v5441 = vadd.f32 0.0, %v5440
        %v5442 = vpop.f32.mrf.mxu0
        %v5443 = vadd.f32 0.0, %v5442
        %5444 = vdwg.mxu0
        %5445 = vmatpush.bf16.msra.mxu0 0
        %5446 = vmatpush.bf16.msra.mxu0 0
        %5447 = vmatpush.bf16.msra.mxu0 0
        %5448 = vmatpush.bf16.msra.mxu0 0
        %5449 = vmatpush.bf16.msra.mxu0 0
        %5450 = vmatpush.bf16.msra.mxu0 0
        %5451 = vmatpush.bf16.msra.mxu0 %v517
        %5452 = vmatpush.bf16.msra.mxu0 %v515
        %5453 = vmatmul.bf16.gmra.mxu0 %v5421
        %v5454 = vpop.f32.mrf.mxu0
        %v5455 = vadd.f32 0.0, %v5454
        %v5456 = vpop.f32.mrf.mxu0
        %v5457 = vadd.f32 0.0, %v5456
        %5458 = vmatmul.bf16.gmra.mxu0 %v5424
        %v5459 = vpop.f32.mrf.mxu0
        %v5460 = vadd.f32 0.0, %v5459
        %v5461 = vpop.f32.mrf.mxu0
        %v5462 = vadd.f32 0.0, %v5461
        %5463 = vdwg.mxu0
        %v5464 = vadd.f32 %v5386, %v5436
        %v5465 = vadd.f32 %v5405, %v5455
        %v5466 = vadd.f32 %v5388, %v5438
        %v5467 = vadd.f32 %v5407, %v5457
        %v5468 = vadd.f32 %v5391, %v5441
        %v5469 = vadd.f32 %v5410, %v5460
        %v5470 = vadd.f32 %v5393, %v5443
        %v5471 = vadd.f32 %v5412, %v5462
        %v5472 = vld [vmem:[%s5313 + $0x3] sm:$0xff]
        %v5473 = vld [vmem:[%s5313 + $0xb] sm:$0xff]
        %v5474 = vld [vmem:[%s5313 + $0x13] sm:$0xff]
        %v5475 = vld [vmem:[%s5313 + $0x1b] sm:$0xf]
        %v5476 = vpack.c.bf16 %v5473, %v5472
        %v5477 = vpack.c.bf16 %v5475, %v5474
        %v5479 = vsel %vm382, %v5476, 0
        %v5482 = vsel %vm382, %v5477, 0
        %5484 = vmatpush.bf16.msra.mxu0 0
        %5485 = vmatpush.bf16.msra.mxu0 0
        %5486 = vmatpush.bf16.msra.mxu0 0
        %5487 = vmatpush.bf16.msra.mxu0 0
        %5488 = vmatpush.bf16.msra.mxu0 0
        %5489 = vmatpush.bf16.msra.mxu0 0
        %5490 = vmatpush.bf16.msra.mxu0 %v599
        %5491 = vmatpush.bf16.msra.mxu0 %v597
        %5492 = vmatmul.bf16.gmra.mxu0 %v5479
        %v5493 = vpop.f32.mrf.mxu0
        %v5494 = vadd.f32 0.0, %v5493
        %v5495 = vpop.f32.mrf.mxu0
        %v5496 = vadd.f32 0.0, %v5495
        %5497 = vmatmul.bf16.gmra.mxu0 %v5482
        %v5498 = vpop.f32.mrf.mxu0
        %v5499 = vadd.f32 0.0, %v5498
        %v5500 = vpop.f32.mrf.mxu0
        %v5501 = vadd.f32 0.0, %v5500
        %5502 = vdwg.mxu0
        %5503 = vmatpush.bf16.msra.mxu0 0
        %5504 = vmatpush.bf16.msra.mxu0 0
        %5505 = vmatpush.bf16.msra.mxu0 0
        %5506 = vmatpush.bf16.msra.mxu0 0
        %5507 = vmatpush.bf16.msra.mxu0 0
        %5508 = vmatpush.bf16.msra.mxu0 0
        %5509 = vmatpush.bf16.msra.mxu0 %v600
        %5510 = vmatpush.bf16.msra.mxu0 %v598
        %5511 = vmatmul.bf16.gmra.mxu0 %v5479
        %v5512 = vpop.f32.mrf.mxu0
        %v5513 = vadd.f32 0.0, %v5512
        %v5514 = vpop.f32.mrf.mxu0
        %v5515 = vadd.f32 0.0, %v5514
        %5516 = vmatmul.bf16.gmra.mxu0 %v5482
        %v5517 = vpop.f32.mrf.mxu0
        %v5518 = vadd.f32 0.0, %v5517
        %v5519 = vpop.f32.mrf.mxu0
        %v5520 = vadd.f32 0.0, %v5519
        %5521 = vdwg.mxu0
        %v5522 = vadd.f32 %v5464, %v5494
        %v5523 = vadd.f32 %v5465, %v5513
        %v5524 = vadd.f32 %v5466, %v5496
        %v5525 = vadd.f32 %v5467, %v5515
        %v5526 = vadd.f32 %v5468, %v5499
        %v5527 = vadd.f32 %v5469, %v5518
        %v5528 = vadd.f32 %v5470, %v5501
        %v5529 = vadd.f32 %v5471, %v5520
        %v5530 = vld [vmem:[%s5313 + $0x4] sm:$0xff]
        %v5531 = vld [vmem:[%s5313 + $0xc] sm:$0xff]
        %v5532 = vld [vmem:[%s5313 + $0x14] sm:$0xff]
        %v5533 = vld [vmem:[%s5313 + $0x1c] sm:$0xf]
        %v5534 = vpack.c.bf16 %v5531, %v5530
        %v5535 = vpack.c.bf16 %v5533, %v5532
        %v5537 = vsel %vm382, %v5534, 0
        %v5540 = vsel %vm382, %v5535, 0
        %5542 = vmatpush.bf16.msra.mxu0 0
        %5543 = vmatpush.bf16.msra.mxu0 0
        %5544 = vmatpush.bf16.msra.mxu0 0
        %5545 = vmatpush.bf16.msra.mxu0 0
        %5546 = vmatpush.bf16.msra.mxu0 0
        %5547 = vmatpush.bf16.msra.mxu0 0
        %5548 = vmatpush.bf16.msra.mxu0 %v682
        %5549 = vmatpush.bf16.msra.mxu0 %v680
        %5550 = vmatmul.bf16.gmra.mxu0 %v5537
        %v5551 = vpop.f32.mrf.mxu0
        %v5552 = vadd.f32 0.0, %v5551
        %v5553 = vpop.f32.mrf.mxu0
        %v5554 = vadd.f32 0.0, %v5553
        %5555 = vmatmul.bf16.gmra.mxu0 %v5540
        %v5556 = vpop.f32.mrf.mxu0
        %v5557 = vadd.f32 0.0, %v5556
        %v5558 = vpop.f32.mrf.mxu0
        %v5559 = vadd.f32 0.0, %v5558
        %5560 = vdwg.mxu0
        %5561 = vmatpush.bf16.msra.mxu0 0
        %5562 = vmatpush.bf16.msra.mxu0 0
        %5563 = vmatpush.bf16.msra.mxu0 0
        %5564 = vmatpush.bf16.msra.mxu0 0
        %5565 = vmatpush.bf16.msra.mxu0 0
        %5566 = vmatpush.bf16.msra.mxu0 0
        %5567 = vmatpush.bf16.msra.mxu0 %v683
        %5568 = vmatpush.bf16.msra.mxu0 %v681
        %5569 = vmatmul.bf16.gmra.mxu0 %v5537
        %v5570 = vpop.f32.mrf.mxu0
        %v5571 = vadd.f32 0.0, %v5570
        %v5572 = vpop.f32.mrf.mxu0
        %v5573 = vadd.f32 0.0, %v5572
        %5574 = vmatmul.bf16.gmra.mxu0 %v5540
        %v5575 = vpop.f32.mrf.mxu0
        %v5576 = vadd.f32 0.0, %v5575
        %v5577 = vpop.f32.mrf.mxu0
        %v5578 = vadd.f32 0.0, %v5577
        %5579 = vdwg.mxu0
        %v5580 = vadd.f32 %v5522, %v5552
        %v5581 = vadd.f32 %v5523, %v5571
        %v5582 = vadd.f32 %v5524, %v5554
        %v5583 = vadd.f32 %v5525, %v5573
        %v5584 = vadd.f32 %v5526, %v5557
        %v5585 = vadd.f32 %v5527, %v5576
        %v5586 = vadd.f32 %v5528, %v5559
        %v5587 = vadd.f32 %v5529, %v5578
        %v5588 = vadd.f32 %v5580, %v741
        %v5589 = vadd.f32 %v5581, %v742
        %v5590 = vadd.f32 %v5582, %v741
        %v5591 = vadd.f32 %v5583, %v742
        %v5592 = vadd.f32 %v5584, %v741
        %v5593 = vadd.f32 %v5585, %v742
        %v5594 = vadd.f32 %v5586, %v741
        %v5595 = vadd.f32 %v5587, %v742
        %vm5596 = vcmp.ge.f32.partialorder %v5588, 0.0
        %vm5597 = vcmp.ge.f32.partialorder %v5589, 0.0
        %vm5598 = vcmp.ge.f32.partialorder %v5590, 0.0
        %vm5599 = vcmp.ge.f32.partialorder %v5591, 0.0
        %vm5600 = vcmp.ge.f32.partialorder %v5592, 0.0
        %vm5601 = vcmp.ge.f32.partialorder %v5593, 0.0
        %vm5602 = vcmp.ge.f32.partialorder %v5594, 0.0
        %vm5603 = vcmp.ge.f32.partialorder %v5595, 0.0
        %v5604 = vmul.f32 %v5588, 0.01
        %v5605 = vmul.f32 %v5589, 0.01
        %v5606 = vmul.f32 %v5590, 0.01
        %v5607 = vmul.f32 %v5591, 0.01
        %v5608 = vmul.f32 %v5592, 0.01
        %v5609 = vmul.f32 %v5593, 0.01
        %v5610 = vmul.f32 %v5594, 0.01
        %v5611 = vmul.f32 %v5595, 0.01
        %v5612 = vsel %vm5596, %v5588, %v5604
        %v5613 = vsel %vm5597, %v5589, %v5605
        %v5614 = vsel %vm5598, %v5590, %v5606
        %v5615 = vsel %vm5599, %v5591, %v5607
        %v5616 = vsel %vm5600, %v5592, %v5608
        %v5617 = vsel %vm5601, %v5593, %v5609
        %v5618 = vsel %vm5602, %v5594, %v5610
        %v5619 = vsel %vm5603, %v5595, %v5611
        %5628 = vrot.lane.b32.xlu0 %v5612, 122
        %v5629 = vpop.permute.xlu0 %5628
        %5630 = vrot.lane.b32.xlu0 %v5613, 122
        %v5631 = vpop.permute.xlu0 %5630
        %5632 = vrot.lane.b32.xlu0 %v5614, 122
        %v5633 = vpop.permute.xlu0 %5632
        %5634 = vrot.lane.b32.xlu0 %v5615, 122
        %v5635 = vpop.permute.xlu0 %5634
        %5636 = vrot.lane.b32.xlu0 %v5616, 122
        %v5637 = vpop.permute.xlu0 %5636
        %5638 = vrot.lane.b32.xlu0 %v5617, 122
        %v5639 = vpop.permute.xlu0 %5638
        %5640 = vrot.lane.b32.xlu0 %v5618, 122
        %v5641 = vpop.permute.xlu0 %5640
        %5642 = vrot.lane.b32.xlu0 %v5619, 122
        %v5643 = vpop.permute.xlu0 %5642
        %v5644 = vsel %vm801, %v5629, %v5631
        %v5645 = vsel %vm801, %v5633, %v5635
        %v5646 = vsel %vm801, %v5637, %v5639
        %v5647 = vsel %vm801, %v5641, %v5643
        %v5656 = vmax.f32 %v5612, %v5644
        %v5657 = vmax.f32 %v5613, %v5631
        %v5658 = vmax.f32 %v5614, %v5645
        %v5659 = vmax.f32 %v5615, %v5635
        %v5660 = vmax.f32 %v5616, %v5646
        %v5661 = vmax.f32 %v5617, %v5639
        %v5662 = vmax.f32 %v5618, %v5647
        %v5663 = vmax.f32 %v5619, %v5643
        %v5664 = vpack.c.bf16 %v5658, %v5656
        %v5665 = vpack.c.bf16 %v5659, %v5657
        %v5666 = vpack.c.bf16 %v5662, %v5660
        %v5667 = vpack.c.bf16 %v5663, %v5661
        %v5669 = vsel %vm910, %v5665, 0
        %v5672 = vsel %vm910, %v5667, 0
        %5674 = vmatpush.bf16.msra.mxu0 %v896
        %5675 = vmatpush.bf16.msra.mxu0 %v895
        %5676 = vmatpush.bf16.msra.mxu0 %v894
        %5677 = vmatpush.bf16.msra.mxu0 %v893
        %5678 = vmatpush.bf16.msra.mxu0 %v892
        %5679 = vmatpush.bf16.msra.mxu0 %v891
        %5680 = vmatpush.bf16.msra.mxu0 %v890
        %5681 = vmatpush.bf16.msra.mxu0 %v889
        %5682 = vmatmul.bf16.gmra.mxu0 %v5664
        %v5683 = vpop.f32.mrf.mxu0
        %v5684 = vadd.f32 0.0, %v5683
        %v5685 = vpop.f32.mrf.mxu0
        %v5686 = vadd.f32 0.0, %v5685
        %5687 = vmatmul.bf16.gmra.mxu0 %v5666
        %v5688 = vpop.f32.mrf.mxu0
        %v5689 = vadd.f32 0.0, %v5688
        %v5690 = vpop.f32.mrf.mxu0
        %v5691 = vadd.f32 0.0, %v5690
        %5692 = vdwg.mxu0
        %5693 = vmatpush.bf16.msra.mxu0 0
        %5694 = vmatpush.bf16.msra.mxu0 0
        %5695 = vmatpush.bf16.msra.mxu0 0
        %5696 = vmatpush.bf16.msra.mxu0 0
        %5697 = vmatpush.bf16.msra.mxu0 0
        %5698 = vmatpush.bf16.msra.mxu0 %v919
        %5699 = vmatpush.bf16.msra.mxu0 %v898
        %5700 = vmatpush.bf16.msra.mxu0 %v897
        %5701 = vmatmul.bf16.gmra.mxu0 %v5669
        %v5702 = vpop.f32.mrf.mxu0
        %v5703 = vadd.f32 %v5684, %v5702
        %v5704 = vpop.f32.mrf.mxu0
        %v5705 = vadd.f32 %v5686, %v5704
        %5706 = vmatmul.bf16.gmra.mxu0 %v5672
        %v5707 = vpop.f32.mrf.mxu0
        %v5708 = vadd.f32 %v5689, %v5707
        %v5709 = vpop.f32.mrf.mxu0
        %v5710 = vadd.f32 %v5691, %v5709
        %5711 = vdwg.mxu0
        %v5716 = vrot.slane %v5703, 1
        %v5717 = vrot.slane %v5705, 1
        %v5718 = vsel %vm963, %v5716, %v5717
        %v5719 = vrot.slane %v5708, 1
        %v5720 = vsel %vm963, %v5717, %v5719
        %v5721 = vrot.slane %v5710, 1
        %v5722 = vsel %vm963, %v5719, %v5721
        %v5727 = vmax.f32 %v5703, %v5718
        %v5728 = vmax.f32 %v5705, %v5720
        %v5729 = vmax.f32 %v5708, %v5722
        %v5730 = vmax.f32 %v5710, %v5721
        %v5731 = vpack.c.bf16 %v5728, %v5727
        %v5732 = vpack.c.bf16 %v5730, %v5729
        %v5734 = vand.u32 %v5732, %v995
        %5736 = vmatpush.bf16.msra.mxu0 0
        %5737 = vmatpush.bf16.msra.mxu0 0
        %5738 = vmatpush.bf16.msra.mxu0 0
        %5739 = vmatpush.bf16.msra.mxu0 0
        %5740 = vmatpush.bf16.msra.mxu0 0
        %5741 = vmatpush.bf16.msra.mxu0 0
        %5742 = vmatpush.bf16.msra.mxu0 %v5734
        %5743 = vmatpush.bf16.msra.mxu0 %v5731
        %5744 = vmatmul.bf16.gmra.mxu0 %v990
        %v5745 = vpop.f32.mrf.mxu0
        %v5746 = vadd.f32 0.0, %v5745
        %v5747 = vpop.f32.mrf.mxu0
        %v5748 = vadd.f32 0.0, %v5747
        %5749 = vdwg.mxu0
        %v5750 = vpack.c.bf16 %v5748, %v5746
        %v5752 = vshrl.u32 %v5750, 16
        %v5754 = vshll.u32 %v5750, 16
        %v5756 = vrot.slane %v5754, 1
        %v5757 = vor.u32 %v5752, %v5756
        %v5759 = vsel %vm1099, %v5757, 0
        %5761 = vmatpush.bf16.msra.mxu0 0
        %5762 = vmatpush.bf16.msra.mxu0 0
        %5763 = vmatpush.bf16.msra.mxu0 %v1105
        %5764 = vmatpush.bf16.msra.mxu0 %v1085
        %5765 = vmatpush.bf16.msra.mxu0 %v1083
        %5766 = vmatpush.bf16.msra.mxu0 %v1081
        %5767 = vmatpush.bf16.msra.mxu0 %v1079
        %5768 = vmatpush.bf16.msra.mxu0 %v1077
        %5769 = vmatmul.bf16.gmra.mxu0 %v5759
        %v5770 = vpop.f32.mrf.mxu0
        %v5771 = vadd.f32 0.0, %v5770
        %v5772 = vpop.f32.mrf.mxu0
        %v5773 = vadd.f32 0.0, %v5772
        %5774 = vdwg.mxu0
        %5775 = vmatpush.bf16.msra.mxu0 0
        %5776 = vmatpush.bf16.msra.mxu0 0
        %5777 = vmatpush.bf16.msra.mxu0 %v1108
        %5778 = vmatpush.bf16.msra.mxu0 %v1086
        %5779 = vmatpush.bf16.msra.mxu0 %v1084
        %5780 = vmatpush.bf16.msra.mxu0 %v1082
        %5781 = vmatpush.bf16.msra.mxu0 %v1080
        %5782 = vmatpush.bf16.msra.mxu0 %v1078
        %5783 = vmatmul.bf16.gmra.mxu0 %v5759
        %v5784 = vpop.f32.mrf.mxu0
        %v5785 = vadd.f32 0.0, %v5784
        %v5786 = vpop.f32.mrf.mxu0
        %v5787 = vadd.f32 0.0, %v5786
        %5788 = vdwg.mxu0
        %v5789 = vsel %vm1099, %v5750, 0
        %5791 = vmatpush.bf16.msra.mxu0 0
        %5792 = vmatpush.bf16.msra.mxu0 0
        %5793 = vmatpush.bf16.msra.mxu0 %v1196
        %5794 = vmatpush.bf16.msra.mxu0 %v1179
        %5795 = vmatpush.bf16.msra.mxu0 %v1177
        %5796 = vmatpush.bf16.msra.mxu0 %v1175
        %5797 = vmatpush.bf16.msra.mxu0 %v1173
        %5798 = vmatpush.bf16.msra.mxu0 %v1171
        %5799 = vmatmul.bf16.gmra.mxu0 %v5789
        %v5800 = vpop.f32.mrf.mxu0
        %v5801 = vadd.f32 %v5771, %v5800
        %v5802 = vpop.f32.mrf.mxu0
        %v5803 = vadd.f32 %v5773, %v5802
        %5804 = vdwg.mxu0
        %5805 = vmatpush.bf16.msra.mxu0 0
        %5806 = vmatpush.bf16.msra.mxu0 0
        %5807 = vmatpush.bf16.msra.mxu0 %v1199
        %5808 = vmatpush.bf16.msra.mxu0 %v1180
        %5809 = vmatpush.bf16.msra.mxu0 %v1178
        %5810 = vmatpush.bf16.msra.mxu0 %v1176
        %5811 = vmatpush.bf16.msra.mxu0 %v1174
        %5812 = vmatpush.bf16.msra.mxu0 %v1172
        %5813 = vmatmul.bf16.gmra.mxu0 %v5789
        %v5814 = vpop.f32.mrf.mxu0
        %v5815 = vadd.f32 %v5785, %v5814
        %v5816 = vpop.f32.mrf.mxu0
        %v5817 = vadd.f32 %v5787, %v5816
        %5818 = vdwg.mxu0
        %v5820 = vrot.slane %v5750, 1
        %v5822 = vsel %vm1099, %v5820, 0
        %5824 = vmatpush.bf16.msra.mxu0 0
        %5825 = vmatpush.bf16.msra.mxu0 0
        %5826 = vmatpush.bf16.msra.mxu0 %v1302
        %5827 = vmatpush.bf16.msra.mxu0 %v1284
        %5828 = vmatpush.bf16.msra.mxu0 %v1282
        %5829 = vmatpush.bf16.msra.mxu0 %v1280
        %5830 = vmatpush.bf16.msra.mxu0 %v1278
        %5831 = vmatpush.bf16.msra.mxu0 %v1276
        %5832 = vmatmul.bf16.gmra.mxu0 %v5822
        %v5833 = vpop.f32.mrf.mxu0
        %v5834 = vadd.f32 0.0, %v5833
        %v5835 = vpop.f32.mrf.mxu0
        %v5836 = vadd.f32 0.0, %v5835
        %5837 = vdwg.mxu0
        %5838 = vmatpush.bf16.msra.mxu0 0
        %5839 = vmatpush.bf16.msra.mxu0 0
        %5840 = vmatpush.bf16.msra.mxu0 %v1305
        %5841 = vmatpush.bf16.msra.mxu0 %v1285
        %5842 = vmatpush.bf16.msra.mxu0 %v1283
        %5843 = vmatpush.bf16.msra.mxu0 %v1281
        %5844 = vmatpush.bf16.msra.mxu0 %v1279
        %5845 = vmatpush.bf16.msra.mxu0 %v1277
        %5846 = vmatmul.bf16.gmra.mxu0 %v5822
        %v5847 = vpop.f32.mrf.mxu0
        %v5848 = vadd.f32 0.0, %v5847
        %v5849 = vpop.f32.mrf.mxu0
        %v5850 = vadd.f32 0.0, %v5849
        %5851 = vdwg.mxu0
        %v5852 = vadd.f32 %v5801, %v5834
        %v5853 = vadd.f32 %v5815, %v5848
        %v5854 = vadd.f32 %v5803, %v5836
        %v5855 = vadd.f32 %v5817, %v5850
        %v5856 = vrot.slane %v5752, 1
        %v5857 = vrot.slane %v5754, 2
        %v5858 = vor.u32 %v5856, %v5857
        %v5860 = vsel %vm1099, %v5858, 0
        %5862 = vmatpush.bf16.msra.mxu0 0
        %5863 = vmatpush.bf16.msra.mxu0 0
        %5864 = vmatpush.bf16.msra.mxu0 %v1413
        %5865 = vmatpush.bf16.msra.mxu0 %v1395
        %5866 = vmatpush.bf16.msra.mxu0 %v1393
        %5867 = vmatpush.bf16.msra.mxu0 %v1391
        %5868 = vmatpush.bf16.msra.mxu0 %v1389
        %5869 = vmatpush.bf16.msra.mxu0 %v1387
        %5870 = vmatmul.bf16.gmra.mxu0 %v5860
        %v5871 = vpop.f32.mrf.mxu0
        %v5872 = vadd.f32 0.0, %v5871
        %v5873 = vpop.f32.mrf.mxu0
        %v5874 = vadd.f32 0.0, %v5873
        %5875 = vdwg.mxu0
        %5876 = vmatpush.bf16.msra.mxu0 0
        %5877 = vmatpush.bf16.msra.mxu0 0
        %5878 = vmatpush.bf16.msra.mxu0 %v1416
        %5879 = vmatpush.bf16.msra.mxu0 %v1396
        %5880 = vmatpush.bf16.msra.mxu0 %v1394
        %5881 = vmatpush.bf16.msra.mxu0 %v1392
        %5882 = vmatpush.bf16.msra.mxu0 %v1390
        %5883 = vmatpush.bf16.msra.mxu0 %v1388
        %5884 = vmatmul.bf16.gmra.mxu0 %v5860
        %v5885 = vpop.f32.mrf.mxu0
        %v5886 = vadd.f32 0.0, %v5885
        %v5887 = vpop.f32.mrf.mxu0
        %v5888 = vadd.f32 0.0, %v5887
        %5889 = vdwg.mxu0
        %v5890 = vadd.f32 %v5852, %v5872
        %v5891 = vadd.f32 %v5853, %v5886
        %v5892 = vadd.f32 %v5854, %v5874
        %v5893 = vadd.f32 %v5855, %v5888
        %v5894 = vrot.slane %v5750, 2
        %v5896 = vsel %vm1099, %v5894, 0
        %5898 = vmatpush.bf16.msra.mxu0 0
        %5899 = vmatpush.bf16.msra.mxu0 0
        %5900 = vmatpush.bf16.msra.mxu0 %v1522
        %5901 = vmatpush.bf16.msra.mxu0 %v1504
        %5902 = vmatpush.bf16.msra.mxu0 %v1502
        %5903 = vmatpush.bf16.msra.mxu0 %v1500
        %5904 = vmatpush.bf16.msra.mxu0 %v1498
        %5905 = vmatpush.bf16.msra.mxu0 %v1496
        %5906 = vmatmul.bf16.gmra.mxu0 %v5896
        %v5907 = vpop.f32.mrf.mxu0
        %v5908 = vadd.f32 0.0, %v5907
        %v5909 = vpop.f32.mrf.mxu0
        %v5910 = vadd.f32 0.0, %v5909
        %5911 = vdwg.mxu0
        %5912 = vmatpush.bf16.msra.mxu0 0
        %5913 = vmatpush.bf16.msra.mxu0 0
        %5914 = vmatpush.bf16.msra.mxu0 %v1525
        %5915 = vmatpush.bf16.msra.mxu0 %v1505
        %5916 = vmatpush.bf16.msra.mxu0 %v1503
        %5917 = vmatpush.bf16.msra.mxu0 %v1501
        %5918 = vmatpush.bf16.msra.mxu0 %v1499
        %5919 = vmatpush.bf16.msra.mxu0 %v1497
        %5920 = vmatmul.bf16.gmra.mxu0 %v5896
        %v5921 = vpop.f32.mrf.mxu0
        %v5922 = vadd.f32 0.0, %v5921
        %v5923 = vpop.f32.mrf.mxu0
        %v5924 = vadd.f32 0.0, %v5923
        %5925 = vdwg.mxu0
        %v5926 = vadd.f32 %v5890, %v5908
        %v5927 = vadd.f32 %v5891, %v5922
        %v5928 = vadd.f32 %v5892, %v5910
        %v5929 = vadd.f32 %v5893, %v5924
        %v5930 = vadd.f32 %v5926, %v1560
        %v5931 = vadd.f32 %v5927, %v1561
        %v5932 = vadd.f32 %v5928, %v1560
        %v5933 = vadd.f32 %v5929, %v1561
        %vm5934 = vcmp.ge.f32.partialorder %v5930, 0.0
        %vm5935 = vcmp.ge.f32.partialorder %v5931, 0.0
        %vm5936 = vcmp.ge.f32.partialorder %v5932, 0.0
        %vm5937 = vcmp.ge.f32.partialorder %v5933, 0.0
        %v5938 = vmul.f32 %v5930, 0.01
        %v5939 = vmul.f32 %v5931, 0.01
        %v5940 = vmul.f32 %v5932, 0.01
        %v5941 = vmul.f32 %v5933, 0.01
        %v5942 = vsel %vm5934, %v5930, %v5938
        %v5943 = vsel %vm5935, %v5931, %v5939
        %v5944 = vsel %vm5936, %v5932, %v5940
        %v5945 = vsel %vm5937, %v5933, %v5941
        %5950 = vrot.lane.b32.xlu0 %v5942, 112
        %v5951 = vpop.permute.xlu0 %5950
        %5952 = vrot.lane.b32.xlu0 %v5943, 112
        %v5953 = vpop.permute.xlu0 %5952
        %5954 = vrot.lane.b32.xlu0 %v5944, 112
        %v5955 = vpop.permute.xlu0 %5954
        %5956 = vrot.lane.b32.xlu0 %v5945, 112
        %v5957 = vpop.permute.xlu0 %5956
        %v5958 = vsel %vm1592, %v5951, %v5953
        %v5959 = vsel %vm1592, %v5955, %v5957
        %v5964 = vmax.f32 %v5942, %v5958
        %v5965 = vmax.f32 %v5943, %v5953
        %v5966 = vmax.f32 %v5944, %v5959
        %v5967 = vmax.f32 %v5945, %v5957
        %v5968 = vpack.c.bf16 %v5966, %v5964
        %v5969 = vpack.c.bf16 %v5967, %v5965
        %v5971 = vsel %vm1677, %v5969, 0
        %5973 = vmatpush.bf16.msra.mxu0 %v1666
        %5974 = vmatpush.bf16.msra.mxu0 %v1665
        %5975 = vmatpush.bf16.msra.mxu0 %v1664
        %5976 = vmatpush.bf16.msra.mxu0 %v1663
        %5977 = vmatpush.bf16.msra.mxu0 %v1662
        %5978 = vmatpush.bf16.msra.mxu0 %v1661
        %5979 = vmatpush.bf16.msra.mxu0 %v1660
        %5980 = vmatpush.bf16.msra.mxu0 %v1659
        %5981 = vmatmul.bf16.gmra.mxu0 %v5968
        %v5982 = vpop.f32.mrf.mxu0
        %v5983 = vadd.f32 0.0, %v5982
        %v5984 = vpop.f32.mrf.mxu0
        %v5985 = vadd.f32 0.0, %v5984
        %5986 = vdwg.mxu0
        %5987 = vmatpush.bf16.msra.mxu0 0
        %5988 = vmatpush.bf16.msra.mxu0 0
        %5989 = vmatpush.bf16.msra.mxu0 0
        %5990 = vmatpush.bf16.msra.mxu0 0
        %5991 = vmatpush.bf16.msra.mxu0 0
        %5992 = vmatpush.bf16.msra.mxu0 0
        %5993 = vmatpush.bf16.msra.mxu0 0
        %5994 = vmatpush.bf16.msra.mxu0 %v1667
        %5995 = vmatmul.bf16.gmra.mxu0 %v5971
        %v5996 = vpop.f32.mrf.mxu0
        %v5997 = vadd.f32 %v5983, %v5996
        %v5998 = vpop.f32.mrf.mxu0
        %v5999 = vadd.f32 %v5985, %v5998
        %6000 = vdwg.mxu0
        %v6003 = vrot.slane %v5997, 1
        %v6004 = vrot.slane %v5999, 1
        %v6005 = vsel %vm963, %v6003, %v6004
        %v6008 = vmax.f32 %v5997, %v6005
        %v6009 = vmax.f32 %v5999, %v6004
        %v6010 = vpack.c.bf16 %v6009, %v6008
        %v6012 = vand.u32 %v6010, %v1726
        %6014 = vmatpush.bf16.msra.mxu0 0
        %6015 = vmatpush.bf16.msra.mxu0 0
        %6016 = vmatpush.bf16.msra.mxu0 0
        %6017 = vmatpush.bf16.msra.mxu0 0
        %6018 = vmatpush.bf16.msra.mxu0 0
        %6019 = vmatpush.bf16.msra.mxu0 0
        %6020 = vmatpush.bf16.msra.mxu0 0
        %6021 = vmatpush.bf16.msra.mxu0 %v6012
        %6022 = vmatmul.bf16.gmra.mxu0 %v1722
        %v6023 = vpop.f32.mrf.mxu0
        %v6024 = vadd.f32 0.0, %v6023
        %v6025 = vpop.f32.mrf.mxu0
        %6026 = vdwg.mxu0
        %s6027 = scalar_lea.vmem %s334, 224
        %v6028 = vld [vmem:[%s6027] sm:$0xff]
        %v6029 = vld [vmem:[%s6027 + $0x8] sm:$0xff]
        %v6030 = vld [vmem:[%s6027 + $0x10] sm:$0xff]
        %v6031 = vld [vmem:[%s6027 + $0x18] sm:$0xf]
        %v6032 = vpack.c.bf16 %v6029, %v6028
        %v6033 = vpack.c.bf16 %v6031, %v6030
        %v6034 = vld [vmem:[%s6027 + $0x1] sm:$0xff]
        %v6035 = vld [vmem:[%s6027 + $0x9] sm:$0xff]
        %v6036 = vld [vmem:[%s6027 + $0x11] sm:$0xff]
        %v6037 = vld [vmem:[%s6027 + $0x19] sm:$0xf]
        %v6038 = vpack.c.bf16 %v6035, %v6034
        %v6039 = vpack.c.bf16 %v6037, %v6036
        %v6041 = vsel %vm382, %v6038, 0
        %v6044 = vsel %vm382, %v6039, 0
        %6046 = vmatpush.bf16.msra.mxu0 0
        %6047 = vmatpush.bf16.msra.mxu0 0
        %6048 = vmatpush.bf16.msra.mxu0 0
        %6049 = vmatpush.bf16.msra.mxu0 0
        %6050 = vmatpush.bf16.msra.mxu0 0
        %6051 = vmatpush.bf16.msra.mxu0 0
        %6052 = vmatpush.bf16.msra.mxu0 %v376
        %6053 = vmatpush.bf16.msra.mxu0 %v374
        %6054 = vmatmul.bf16.gmra.mxu0 %v6041
        %v6055 = vpop.f32.mrf.mxu0
        %v6056 = vadd.f32 0.0, %v6055
        %v6057 = vpop.f32.mrf.mxu0
        %v6058 = vadd.f32 0.0, %v6057
        %6059 = vmatmul.bf16.gmra.mxu0 %v6044
        %v6060 = vpop.f32.mrf.mxu0
        %v6061 = vadd.f32 0.0, %v6060
        %v6062 = vpop.f32.mrf.mxu0
        %v6063 = vadd.f32 0.0, %v6062
        %6064 = vdwg.mxu0
        %6065 = vmatpush.bf16.msra.mxu0 0
        %6066 = vmatpush.bf16.msra.mxu0 0
        %6067 = vmatpush.bf16.msra.mxu0 0
        %6068 = vmatpush.bf16.msra.mxu0 0
        %6069 = vmatpush.bf16.msra.mxu0 0
        %6070 = vmatpush.bf16.msra.mxu0 0
        %6071 = vmatpush.bf16.msra.mxu0 %v377
        %6072 = vmatpush.bf16.msra.mxu0 %v375
        %6073 = vmatmul.bf16.gmra.mxu0 %v6041
        %v6074 = vpop.f32.mrf.mxu0
        %v6075 = vadd.f32 0.0, %v6074
        %v6076 = vpop.f32.mrf.mxu0
        %v6077 = vadd.f32 0.0, %v6076
        %6078 = vmatmul.bf16.gmra.mxu0 %v6044
        %v6079 = vpop.f32.mrf.mxu0
        %v6080 = vadd.f32 0.0, %v6079
        %v6081 = vpop.f32.mrf.mxu0
        %v6082 = vadd.f32 0.0, %v6081
        %6083 = vdwg.mxu0
        %v6085 = vsel %vm382, %v6032, 0
        %v6088 = vsel %vm382, %v6033, 0
        %6090 = vmatpush.bf16.msra.mxu0 0
        %6091 = vmatpush.bf16.msra.mxu0 0
        %6092 = vmatpush.bf16.msra.mxu0 0
        %6093 = vmatpush.bf16.msra.mxu0 0
        %6094 = vmatpush.bf16.msra.mxu0 0
        %6095 = vmatpush.bf16.msra.mxu0 0
        %6096 = vmatpush.bf16.msra.mxu0 %v441
        %6097 = vmatpush.bf16.msra.mxu0 %v439
        %6098 = vmatmul.bf16.gmra.mxu0 %v6085
        %v6099 = vpop.f32.mrf.mxu0
        %v6100 = vadd.f32 %v6056, %v6099
        %v6101 = vpop.f32.mrf.mxu0
        %v6102 = vadd.f32 %v6058, %v6101
        %6103 = vmatmul.bf16.gmra.mxu0 %v6088
        %v6104 = vpop.f32.mrf.mxu0
        %v6105 = vadd.f32 %v6061, %v6104
        %v6106 = vpop.f32.mrf.mxu0
        %v6107 = vadd.f32 %v6063, %v6106
        %6108 = vdwg.mxu0
        %6109 = vmatpush.bf16.msra.mxu0 0
        %6110 = vmatpush.bf16.msra.mxu0 0
        %6111 = vmatpush.bf16.msra.mxu0 0
        %6112 = vmatpush.bf16.msra.mxu0 0
        %6113 = vmatpush.bf16.msra.mxu0 0
        %6114 = vmatpush.bf16.msra.mxu0 0
        %6115 = vmatpush.bf16.msra.mxu0 %v442
        %6116 = vmatpush.bf16.msra.mxu0 %v440
        %6117 = vmatmul.bf16.gmra.mxu0 %v6085
        %v6118 = vpop.f32.mrf.mxu0
        %v6119 = vadd.f32 %v6075, %v6118
        %v6120 = vpop.f32.mrf.mxu0
        %v6121 = vadd.f32 %v6077, %v6120
        %6122 = vmatmul.bf16.gmra.mxu0 %v6088
        %v6123 = vpop.f32.mrf.mxu0
        %v6124 = vadd.f32 %v6080, %v6123
        %v6125 = vpop.f32.mrf.mxu0
        %v6126 = vadd.f32 %v6082, %v6125
        %6127 = vdwg.mxu0
        %v6128 = vld [vmem:[%s6027 + $0x2] sm:$0xff]
        %v6129 = vld [vmem:[%s6027 + $0xa] sm:$0xff]
        %v6130 = vld [vmem:[%s6027 + $0x12] sm:$0xff]
        %v6131 = vld [vmem:[%s6027 + $0x1a] sm:$0xf]
        %v6132 = vpack.c.bf16 %v6129, %v6128
        %v6133 = vpack.c.bf16 %v6131, %v6130
        %v6135 = vsel %vm382, %v6132, 0
        %v6138 = vsel %vm382, %v6133, 0
        %6140 = vmatpush.bf16.msra.mxu0 0
        %6141 = vmatpush.bf16.msra.mxu0 0
        %6142 = vmatpush.bf16.msra.mxu0 0
        %6143 = vmatpush.bf16.msra.mxu0 0
        %6144 = vmatpush.bf16.msra.mxu0 0
        %6145 = vmatpush.bf16.msra.mxu0 0
        %6146 = vmatpush.bf16.msra.mxu0 %v516
        %6147 = vmatpush.bf16.msra.mxu0 %v514
        %6148 = vmatmul.bf16.gmra.mxu0 %v6135
        %v6149 = vpop.f32.mrf.mxu0
        %v6150 = vadd.f32 0.0, %v6149
        %v6151 = vpop.f32.mrf.mxu0
        %v6152 = vadd.f32 0.0, %v6151
        %6153 = vmatmul.bf16.gmra.mxu0 %v6138
        %v6154 = vpop.f32.mrf.mxu0
        %v6155 = vadd.f32 0.0, %v6154
        %v6156 = vpop.f32.mrf.mxu0
        %v6157 = vadd.f32 0.0, %v6156
        %6158 = vdwg.mxu0
        %6159 = vmatpush.bf16.msra.mxu0 0
        %6160 = vmatpush.bf16.msra.mxu0 0
        %6161 = vmatpush.bf16.msra.mxu0 0
        %6162 = vmatpush.bf16.msra.mxu0 0
        %6163 = vmatpush.bf16.msra.mxu0 0
        %6164 = vmatpush.bf16.msra.mxu0 0
        %6165 = vmatpush.bf16.msra.mxu0 %v517
        %6166 = vmatpush.bf16.msra.mxu0 %v515
        %6167 = vmatmul.bf16.gmra.mxu0 %v6135
        %v6168 = vpop.f32.mrf.mxu0
        %v6169 = vadd.f32 0.0, %v6168
        %v6170 = vpop.f32.mrf.mxu0
        %v6171 = vadd.f32 0.0, %v6170
        %6172 = vmatmul.bf16.gmra.mxu0 %v6138
        %v6173 = vpop.f32.mrf.mxu0
        %v6174 = vadd.f32 0.0, %v6173
        %v6175 = vpop.f32.mrf.mxu0
        %v6176 = vadd.f32 0.0, %v6175
        %6177 = vdwg.mxu0
        %v6178 = vadd.f32 %v6100, %v6150
        %v6179 = vadd.f32 %v6119, %v6169
        %v6180 = vadd.f32 %v6102, %v6152
        %v6181 = vadd.f32 %v6121, %v6171
        %v6182 = vadd.f32 %v6105, %v6155
        %v6183 = vadd.f32 %v6124, %v6174
        %v6184 = vadd.f32 %v6107, %v6157
        %v6185 = vadd.f32 %v6126, %v6176
        %v6186 = vld [vmem:[%s6027 + $0x3] sm:$0xff]
        %v6187 = vld [vmem:[%s6027 + $0xb] sm:$0xff]
        %v6188 = vld [vmem:[%s6027 + $0x13] sm:$0xff]
        %v6189 = vld [vmem:[%s6027 + $0x1b] sm:$0xf]
        %v6190 = vpack.c.bf16 %v6187, %v6186
        %v6191 = vpack.c.bf16 %v6189, %v6188
        %v6193 = vsel %vm382, %v6190, 0
        %v6196 = vsel %vm382, %v6191, 0
        %6198 = vmatpush.bf16.msra.mxu0 0
        %6199 = vmatpush.bf16.msra.mxu0 0
        %6200 = vmatpush.bf16.msra.mxu0 0
        %6201 = vmatpush.bf16.msra.mxu0 0
        %6202 = vmatpush.bf16.msra.mxu0 0
        %6203 = vmatpush.bf16.msra.mxu0 0
        %6204 = vmatpush.bf16.msra.mxu0 %v599
        %6205 = vmatpush.bf16.msra.mxu0 %v597
        %6206 = vmatmul.bf16.gmra.mxu0 %v6193
        %v6207 = vpop.f32.mrf.mxu0
        %v6208 = vadd.f32 0.0, %v6207
        %v6209 = vpop.f32.mrf.mxu0
        %v6210 = vadd.f32 0.0, %v6209
        %6211 = vmatmul.bf16.gmra.mxu0 %v6196
        %v6212 = vpop.f32.mrf.mxu0
        %v6213 = vadd.f32 0.0, %v6212
        %v6214 = vpop.f32.mrf.mxu0
        %v6215 = vadd.f32 0.0, %v6214
        %6216 = vdwg.mxu0
        %6217 = vmatpush.bf16.msra.mxu0 0
        %6218 = vmatpush.bf16.msra.mxu0 0
        %6219 = vmatpush.bf16.msra.mxu0 0
        %6220 = vmatpush.bf16.msra.mxu0 0
        %6221 = vmatpush.bf16.msra.mxu0 0
        %6222 = vmatpush.bf16.msra.mxu0 0
        %6223 = vmatpush.bf16.msra.mxu0 %v600
        %6224 = vmatpush.bf16.msra.mxu0 %v598
        %6225 = vmatmul.bf16.gmra.mxu0 %v6193
        %v6226 = vpop.f32.mrf.mxu0
        %v6227 = vadd.f32 0.0, %v6226
        %v6228 = vpop.f32.mrf.mxu0
        %v6229 = vadd.f32 0.0, %v6228
        %6230 = vmatmul.bf16.gmra.mxu0 %v6196
        %v6231 = vpop.f32.mrf.mxu0
        %v6232 = vadd.f32 0.0, %v6231
        %v6233 = vpop.f32.mrf.mxu0
        %v6234 = vadd.f32 0.0, %v6233
        %6235 = vdwg.mxu0
        %v6236 = vadd.f32 %v6178, %v6208
        %v6237 = vadd.f32 %v6179, %v6227
        %v6238 = vadd.f32 %v6180, %v6210
        %v6239 = vadd.f32 %v6181, %v6229
        %v6240 = vadd.f32 %v6182, %v6213
        %v6241 = vadd.f32 %v6183, %v6232
        %v6242 = vadd.f32 %v6184, %v6215
        %v6243 = vadd.f32 %v6185, %v6234
        %v6244 = vld [vmem:[%s6027 + $0x4] sm:$0xff]
        %v6245 = vld [vmem:[%s6027 + $0xc] sm:$0xff]
        %v6246 = vld [vmem:[%s6027 + $0x14] sm:$0xff]
        %v6247 = vld [vmem:[%s6027 + $0x1c] sm:$0xf]
        %v6248 = vpack.c.bf16 %v6245, %v6244
        %v6249 = vpack.c.bf16 %v6247, %v6246
        %v6251 = vsel %vm382, %v6248, 0
        %v6254 = vsel %vm382, %v6249, 0
        %6256 = vmatpush.bf16.msra.mxu0 0
        %6257 = vmatpush.bf16.msra.mxu0 0
        %6258 = vmatpush.bf16.msra.mxu0 0
        %6259 = vmatpush.bf16.msra.mxu0 0
        %6260 = vmatpush.bf16.msra.mxu0 0
        %6261 = vmatpush.bf16.msra.mxu0 0
        %6262 = vmatpush.bf16.msra.mxu0 %v682
        %6263 = vmatpush.bf16.msra.mxu0 %v680
        %6264 = vmatmul.bf16.gmra.mxu0 %v6251
        %v6265 = vpop.f32.mrf.mxu0
        %v6266 = vadd.f32 0.0, %v6265
        %v6267 = vpop.f32.mrf.mxu0
        %v6268 = vadd.f32 0.0, %v6267
        %6269 = vmatmul.bf16.gmra.mxu0 %v6254
        %v6270 = vpop.f32.mrf.mxu0
        %v6271 = vadd.f32 0.0, %v6270
        %v6272 = vpop.f32.mrf.mxu0
        %v6273 = vadd.f32 0.0, %v6272
        %6274 = vdwg.mxu0
        %6275 = vmatpush.bf16.msra.mxu0 0
        %6276 = vmatpush.bf16.msra.mxu0 0
        %6277 = vmatpush.bf16.msra.mxu0 0
        %6278 = vmatpush.bf16.msra.mxu0 0
        %6279 = vmatpush.bf16.msra.mxu0 0
        %6280 = vmatpush.bf16.msra.mxu0 0
        %6281 = vmatpush.bf16.msra.mxu0 %v683
        %6282 = vmatpush.bf16.msra.mxu0 %v681
        %6283 = vmatmul.bf16.gmra.mxu0 %v6251
        %v6284 = vpop.f32.mrf.mxu0
        %v6285 = vadd.f32 0.0, %v6284
        %v6286 = vpop.f32.mrf.mxu0
        %v6287 = vadd.f32 0.0, %v6286
        %6288 = vmatmul.bf16.gmra.mxu0 %v6254
        %v6289 = vpop.f32.mrf.mxu0
        %v6290 = vadd.f32 0.0, %v6289
        %v6291 = vpop.f32.mrf.mxu0
        %v6292 = vadd.f32 0.0, %v6291
        %6293 = vdwg.mxu0
        %v6294 = vadd.f32 %v6236, %v6266
        %v6295 = vadd.f32 %v6237, %v6285
        %v6296 = vadd.f32 %v6238, %v6268
        %v6297 = vadd.f32 %v6239, %v6287
        %v6298 = vadd.f32 %v6240, %v6271
        %v6299 = vadd.f32 %v6241, %v6290
        %v6300 = vadd.f32 %v6242, %v6273
        %v6301 = vadd.f32 %v6243, %v6292
        %v6302 = vadd.f32 %v6294, %v741
        %v6303 = vadd.f32 %v6295, %v742
        %v6304 = vadd.f32 %v6296, %v741
        %v6305 = vadd.f32 %v6297, %v742
        %v6306 = vadd.f32 %v6298, %v741
        %v6307 = vadd.f32 %v6299, %v742
        %v6308 = vadd.f32 %v6300, %v741
        %v6309 = vadd.f32 %v6301, %v742
        %vm6310 = vcmp.ge.f32.partialorder %v6302, 0.0
        %vm6311 = vcmp.ge.f32.partialorder %v6303, 0.0
        %vm6312 = vcmp.ge.f32.partialorder %v6304, 0.0
        %vm6313 = vcmp.ge.f32.partialorder %v6305, 0.0
        %vm6314 = vcmp.ge.f32.partialorder %v6306, 0.0
        %vm6315 = vcmp.ge.f32.partialorder %v6307, 0.0
        %vm6316 = vcmp.ge.f32.partialorder %v6308, 0.0
        %vm6317 = vcmp.ge.f32.partialorder %v6309, 0.0
        %v6318 = vmul.f32 %v6302, 0.01
        %v6319 = vmul.f32 %v6303, 0.01
        %v6320 = vmul.f32 %v6304, 0.01
        %v6321 = vmul.f32 %v6305, 0.01
        %v6322 = vmul.f32 %v6306, 0.01
        %v6323 = vmul.f32 %v6307, 0.01
        %v6324 = vmul.f32 %v6308, 0.01
        %v6325 = vmul.f32 %v6309, 0.01
        %v6326 = vsel %vm6310, %v6302, %v6318
        %v6327 = vsel %vm6311, %v6303, %v6319
        %v6328 = vsel %vm6312, %v6304, %v6320
        %v6329 = vsel %vm6313, %v6305, %v6321
        %v6330 = vsel %vm6314, %v6306, %v6322
        %v6331 = vsel %vm6315, %v6307, %v6323
        %v6332 = vsel %vm6316, %v6308, %v6324
        %v6333 = vsel %vm6317, %v6309, %v6325
        %6342 = vrot.lane.b32.xlu0 %v6326, 122
        %v6343 = vpop.permute.xlu0 %6342
        %6344 = vrot.lane.b32.xlu0 %v6327, 122
        %v6345 = vpop.permute.xlu0 %6344
        %6346 = vrot.lane.b32.xlu0 %v6328, 122
        %v6347 = vpop.permute.xlu0 %6346
        %6348 = vrot.lane.b32.xlu0 %v6329, 122
        %v6349 = vpop.permute.xlu0 %6348
        %6350 = vrot.lane.b32.xlu0 %v6330, 122
        %v6351 = vpop.permute.xlu0 %6350
        %6352 = vrot.lane.b32.xlu0 %v6331, 122
        %v6353 = vpop.permute.xlu0 %6352
        %6354 = vrot.lane.b32.xlu0 %v6332, 122
        %v6355 = vpop.permute.xlu0 %6354
        %6356 = vrot.lane.b32.xlu0 %v6333, 122
        %v6357 = vpop.permute.xlu0 %6356
        %v6358 = vsel %vm801, %v6343, %v6345
        %v6359 = vsel %vm801, %v6347, %v6349
        %v6360 = vsel %vm801, %v6351, %v6353
        %v6361 = vsel %vm801, %v6355, %v6357
        %v6370 = vmax.f32 %v6326, %v6358
        %v6371 = vmax.f32 %v6327, %v6345
        %v6372 = vmax.f32 %v6328, %v6359
        %v6373 = vmax.f32 %v6329, %v6349
        %v6374 = vmax.f32 %v6330, %v6360
        %v6375 = vmax.f32 %v6331, %v6353
        %v6376 = vmax.f32 %v6332, %v6361
        %v6377 = vmax.f32 %v6333, %v6357
        %v6378 = vpack.c.bf16 %v6372, %v6370
        %v6379 = vpack.c.bf16 %v6373, %v6371
        %v6380 = vpack.c.bf16 %v6376, %v6374
        %v6381 = vpack.c.bf16 %v6377, %v6375
        %v6383 = vsel %vm910, %v6379, 0
        %v6386 = vsel %vm910, %v6381, 0
        %6388 = vmatpush.bf16.msra.mxu0 %v896
        %6389 = vmatpush.bf16.msra.mxu0 %v895
        %6390 = vmatpush.bf16.msra.mxu0 %v894
        %6391 = vmatpush.bf16.msra.mxu0 %v893
        %6392 = vmatpush.bf16.msra.mxu0 %v892
        %6393 = vmatpush.bf16.msra.mxu0 %v891
        %6394 = vmatpush.bf16.msra.mxu0 %v890
        %6395 = vmatpush.bf16.msra.mxu0 %v889
        %6396 = vmatmul.bf16.gmra.mxu0 %v6378
        %v6397 = vpop.f32.mrf.mxu0
        %v6398 = vadd.f32 0.0, %v6397
        %v6399 = vpop.f32.mrf.mxu0
        %v6400 = vadd.f32 0.0, %v6399
        %6401 = vmatmul.bf16.gmra.mxu0 %v6380
        %v6402 = vpop.f32.mrf.mxu0
        %v6403 = vadd.f32 0.0, %v6402
        %v6404 = vpop.f32.mrf.mxu0
        %v6405 = vadd.f32 0.0, %v6404
        %6406 = vdwg.mxu0
        %6407 = vmatpush.bf16.msra.mxu0 0
        %6408 = vmatpush.bf16.msra.mxu0 0
        %6409 = vmatpush.bf16.msra.mxu0 0
        %6410 = vmatpush.bf16.msra.mxu0 0
        %6411 = vmatpush.bf16.msra.mxu0 0
        %6412 = vmatpush.bf16.msra.mxu0 %v919
        %6413 = vmatpush.bf16.msra.mxu0 %v898
        %6414 = vmatpush.bf16.msra.mxu0 %v897
        %6415 = vmatmul.bf16.gmra.mxu0 %v6383
        %v6416 = vpop.f32.mrf.mxu0
        %v6417 = vadd.f32 %v6398, %v6416
        %v6418 = vpop.f32.mrf.mxu0
        %v6419 = vadd.f32 %v6400, %v6418
        %6420 = vmatmul.bf16.gmra.mxu0 %v6386
        %v6421 = vpop.f32.mrf.mxu0
        %v6422 = vadd.f32 %v6403, %v6421
        %v6423 = vpop.f32.mrf.mxu0
        %v6424 = vadd.f32 %v6405, %v6423
        %6425 = vdwg.mxu0
        %v6430 = vrot.slane %v6417, 1
        %v6431 = vrot.slane %v6419, 1
        %v6432 = vsel %vm963, %v6430, %v6431
        %v6433 = vrot.slane %v6422, 1
        %v6434 = vsel %vm963, %v6431, %v6433
        %v6435 = vrot.slane %v6424, 1
        %v6436 = vsel %vm963, %v6433, %v6435
        %v6441 = vmax.f32 %v6417, %v6432
        %v6442 = vmax.f32 %v6419, %v6434
        %v6443 = vmax.f32 %v6422, %v6436
        %v6444 = vmax.f32 %v6424, %v6435
        %v6445 = vpack.c.bf16 %v6442, %v6441
        %v6446 = vpack.c.bf16 %v6444, %v6443
        %v6448 = vand.u32 %v6446, %v995
        %6450 = vmatpush.bf16.msra.mxu0 0
        %6451 = vmatpush.bf16.msra.mxu0 0
        %6452 = vmatpush.bf16.msra.mxu0 0
        %6453 = vmatpush.bf16.msra.mxu0 0
        %6454 = vmatpush.bf16.msra.mxu0 0
        %6455 = vmatpush.bf16.msra.mxu0 0
        %6456 = vmatpush.bf16.msra.mxu0 %v6448
        %6457 = vmatpush.bf16.msra.mxu0 %v6445
        %6458 = vmatmul.bf16.gmra.mxu0 %v990
        %v6459 = vpop.f32.mrf.mxu0
        %v6460 = vadd.f32 0.0, %v6459
        %v6461 = vpop.f32.mrf.mxu0
        %v6462 = vadd.f32 0.0, %v6461
        %6463 = vdwg.mxu0
        %v6464 = vpack.c.bf16 %v6462, %v6460
        %v6466 = vshrl.u32 %v6464, 16
        %v6468 = vshll.u32 %v6464, 16
        %v6470 = vrot.slane %v6468, 1
        %v6471 = vor.u32 %v6466, %v6470
        %v6473 = vsel %vm1099, %v6471, 0
        %6475 = vmatpush.bf16.msra.mxu0 0
        %6476 = vmatpush.bf16.msra.mxu0 0
        %6477 = vmatpush.bf16.msra.mxu0 %v1105
        %6478 = vmatpush.bf16.msra.mxu0 %v1085
        %6479 = vmatpush.bf16.msra.mxu0 %v1083
        %6480 = vmatpush.bf16.msra.mxu0 %v1081
        %6481 = vmatpush.bf16.msra.mxu0 %v1079
        %6482 = vmatpush.bf16.msra.mxu0 %v1077
        %6483 = vmatmul.bf16.gmra.mxu0 %v6473
        %v6484 = vpop.f32.mrf.mxu0
        %v6485 = vadd.f32 0.0, %v6484
        %v6486 = vpop.f32.mrf.mxu0
        %v6487 = vadd.f32 0.0, %v6486
        %6488 = vdwg.mxu0
        %6489 = vmatpush.bf16.msra.mxu0 0
        %6490 = vmatpush.bf16.msra.mxu0 0
        %6491 = vmatpush.bf16.msra.mxu0 %v1108
        %6492 = vmatpush.bf16.msra.mxu0 %v1086
        %6493 = vmatpush.bf16.msra.mxu0 %v1084
        %6494 = vmatpush.bf16.msra.mxu0 %v1082
        %6495 = vmatpush.bf16.msra.mxu0 %v1080
        %6496 = vmatpush.bf16.msra.mxu0 %v1078
        %6497 = vmatmul.bf16.gmra.mxu0 %v6473
        %v6498 = vpop.f32.mrf.mxu0
        %v6499 = vadd.f32 0.0, %v6498
        %v6500 = vpop.f32.mrf.mxu0
        %v6501 = vadd.f32 0.0, %v6500
        %6502 = vdwg.mxu0
        %v6503 = vsel %vm1099, %v6464, 0
        %6505 = vmatpush.bf16.msra.mxu0 0
        %6506 = vmatpush.bf16.msra.mxu0 0
        %6507 = vmatpush.bf16.msra.mxu0 %v1196
        %6508 = vmatpush.bf16.msra.mxu0 %v1179
        %6509 = vmatpush.bf16.msra.mxu0 %v1177
        %6510 = vmatpush.bf16.msra.mxu0 %v1175
        %6511 = vmatpush.bf16.msra.mxu0 %v1173
        %6512 = vmatpush.bf16.msra.mxu0 %v1171
        %6513 = vmatmul.bf16.gmra.mxu0 %v6503
        %v6514 = vpop.f32.mrf.mxu0
        %v6515 = vadd.f32 %v6485, %v6514
        %v6516 = vpop.f32.mrf.mxu0
        %v6517 = vadd.f32 %v6487, %v6516
        %6518 = vdwg.mxu0
        %6519 = vmatpush.bf16.msra.mxu0 0
        %6520 = vmatpush.bf16.msra.mxu0 0
        %6521 = vmatpush.bf16.msra.mxu0 %v1199
        %6522 = vmatpush.bf16.msra.mxu0 %v1180
        %6523 = vmatpush.bf16.msra.mxu0 %v1178
        %6524 = vmatpush.bf16.msra.mxu0 %v1176
        %6525 = vmatpush.bf16.msra.mxu0 %v1174
        %6526 = vmatpush.bf16.msra.mxu0 %v1172
        %6527 = vmatmul.bf16.gmra.mxu0 %v6503
        %v6528 = vpop.f32.mrf.mxu0
        %v6529 = vadd.f32 %v6499, %v6528
        %v6530 = vpop.f32.mrf.mxu0
        %v6531 = vadd.f32 %v6501, %v6530
        %6532 = vdwg.mxu0
        %v6534 = vrot.slane %v6464, 1
        %v6536 = vsel %vm1099, %v6534, 0
        %6538 = vmatpush.bf16.msra.mxu0 0
        %6539 = vmatpush.bf16.msra.mxu0 0
        %6540 = vmatpush.bf16.msra.mxu0 %v1302
        %6541 = vmatpush.bf16.msra.mxu0 %v1284
        %6542 = vmatpush.bf16.msra.mxu0 %v1282
        %6543 = vmatpush.bf16.msra.mxu0 %v1280
        %6544 = vmatpush.bf16.msra.mxu0 %v1278
        %6545 = vmatpush.bf16.msra.mxu0 %v1276
        %6546 = vmatmul.bf16.gmra.mxu0 %v6536
        %v6547 = vpop.f32.mrf.mxu0
        %v6548 = vadd.f32 0.0, %v6547
        %v6549 = vpop.f32.mrf.mxu0
        %v6550 = vadd.f32 0.0, %v6549
        %6551 = vdwg.mxu0
        %6552 = vmatpush.bf16.msra.mxu0 0
        %6553 = vmatpush.bf16.msra.mxu0 0
        %6554 = vmatpush.bf16.msra.mxu0 %v1305
        %6555 = vmatpush.bf16.msra.mxu0 %v1285
        %6556 = vmatpush.bf16.msra.mxu0 %v1283
        %6557 = vmatpush.bf16.msra.mxu0 %v1281
        %6558 = vmatpush.bf16.msra.mxu0 %v1279
        %6559 = vmatpush.bf16.msra.mxu0 %v1277
        %6560 = vmatmul.bf16.gmra.mxu0 %v6536
        %v6561 = vpop.f32.mrf.mxu0
        %v6562 = vadd.f32 0.0, %v6561
        %v6563 = vpop.f32.mrf.mxu0
        %v6564 = vadd.f32 0.0, %v6563
        %6565 = vdwg.mxu0
        %v6566 = vadd.f32 %v6515, %v6548
        %v6567 = vadd.f32 %v6529, %v6562
        %v6568 = vadd.f32 %v6517, %v6550
        %v6569 = vadd.f32 %v6531, %v6564
        %v6570 = vrot.slane %v6466, 1
        %v6571 = vrot.slane %v6468, 2
        %v6572 = vor.u32 %v6570, %v6571
        %v6574 = vsel %vm1099, %v6572, 0
        %6576 = vmatpush.bf16.msra.mxu0 0
        %6577 = vmatpush.bf16.msra.mxu0 0
        %6578 = vmatpush.bf16.msra.mxu0 %v1413
        %6579 = vmatpush.bf16.msra.mxu0 %v1395
        %6580 = vmatpush.bf16.msra.mxu0 %v1393
        %6581 = vmatpush.bf16.msra.mxu0 %v1391
        %6582 = vmatpush.bf16.msra.mxu0 %v1389
        %6583 = vmatpush.bf16.msra.mxu0 %v1387
        %6584 = vmatmul.bf16.gmra.mxu0 %v6574
        %v6585 = vpop.f32.mrf.mxu0
        %v6586 = vadd.f32 0.0, %v6585
        %v6587 = vpop.f32.mrf.mxu0
        %v6588 = vadd.f32 0.0, %v6587
        %6589 = vdwg.mxu0
        %6590 = vmatpush.bf16.msra.mxu0 0
        %6591 = vmatpush.bf16.msra.mxu0 0
        %6592 = vmatpush.bf16.msra.mxu0 %v1416
        %6593 = vmatpush.bf16.msra.mxu0 %v1396
        %6594 = vmatpush.bf16.msra.mxu0 %v1394
        %6595 = vmatpush.bf16.msra.mxu0 %v1392
        %6596 = vmatpush.bf16.msra.mxu0 %v1390
        %6597 = vmatpush.bf16.msra.mxu0 %v1388
        %6598 = vmatmul.bf16.gmra.mxu0 %v6574
        %v6599 = vpop.f32.mrf.mxu0
        %v6600 = vadd.f32 0.0, %v6599
        %v6601 = vpop.f32.mrf.mxu0
        %v6602 = vadd.f32 0.0, %v6601
        %6603 = vdwg.mxu0
        %v6604 = vadd.f32 %v6566, %v6586
        %v6605 = vadd.f32 %v6567, %v6600
        %v6606 = vadd.f32 %v6568, %v6588
        %v6607 = vadd.f32 %v6569, %v6602
        %v6608 = vrot.slane %v6464, 2
        %v6610 = vsel %vm1099, %v6608, 0
        %6612 = vmatpush.bf16.msra.mxu0 0
        %6613 = vmatpush.bf16.msra.mxu0 0
        %6614 = vmatpush.bf16.msra.mxu0 %v1522
        %6615 = vmatpush.bf16.msra.mxu0 %v1504
        %6616 = vmatpush.bf16.msra.mxu0 %v1502
        %6617 = vmatpush.bf16.msra.mxu0 %v1500
        %6618 = vmatpush.bf16.msra.mxu0 %v1498
        %6619 = vmatpush.bf16.msra.mxu0 %v1496
        %6620 = vmatmul.bf16.gmra.mxu0 %v6610
        %v6621 = vpop.f32.mrf.mxu0
        %v6622 = vadd.f32 0.0, %v6621
        %v6623 = vpop.f32.mrf.mxu0
        %v6624 = vadd.f32 0.0, %v6623
        %6625 = vdwg.mxu0
        %6626 = vmatpush.bf16.msra.mxu0 0
        %6627 = vmatpush.bf16.msra.mxu0 0
        %6628 = vmatpush.bf16.msra.mxu0 %v1525
        %6629 = vmatpush.bf16.msra.mxu0 %v1505
        %6630 = vmatpush.bf16.msra.mxu0 %v1503
        %6631 = vmatpush.bf16.msra.mxu0 %v1501
        %6632 = vmatpush.bf16.msra.mxu0 %v1499
        %6633 = vmatpush.bf16.msra.mxu0 %v1497
        %6634 = vmatmul.bf16.gmra.mxu0 %v6610
        %v6635 = vpop.f32.mrf.mxu0
        %v6636 = vadd.f32 0.0, %v6635
        %v6637 = vpop.f32.mrf.mxu0
        %v6638 = vadd.f32 0.0, %v6637
        %6639 = vdwg.mxu0
        %v6640 = vadd.f32 %v6604, %v6622
        %v6641 = vadd.f32 %v6605, %v6636
        %v6642 = vadd.f32 %v6606, %v6624
        %v6643 = vadd.f32 %v6607, %v6638
        %v6644 = vadd.f32 %v6640, %v1560
        %v6645 = vadd.f32 %v6641, %v1561
        %v6646 = vadd.f32 %v6642, %v1560
        %v6647 = vadd.f32 %v6643, %v1561
        %vm6648 = vcmp.ge.f32.partialorder %v6644, 0.0
        %vm6649 = vcmp.ge.f32.partialorder %v6645, 0.0
        %vm6650 = vcmp.ge.f32.partialorder %v6646, 0.0
        %vm6651 = vcmp.ge.f32.partialorder %v6647, 0.0
        %v6652 = vmul.f32 %v6644, 0.01
        %v6653 = vmul.f32 %v6645, 0.01
        %v6654 = vmul.f32 %v6646, 0.01
        %v6655 = vmul.f32 %v6647, 0.01
        %v6656 = vsel %vm6648, %v6644, %v6652
        %v6657 = vsel %vm6649, %v6645, %v6653
        %v6658 = vsel %vm6650, %v6646, %v6654
        %v6659 = vsel %vm6651, %v6647, %v6655
        %6664 = vrot.lane.b32.xlu0 %v6656, 112
        %v6665 = vpop.permute.xlu0 %6664
        %6666 = vrot.lane.b32.xlu0 %v6657, 112
        %v6667 = vpop.permute.xlu0 %6666
        %6668 = vrot.lane.b32.xlu0 %v6658, 112
        %v6669 = vpop.permute.xlu0 %6668
        %6670 = vrot.lane.b32.xlu0 %v6659, 112
        %v6671 = vpop.permute.xlu0 %6670
        %v6672 = vsel %vm1592, %v6665, %v6667
        %v6673 = vsel %vm1592, %v6669, %v6671
        %v6678 = vmax.f32 %v6656, %v6672
        %v6679 = vmax.f32 %v6657, %v6667
        %v6680 = vmax.f32 %v6658, %v6673
        %v6681 = vmax.f32 %v6659, %v6671
        %v6682 = vpack.c.bf16 %v6680, %v6678
        %v6683 = vpack.c.bf16 %v6681, %v6679
        %v6685 = vsel %vm1677, %v6683, 0
        %6687 = vmatpush.bf16.msra.mxu0 %v1666
        %6688 = vmatpush.bf16.msra.mxu0 %v1665
        %6689 = vmatpush.bf16.msra.mxu0 %v1664
        %6690 = vmatpush.bf16.msra.mxu0 %v1663
        %6691 = vmatpush.bf16.msra.mxu0 %v1662
        %6692 = vmatpush.bf16.msra.mxu0 %v1661
        %6693 = vmatpush.bf16.msra.mxu0 %v1660
        %6694 = vmatpush.bf16.msra.mxu0 %v1659
        %6695 = vmatmul.bf16.gmra.mxu0 %v6682
        %v6696 = vpop.f32.mrf.mxu0
        %v6697 = vadd.f32 0.0, %v6696
        %v6698 = vpop.f32.mrf.mxu0
        %v6699 = vadd.f32 0.0, %v6698
        %6700 = vdwg.mxu0
        %6701 = vmatpush.bf16.msra.mxu0 0
        %6702 = vmatpush.bf16.msra.mxu0 0
        %6703 = vmatpush.bf16.msra.mxu0 0
        %6704 = vmatpush.bf16.msra.mxu0 0
        %6705 = vmatpush.bf16.msra.mxu0 0
        %6706 = vmatpush.bf16.msra.mxu0 0
        %6707 = vmatpush.bf16.msra.mxu0 0
        %6708 = vmatpush.bf16.msra.mxu0 %v1667
        %6709 = vmatmul.bf16.gmra.mxu0 %v6685
        %v6710 = vpop.f32.mrf.mxu0
        %v6711 = vadd.f32 %v6697, %v6710
        %v6712 = vpop.f32.mrf.mxu0
        %v6713 = vadd.f32 %v6699, %v6712
        %6714 = vdwg.mxu0
        %v6717 = vrot.slane %v6711, 1
        %v6718 = vrot.slane %v6713, 1
        %v6719 = vsel %vm963, %v6717, %v6718
        %v6722 = vmax.f32 %v6711, %v6719
        %v6723 = vmax.f32 %v6713, %v6718
        %v6724 = vpack.c.bf16 %v6723, %v6722
        %v6726 = vand.u32 %v6724, %v1726
        %6728 = vmatpush.bf16.msra.mxu0 0
        %6729 = vmatpush.bf16.msra.mxu0 0
        %6730 = vmatpush.bf16.msra.mxu0 0
        %6731 = vmatpush.bf16.msra.mxu0 0
        %6732 = vmatpush.bf16.msra.mxu0 0
        %6733 = vmatpush.bf16.msra.mxu0 0
        %6734 = vmatpush.bf16.msra.mxu0 0
        %6735 = vmatpush.bf16.msra.mxu0 %v6726
        %6736 = vmatmul.bf16.gmra.mxu0 %v1722
        %v6737 = vpop.f32.mrf.mxu0
        %v6738 = vadd.f32 0.0, %v6737
        %v6739 = vpop.f32.mrf.mxu0
        %6740 = vdwg.mxu0
        %v6741 = vlaneseq
        %v6742 = vshrl.u32 %v6741, 7
        %vm6743 = vcmp.eq.s32.totalorder %v6742, 0
        %v6744 = vperm.slane %v1740, 0
        %v6745 = vsel %vm6743, %v6744, 0.0
        %vm6746 = vcmp.eq.s32.totalorder %v6742, 1
        %v6747 = vperm.slane %v2454, 0
        %v6748 = vsel %vm6746, %v6747, %v6745
        %vm6749 = vcmp.eq.s32.totalorder %v6742, 2
        %v6750 = vperm.slane %v3168, 0
        %v6751 = vsel %vm6749, %v6750, %v6748
        %vm6752 = vcmp.eq.s32.totalorder %v6742, 3
        %v6753 = vperm.slane %v3882, 0
        %v6754 = vsel %vm6752, %v6753, %v6751
        %vm6755 = vcmp.eq.s32.totalorder %v6742, 4
        %v6756 = vperm.slane %v4596, 0
        %v6757 = vsel %vm6755, %v6756, %v6754
        %vm6758 = vcmp.eq.s32.totalorder %v6742, 5
        %v6759 = vperm.slane %v5310, 0
        %v6760 = vsel %vm6758, %v6759, %v6757
        %vm6761 = vcmp.eq.s32.totalorder %v6742, 6
        %v6762 = vperm.slane %v6024, 0
        %v6763 = vsel %vm6761, %v6762, %v6760
        %vm6764 = vcmp.eq.s32.totalorder %v6742, 7
        %v6765 = vperm.slane %v6738, 0
        %v6766 = vsel %vm6764, %v6765, %v6763
        %v6767 = vpack.c.bf16 %v6766, %v6766
        %v6768 = vld [vmem:[%s7] sm:$0xf]
        %v6769 = vld [vmem:[%s7 + $0x4] sm:$0xf]
        %v6770 = vld [vmem:[%s7 + $0x8] sm:$0xf]
        %v6771 = vld [vmem:[%s7 + $0xc] sm:$0xf]
        %v6772 = vld [vmem:[%s7 + $0x10] sm:$0xf]
        %v6773 = vld [vmem:[%s7 + $0x14] sm:$0xf]
        %v6774 = vld [vmem:[%s7 + $0x18] sm:$0xf]
        %v6775 = vld [vmem:[%s7 + $0x1c] sm:$0xf]
        %v6776 = vld [vmem:[%s7 + $0x20] sm:$0xf]
        %v6777 = vld [vmem:[%s7 + $0x24] sm:$0xf]
        %v6778 = vperm.slane %v1740, 1
        %v6779 = vsel %vm6743, %v6778, 0.0
        %v6780 = vperm.slane %v2454, 1
        %v6781 = vsel %vm6746, %v6780, %v6779
        %v6782 = vperm.slane %v3168, 1
        %v6783 = vsel %vm6749, %v6782, %v6781
        %v6784 = vperm.slane %v3882, 1
        %v6785 = vsel %vm6752, %v6784, %v6783
        %v6786 = vperm.slane %v4596, 1
        %v6787 = vsel %vm6755, %v6786, %v6785
        %v6788 = vperm.slane %v5310, 1
        %v6789 = vsel %vm6758, %v6788, %v6787
        %v6790 = vperm.slane %v6024, 1
        %v6791 = vsel %vm6761, %v6790, %v6789
        %v6792 = vperm.slane %v6738, 1
        %v6793 = vsel %vm6764, %v6792, %v6791
        %v6794 = vpack.c.bf16 %v6793, %v6793
        %s6795 = scalar_lea.vmem %s7, 40
        %v6796 = vld [vmem:[%s6795] sm:$0xf]
        %v6797 = vld [vmem:[%s6795 + $0x4] sm:$0xf]
        %v6798 = vld [vmem:[%s6795 + $0x8] sm:$0xf]
        %v6799 = vld [vmem:[%s6795 + $0xc] sm:$0xf]
        %v6800 = vld [vmem:[%s6795 + $0x10] sm:$0xf]
        %v6801 = vld [vmem:[%s6795 + $0x14] sm:$0xf]
        %v6802 = vld [vmem:[%s6795 + $0x18] sm:$0xf]
        %v6803 = vld [vmem:[%s6795 + $0x1c] sm:$0xf]
        %v6804 = vld [vmem:[%s6795 + $0x20] sm:$0xf]
        %v6805 = vld [vmem:[%s6795 + $0x24] sm:$0xf]
        %v6816 = vunpack.c.l.b16 %v6796
        %v6817 = vunpack.c.l.b16 %v6797
        %v6818 = vunpack.c.l.b16 %v6798
        %v6819 = vunpack.c.l.b16 %v6799
        %v6820 = vunpack.c.l.b16 %v6800
        %v6821 = vunpack.c.l.b16 %v6801
        %v6822 = vunpack.c.l.b16 %v6802
        %v6823 = vunpack.c.l.b16 %v6803
        %v6824 = vunpack.c.l.b16 %v6804
        %v6825 = vunpack.c.l.b16 %v6805
        %v6826 = vpack.c.b16 %v6817, %v6816
        %v6827 = vpack.c.b16 %v6819, %v6818
        %v6828 = vpack.c.b16 %v6821, %v6820
        %v6829 = vpack.c.b16 %v6823, %v6822
        %v6830 = vpack.c.b16 %v6825, %v6824
        %vm6836 = vcmask 654336
        %v6838 = vsel %vm6836, %v6794, 0
        %6840 = vmatpush.bf16.msra.mxu0 0
        %6841 = vmatpush.bf16.msra.mxu0 0
        %6842 = vmatpush.bf16.msra.mxu0 0
        %6843 = vmatpush.bf16.msra.mxu0 %v6830
        %6844 = vmatpush.bf16.msra.mxu0 %v6829
        %6845 = vmatpush.bf16.msra.mxu0 %v6828
        %6846 = vmatpush.bf16.msra.mxu0 %v6827
        %6847 = vmatpush.bf16.msra.mxu0 %v6826
        %6848 = vmatmul.bf16.gmra.mxu0 %v6838
        %v6849 = vpop.f32.mrf.mxu0
        %v6850 = vadd.f32 0.0, %v6849
        %v6851 = vpop.f32.mrf.mxu0
        %6852 = vdwg.mxu0
        %v6863 = vunpack.c.l.b16 %v6768
        %v6864 = vunpack.c.l.b16 %v6769
        %v6865 = vunpack.c.l.b16 %v6770
        %v6866 = vunpack.c.l.b16 %v6771
        %v6867 = vunpack.c.l.b16 %v6772
        %v6868 = vunpack.c.l.b16 %v6773
        %v6869 = vunpack.c.l.b16 %v6774
        %v6870 = vunpack.c.l.b16 %v6775
        %v6871 = vunpack.c.l.b16 %v6776
        %v6872 = vunpack.c.l.b16 %v6777
        %v6873 = vpack.c.b16 %v6864, %v6863
        %v6874 = vpack.c.b16 %v6866, %v6865
        %v6875 = vpack.c.b16 %v6868, %v6867
        %v6876 = vpack.c.b16 %v6870, %v6869
        %v6877 = vpack.c.b16 %v6872, %v6871
        %v6884 = vsel %vm6836, %v6767, 0
        %6886 = vmatpush.bf16.msra.mxu0 0
        %6887 = vmatpush.bf16.msra.mxu0 0
        %6888 = vmatpush.bf16.msra.mxu0 0
        %6889 = vmatpush.bf16.msra.mxu0 %v6877
        %6890 = vmatpush.bf16.msra.mxu0 %v6876
        %6891 = vmatpush.bf16.msra.mxu0 %v6875
        %6892 = vmatpush.bf16.msra.mxu0 %v6874
        %6893 = vmatpush.bf16.msra.mxu0 %v6873
        %6894 = vmatmul.bf16.gmra.mxu0 %v6884
        %v6895 = vpop.f32.mrf.mxu0
        %v6896 = vadd.f32 %v6850, %v6895
        %v6897 = vpop.f32.mrf.mxu0
        %6898 = vdwg.mxu0
        %v6899 = vperm.slane %v1740, 2
        %v6900 = vsel %vm6743, %v6899, 0.0
        %v6901 = vperm.slane %v2454, 2
        %v6902 = vsel %vm6746, %v6901, %v6900
        %v6903 = vperm.slane %v3168, 2
        %v6904 = vsel %vm6749, %v6903, %v6902
        %v6905 = vperm.slane %v3882, 2
        %v6906 = vsel %vm6752, %v6905, %v6904
        %v6907 = vperm.slane %v4596, 2
        %v6908 = vsel %vm6755, %v6907, %v6906
        %v6909 = vperm.slane %v5310, 2
        %v6910 = vsel %vm6758, %v6909, %v6908
        %v6911 = vperm.slane %v6024, 2
        %v6912 = vsel %vm6761, %v6911, %v6910
        %v6913 = vperm.slane %v6738, 2
        %v6914 = vsel %vm6764, %v6913, %v6912
        %v6915 = vpack.c.bf16 %v6914, %v6914
        %s6916 = scalar_lea.vmem %s7, 80
        %v6917 = vld [vmem:[%s6916] sm:$0xf]
        %v6918 = vld [vmem:[%s6916 + $0x4] sm:$0xf]
        %v6919 = vld [vmem:[%s6916 + $0x8] sm:$0xf]
        %v6920 = vld [vmem:[%s6916 + $0xc] sm:$0xf]
        %v6921 = vld [vmem:[%s6916 + $0x10] sm:$0xf]
        %v6922 = vld [vmem:[%s6916 + $0x14] sm:$0xf]
        %v6923 = vld [vmem:[%s6916 + $0x18] sm:$0xf]
        %v6924 = vld [vmem:[%s6916 + $0x1c] sm:$0xf]
        %v6925 = vld [vmem:[%s6916 + $0x20] sm:$0xf]
        %v6926 = vld [vmem:[%s6916 + $0x24] sm:$0xf]
        %v6937 = vunpack.c.l.b16 %v6917
        %v6938 = vunpack.c.l.b16 %v6918
        %v6939 = vunpack.c.l.b16 %v6919
        %v6940 = vunpack.c.l.b16 %v6920
        %v6941 = vunpack.c.l.b16 %v6921
        %v6942 = vunpack.c.l.b16 %v6922
        %v6943 = vunpack.c.l.b16 %v6923
        %v6944 = vunpack.c.l.b16 %v6924
        %v6945 = vunpack.c.l.b16 %v6925
        %v6946 = vunpack.c.l.b16 %v6926
        %v6947 = vpack.c.b16 %v6938, %v6937
        %v6948 = vpack.c.b16 %v6940, %v6939
        %v6949 = vpack.c.b16 %v6942, %v6941
        %v6950 = vpack.c.b16 %v6944, %v6943
        %v6951 = vpack.c.b16 %v6946, %v6945
        %v6958 = vsel %vm6836, %v6915, 0
        %6960 = vmatpush.bf16.msra.mxu0 0
        %6961 = vmatpush.bf16.msra.mxu0 0
        %6962 = vmatpush.bf16.msra.mxu0 0
        %6963 = vmatpush.bf16.msra.mxu0 %v6951
        %6964 = vmatpush.bf16.msra.mxu0 %v6950
        %6965 = vmatpush.bf16.msra.mxu0 %v6949
        %6966 = vmatpush.bf16.msra.mxu0 %v6948
        %6967 = vmatpush.bf16.msra.mxu0 %v6947
        %6968 = vmatmul.bf16.gmra.mxu0 %v6958
        %v6969 = vpop.f32.mrf.mxu0
        %v6970 = vadd.f32 0.0, %v6969
        %v6971 = vpop.f32.mrf.mxu0
        %6972 = vdwg.mxu0
        %v6973 = vadd.f32 %v6896, %v6970
        %v6974 = vperm.slane %v1740, 3
        %v6975 = vsel %vm6743, %v6974, 0.0
        %v6976 = vperm.slane %v2454, 3
        %v6977 = vsel %vm6746, %v6976, %v6975
        %v6978 = vperm.slane %v3168, 3
        %v6979 = vsel %vm6749, %v6978, %v6977
        %v6980 = vperm.slane %v3882, 3
        %v6981 = vsel %vm6752, %v6980, %v6979
        %v6982 = vperm.slane %v4596, 3
        %v6983 = vsel %vm6755, %v6982, %v6981
        %v6984 = vperm.slane %v5310, 3
        %v6985 = vsel %vm6758, %v6984, %v6983
        %v6986 = vperm.slane %v6024, 3
        %v6987 = vsel %vm6761, %v6986, %v6985
        %v6988 = vperm.slane %v6738, 3
        %v6989 = vsel %vm6764, %v6988, %v6987
        %v6990 = vpack.c.bf16 %v6989, %v6989
        %s6991 = scalar_lea.vmem %s7, 120
        %v6992 = vld [vmem:[%s6991] sm:$0xf]
        %v6993 = vld [vmem:[%s6991 + $0x4] sm:$0xf]
        %v6994 = vld [vmem:[%s6991 + $0x8] sm:$0xf]
        %v6995 = vld [vmem:[%s6991 + $0xc] sm:$0xf]
        %v6996 = vld [vmem:[%s6991 + $0x10] sm:$0xf]
        %v6997 = vld [vmem:[%s6991 + $0x14] sm:$0xf]
        %v6998 = vld [vmem:[%s6991 + $0x18] sm:$0xf]
        %v6999 = vld [vmem:[%s6991 + $0x1c] sm:$0xf]
        %v7000 = vld [vmem:[%s6991 + $0x20] sm:$0xf]
        %v7001 = vld [vmem:[%s6991 + $0x24] sm:$0xf]
        %v7012 = vunpack.c.l.b16 %v6992
        %v7013 = vunpack.c.l.b16 %v6993
        %v7014 = vunpack.c.l.b16 %v6994
        %v7015 = vunpack.c.l.b16 %v6995
        %v7016 = vunpack.c.l.b16 %v6996
        %v7017 = vunpack.c.l.b16 %v6997
        %v7018 = vunpack.c.l.b16 %v6998
        %v7019 = vunpack.c.l.b16 %v6999
        %v7020 = vunpack.c.l.b16 %v7000
        %v7021 = vunpack.c.l.b16 %v7001
        %v7022 = vpack.c.b16 %v7013, %v7012
        %v7023 = vpack.c.b16 %v7015, %v7014
        %v7024 = vpack.c.b16 %v7017, %v7016
        %v7025 = vpack.c.b16 %v7019, %v7018
        %v7026 = vpack.c.b16 %v7021, %v7020
        %v7033 = vsel %vm6836, %v6990, 0
        %7035 = vmatpush.bf16.msra.mxu0 0
        %7036 = vmatpush.bf16.msra.mxu0 0
        %7037 = vmatpush.bf16.msra.mxu0 0
        %7038 = vmatpush.bf16.msra.mxu0 %v7026
        %7039 = vmatpush.bf16.msra.mxu0 %v7025
        %7040 = vmatpush.bf16.msra.mxu0 %v7024
        %7041 = vmatpush.bf16.msra.mxu0 %v7023
        %7042 = vmatpush.bf16.msra.mxu0 %v7022
        %7043 = vmatmul.bf16.gmra.mxu0 %v7033
        %v7044 = vpop.f32.mrf.mxu0
        %v7045 = vadd.f32 0.0, %v7044
        %v7046 = vpop.f32.mrf.mxu0
        %7047 = vdwg.mxu0
        %v7048 = vadd.f32 %v6973, %v7045
        %v7049 = vperm.slane %v1740, 4
        %v7050 = vsel %vm6743, %v7049, 0.0
        %v7051 = vperm.slane %v2454, 4
        %v7052 = vsel %vm6746, %v7051, %v7050
        %v7053 = vperm.slane %v3168, 4
        %v7054 = vsel %vm6749, %v7053, %v7052
        %v7055 = vperm.slane %v3882, 4
        %v7056 = vsel %vm6752, %v7055, %v7054
        %v7057 = vperm.slane %v4596, 4
        %v7058 = vsel %vm6755, %v7057, %v7056
        %v7059 = vperm.slane %v5310, 4
        %v7060 = vsel %vm6758, %v7059, %v7058
        %v7061 = vperm.slane %v6024, 4
        %v7062 = vsel %vm6761, %v7061, %v7060
        %v7063 = vperm.slane %v6738, 4
        %v7064 = vsel %vm6764, %v7063, %v7062
        %v7065 = vpack.c.bf16 %v7064, %v7064
        %s7066 = scalar_lea.vmem %s7, 160
        %v7067 = vld [vmem:[%s7066] sm:$0xf]
        %v7068 = vld [vmem:[%s7066 + $0x4] sm:$0xf]
        %v7069 = vld [vmem:[%s7066 + $0x8] sm:$0xf]
        %v7070 = vld [vmem:[%s7066 + $0xc] sm:$0xf]
        %v7071 = vld [vmem:[%s7066 + $0x10] sm:$0xf]
        %v7072 = vld [vmem:[%s7066 + $0x14] sm:$0xf]
        %v7073 = vld [vmem:[%s7066 + $0x18] sm:$0xf]
        %v7074 = vld [vmem:[%s7066 + $0x1c] sm:$0xf]
        %v7075 = vld [vmem:[%s7066 + $0x20] sm:$0xf]
        %v7076 = vld [vmem:[%s7066 + $0x24] sm:$0xf]
        %v7087 = vunpack.c.l.b16 %v7067
        %v7088 = vunpack.c.l.b16 %v7068
        %v7089 = vunpack.c.l.b16 %v7069
        %v7090 = vunpack.c.l.b16 %v7070
        %v7091 = vunpack.c.l.b16 %v7071
        %v7092 = vunpack.c.l.b16 %v7072
        %v7093 = vunpack.c.l.b16 %v7073
        %v7094 = vunpack.c.l.b16 %v7074
        %v7095 = vunpack.c.l.b16 %v7075
        %v7096 = vunpack.c.l.b16 %v7076
        %v7097 = vpack.c.b16 %v7088, %v7087
        %v7098 = vpack.c.b16 %v7090, %v7089
        %v7099 = vpack.c.b16 %v7092, %v7091
        %v7100 = vpack.c.b16 %v7094, %v7093
        %v7101 = vpack.c.b16 %v7096, %v7095
        %v7108 = vsel %vm6836, %v7065, 0
        %7110 = vmatpush.bf16.msra.mxu0 0
        %7111 = vmatpush.bf16.msra.mxu0 0
        %7112 = vmatpush.bf16.msra.mxu0 0
        %7113 = vmatpush.bf16.msra.mxu0 %v7101
        %7114 = vmatpush.bf16.msra.mxu0 %v7100
        %7115 = vmatpush.bf16.msra.mxu0 %v7099
        %7116 = vmatpush.bf16.msra.mxu0 %v7098
        %7117 = vmatpush.bf16.msra.mxu0 %v7097
        %7118 = vmatmul.bf16.gmra.mxu0 %v7108
        %v7119 = vpop.f32.mrf.mxu0
        %v7120 = vadd.f32 0.0, %v7119
        %v7121 = vpop.f32.mrf.mxu0
        %7122 = vdwg.mxu0
        %v7123 = vadd.f32 %v7048, %v7120
        %v7124 = vperm.slane %v340, 0
        %v7125 = vadd.f32 %v7123, %v7124
        %vm7126 = vcmp.ge.f32.partialorder %v7125, 0.0
        %v7127 = vmul.f32 %v7125, 0.01
        %v7128 = vsel %vm7126, %v7125, %v7127
        %7129 = vst [vmem:[%s328] sm:$0xff] %v7128
        %s7130 = sand.u32 %s225, 1
        %s7131 = scalar_lea.sflag [#allocation3], %s7130
        %s7132 = sand.u32 %s225, 1
        %s7133 = smul.addr %s7132, 8
        %s7134 = scalar_lea.vmem [#allocation2], %s7133
        // Predicated region
        $region57: #{lenet_rep_forward.1} parent=55 // pred_check
          %p7135 = pneg %p235
        $region58: #{lenet_rep_forward.1} parent=55 // pred_check_branch
          %7137 = sbr.rel (%p7135) target = $region60
        $region59: #{lenet_rep_forward.1} parent=55 // pred_region
          %7139 = vsyncadd %s7131, 0
          %s7140 = smul.addr %s23, 8
          %s7141 = scalar_lea.hbm %s9, %s7140
          %s7143 = sshll.u32 %s7134, 4
          %s7144 = int_to_ptr.vmem [resolvable:$true] %s7143
          %s7145 = sshll.u32 %s7141, 4
          %s7146 = int_to_ptr.hbm [resolvable:$true] %s7145
          %7148 = dma.vmem_to_hbm [thread:$0]  %s7144, 128, %s7146, %s7131
        $region60: #{lenet_rep_forward.1} parent=55 // pred_fallthru
          _
      $region56: #{lenet_rep_forward.1} parent=5 // pred_fallthru
        _
      %p7149 = scmp.le.s32.totalorder 2, %s18
      // Predicated region
      $region61: #{lenet_rep_forward.1} parent=5 // pred_check
        %p7150 = pneg %p7149
      $region62: #{lenet_rep_forward.1} parent=5 // pred_check_branch
        %7152 = sbr.rel (%p7150) target = $region64
      $region63: #{lenet_rep_forward.1} parent=5 // pred_region
        %s7153 = ssub.s32 %s18, 2
        // Predicated region
        $region65: #{lenet_rep_forward.1} parent=63 // pred_check
          %p7154 = pneg %p241
        $region66: #{lenet_rep_forward.1} parent=63 // pred_check_branch
          %7156 = sbr.rel (%p7154) target = $region68
        $region67: #{lenet_rep_forward.1} parent=63 // pred_region
          %s7157 = sand.u32 %s226, 1
          %s7158 = scalar_lea.sflag [#allocation3], %s7157
          %s7159 = sand.u32 %s226, 1
          %s7160 = smul.addr %s7159, 8
          %s7161 = scalar_lea.vmem [#allocation2], %s7160
          %7163 = dma.done %s7158, 128
        $region68: #{lenet_rep_forward.1} parent=63 // pred_fallthru
          _
      $region64: #{lenet_rep_forward.1} parent=5 // pred_fallthru
        _
    $region6: #{lenet_rep_forward.1} parent=1 // loop_footer
      %s22 = sadd.s32 1, %s18
    $region7: #{lenet_rep_forward.1} parent=1 // loop_footer_branch
      %17 = sbr.rel target = $region3
    $region8: #{lenet_rep_forward.1} parent=1 // loop_exit
      _
    %7164 = vsyncpa [#allocation3], 1
    %s7165 = scalar_lea.sflag [#allocation3], 1
    %7166 = vsyncpa %s7165, 1

</llo_original>
